<compile_context>
chip_gen: v6e
topology: v6e:2x2x1
jax: 0.10.0
libtpu: 0.0.40
codegen_flags: <defaults>
</compile_context>

<pallas_src>
import functools
import math

import jax
import jax.numpy as jnp
from jax.experimental import pallas as pl
from jax.experimental.pallas import tpu as pltpu

_BN_EPS = 1e-5
_FRONT = 8     # zero guard rows in front of the stitched VMEM strip
_TAIL = 8      # zero guard rows behind it

TAPS_3X3 = tuple((dy, dx) for dy in (-1, 0, 1) for dx in (-1, 0, 1))
TAPS_S2D = tuple((dy, dx) for dy in (-1, 0) for dx in (-1, 0))


def _round_up(x, m):
    return ((x + m - 1) // m) * m


@functools.lru_cache(maxsize=None)
def _vmem_cap():
    try:
        cap = int(pltpu.get_tpu_info().vmem_capacity_bytes)
        if cap < (32 << 20):
            cap = 64 << 20
    except Exception:
        cap = 64 << 20          # conservative fallback: v7x per-TC VMEM
    return cap


def _vmem_limit(need_bytes):
    cap = int(0.55 * _vmem_cap())           # leave headroom for compiler scratch
    return int(min(max(int(need_bytes) + (4 << 20), 20 << 20), cap))


def _apply_act(y, act):
    # y is f32; epilogue stays f32 (no bf16 VPU/EUP on v5e), cast on store.
    if act == "silu":
        return y * pl.reciprocal(1.0 + jnp.exp(-y), approx=True)
    if act == "lrelu":
        return jnp.where(y > 0, y, 0.1 * y)
    return y


# ----------------------------------------------------------------------------
# Kernel 1: fused multi-input / multi-output GEMM
#   out_j = act( sum_i A_i @ W_i + shift )[:, split_j]
# Used for every 1x1 conv, the ELAN cv1+cv2 pair, the ELAN concat+out conv,
# the DownSample-concat -> next cv1/cv2, the stem im2col conv and the head.
# ----------------------------------------------------------------------------
def _fused_mm_kernel(*refs, n_in, splits, act):
    a_refs = refs[:n_in]
    w_refs = refs[n_in:2 * n_in]
    b_ref = refs[2 * n_in]
    o_refs = refs[2 * n_in + 1:]
    acc = jnp.dot(a_refs[0][...], w_refs[0][...],
                  preferred_element_type=jnp.float32)
    for i in range(1, n_in):
        acc = acc + jnp.dot(a_refs[i][...], w_refs[i][...],
                            preferred_element_type=jnp.float32)
    y = _apply_act(acc + b_ref[...], act)
    off = 0
    for j, n_j in enumerate(splits):
        o_refs[j][...] = y[:, off:off + n_j].astype(o_refs[j].dtype)
        off += n_j


def _pick_tm(m, k_total, n_total):
    per_row = 2 * k_total + 4 * n_total + 2 * n_total
    tm = (6 << 20) // max(per_row, 1)
    tm = max(256, min(tm, 4096))
    tm = (tm // 128) * 128
    return m if m <= tm else tm


@functools.lru_cache(maxsize=None)
def _get_fused_mm(m, ks, n_total, splits, tm, act, out_dtype_name, a_dtype_name):
    out_dtype = jnp.dtype(out_dtype_name)
    a_dtype = jnp.dtype(a_dtype_name)
    ab = a_dtype.itemsize
    n_in = len(ks)
    need = (sum(2 * tm * k * ab for k in ks)          # A tiles (double buffered)
            + sum(k * n_total * ab for k in ks)       # resident weights
            + 2 * sum(tm * nj * out_dtype.itemsize for nj in splits)
            + 2 * tm * n_total * 4                    # f32 acc / epilogue temps
            + n_total * 4)
    kernel = functools.partial(_fused_mm_kernel, n_in=n_in, splits=splits, act=act)
    in_specs = ([pl.BlockSpec((tm, k), lambda i: (i, 0)) for k in ks]
                + [pl.BlockSpec((k, n_total), lambda i: (0, 0)) for k in ks]
                + [pl.BlockSpec((1, n_total), lambda i: (0, 0))])
    out_specs = tuple(pl.BlockSpec((tm, nj), lambda i: (i, 0)) for nj in splits)
    out_shape = tuple(jax.ShapeDtypeStruct((m, nj), out_dtype) for nj in splits)
    fn = pl.pallas_call(
        kernel,
        out_shape=out_shape,
        grid=(pl.cdiv(m, tm),),
        in_specs=in_specs,
        out_specs=out_specs,
        compiler_params=pltpu.CompilerParams(
            dimension_semantics=("parallel",),
            vmem_limit_bytes=_vmem_limit(need)),
        cost_estimate=pl.CostEstimate(
            flops=2 * m * sum(ks) * n_total,
            transcendentals=m * n_total if act == "silu" else 0,
            bytes_accessed=ab * (m * sum(ks) + sum(ks) * n_total)
                           + m * n_total * out_dtype.itemsize),
    )
    return jax.jit(fn)


def fused_gemm(a_list, w_list, shift, act, splits, out_dtype=jnp.bfloat16):
    """a_list[i]: (M, K_i); w_list[i]: (K_i, N_total); shift: (N_total,).
    Returns list of (M, split_j) arrays (lane slices of the shared epilogue)."""
    m = a_list[0].shape[0]
    ks = tuple(int(a.shape[1]) for a in a_list)
    n_total = int(w_list[0].shape[1])
    tm = _pick_tm(m, sum(ks), n_total)
    fn = _get_fused_mm(m, ks, n_total, tuple(int(s) for s in splits), tm, act,
                       jnp.dtype(out_dtype).name, jnp.dtype(a_list[0].dtype).name)
    outs = fn(*a_list, *w_list,
              shift.reshape(1, n_total).astype(jnp.float32))
    return list(outs)


# ----------------------------------------------------------------------------
# Kernel 2: row-tiled direct convolution (3x3/s1 and space-to-depth'd 3x3/s2)
#   - unpadded image, flattened to (B, H*W, C); one halo row above/below comes
#     from two extra 1-row BlockSpec views of the same array.
#   - per tile: stitch a row-padded strip in VMEM, build a (tile, ntaps*C)
#     patch matrix, one MXU matmul against the (ntaps*C, Cout) weight,
#     BN-shift + activation epilogue, narrow lane-contiguous store.
# ----------------------------------------------------------------------------
def _dconv_kernel(*refs, taps, tr, W, C, act, has_halo):
    if has_halo:
        x_top_ref, x_mid_ref, x_bot_ref, w_ref, b_ref, o_ref, xflat, patches = refs
    else:
        x_mid_ref, w_ref, b_ref, o_ref, xflat, patches = refs
        x_top_ref = x_bot_ref = None
    tm = tr * W

    # zero guard rows (only ever read at column-masked positions, but must be
    # deterministic because masking is a select against real data).
    xflat[pl.ds(0, _FRONT), :] = jnp.zeros((_FRONT, C), xflat.dtype)
    xflat[pl.ds(_FRONT + (tr + 2) * W, _TAIL), :] = jnp.zeros((_TAIL, C), xflat.dtype)

    # halo row above / below the tile (zero at the image border).
    if has_halo:
        t = pl.program_id(1)
        nt = pl.num_programs(1)

        @pl.when(t > 0)
        def _():
            xflat[pl.ds(_FRONT, W), :] = x_top_ref[0]

        @pl.when(t == 0)
        def _():
            xflat[pl.ds(_FRONT, W), :] = jnp.zeros((W, C), xflat.dtype)

        @pl.when(t < nt - 1)
        def _():
            xflat[pl.ds(_FRONT + (tr + 1) * W, W), :] = x_bot_ref[0]

        @pl.when(t == nt - 1)
        def _():
            xflat[pl.ds(_FRONT + (tr + 1) * W, W), :] = jnp.zeros((W, C), xflat.dtype)
    else:
        xflat[pl.ds(_FRONT, W), :] = jnp.zeros((W, C), xflat.dtype)
        xflat[pl.ds(_FRONT + (tr + 1) * W, W), :] = jnp.zeros((W, C), xflat.dtype)

    # the tile's own rows
    xflat[pl.ds(_FRONT + W, tm), :] = x_mid_ref[0]

    # column-boundary masks: a flat shift by +-1 wraps into the neighbouring
    # image row, which must read as zero padding.
    col = jax.lax.broadcasted_iota(jnp.int32, (tm, 1), 0) % W
    not_left = col > 0
    not_right = col < (W - 1)

    for ti, (dy, dx) in enumerate(taps):
        start = _FRONT + (dy + 1) * W + dx
        src = xflat[pl.ds(start, tm), :]
        if dx < 0:
            src = jnp.where(not_left, src, 0.0)
        elif dx > 0:
            src = jnp.where(not_right, src, 0.0)
        patches[:, pl.ds(ti * C, C)] = src

    acc = jnp.dot(patches[...], w_ref[...], preferred_element_type=jnp.float32)
    y = _apply_act(acc + b_ref[...], act)
    o_ref[0] = y.astype(o_ref.dtype)


def _pick_tr(H, W):
    best = 1
    for tr in range(1, H + 1):
        if H % tr == 0 and tr * W <= 2048:
            best = tr
    return best


@functools.lru_cache(maxsize=None)
def _get_dconv_fn(batch, H, W, C, cout, taps, tr, act):
    nt = H // tr
    has_halo = nt > 1
    tm = tr * W
    ntaps = len(taps)
    xflat_rows = _FRONT + (tr + 2) * W + _TAIL
    need = (2 * 2 * tm * C                        # x_mid (double buffered)
            + (2 * 2 * 2 * W * C if has_halo else 0)
            + 2 * ntaps * C * cout                # resident weights
            + xflat_rows * C * 2                  # stitched strip scratch
            + tm * ntaps * C * 2                  # patch scratch
            + 2 * 2 * tm * cout                   # out (double buffered)
            + 2 * 4 * tm * cout)                  # f32 acc / epilogue temps
    kernel = functools.partial(_dconv_kernel, taps=taps, tr=tr, W=W, C=C,
                               act=act, has_halo=has_halo)
    mid_spec = pl.BlockSpec((1, tm, C), lambda b, t: (b, t, 0))
    w_spec = pl.BlockSpec((ntaps * C, cout), lambda b, t: (0, 0))
    b_spec = pl.BlockSpec((1, cout), lambda b, t: (0, 0))
    out_spec = pl.BlockSpec((1, tm, cout), lambda b, t: (b, t, 0))
    if has_halo:
        top_spec = pl.BlockSpec(
            (1, W, C), lambda b, t: (b, jnp.maximum(t * tr - 1, 0), 0))
        bot_spec = pl.BlockSpec(
            (1, W, C), lambda b, t: (b, jnp.minimum(t * tr + tr, H - 1), 0))
        in_specs = [top_spec, mid_spec, bot_spec, w_spec, b_spec]
    else:
        in_specs = [mid_spec, w_spec, b_spec]
    fn = pl.pallas_call(
        kernel,
        out_shape=jax.ShapeDtypeStruct((batch, H * W, cout), jnp.bfloat16),
        grid=(batch, nt),
        in_specs=in_specs,
        out_specs=out_spec,
        scratch_shapes=[pltpu.VMEM((xflat_rows, C), jnp.bfloat16),
                        pltpu.VMEM((tm, ntaps * C), jnp.bfloat16)],
        compiler_params=pltpu.CompilerParams(
            dimension_semantics=("parallel", "parallel"),
            vmem_limit_bytes=_vmem_limit(need)),
        cost_estimate=pl.CostEstimate(
            flops=2 * batch * H * W * ntaps * C * cout,
            transcendentals=batch * H * W * cout if act == "silu" else 0,
            bytes_accessed=2 * batch * H * W * (C + cout) + 2 * ntaps * C * cout),
    )
    return jax.jit(fn)


def conv_direct(x_flat, H, W, cp):
    """x_flat: (B, H*W, C) bf16 -> (B, H*W, Cout) bf16 (same spatial size)."""
    b, _, C = x_flat.shape
    cout = cp["wmat"].shape[-1]
    tr = _pick_tr(H, W)
    assert H % tr == 0
    fn = _get_dconv_fn(b, H, W, C, cout, cp["taps"], tr, cp["act"])
    shift = cp["shift"].reshape(1, cout).astype(jnp.float32)
    if H // tr > 1:
        return fn(x_flat, x_flat, x_flat, cp["wmat"], shift)
    return fn(x_flat, cp["wmat"], shift)


# ----------------------------------------------------------------------------
# Plain-JAX glue
# ----------------------------------------------------------------------------
def im2col(x, k, s, p):
    """x: (B, H, W, C) -> patches (B*Ho*Wo, k*k*C), order (kh, kw, c)."""
    if p:
        x = jnp.pad(x, ((0, 0), (p, p), (p, p), (0, 0)))
    b, hp, wp, c = x.shape
    ho = (hp - k) // s + 1
    wo = (wp - k) // s + 1
    cols = []
    for kh in range(k):
        for kw in range(k):
            cols.append(x[:, kh:kh + s * ho:s, kw:kw + s * wo:s, :])
    patches = jnp.concatenate(cols, axis=-1)
    return patches.reshape(b * ho * wo, k * k * c), (b, ho, wo)


# ----------------------------------------------------------------------------
# Parameter construction (deterministic, matches module shapes / init)
# ----------------------------------------------------------------------------
class KeyGen:
    def __init__(self, key):
        self.key = key

    def __call__(self):
        self.key, sub = jax.random.split(self.key)
        return sub


def make_conv(key, c1, c2, k=1, p=0, s=1, act="silu"):
    # TODO(synk): depthwise variant not implemented (module default depthwise=False).
    w = 0.1 * jax.random.normal(key, (c2, c1, k, k), jnp.float32)   # torch OIHW
    gamma = jnp.ones((c2,), jnp.float32)
    beta = jnp.zeros((c2,), jnp.float32)
    mean = jnp.zeros((c2,), jnp.float32)
    var = jnp.ones((c2,), jnp.float32)
    scale = gamma / jnp.sqrt(var + _BN_EPS)      # folded into the weights
    shift = beta - mean * scale                  # applied in-kernel (f32)
    w_khwc = jnp.transpose(w, (2, 3, 1, 0)) * scale   # (kh, kw, Cin, Cout)
    if k == 1:
        return dict(kind="gemm", act=act, shift=shift,
                    wmat=w_khwc.reshape(c1, c2).astype(jnp.bfloat16))
    assert k == 3 and p == 1
    if s == 1 and c1 >= 32:
        wmat = w_khwc.reshape(9 * c1, c2).astype(jnp.bfloat16)
        return dict(kind="direct", taps=TAPS_3X3, act=act, shift=shift, wmat=wmat)
    if s == 2:
        # stride-2 3x3 == space-to-depth + 2x2 conv (taps dy,dx in {-1,0}).
        wp = jnp.zeros((2, 2, 2, 2, c1, c2), jnp.float32)   # [a+1,b+1,ph,pw,ci,co]
        for kh in range(3):
            a, ph = (kh - 1) // 2, (kh - 1) % 2
            for kw in range(3):
                bb, pw = (kw - 1) // 2, (kw - 1) % 2
                wp = wp.at[a + 1, bb + 1, ph, pw].set(w_khwc[kh, kw])
        wmat = wp.reshape(4 * 4 * c1, c2).astype(jnp.bfloat16)
        return dict(kind="s2d", taps=TAPS_S2D, act=act, shift=shift, wmat=wmat)
    # Cin=3 stem conv: HBM im2col GEMM path.
    wmat = w_khwc.reshape(9 * c1, c2).astype(jnp.bfloat16)
    return dict(kind="im2col", k=3, s=s, p=p, act=act, shift=shift, wmat=wmat)


def apply_conv(x_flat, H, W, cp):
    """x_flat: (B, H*W, Cin) bf16 -> (y_flat, Ho, Wo)."""
    b = x_flat.shape[0]
    if cp["kind"] == "gemm":
        n = cp["wmat"].shape[1]
        y = fused_gemm([x_flat.reshape(b * H * W, -1)], [cp["wmat"]],
                       cp["shift"], cp["act"], (n,))[0]
        return y.reshape(b, H * W, n), H, W
    if cp["kind"] == "direct":
        return conv_direct(x_flat, H, W, cp), H, W
    if cp["kind"] == "s2d":
        C = x_flat.shape[-1]
        hh, wh = H // 2, W // 2
        xs = (x_flat.reshape(b, hh, 2, wh, 2, C)
              .transpose(0, 1, 3, 2, 4, 5)
              .reshape(b, hh * wh, 4 * C))
        return conv_direct(xs, hh, wh, cp), hh, wh
    # im2col path (stem, Cin=3)
    patches, (b2, ho, wo) = im2col(x_flat.reshape(b, H, W, -1), 3, cp["s"], cp["p"])
    n = cp["wmat"].shape[1]
    y = fused_gemm([patches], [cp["wmat"]], cp["shift"], cp["act"], (n,))[0]
    return y.reshape(b, ho * wo, n), ho, wo


def make_elan_block(kg, in_dims, out_dim, expand_ratio, act="silu", depth=2):
    in_dim = sum(in_dims)
    inter = int(in_dim * expand_ratio)
    cv1 = make_conv(kg(), in_dim, inter, k=1, act=act)
    cv2 = make_conv(kg(), in_dim, inter, k=1, act=act)
    # cv1+cv2 fused: per input piece, its rows of both weights side by side.
    w12, off = [], 0
    for cdim in in_dims:
        w12.append(jnp.concatenate([cv1["wmat"][off:off + cdim],
                                    cv2["wmat"][off:off + cdim]], axis=1))
        off += cdim
    shift12 = jnp.concatenate([cv1["shift"], cv2["shift"]])
    cv3 = [make_conv(kg(), inter, inter, k=3, p=1, act=act) for _ in range(depth)]
    cv4 = [make_conv(kg(), inter, inter, k=3, p=1, act=act) for _ in range(depth)]
    outc = make_conv(kg(), inter * 4, out_dim, k=1, act="silu")
    w_out = [outc["wmat"][i * inter:(i + 1) * inter] for i in range(4)]
    return dict(inter=inter, act=act, w12=w12, shift12=shift12,
                cv3=cv3, cv4=cv4, w_out=w_out, shift_out=outc["shift"],
                out_dim=out_dim)


def apply_elan(pieces, H, W, ep):
    b = pieces[0].shape[0]
    m = b * H * W
    inter = ep["inter"]
    a_list = [p.reshape(m, -1) for p in pieces]
    x1, x2 = fused_gemm(a_list, ep["w12"], ep["shift12"], ep["act"],
                        (inter, inter))
    x3 = x2.reshape(b, H * W, inter)
    for cp in ep["cv3"]:
        x3, H, W = apply_conv(x3, H, W, cp)
    x4 = x3
    for cp in ep["cv4"]:
        x4, H, W = apply_conv(x4, H, W, cp)
    # torch.cat([x1, x2, x3, x4], dim=1) + 1x1 'out' conv, as a K-split GEMM.
    out = fused_gemm([x1, x2, x3.reshape(m, inter), x4.reshape(m, inter)],
                     ep["w_out"], ep["shift_out"], "silu", (ep["out_dim"],))[0]
    return out.reshape(b, H * W, ep["out_dim"]), H, W


def make_downsample(kg, in_dim, act="silu"):
    inter = in_dim // 2
    return dict(inter=inter,
                cv1=make_conv(kg(), in_dim, inter, k=1, act=act),
                cv2_0=make_conv(kg(), in_dim, inter, k=1, act=act),
                cv2_1=make_conv(kg(), inter, inter, k=3, p=1, s=2, act=act))


def apply_downsample(x_flat, H, W, dp):
    b, _, C = x_flat.shape
    # branch 2: 1x1 conv then 3x3 stride-2 conv
    y0, _, _ = apply_conv(x_flat, H, W, dp["cv2_0"])
    x2, Ho, Wo = apply_conv(y0, H, W, dp["cv2_1"])
    # branch 1: maxpool 2x2 then 1x1 conv
    xp = x_flat.reshape(b, H // 2, 2, W // 2, 2, C).max(axis=(2, 4))
    xp = xp.reshape(b, Ho * Wo, C)
    x1, _, _ = apply_conv(xp, Ho, Wo, dp["cv1"])
    # torch.cat([x1, x2], dim=1) is NOT materialized: returned as pieces that
    # feed the next ELAN's fused cv1/cv2 as a K-split.
    return [x1, x2], Ho, Wo


def make_elannet(key, num_features=1000):
    kg = KeyGen(key)
    p = {}
    p["layer_1"] = [
        make_conv(kg(), 3, 32, k=3, p=1),
        make_conv(kg(), 32, 64, k=3, p=1, s=2),
        make_conv(kg(), 64, 64, k=3, p=1),
    ]
    p["layer_2"] = dict(
        conv=make_conv(kg(), 64, 128, k=3, p=1, s=2),
        elan=make_elan_block(kg, (128,), 256, 0.5),
    )
    p["layer_3"] = dict(down=make_downsample(kg, 256),
                        elan=make_elan_block(kg, (128, 128), 512, 0.5))
    p["layer_4"] = dict(down=make_downsample(kg, 512),
                        elan=make_elan_block(kg, (256, 256), 1024, 0.5))
    p["layer_5"] = dict(down=make_downsample(kg, 1024),
                        elan=make_elan_block(kg, (512, 512), 1024, 0.25))

    final_dim = 1024
    bound = 1.0 / math.sqrt(final_dim)
    lw = jax.random.uniform(kg(), (num_features, final_dim), jnp.float32,
                            -bound, bound)
    lb = jax.random.uniform(kg(), (num_features,), jnp.float32, -bound, bound)
    # nn.BatchNorm1d(num_features), eval mode: weight=1, bias=0, mean=0, var=1.
    bn_scale = 1.0 / math.sqrt(1.0 + _BN_EPS)
    n_pad = _round_up(num_features, 128)     # lane-dense store, sliced back after
    wmat = jnp.pad(lw.T * bn_scale, ((0, 0), (0, n_pad - num_features)))
    shift = jnp.pad(lb * bn_scale, (0, n_pad - num_features))
    p["head"] = dict(wmat=wmat.astype(jnp.float32), shift=shift,
                     n_out=num_features, n_pad=n_pad)
    return p


def elannet_forward(x_nchw, params):
    # T.Resize((224, 224)) bilinear -- plain JAX glue.
    x = jnp.transpose(x_nchw, (0, 2, 3, 1)).astype(jnp.float32)   # NCHW -> NHWC
    b = x.shape[0]
    x = jax.image.resize(x, (b, 224, 224, x.shape[-1]), method="bilinear")
    x = x.astype(jnp.bfloat16).reshape(b, 224 * 224, 3)
    H = W = 224

    for cp in params["layer_1"]:
        x, H, W = apply_conv(x, H, W, cp)
    x, H, W = apply_conv(x, H, W, params["layer_2"]["conv"])
    x, H, W = apply_elan([x], H, W, params["layer_2"]["elan"])
    for name in ("layer_3", "layer_4", "layer_5"):
        pieces, H, W = apply_downsample(x, H, W, params[name]["down"])
        x, H, W = apply_elan(pieces, H, W, params[name]["elan"])

    # AdaptiveAvgPool2d((1,1)) + flatten(1), pooled in f32 for accuracy.
    feat = jnp.mean(x.astype(jnp.float32), axis=1)    # (B, 1024)
    h = params["head"]
    out = fused_gemm([feat], [h["wmat"]], h["shift"], "none", (h["n_pad"],),
                     out_dtype=jnp.float32)[0]
    return out[:, :h["n_out"]]


if __name__ == "__main__":
    key = jax.random.PRNGKey(0)
    pkey, xkey = jax.random.split(key)
    params = make_elannet(pkey, num_features=1000)
    # PyTorch-style NCHW input at small spatial size; forward resizes to 224x224.
    x = jax.random.normal(xkey, (2, 3, 16, 16), jnp.float32)
    out = elannet_forward(x, params)
    out = jax.block_until_ready(out)
    assert out.shape == (2, 1000) and out.dtype == jnp.float32
    assert bool(jnp.all(jnp.isfinite(out)))
    print("KERNEL_OK")
</pallas_src>

<mosaic_0001>
module attributes {stable_mosaic.version = 11 : i64} {
  func.func @_fused_mm_kernel(%arg0: i32, %arg1: memref<4096x27xbf16, #tpu.memory_space<vmem>>, %arg2: memref<27x32xbf16, #tpu.memory_space<vmem>>, %arg3: memref<1x32xf32, #tpu.memory_space<vmem>>, %arg4: memref<4096x32xbf16, #tpu.memory_space<vmem>>) attributes {dimension_semantics = [#tpu.dimension_semantics<parallel>], iteration_bounds = array<i64: 25>, scalar_prefetch = 0 : i64, scratch_operands = 0 : i64, tpu.core_type = #tpu.core_type<tc>, window_params = [{transform_indices = @transform_0, window_bounds = array<i64: 4096, 27>}, {pipeline_mode = #tpu.pipeline_mode<synchronous>, transform_indices = @transform_1, window_bounds = array<i64: 27, 32>}, {pipeline_mode = #tpu.pipeline_mode<synchronous>, transform_indices = @transform_2, window_bounds = array<i64: 1, 32>}, {transform_indices = @transform_3, window_bounds = array<i64: 4096, 32>}]} {
    %c0 = arith.constant 0 : index
    %c0_0 = arith.constant 0 : index
    %0 = vector.load %arg1[%c0, %c0_0] : memref<4096x27xbf16, #tpu.memory_space<vmem>>, vector<4096x27xbf16>
    %c0_1 = arith.constant 0 : index
    %c0_2 = arith.constant 0 : index
    %1 = vector.load %arg2[%c0_1, %c0_2] : memref<27x32xbf16, #tpu.memory_space<vmem>>, vector<27x32xbf16>
    %cst = arith.constant dense<0.000000e+00> : vector<4096x32xf32>
    %2 = tpu.matmul %0, %1, %cst {dimension_numbers = #tpu.dot_dimension_numbers<[1], [0], [0], [1], [0, 0, 1, 1], [], []>} : vector<4096x27xbf16>, vector<27x32xbf16>, vector<4096x32xf32> -> vector<4096x32xf32>
    %c0_3 = arith.constant 0 : index
    %c0_4 = arith.constant 0 : index
    %3 = vector.load %arg3[%c0_3, %c0_4] : memref<1x32xf32, #tpu.memory_space<vmem>>, vector<1x32xf32>
    %4 = vector.broadcast %3 : vector<1x32xf32> to vector<4096x32xf32>
    %5 = arith.addf %2, %4 : vector<4096x32xf32>
    %cst_5 = arith.constant 0.000000e+00 : f32
    %6 = vector.broadcast %cst_5 : f32 to vector<4096x32xf32>
    %7 = arith.subf %6, %5 : vector<4096x32xf32>
    %8 = math.exp %7 : vector<4096x32xf32>
    %cst_6 = arith.constant 1.000000e+00 : f32
    %9 = vector.broadcast %cst_6 : f32 to vector<4096x32xf32>
    %10 = arith.addf %9, %8 : vector<4096x32xf32>
    %11 = tpu.reciprocal %10 {approx = true} : vector<4096x32xf32> -> vector<4096x32xf32>
    %12 = arith.mulf %5, %11 : vector<4096x32xf32>
    %13 = arith.truncf %12 : vector<4096x32xf32> to vector<4096x32xbf16>
    %c0_7 = arith.constant 0 : index
    %c0_8 = arith.constant 0 : index
    %14 = vector.load %arg4[%c0_7, %c0_8] : memref<4096x32xbf16, #tpu.memory_space<vmem>>, vector<4096x32xbf16>
    tpu.vector_store %arg4[%c0_7, %c0_8], %13 {strides = array<i32>} : memref<4096x32xbf16, #tpu.memory_space<vmem>>, vector<4096x32xbf16>,
    return
  }
  func.func @transform_0(%arg0: i32) -> (i32, i32) {
    %c0_i32 = arith.constant 0 : i32
    %c0_i32_0 = arith.constant 0 : i32
    return %arg0, %c0_i32 : i32, i32
  }
  func.func @transform_1(%arg0: i32) -> (i32, i32) {
    %c0_i32 = arith.constant 0 : i32
    %c0_i32_0 = arith.constant 0 : i32
    %c0_i32_1 = arith.constant 0 : i32
    return %c0_i32, %c0_i32_0 : i32, i32
  }
  func.func @transform_2(%arg0: i32) -> (i32, i32) {
    %c0_i32 = arith.constant 0 : i32
    %c0_i32_0 = arith.constant 0 : i32
    %c0_i32_1 = arith.constant 0 : i32
    return %c0_i32, %c0_i32_0 : i32, i32
  }
  func.func @transform_3(%arg0: i32) -> (i32, i32) {
    %c0_i32 = arith.constant 0 : i32
    %c0_i32_0 = arith.constant 0 : i32
    return %arg0, %c0_i32 : i32, i32
  }
}

</mosaic_0001>

<llo_original>
// kernel: tpu_custom_call.1
$region0: #{tpu_custom_call.1}
  #allocation0 [shape = 'u32[]', space=smem, size = 0x4, offset = 0x4, fixed_abs, tag = 'smem constant byte address 0x4 - core index']
  #allocation1 [shape = 'u32[144,128]{1,0:T(1,128)}', space=vmem, size = 0x12000, scoped, tag = 'internal scratch']
  %s0 = inlined_call_operand.vmem [shape: bf16[100352,27], index: 0, kind: input, shape index: {}]
  %s1 = inlined_call_operand.vmem [shape: bf16[27,32], index: 1, kind: input, shape index: {}]
  %s2 = inlined_call_operand.vmem [shape: f32[1,32], index: 2, kind: input, shape index: {}]
  %s3 = inlined_call_operand.vmem [shape: bf16[100352,32], index: 3, kind: output, shape index: {}]
  %s4 = sld [smem:[#allocation0]]
  $region89: #{tpu_custom_call.1} parent=0
    _
  %s6 = ssub.s32 1, %s4
  %s7 = scalar_select 0, %s6, %s4
  $region1: #{tpu_custom_call.1} parent=0
    #allocation2 [shape = 'u8[2097152]{0}', space=vmem, size = 0x200000, scoped, tag = 'output window, operand 0']
    loop: start=0, step=1, limit=27
    $region2: #{tpu_custom_call.1} parent=1 // loop_pre_header
      _
    $region3: #{tpu_custom_call.1} parent=1 // loop_header
      %s9 = sphi 0, %s13
      %p10 = scmp.ge.s32.totalorder %s9, 27
      %s19 = sphi 0, %s21
      %s22 = sphi 0, %s19
      %s23 = sphi 0, %s22
      %s39 = sphi 0, %s23
      %s43 = sphi 0, %s43
      %s45 = sphi 0, %s43
      %s46 = sphi 0, %s45
      %s60 = sphi 0, %s46
      %s64 = sphi 0, %s64
      %s66 = sphi 0, %s64
      %s67 = sphi 0, %s66
      %s81 = sphi 0, %s67
      %s87 = sphi 0, %s89
      %s90 = sphi 0, %s87
      %s91 = sphi 0, %s90
      %s107 = sphi 0, %s91
    $region4: #{tpu_custom_call.1} parent=1 // loop_header_branch
      %12 = sbr.rel (%p10) target = $region8
    $region5: #{tpu_custom_call.1} parent=1 // loop_body
      %s14 = ssub.s32 %s9, 1
      %s15 = ssub.s32 %s9, 2
      %s16 = sadd.s32 %s9, 1
      %s17 = ssub.s32 %s9, %s16
      %p18 = scmp.eq.s32.totalorder %s17, 0
      %s20 = sadd.s32 %s19, 1
      %s21 = scalar_select %p18, %s19, %s20
      %p24 = pneg %p18
      %p25 = scmp.eq.s32.totalorder %s9, 24
      %p26 = por %p24, %p25
      %p27 = scmp.ne.s32.totalorder %s19, %s22
      %p28 = scmp.eq.s32.totalorder %s9, 0
      %p29 = por %p27, %p28
      %p30 = scmp.ne.s32.totalorder %s19, %s22
      %p31 = scmp.eq.s32.totalorder %s14, 24
      %p32 = por %p30, %p31
      %p33 = scmp.ne.s32.totalorder %s22, %s23
      %p34 = scmp.eq.s32.totalorder %s14, 0
      %p35 = por %p33, %p34
      %p36 = scmp.ne.s32.totalorder %s22, %s23
      %p37 = scmp.eq.s32.totalorder %s15, 24
      %p38 = por %p36, %p37
      %p40 = scmp.ne.s32.totalorder %s23, %s39
      %p41 = scmp.eq.s32.totalorder %s15, 0
      %p42 = por %p40, %p41
      %s44 = sadd.s32 %s43, 1
      %p47 = scmp.eq.s32.totalorder %s9, 24
      %p48 = scmp.ne.s32.totalorder %s43, %s45
      %p49 = scmp.eq.s32.totalorder %s9, 0
      %p50 = por %p48, %p49
      %p51 = scmp.ne.s32.totalorder %s43, %s45
      %p52 = scmp.eq.s32.totalorder %s14, 24
      %p53 = por %p51, %p52
      %p54 = scmp.ne.s32.totalorder %s45, %s46
      %p55 = scmp.eq.s32.totalorder %s14, 0
      %p56 = por %p54, %p55
      %p57 = scmp.ne.s32.totalorder %s45, %s46
      %p58 = scmp.eq.s32.totalorder %s15, 24
      %p59 = por %p57, %p58
      %p61 = scmp.ne.s32.totalorder %s46, %s60
      %p62 = scmp.eq.s32.totalorder %s15, 0
      %p63 = por %p61, %p62
      %s65 = sadd.s32 %s64, 1
      %p68 = scmp.eq.s32.totalorder %s9, 24
      %p69 = scmp.ne.s32.totalorder %s64, %s66
      %p70 = scmp.eq.s32.totalorder %s9, 0
      %p71 = por %p69, %p70
      %p72 = scmp.ne.s32.totalorder %s64, %s66
      %p73 = scmp.eq.s32.totalorder %s14, 24
      %p74 = por %p72, %p73
      %p75 = scmp.ne.s32.totalorder %s66, %s67
      %p76 = scmp.eq.s32.totalorder %s14, 0
      %p77 = por %p75, %p76
      %p78 = scmp.ne.s32.totalorder %s66, %s67
      %p79 = scmp.eq.s32.totalorder %s15, 24
      %p80 = por %p78, %p79
      %p82 = scmp.ne.s32.totalorder %s67, %s81
      %p83 = scmp.eq.s32.totalorder %s15, 0
      %p84 = por %p82, %p83
      %s85 = ssub.s32 %s9, %s16
      %p86 = scmp.eq.s32.totalorder %s85, 0
      %s88 = sadd.s32 %s87, 1
      %s89 = scalar_select %p86, %s87, %s88
      %p92 = pneg %p86
      %p93 = scmp.eq.s32.totalorder %s9, 24
      %p94 = por %p92, %p93
      %p95 = scmp.ne.s32.totalorder %s87, %s90
      %p96 = scmp.eq.s32.totalorder %s9, 0
      %p97 = por %p95, %p96
      %p98 = scmp.ne.s32.totalorder %s87, %s90
      %p99 = scmp.eq.s32.totalorder %s14, 24
      %p100 = por %p98, %p99
      %p101 = scmp.ne.s32.totalorder %s90, %s91
      %p102 = scmp.eq.s32.totalorder %s14, 0
      %p103 = por %p101, %p102
      %p104 = scmp.ne.s32.totalorder %s90, %s91
      %p105 = scmp.eq.s32.totalorder %s15, 24
      %p106 = por %p104, %p105
      %p108 = scmp.ne.s32.totalorder %s91, %s107
      %p109 = scmp.eq.s32.totalorder %s15, 0
      %p110 = por %p108, %p109
      %p111 = scmp.le.s32.totalorder 1, %s9
      %p112 = scmp.lt.s32.totalorder %s9, 26
      %p113 = pnand %p111, %p112
      %p114 = pneg %p113
      // Predicated region
      $region9: #{tpu_custom_call.1} parent=5 // pred_check
        _
      $region10: #{tpu_custom_call.1} parent=5 // pred_check_branch
        %116 = sbr.rel (%p113) target = $region12
      $region11: #{tpu_custom_call.1} parent=5 // pred_region
        %s117 = ssub.s32 %s9, 1
        // Predicated region
        $region13: #{tpu_custom_call.1} parent=11 // pred_check
          %p118 = pneg %p56
        $region14: #{tpu_custom_call.1} parent=11 // pred_check_branch
          %120 = sbr.rel (%p118) target = $region16
        $region15: #{tpu_custom_call.1} parent=11 // pred_region
          _
        $region16: #{tpu_custom_call.1} parent=11 // pred_fallthru
          _
        // Predicated region
        $region17: #{tpu_custom_call.1} parent=11 // pred_check
          %p121 = pneg %p77
        $region18: #{tpu_custom_call.1} parent=11 // pred_check_branch
          %123 = sbr.rel (%p121) target = $region20
        $region19: #{tpu_custom_call.1} parent=11 // pred_region
          _
        $region20: #{tpu_custom_call.1} parent=11 // pred_fallthru
          _
      $region12: #{tpu_custom_call.1} parent=5 // pred_fallthru
        _
      %p124 = scmp.lt.s32.totalorder %s9, 25
      // Predicated region
      $region21: #{tpu_custom_call.1} parent=5 // pred_check
        %p125 = pneg %p124
      $region22: #{tpu_custom_call.1} parent=5 // pred_check_branch
        %127 = sbr.rel (%p125) target = $region24
      $region23: #{tpu_custom_call.1} parent=5 // pred_region
        // Predicated region
        $region25: #{tpu_custom_call.1} parent=23 // pred_check
          %p128 = pneg %p29
        $region26: #{tpu_custom_call.1} parent=23 // pred_check_branch
          %130 = sbr.rel (%p128) target = $region28
        $region27: #{tpu_custom_call.1} parent=23 // pred_region
          %s131 = smul.u32 512, %s9
          %s132 = ssub.s32 12544, %s131
          %p133 = scmp.lt.s32.totalorder %s132, 512
          %s134 = scalar_select %p133, %s132, 512
          %s135 = smul.u32 64, %s134
          %p136 = scmp.lt.s32.totalorder %s131, 12543
          %s137 = scalar_select %p136, %s131, 12543
          %s138 = smul.addr %s137, 4
          %s139 = scalar_lea.vmem %s0, %s138
          %s140 = smul.u32 512, %s9
          %s141 = ssub.s32 12544, %s140
          %p142 = scmp.lt.s32.totalorder %s141, 512
          %s143 = scalar_select %p142, %s141, 512
          %s144 = smul.u32 64, %s143
        $region28: #{tpu_custom_call.1} parent=23 // pred_fallthru
          _
      $region24: #{tpu_custom_call.1} parent=5 // pred_fallthru
        _
      %p145 = scmp.le.s32.totalorder 1, %s9
      %p146 = scmp.lt.s32.totalorder %s9, 26
      %p147 = pnand %p145, %p146
      %p148 = pneg %p147
      // Predicated region
      $region29: #{tpu_custom_call.1} parent=5 // pred_check
        _
      $region30: #{tpu_custom_call.1} parent=5 // pred_check_branch
        %150 = sbr.rel (%p147) target = $region32
      $region31: #{tpu_custom_call.1} parent=5 // pred_region
        %s151 = ssub.s32 %s9, 1
        %s152 = smul.u32 512, %s14
        %s153 = ssub.s32 12544, %s152
        %p154 = scmp.lt.s32.totalorder %s153, 512
        %s155 = scalar_select %p154, %s153, 512
        %s156 = smul.u32 64, %s155
        %p157 = scmp.lt.s32.totalorder %s152, 12543
        %s158 = scalar_select %p157, %s152, 12543
        %s159 = smul.addr %s158, 4
        %s160 = scalar_lea.vmem %s0, %s159
        %p161 = pneg %p35
        %p162 = pneg %p32
        %p163 = pneg %p56
        %p164 = pneg %p53
        %p165 = pneg %p77
        %p166 = pneg %p74
        %p167 = pneg %p103
        %p168 = pneg %p100
        %s169 = sand.u32 %s90, 1
        %s170 = sand.u32 %s90, 1
        %s171 = smul.addr %s170, 2048
        %s172 = scalar_lea.vmem [#allocation2], %s171
        %s173 = smul.u32 512, %s14
        %s174 = ssub.s32 12544, %s173
        %p175 = scmp.lt.s32.totalorder %s174, 512
        %s176 = scalar_select %p175, %s174, 512
        %s177 = smul.u32 64, %s176
        %p178 = scmp.lt.s32.totalorder %s173, 12543
        %s179 = scalar_select %p178, %s173, 12543
        %s180 = smul.addr %s179, 4
        %s181 = scalar_lea.vmem %s0, %s180
        %s182 = smul.u32 512, %s14
        %s183 = ssub.s32 12544, %s182
        %p184 = scmp.lt.s32.totalorder %s183, 512
        %s185 = scalar_select %p184, %s183, 512
        %s186 = smul.u32 64, %s185
        %s187 = smul.u32 512, %s14
        %s188 = ssub.s32 12544, %s187
        %p189 = scmp.lt.s32.totalorder %s188, 512
        %s190 = scalar_select %p189, %s188, 512
        %s191 = smul.u32 64, %s190
        %v193 = vld [vmem:[%s181] sm:$0xf]
        %v194 = vld [vmem:[%s181 + $0x4] sm:$0xf]
        %v195 = vld [vmem:[%s181 + $0x8] sm:$0xf]
        %v196 = vld [vmem:[%s181 + $0xc] sm:$0xf]
        %v197 = vld [vmem:[%s181 + $0x10] sm:$0xf]
        %v198 = vld [vmem:[%s181 + $0x14] sm:$0xf]
        %v199 = vld [vmem:[%s181 + $0x18] sm:$0xf]
        %v200 = vld [vmem:[%s181 + $0x1c] sm:$0xf]
        %v201 = vld [vmem:[%s181 + $0x20] sm:$0xf]
        %v202 = vld [vmem:[%s181 + $0x24] sm:$0xf]
        %v203 = vld [vmem:[%s181 + $0x28] sm:$0xf]
        %v204 = vld [vmem:[%s181 + $0x2c] sm:$0xf]
        %v205 = vld [vmem:[%s181 + $0x30] sm:$0xf]
        %v206 = vld [vmem:[%s181 + $0x34] sm:$0xf]
        %v207 = vld [vmem:[%s181 + $0x38] sm:$0xf]
        %v208 = vld [vmem:[%s181 + $0x3c] sm:$0xf]
        %v209 = vld [vmem:[%s181 + $0x40] sm:$0xf]
        %v210 = vld [vmem:[%s181 + $0x44] sm:$0xf]
        %v211 = vld [vmem:[%s181 + $0x48] sm:$0xf]
        %v212 = vld [vmem:[%s181 + $0x4c] sm:$0xf]
        %v213 = vld [vmem:[%s181 + $0x50] sm:$0xf]
        %v214 = vld [vmem:[%s181 + $0x54] sm:$0xf]
        %v215 = vld [vmem:[%s181 + $0x58] sm:$0xf]
        %v216 = vld [vmem:[%s181 + $0x5c] sm:$0xf]
        %v217 = vld [vmem:[%s181 + $0x60] sm:$0xf]
        %v218 = vld [vmem:[%s181 + $0x64] sm:$0xf]
        %v219 = vld [vmem:[%s181 + $0x68] sm:$0xf]
        %v220 = vld [vmem:[%s181 + $0x6c] sm:$0xf]
        %v221 = vld [vmem:[%s181 + $0x70] sm:$0xf]
        %v222 = vld [vmem:[%s181 + $0x74] sm:$0xf]
        %v223 = vld [vmem:[%s181 + $0x78] sm:$0xf]
        %v224 = vld [vmem:[%s181 + $0x7c] sm:$0xf]
        %v225 = vld [vmem:[%s181 + $0x80] sm:$0xf]
        %v226 = vld [vmem:[%s181 + $0x84] sm:$0xf]
        %v227 = vld [vmem:[%s181 + $0x88] sm:$0xf]
        %v228 = vld [vmem:[%s181 + $0x8c] sm:$0xf]
        %v229 = vld [vmem:[%s181 + $0x90] sm:$0xf]
        %v230 = vld [vmem:[%s181 + $0x94] sm:$0xf]
        %v231 = vld [vmem:[%s181 + $0x98] sm:$0xf]
        %v232 = vld [vmem:[%s181 + $0x9c] sm:$0xf]
        %v233 = vld [vmem:[%s181 + $0xa0] sm:$0xf]
        %v234 = vld [vmem:[%s181 + $0xa4] sm:$0xf]
        %v235 = vld [vmem:[%s181 + $0xa8] sm:$0xf]
        %v236 = vld [vmem:[%s181 + $0xac] sm:$0xf]
        %v237 = vld [vmem:[%s181 + $0xb0] sm:$0xf]
        %v238 = vld [vmem:[%s181 + $0xb4] sm:$0xf]
        %v239 = vld [vmem:[%s181 + $0xb8] sm:$0xf]
        %v240 = vld [vmem:[%s181 + $0xbc] sm:$0xf]
        %v241 = vld [vmem:[%s181 + $0xc0] sm:$0xf]
        %v242 = vld [vmem:[%s181 + $0xc4] sm:$0xf]
        %v243 = vld [vmem:[%s181 + $0xc8] sm:$0xf]
        %v244 = vld [vmem:[%s181 + $0xcc] sm:$0xf]
        %v245 = vld [vmem:[%s181 + $0xd0] sm:$0xf]
        %v246 = vld [vmem:[%s181 + $0xd4] sm:$0xf]
        %v247 = vld [vmem:[%s181 + $0xd8] sm:$0xf]
        %v248 = vld [vmem:[%s181 + $0xdc] sm:$0xf]
        %v249 = vld [vmem:[%s181 + $0xe0] sm:$0xf]
        %v250 = vld [vmem:[%s181 + $0xe4] sm:$0xf]
        %v251 = vld [vmem:[%s181 + $0xe8] sm:$0xf]
        %v252 = vld [vmem:[%s181 + $0xec] sm:$0xf]
        %v253 = vld [vmem:[%s181 + $0xf0] sm:$0xf]
        %v254 = vld [vmem:[%s181 + $0xf4] sm:$0xf]
        %v255 = vld [vmem:[%s181 + $0xf8] sm:$0xf]
        %v256 = vld [vmem:[%s181 + $0xfc] sm:$0xf]
        %v257 = vld [vmem:[%s181 + $0x100] sm:$0xf]
        %v258 = vld [vmem:[%s181 + $0x104] sm:$0xf]
        %v259 = vld [vmem:[%s181 + $0x108] sm:$0xf]
        %v260 = vld [vmem:[%s181 + $0x10c] sm:$0xf]
        %v261 = vld [vmem:[%s181 + $0x110] sm:$0xf]
        %v262 = vld [vmem:[%s181 + $0x114] sm:$0xf]
        %v263 = vld [vmem:[%s181 + $0x118] sm:$0xf]
        %v264 = vld [vmem:[%s181 + $0x11c] sm:$0xf]
        %v265 = vld [vmem:[%s181 + $0x120] sm:$0xf]
        %v266 = vld [vmem:[%s181 + $0x124] sm:$0xf]
        %v267 = vld [vmem:[%s181 + $0x128] sm:$0xf]
        %v268 = vld [vmem:[%s181 + $0x12c] sm:$0xf]
        %v269 = vld [vmem:[%s181 + $0x130] sm:$0xf]
        %v270 = vld [vmem:[%s181 + $0x134] sm:$0xf]
        %v271 = vld [vmem:[%s181 + $0x138] sm:$0xf]
        %v272 = vld [vmem:[%s181 + $0x13c] sm:$0xf]
        %v273 = vld [vmem:[%s181 + $0x140] sm:$0xf]
        %v274 = vld [vmem:[%s181 + $0x144] sm:$0xf]
        %v275 = vld [vmem:[%s181 + $0x148] sm:$0xf]
        %v276 = vld [vmem:[%s181 + $0x14c] sm:$0xf]
        %v277 = vld [vmem:[%s181 + $0x150] sm:$0xf]
        %v278 = vld [vmem:[%s181 + $0x154] sm:$0xf]
        %v279 = vld [vmem:[%s181 + $0x158] sm:$0xf]
        %v280 = vld [vmem:[%s181 + $0x15c] sm:$0xf]
        %v281 = vld [vmem:[%s181 + $0x160] sm:$0xf]
        %v282 = vld [vmem:[%s181 + $0x164] sm:$0xf]
        %v283 = vld [vmem:[%s181 + $0x168] sm:$0xf]
        %v284 = vld [vmem:[%s181 + $0x16c] sm:$0xf]
        %v285 = vld [vmem:[%s181 + $0x170] sm:$0xf]
        %v286 = vld [vmem:[%s181 + $0x174] sm:$0xf]
        %v287 = vld [vmem:[%s181 + $0x178] sm:$0xf]
        %v288 = vld [vmem:[%s181 + $0x17c] sm:$0xf]
        %v289 = vld [vmem:[%s181 + $0x180] sm:$0xf]
        %v290 = vld [vmem:[%s181 + $0x184] sm:$0xf]
        %v291 = vld [vmem:[%s181 + $0x188] sm:$0xf]
        %v292 = vld [vmem:[%s181 + $0x18c] sm:$0xf]
        %v293 = vld [vmem:[%s181 + $0x190] sm:$0xf]
        %v294 = vld [vmem:[%s181 + $0x194] sm:$0xf]
        %v295 = vld [vmem:[%s181 + $0x198] sm:$0xf]
        %v296 = vld [vmem:[%s181 + $0x19c] sm:$0xf]
        %v297 = vld [vmem:[%s181 + $0x1a0] sm:$0xf]
        %v298 = vld [vmem:[%s181 + $0x1a4] sm:$0xf]
        %v299 = vld [vmem:[%s181 + $0x1a8] sm:$0xf]
        %v300 = vld [vmem:[%s181 + $0x1ac] sm:$0xf]
        %v301 = vld [vmem:[%s181 + $0x1b0] sm:$0xf]
        %v302 = vld [vmem:[%s181 + $0x1b4] sm:$0xf]
        %v303 = vld [vmem:[%s181 + $0x1b8] sm:$0xf]
        %v304 = vld [vmem:[%s181 + $0x1bc] sm:$0xf]
        %v305 = vld [vmem:[%s181 + $0x1c0] sm:$0xf]
        %v306 = vld [vmem:[%s181 + $0x1c4] sm:$0xf]
        %v307 = vld [vmem:[%s181 + $0x1c8] sm:$0xf]
        %v308 = vld [vmem:[%s181 + $0x1cc] sm:$0xf]
        %v309 = vld [vmem:[%s181 + $0x1d0] sm:$0xf]
        %v310 = vld [vmem:[%s181 + $0x1d4] sm:$0xf]
        %v311 = vld [vmem:[%s181 + $0x1d8] sm:$0xf]
        %v312 = vld [vmem:[%s181 + $0x1dc] sm:$0xf]
        %v313 = vld [vmem:[%s181 + $0x1e0] sm:$0xf]
        %v314 = vld [vmem:[%s181 + $0x1e4] sm:$0xf]
        %v315 = vld [vmem:[%s181 + $0x1e8] sm:$0xf]
        %v316 = vld [vmem:[%s181 + $0x1ec] sm:$0xf]
        %v317 = vld [vmem:[%s181 + $0x1f0] sm:$0xf]
        %v318 = vld [vmem:[%s181 + $0x1f4] sm:$0xf]
        %v319 = vld [vmem:[%s181 + $0x1f8] sm:$0xf]
        %v320 = vld [vmem:[%s181 + $0x1fc] sm:$0xf]
        %v321 = vld [vmem:[%s181 + $0x200] sm:$0xf]
        %v322 = vld [vmem:[%s181 + $0x204] sm:$0xf]
        %v323 = vld [vmem:[%s181 + $0x208] sm:$0xf]
        %v324 = vld [vmem:[%s181 + $0x20c] sm:$0xf]
        %v325 = vld [vmem:[%s181 + $0x210] sm:$0xf]
        %v326 = vld [vmem:[%s181 + $0x214] sm:$0xf]
        %v327 = vld [vmem:[%s181 + $0x218] sm:$0xf]
        %v328 = vld [vmem:[%s181 + $0x21c] sm:$0xf]
        %v329 = vld [vmem:[%s181 + $0x220] sm:$0xf]
        %v330 = vld [vmem:[%s181 + $0x224] sm:$0xf]
        %v331 = vld [vmem:[%s181 + $0x228] sm:$0xf]
        %v332 = vld [vmem:[%s181 + $0x22c] sm:$0xf]
        %v333 = vld [vmem:[%s181 + $0x230] sm:$0xf]
        %v334 = vld [vmem:[%s181 + $0x234] sm:$0xf]
        %v335 = vld [vmem:[%s181 + $0x238] sm:$0xf]
        %v336 = vld [vmem:[%s181 + $0x23c] sm:$0xf]
        %v337 = vld [vmem:[%s181 + $0x240] sm:$0xf]
        %v338 = vld [vmem:[%s181 + $0x244] sm:$0xf]
        %v339 = vld [vmem:[%s181 + $0x248] sm:$0xf]
        %v340 = vld [vmem:[%s181 + $0x24c] sm:$0xf]
        %v341 = vld [vmem:[%s181 + $0x250] sm:$0xf]
        %v342 = vld [vmem:[%s181 + $0x254] sm:$0xf]
        %v343 = vld [vmem:[%s181 + $0x258] sm:$0xf]
        %v344 = vld [vmem:[%s181 + $0x25c] sm:$0xf]
        %v345 = vld [vmem:[%s181 + $0x260] sm:$0xf]
        %v346 = vld [vmem:[%s181 + $0x264] sm:$0xf]
        %v347 = vld [vmem:[%s181 + $0x268] sm:$0xf]
        %v348 = vld [vmem:[%s181 + $0x26c] sm:$0xf]
        %v349 = vld [vmem:[%s181 + $0x270] sm:$0xf]
        %v350 = vld [vmem:[%s181 + $0x274] sm:$0xf]
        %v351 = vld [vmem:[%s181 + $0x278] sm:$0xf]
        %v352 = vld [vmem:[%s181 + $0x27c] sm:$0xf]
        %v353 = vld [vmem:[%s181 + $0x280] sm:$0xf]
        %v354 = vld [vmem:[%s181 + $0x284] sm:$0xf]
        %v355 = vld [vmem:[%s181 + $0x288] sm:$0xf]
        %v356 = vld [vmem:[%s181 + $0x28c] sm:$0xf]
        %v357 = vld [vmem:[%s181 + $0x290] sm:$0xf]
        %v358 = vld [vmem:[%s181 + $0x294] sm:$0xf]
        %v359 = vld [vmem:[%s181 + $0x298] sm:$0xf]
        %v360 = vld [vmem:[%s181 + $0x29c] sm:$0xf]
        %v361 = vld [vmem:[%s181 + $0x2a0] sm:$0xf]
        %v362 = vld [vmem:[%s181 + $0x2a4] sm:$0xf]
        %v363 = vld [vmem:[%s181 + $0x2a8] sm:$0xf]
        %v364 = vld [vmem:[%s181 + $0x2ac] sm:$0xf]
        %v365 = vld [vmem:[%s181 + $0x2b0] sm:$0xf]
        %v366 = vld [vmem:[%s181 + $0x2b4] sm:$0xf]
        %v367 = vld [vmem:[%s181 + $0x2b8] sm:$0xf]
        %v368 = vld [vmem:[%s181 + $0x2bc] sm:$0xf]
        %v369 = vld [vmem:[%s181 + $0x2c0] sm:$0xf]
        %v370 = vld [vmem:[%s181 + $0x2c4] sm:$0xf]
        %v371 = vld [vmem:[%s181 + $0x2c8] sm:$0xf]
        %v372 = vld [vmem:[%s181 + $0x2cc] sm:$0xf]
        %v373 = vld [vmem:[%s181 + $0x2d0] sm:$0xf]
        %v374 = vld [vmem:[%s181 + $0x2d4] sm:$0xf]
        %v375 = vld [vmem:[%s181 + $0x2d8] sm:$0xf]
        %v376 = vld [vmem:[%s181 + $0x2dc] sm:$0xf]
        %v377 = vld [vmem:[%s181 + $0x2e0] sm:$0xf]
        %v378 = vld [vmem:[%s181 + $0x2e4] sm:$0xf]
        %v379 = vld [vmem:[%s181 + $0x2e8] sm:$0xf]
        %v380 = vld [vmem:[%s181 + $0x2ec] sm:$0xf]
        %v381 = vld [vmem:[%s181 + $0x2f0] sm:$0xf]
        %v382 = vld [vmem:[%s181 + $0x2f4] sm:$0xf]
        %v383 = vld [vmem:[%s181 + $0x2f8] sm:$0xf]
        %v384 = vld [vmem:[%s181 + $0x2fc] sm:$0xf]
        %v385 = vld [vmem:[%s181 + $0x300] sm:$0xf]
        %v386 = vld [vmem:[%s181 + $0x304] sm:$0xf]
        %v387 = vld [vmem:[%s181 + $0x308] sm:$0xf]
        %v388 = vld [vmem:[%s181 + $0x30c] sm:$0xf]
        %v389 = vld [vmem:[%s181 + $0x310] sm:$0xf]
        %v390 = vld [vmem:[%s181 + $0x314] sm:$0xf]
        %v391 = vld [vmem:[%s181 + $0x318] sm:$0xf]
        %v392 = vld [vmem:[%s181 + $0x31c] sm:$0xf]
        %v393 = vld [vmem:[%s181 + $0x320] sm:$0xf]
        %v394 = vld [vmem:[%s181 + $0x324] sm:$0xf]
        %v395 = vld [vmem:[%s181 + $0x328] sm:$0xf]
        %v396 = vld [vmem:[%s181 + $0x32c] sm:$0xf]
        %v397 = vld [vmem:[%s181 + $0x330] sm:$0xf]
        %v398 = vld [vmem:[%s181 + $0x334] sm:$0xf]
        %v399 = vld [vmem:[%s181 + $0x338] sm:$0xf]
        %v400 = vld [vmem:[%s181 + $0x33c] sm:$0xf]
        %v401 = vld [vmem:[%s181 + $0x340] sm:$0xf]
        %v402 = vld [vmem:[%s181 + $0x344] sm:$0xf]
        %v403 = vld [vmem:[%s181 + $0x348] sm:$0xf]
        %v404 = vld [vmem:[%s181 + $0x34c] sm:$0xf]
        %v405 = vld [vmem:[%s181 + $0x350] sm:$0xf]
        %v406 = vld [vmem:[%s181 + $0x354] sm:$0xf]
        %v407 = vld [vmem:[%s181 + $0x358] sm:$0xf]
        %v408 = vld [vmem:[%s181 + $0x35c] sm:$0xf]
        %v409 = vld [vmem:[%s181 + $0x360] sm:$0xf]
        %v410 = vld [vmem:[%s181 + $0x364] sm:$0xf]
        %v411 = vld [vmem:[%s181 + $0x368] sm:$0xf]
        %v412 = vld [vmem:[%s181 + $0x36c] sm:$0xf]
        %v413 = vld [vmem:[%s181 + $0x370] sm:$0xf]
        %v414 = vld [vmem:[%s181 + $0x374] sm:$0xf]
        %v415 = vld [vmem:[%s181 + $0x378] sm:$0xf]
        %v416 = vld [vmem:[%s181 + $0x37c] sm:$0xf]
        %v417 = vld [vmem:[%s181 + $0x380] sm:$0xf]
        %v418 = vld [vmem:[%s181 + $0x384] sm:$0xf]
        %v419 = vld [vmem:[%s181 + $0x388] sm:$0xf]
        %v420 = vld [vmem:[%s181 + $0x38c] sm:$0xf]
        %v421 = vld [vmem:[%s181 + $0x390] sm:$0xf]
        %v422 = vld [vmem:[%s181 + $0x394] sm:$0xf]
        %v423 = vld [vmem:[%s181 + $0x398] sm:$0xf]
        %v424 = vld [vmem:[%s181 + $0x39c] sm:$0xf]
        %v425 = vld [vmem:[%s181 + $0x3a0] sm:$0xf]
        %v426 = vld [vmem:[%s181 + $0x3a4] sm:$0xf]
        %v427 = vld [vmem:[%s181 + $0x3a8] sm:$0xf]
        %v428 = vld [vmem:[%s181 + $0x3ac] sm:$0xf]
        %v429 = vld [vmem:[%s181 + $0x3b0] sm:$0xf]
        %v430 = vld [vmem:[%s181 + $0x3b4] sm:$0xf]
        %v431 = vld [vmem:[%s181 + $0x3b8] sm:$0xf]
        %v432 = vld [vmem:[%s181 + $0x3bc] sm:$0xf]
        %v433 = vld [vmem:[%s181 + $0x3c0] sm:$0xf]
        %v434 = vld [vmem:[%s181 + $0x3c4] sm:$0xf]
        %v435 = vld [vmem:[%s181 + $0x3c8] sm:$0xf]
        %v436 = vld [vmem:[%s181 + $0x3cc] sm:$0xf]
        %v437 = vld [vmem:[%s181 + $0x3d0] sm:$0xf]
        %v438 = vld [vmem:[%s181 + $0x3d4] sm:$0xf]
        %v439 = vld [vmem:[%s181 + $0x3d8] sm:$0xf]
        %v440 = vld [vmem:[%s181 + $0x3dc] sm:$0xf]
        %v441 = vld [vmem:[%s181 + $0x3e0] sm:$0xf]
        %v442 = vld [vmem:[%s181 + $0x3e4] sm:$0xf]
        %v443 = vld [vmem:[%s181 + $0x3e8] sm:$0xf]
        %v444 = vld [vmem:[%s181 + $0x3ec] sm:$0xf]
        %v445 = vld [vmem:[%s181 + $0x3f0] sm:$0xf]
        %v446 = vld [vmem:[%s181 + $0x3f4] sm:$0xf]
        %v447 = vld [vmem:[%s181 + $0x3f8] sm:$0xf]
        %v448 = vld [vmem:[%s181 + $0x3fc] sm:$0xf]
        %v449 = vld [vmem:[%s181 + $0x400] sm:$0xf]
        %v450 = vld [vmem:[%s181 + $0x404] sm:$0xf]
        %v451 = vld [vmem:[%s181 + $0x408] sm:$0xf]
        %v452 = vld [vmem:[%s181 + $0x40c] sm:$0xf]
        %v453 = vld [vmem:[%s181 + $0x410] sm:$0xf]
        %v454 = vld [vmem:[%s181 + $0x414] sm:$0xf]
        %v455 = vld [vmem:[%s181 + $0x418] sm:$0xf]
        %v456 = vld [vmem:[%s181 + $0x41c] sm:$0xf]
        %v457 = vld [vmem:[%s181 + $0x420] sm:$0xf]
        %v458 = vld [vmem:[%s181 + $0x424] sm:$0xf]
        %v459 = vld [vmem:[%s181 + $0x428] sm:$0xf]
        %v460 = vld [vmem:[%s181 + $0x42c] sm:$0xf]
        %v461 = vld [vmem:[%s181 + $0x430] sm:$0xf]
        %v462 = vld [vmem:[%s181 + $0x434] sm:$0xf]
        %v463 = vld [vmem:[%s181 + $0x438] sm:$0xf]
        %v464 = vld [vmem:[%s181 + $0x43c] sm:$0xf]
        %v465 = vld [vmem:[%s181 + $0x440] sm:$0xf]
        %v466 = vld [vmem:[%s181 + $0x444] sm:$0xf]
        %v467 = vld [vmem:[%s181 + $0x448] sm:$0xf]
        %v468 = vld [vmem:[%s181 + $0x44c] sm:$0xf]
        %v469 = vld [vmem:[%s181 + $0x450] sm:$0xf]
        %v470 = vld [vmem:[%s181 + $0x454] sm:$0xf]
        %v471 = vld [vmem:[%s181 + $0x458] sm:$0xf]
        %v472 = vld [vmem:[%s181 + $0x45c] sm:$0xf]
        %v473 = vld [vmem:[%s181 + $0x460] sm:$0xf]
        %v474 = vld [vmem:[%s181 + $0x464] sm:$0xf]
        %v475 = vld [vmem:[%s181 + $0x468] sm:$0xf]
        %v476 = vld [vmem:[%s181 + $0x46c] sm:$0xf]
        %v477 = vld [vmem:[%s181 + $0x470] sm:$0xf]
        %v478 = vld [vmem:[%s181 + $0x474] sm:$0xf]
        %v479 = vld [vmem:[%s181 + $0x478] sm:$0xf]
        %v480 = vld [vmem:[%s181 + $0x47c] sm:$0xf]
        %v481 = vld [vmem:[%s181 + $0x480] sm:$0xf]
        %v482 = vld [vmem:[%s181 + $0x484] sm:$0xf]
        %v483 = vld [vmem:[%s181 + $0x488] sm:$0xf]
        %v484 = vld [vmem:[%s181 + $0x48c] sm:$0xf]
        %v485 = vld [vmem:[%s181 + $0x490] sm:$0xf]
        %v486 = vld [vmem:[%s181 + $0x494] sm:$0xf]
        %v487 = vld [vmem:[%s181 + $0x498] sm:$0xf]
        %v488 = vld [vmem:[%s181 + $0x49c] sm:$0xf]
        %v489 = vld [vmem:[%s181 + $0x4a0] sm:$0xf]
        %v490 = vld [vmem:[%s181 + $0x4a4] sm:$0xf]
        %v491 = vld [vmem:[%s181 + $0x4a8] sm:$0xf]
        %v492 = vld [vmem:[%s181 + $0x4ac] sm:$0xf]
        %v493 = vld [vmem:[%s181 + $0x4b0] sm:$0xf]
        %v494 = vld [vmem:[%s181 + $0x4b4] sm:$0xf]
        %v495 = vld [vmem:[%s181 + $0x4b8] sm:$0xf]
        %v496 = vld [vmem:[%s181 + $0x4bc] sm:$0xf]
        %v497 = vld [vmem:[%s181 + $0x4c0] sm:$0xf]
        %v498 = vld [vmem:[%s181 + $0x4c4] sm:$0xf]
        %v499 = vld [vmem:[%s181 + $0x4c8] sm:$0xf]
        %v500 = vld [vmem:[%s181 + $0x4cc] sm:$0xf]
        %v501 = vld [vmem:[%s181 + $0x4d0] sm:$0xf]
        %v502 = vld [vmem:[%s181 + $0x4d4] sm:$0xf]
        %v503 = vld [vmem:[%s181 + $0x4d8] sm:$0xf]
        %v504 = vld [vmem:[%s181 + $0x4dc] sm:$0xf]
        %v505 = vld [vmem:[%s181 + $0x4e0] sm:$0xf]
        %v506 = vld [vmem:[%s181 + $0x4e4] sm:$0xf]
        %v507 = vld [vmem:[%s181 + $0x4e8] sm:$0xf]
        %v508 = vld [vmem:[%s181 + $0x4ec] sm:$0xf]
        %v509 = vld [vmem:[%s181 + $0x4f0] sm:$0xf]
        %v510 = vld [vmem:[%s181 + $0x4f4] sm:$0xf]
        %v511 = vld [vmem:[%s181 + $0x4f8] sm:$0xf]
        %v512 = vld [vmem:[%s181 + $0x4fc] sm:$0xf]
        %v513 = vld [vmem:[%s181 + $0x500] sm:$0xf]
        %v514 = vld [vmem:[%s181 + $0x504] sm:$0xf]
        %v515 = vld [vmem:[%s181 + $0x508] sm:$0xf]
        %v516 = vld [vmem:[%s181 + $0x50c] sm:$0xf]
        %v517 = vld [vmem:[%s181 + $0x510] sm:$0xf]
        %v518 = vld [vmem:[%s181 + $0x514] sm:$0xf]
        %v519 = vld [vmem:[%s181 + $0x518] sm:$0xf]
        %v520 = vld [vmem:[%s181 + $0x51c] sm:$0xf]
        %v521 = vld [vmem:[%s181 + $0x520] sm:$0xf]
        %v522 = vld [vmem:[%s181 + $0x524] sm:$0xf]
        %v523 = vld [vmem:[%s181 + $0x528] sm:$0xf]
        %v524 = vld [vmem:[%s181 + $0x52c] sm:$0xf]
        %v525 = vld [vmem:[%s181 + $0x530] sm:$0xf]
        %v526 = vld [vmem:[%s181 + $0x534] sm:$0xf]
        %v527 = vld [vmem:[%s181 + $0x538] sm:$0xf]
        %v528 = vld [vmem:[%s181 + $0x53c] sm:$0xf]
        %v529 = vld [vmem:[%s181 + $0x540] sm:$0xf]
        %v530 = vld [vmem:[%s181 + $0x544] sm:$0xf]
        %v531 = vld [vmem:[%s181 + $0x548] sm:$0xf]
        %v532 = vld [vmem:[%s181 + $0x54c] sm:$0xf]
        %v533 = vld [vmem:[%s181 + $0x550] sm:$0xf]
        %v534 = vld [vmem:[%s181 + $0x554] sm:$0xf]
        %v535 = vld [vmem:[%s181 + $0x558] sm:$0xf]
        %v536 = vld [vmem:[%s181 + $0x55c] sm:$0xf]
        %v537 = vld [vmem:[%s181 + $0x560] sm:$0xf]
        %v538 = vld [vmem:[%s181 + $0x564] sm:$0xf]
        %v539 = vld [vmem:[%s181 + $0x568] sm:$0xf]
        %v540 = vld [vmem:[%s181 + $0x56c] sm:$0xf]
        %v541 = vld [vmem:[%s181 + $0x570] sm:$0xf]
        %v542 = vld [vmem:[%s181 + $0x574] sm:$0xf]
        %v543 = vld [vmem:[%s181 + $0x578] sm:$0xf]
        %v544 = vld [vmem:[%s181 + $0x57c] sm:$0xf]
        %v545 = vld [vmem:[%s181 + $0x580] sm:$0xf]
        %v546 = vld [vmem:[%s181 + $0x584] sm:$0xf]
        %v547 = vld [vmem:[%s181 + $0x588] sm:$0xf]
        %v548 = vld [vmem:[%s181 + $0x58c] sm:$0xf]
        %v549 = vld [vmem:[%s181 + $0x590] sm:$0xf]
        %v550 = vld [vmem:[%s181 + $0x594] sm:$0xf]
        %v551 = vld [vmem:[%s181 + $0x598] sm:$0xf]
        %v552 = vld [vmem:[%s181 + $0x59c] sm:$0xf]
        %v553 = vld [vmem:[%s181 + $0x5a0] sm:$0xf]
        %v554 = vld [vmem:[%s181 + $0x5a4] sm:$0xf]
        %v555 = vld [vmem:[%s181 + $0x5a8] sm:$0xf]
        %v556 = vld [vmem:[%s181 + $0x5ac] sm:$0xf]
        %v557 = vld [vmem:[%s181 + $0x5b0] sm:$0xf]
        %v558 = vld [vmem:[%s181 + $0x5b4] sm:$0xf]
        %v559 = vld [vmem:[%s181 + $0x5b8] sm:$0xf]
        %v560 = vld [vmem:[%s181 + $0x5bc] sm:$0xf]
        %v561 = vld [vmem:[%s181 + $0x5c0] sm:$0xf]
        %v562 = vld [vmem:[%s181 + $0x5c4] sm:$0xf]
        %v563 = vld [vmem:[%s181 + $0x5c8] sm:$0xf]
        %v564 = vld [vmem:[%s181 + $0x5cc] sm:$0xf]
        %v565 = vld [vmem:[%s181 + $0x5d0] sm:$0xf]
        %v566 = vld [vmem:[%s181 + $0x5d4] sm:$0xf]
        %v567 = vld [vmem:[%s181 + $0x5d8] sm:$0xf]
        %v568 = vld [vmem:[%s181 + $0x5dc] sm:$0xf]
        %v569 = vld [vmem:[%s181 + $0x5e0] sm:$0xf]
        %v570 = vld [vmem:[%s181 + $0x5e4] sm:$0xf]
        %v571 = vld [vmem:[%s181 + $0x5e8] sm:$0xf]
        %v572 = vld [vmem:[%s181 + $0x5ec] sm:$0xf]
        %v573 = vld [vmem:[%s181 + $0x5f0] sm:$0xf]
        %v574 = vld [vmem:[%s181 + $0x5f4] sm:$0xf]
        %v575 = vld [vmem:[%s181 + $0x5f8] sm:$0xf]
        %v576 = vld [vmem:[%s181 + $0x5fc] sm:$0xf]
        %v577 = vld [vmem:[%s181 + $0x600] sm:$0xf]
        %v578 = vld [vmem:[%s181 + $0x604] sm:$0xf]
        %v579 = vld [vmem:[%s181 + $0x608] sm:$0xf]
        %v580 = vld [vmem:[%s181 + $0x60c] sm:$0xf]
        %v581 = vld [vmem:[%s181 + $0x610] sm:$0xf]
        %v582 = vld [vmem:[%s181 + $0x614] sm:$0xf]
        %v583 = vld [vmem:[%s181 + $0x618] sm:$0xf]
        %v584 = vld [vmem:[%s181 + $0x61c] sm:$0xf]
        %v585 = vld [vmem:[%s181 + $0x620] sm:$0xf]
        %v586 = vld [vmem:[%s181 + $0x624] sm:$0xf]
        %v587 = vld [vmem:[%s181 + $0x628] sm:$0xf]
        %v588 = vld [vmem:[%s181 + $0x62c] sm:$0xf]
        %v589 = vld [vmem:[%s181 + $0x630] sm:$0xf]
        %v590 = vld [vmem:[%s181 + $0x634] sm:$0xf]
        %v591 = vld [vmem:[%s181 + $0x638] sm:$0xf]
        %v592 = vld [vmem:[%s181 + $0x63c] sm:$0xf]
        %v593 = vld [vmem:[%s181 + $0x640] sm:$0xf]
        %v594 = vld [vmem:[%s181 + $0x644] sm:$0xf]
        %v595 = vld [vmem:[%s181 + $0x648] sm:$0xf]
        %v596 = vld [vmem:[%s181 + $0x64c] sm:$0xf]
        %v597 = vld [vmem:[%s181 + $0x650] sm:$0xf]
        %v598 = vld [vmem:[%s181 + $0x654] sm:$0xf]
        %v599 = vld [vmem:[%s181 + $0x658] sm:$0xf]
        %v600 = vld [vmem:[%s181 + $0x65c] sm:$0xf]
        %v601 = vld [vmem:[%s181 + $0x660] sm:$0xf]
        %v602 = vld [vmem:[%s181 + $0x664] sm:$0xf]
        %v603 = vld [vmem:[%s181 + $0x668] sm:$0xf]
        %v604 = vld [vmem:[%s181 + $0x66c] sm:$0xf]
        %v605 = vld [vmem:[%s181 + $0x670] sm:$0xf]
        %v606 = vld [vmem:[%s181 + $0x674] sm:$0xf]
        %v607 = vld [vmem:[%s181 + $0x678] sm:$0xf]
        %v608 = vld [vmem:[%s181 + $0x67c] sm:$0xf]
        %v609 = vld [vmem:[%s181 + $0x680] sm:$0xf]
        %v610 = vld [vmem:[%s181 + $0x684] sm:$0xf]
        %v611 = vld [vmem:[%s181 + $0x688] sm:$0xf]
        %v612 = vld [vmem:[%s181 + $0x68c] sm:$0xf]
        %v613 = vld [vmem:[%s181 + $0x690] sm:$0xf]
        %v614 = vld [vmem:[%s181 + $0x694] sm:$0xf]
        %v615 = vld [vmem:[%s181 + $0x698] sm:$0xf]
        %v616 = vld [vmem:[%s181 + $0x69c] sm:$0xf]
        %v617 = vld [vmem:[%s181 + $0x6a0] sm:$0xf]
        %v618 = vld [vmem:[%s181 + $0x6a4] sm:$0xf]
        %v619 = vld [vmem:[%s181 + $0x6a8] sm:$0xf]
        %v620 = vld [vmem:[%s181 + $0x6ac] sm:$0xf]
        %v621 = vld [vmem:[%s181 + $0x6b0] sm:$0xf]
        %v622 = vld [vmem:[%s181 + $0x6b4] sm:$0xf]
        %v623 = vld [vmem:[%s181 + $0x6b8] sm:$0xf]
        %v624 = vld [vmem:[%s181 + $0x6bc] sm:$0xf]
        %v625 = vld [vmem:[%s181 + $0x6c0] sm:$0xf]
        %v626 = vld [vmem:[%s181 + $0x6c4] sm:$0xf]
        %v627 = vld [vmem:[%s181 + $0x6c8] sm:$0xf]
        %v628 = vld [vmem:[%s181 + $0x6cc] sm:$0xf]
        %v629 = vld [vmem:[%s181 + $0x6d0] sm:$0xf]
        %v630 = vld [vmem:[%s181 + $0x6d4] sm:$0xf]
        %v631 = vld [vmem:[%s181 + $0x6d8] sm:$0xf]
        %v632 = vld [vmem:[%s181 + $0x6dc] sm:$0xf]
        %v633 = vld [vmem:[%s181 + $0x6e0] sm:$0xf]
        %v634 = vld [vmem:[%s181 + $0x6e4] sm:$0xf]
        %v635 = vld [vmem:[%s181 + $0x6e8] sm:$0xf]
        %v636 = vld [vmem:[%s181 + $0x6ec] sm:$0xf]
        %v637 = vld [vmem:[%s181 + $0x6f0] sm:$0xf]
        %v638 = vld [vmem:[%s181 + $0x6f4] sm:$0xf]
        %v639 = vld [vmem:[%s181 + $0x6f8] sm:$0xf]
        %v640 = vld [vmem:[%s181 + $0x6fc] sm:$0xf]
        %v641 = vld [vmem:[%s181 + $0x700] sm:$0xf]
        %v642 = vld [vmem:[%s181 + $0x704] sm:$0xf]
        %v643 = vld [vmem:[%s181 + $0x708] sm:$0xf]
        %v644 = vld [vmem:[%s181 + $0x70c] sm:$0xf]
        %v645 = vld [vmem:[%s181 + $0x710] sm:$0xf]
        %v646 = vld [vmem:[%s181 + $0x714] sm:$0xf]
        %v647 = vld [vmem:[%s181 + $0x718] sm:$0xf]
        %v648 = vld [vmem:[%s181 + $0x71c] sm:$0xf]
        %v649 = vld [vmem:[%s181 + $0x720] sm:$0xf]
        %v650 = vld [vmem:[%s181 + $0x724] sm:$0xf]
        %v651 = vld [vmem:[%s181 + $0x728] sm:$0xf]
        %v652 = vld [vmem:[%s181 + $0x72c] sm:$0xf]
        %v653 = vld [vmem:[%s181 + $0x730] sm:$0xf]
        %v654 = vld [vmem:[%s181 + $0x734] sm:$0xf]
        %v655 = vld [vmem:[%s181 + $0x738] sm:$0xf]
        %v656 = vld [vmem:[%s181 + $0x73c] sm:$0xf]
        %v657 = vld [vmem:[%s181 + $0x740] sm:$0xf]
        %v658 = vld [vmem:[%s181 + $0x744] sm:$0xf]
        %v659 = vld [vmem:[%s181 + $0x748] sm:$0xf]
        %v660 = vld [vmem:[%s181 + $0x74c] sm:$0xf]
        %v661 = vld [vmem:[%s181 + $0x750] sm:$0xf]
        %v662 = vld [vmem:[%s181 + $0x754] sm:$0xf]
        %v663 = vld [vmem:[%s181 + $0x758] sm:$0xf]
        %v664 = vld [vmem:[%s181 + $0x75c] sm:$0xf]
        %v665 = vld [vmem:[%s181 + $0x760] sm:$0xf]
        %v666 = vld [vmem:[%s181 + $0x764] sm:$0xf]
        %v667 = vld [vmem:[%s181 + $0x768] sm:$0xf]
        %v668 = vld [vmem:[%s181 + $0x76c] sm:$0xf]
        %v669 = vld [vmem:[%s181 + $0x770] sm:$0xf]
        %v670 = vld [vmem:[%s181 + $0x774] sm:$0xf]
        %v671 = vld [vmem:[%s181 + $0x778] sm:$0xf]
        %v672 = vld [vmem:[%s181 + $0x77c] sm:$0xf]
        %v673 = vld [vmem:[%s181 + $0x780] sm:$0xf]
        %v674 = vld [vmem:[%s181 + $0x784] sm:$0xf]
        %v675 = vld [vmem:[%s181 + $0x788] sm:$0xf]
        %v676 = vld [vmem:[%s181 + $0x78c] sm:$0xf]
        %v677 = vld [vmem:[%s181 + $0x790] sm:$0xf]
        %v678 = vld [vmem:[%s181 + $0x794] sm:$0xf]
        %v679 = vld [vmem:[%s181 + $0x798] sm:$0xf]
        %v680 = vld [vmem:[%s181 + $0x79c] sm:$0xf]
        %v681 = vld [vmem:[%s181 + $0x7a0] sm:$0xf]
        %v682 = vld [vmem:[%s181 + $0x7a4] sm:$0xf]
        %v683 = vld [vmem:[%s181 + $0x7a8] sm:$0xf]
        %v684 = vld [vmem:[%s181 + $0x7ac] sm:$0xf]
        %v685 = vld [vmem:[%s181 + $0x7b0] sm:$0xf]
        %v686 = vld [vmem:[%s181 + $0x7b4] sm:$0xf]
        %v687 = vld [vmem:[%s181 + $0x7b8] sm:$0xf]
        %v688 = vld [vmem:[%s181 + $0x7bc] sm:$0xf]
        %v689 = vld [vmem:[%s181 + $0x7c0] sm:$0xf]
        %v690 = vld [vmem:[%s181 + $0x7c4] sm:$0xf]
        %v691 = vld [vmem:[%s181 + $0x7c8] sm:$0xf]
        %v692 = vld [vmem:[%s181 + $0x7cc] sm:$0xf]
        %v693 = vld [vmem:[%s181 + $0x7d0] sm:$0xf]
        %v694 = vld [vmem:[%s181 + $0x7d4] sm:$0xf]
        %v695 = vld [vmem:[%s181 + $0x7d8] sm:$0xf]
        %v696 = vld [vmem:[%s181 + $0x7dc] sm:$0xf]
        %v697 = vld [vmem:[%s181 + $0x7e0] sm:$0xf]
        %v698 = vld [vmem:[%s181 + $0x7e4] sm:$0xf]
        %v699 = vld [vmem:[%s181 + $0x7e8] sm:$0xf]
        %v700 = vld [vmem:[%s181 + $0x7ec] sm:$0xf]
        %v701 = vld [vmem:[%s181 + $0x7f0] sm:$0xf]
        %v702 = vld [vmem:[%s181 + $0x7f4] sm:$0xf]
        %v703 = vld [vmem:[%s181 + $0x7f8] sm:$0xf]
        %v704 = vld [vmem:[%s181 + $0x7fc] sm:$0xf]
        %v705 = vld [vmem:[%s1] sm:$0xf]
        %v706 = vld [vmem:[%s1 + $0x4] sm:$0xf]
        %v707 = vld [vmem:[%s1 + $0x8] sm:$0xf]
        %v708 = vld [vmem:[%s1 + $0xc] sm:$0x3]
        %v709 = vld [vmem:[%s2] sm:$0x1]
        %v711 = vlaneseq
        %v712 = vshrl.u32 %v711, 7
        %v713 = vsub.s32 0, %v712
        %v714 = vrot.slane %v709, %v713
        %v1228 = vunpack.c.l.b16 %v193
        %v1229 = vunpack.c.l.b16 %v194
        %v1230 = vunpack.c.l.b16 %v195
        %v1231 = vunpack.c.l.b16 %v196
        %v1232 = vunpack.c.l.b16 %v197
        %v1233 = vunpack.c.l.b16 %v198
        %v1234 = vunpack.c.l.b16 %v199
        %v1235 = vunpack.c.l.b16 %v200
        %v1236 = vunpack.c.l.b16 %v201
        %v1237 = vunpack.c.l.b16 %v202
        %v1238 = vunpack.c.l.b16 %v203
        %v1239 = vunpack.c.l.b16 %v204
        %v1240 = vunpack.c.l.b16 %v205
        %v1241 = vunpack.c.l.b16 %v206
        %v1242 = vunpack.c.l.b16 %v207
        %v1243 = vunpack.c.l.b16 %v208
        %v1244 = vunpack.c.l.b16 %v209
        %v1245 = vunpack.c.l.b16 %v210
        %v1246 = vunpack.c.l.b16 %v211
        %v1247 = vunpack.c.l.b16 %v212
        %v1248 = vunpack.c.l.b16 %v213
        %v1249 = vunpack.c.l.b16 %v214
        %v1250 = vunpack.c.l.b16 %v215
        %v1251 = vunpack.c.l.b16 %v216
        %v1252 = vunpack.c.l.b16 %v217
        %v1253 = vunpack.c.l.b16 %v218
        %v1254 = vunpack.c.l.b16 %v219
        %v1255 = vunpack.c.l.b16 %v220
        %v1256 = vunpack.c.l.b16 %v221
        %v1257 = vunpack.c.l.b16 %v222
        %v1258 = vunpack.c.l.b16 %v223
        %v1259 = vunpack.c.l.b16 %v224
        %v1260 = vunpack.c.l.b16 %v225
        %v1261 = vunpack.c.l.b16 %v226
        %v1262 = vunpack.c.l.b16 %v227
        %v1263 = vunpack.c.l.b16 %v228
        %v1264 = vunpack.c.l.b16 %v229
        %v1265 = vunpack.c.l.b16 %v230
        %v1266 = vunpack.c.l.b16 %v231
        %v1267 = vunpack.c.l.b16 %v232
        %v1268 = vunpack.c.l.b16 %v233
        %v1269 = vunpack.c.l.b16 %v234
        %v1270 = vunpack.c.l.b16 %v235
        %v1271 = vunpack.c.l.b16 %v236
        %v1272 = vunpack.c.l.b16 %v237
        %v1273 = vunpack.c.l.b16 %v238
        %v1274 = vunpack.c.l.b16 %v239
        %v1275 = vunpack.c.l.b16 %v240
        %v1276 = vunpack.c.l.b16 %v241
        %v1277 = vunpack.c.l.b16 %v242
        %v1278 = vunpack.c.l.b16 %v243
        %v1279 = vunpack.c.l.b16 %v244
        %v1280 = vunpack.c.l.b16 %v245
        %v1281 = vunpack.c.l.b16 %v246
        %v1282 = vunpack.c.l.b16 %v247
        %v1283 = vunpack.c.l.b16 %v248
        %v1284 = vunpack.c.l.b16 %v249
        %v1285 = vunpack.c.l.b16 %v250
        %v1286 = vunpack.c.l.b16 %v251
        %v1287 = vunpack.c.l.b16 %v252
        %v1288 = vunpack.c.l.b16 %v253
        %v1289 = vunpack.c.l.b16 %v254
        %v1290 = vunpack.c.l.b16 %v255
        %v1291 = vunpack.c.l.b16 %v256
        %v1292 = vunpack.c.l.b16 %v257
        %v1293 = vunpack.c.l.b16 %v258
        %v1294 = vunpack.c.l.b16 %v259
        %v1295 = vunpack.c.l.b16 %v260
        %v1296 = vunpack.c.l.b16 %v261
        %v1297 = vunpack.c.l.b16 %v262
        %v1298 = vunpack.c.l.b16 %v263
        %v1299 = vunpack.c.l.b16 %v264
        %v1300 = vunpack.c.l.b16 %v265
        %v1301 = vunpack.c.l.b16 %v266
        %v1302 = vunpack.c.l.b16 %v267
        %v1303 = vunpack.c.l.b16 %v268
        %v1304 = vunpack.c.l.b16 %v269
        %v1305 = vunpack.c.l.b16 %v270
        %v1306 = vunpack.c.l.b16 %v271
        %v1307 = vunpack.c.l.b16 %v272
        %v1308 = vunpack.c.l.b16 %v273
        %v1309 = vunpack.c.l.b16 %v274
        %v1310 = vunpack.c.l.b16 %v275
        %v1311 = vunpack.c.l.b16 %v276
        %v1312 = vunpack.c.l.b16 %v277
        %v1313 = vunpack.c.l.b16 %v278
        %v1314 = vunpack.c.l.b16 %v279
        %v1315 = vunpack.c.l.b16 %v280
        %v1316 = vunpack.c.l.b16 %v281
        %v1317 = vunpack.c.l.b16 %v282
        %v1318 = vunpack.c.l.b16 %v283
        %v1319 = vunpack.c.l.b16 %v284
        %v1320 = vunpack.c.l.b16 %v285
        %v1321 = vunpack.c.l.b16 %v286
        %v1322 = vunpack.c.l.b16 %v287
        %v1323 = vunpack.c.l.b16 %v288
        %v1324 = vunpack.c.l.b16 %v289
        %v1325 = vunpack.c.l.b16 %v290
        %v1326 = vunpack.c.l.b16 %v291
        %v1327 = vunpack.c.l.b16 %v292
        %v1328 = vunpack.c.l.b16 %v293
        %v1329 = vunpack.c.l.b16 %v294
        %v1330 = vunpack.c.l.b16 %v295
        %v1331 = vunpack.c.l.b16 %v296
        %v1332 = vunpack.c.l.b16 %v297
        %v1333 = vunpack.c.l.b16 %v298
        %v1334 = vunpack.c.l.b16 %v299
        %v1335 = vunpack.c.l.b16 %v300
        %v1336 = vunpack.c.l.b16 %v301
        %v1337 = vunpack.c.l.b16 %v302
        %v1338 = vunpack.c.l.b16 %v303
        %v1339 = vunpack.c.l.b16 %v304
        %v1340 = vunpack.c.l.b16 %v305
        %v1341 = vunpack.c.l.b16 %v306
        %v1342 = vunpack.c.l.b16 %v307
        %v1343 = vunpack.c.l.b16 %v308
        %v1344 = vunpack.c.l.b16 %v309
        %v1345 = vunpack.c.l.b16 %v310
        %v1346 = vunpack.c.l.b16 %v311
        %v1347 = vunpack.c.l.b16 %v312
        %v1348 = vunpack.c.l.b16 %v313
        %v1349 = vunpack.c.l.b16 %v314
        %v1350 = vunpack.c.l.b16 %v315
        %v1351 = vunpack.c.l.b16 %v316
        %v1352 = vunpack.c.l.b16 %v317
        %v1353 = vunpack.c.l.b16 %v318
        %v1354 = vunpack.c.l.b16 %v319
        %v1355 = vunpack.c.l.b16 %v320
        %v1356 = vunpack.c.l.b16 %v321
        %v1357 = vunpack.c.l.b16 %v322
        %v1358 = vunpack.c.l.b16 %v323
        %v1359 = vunpack.c.l.b16 %v324
        %v1360 = vunpack.c.l.b16 %v325
        %v1361 = vunpack.c.l.b16 %v326
        %v1362 = vunpack.c.l.b16 %v327
        %v1363 = vunpack.c.l.b16 %v328
        %v1364 = vunpack.c.l.b16 %v329
        %v1365 = vunpack.c.l.b16 %v330
        %v1366 = vunpack.c.l.b16 %v331
        %v1367 = vunpack.c.l.b16 %v332
        %v1368 = vunpack.c.l.b16 %v333
        %v1369 = vunpack.c.l.b16 %v334
        %v1370 = vunpack.c.l.b16 %v335
        %v1371 = vunpack.c.l.b16 %v336
        %v1372 = vunpack.c.l.b16 %v337
        %v1373 = vunpack.c.l.b16 %v338
        %v1374 = vunpack.c.l.b16 %v339
        %v1375 = vunpack.c.l.b16 %v340
        %v1376 = vunpack.c.l.b16 %v341
        %v1377 = vunpack.c.l.b16 %v342
        %v1378 = vunpack.c.l.b16 %v343
        %v1379 = vunpack.c.l.b16 %v344
        %v1380 = vunpack.c.l.b16 %v345
        %v1381 = vunpack.c.l.b16 %v346
        %v1382 = vunpack.c.l.b16 %v347
        %v1383 = vunpack.c.l.b16 %v348
        %v1384 = vunpack.c.l.b16 %v349
        %v1385 = vunpack.c.l.b16 %v350
        %v1386 = vunpack.c.l.b16 %v351
        %v1387 = vunpack.c.l.b16 %v352
        %v1388 = vunpack.c.l.b16 %v353
        %v1389 = vunpack.c.l.b16 %v354
        %v1390 = vunpack.c.l.b16 %v355
        %v1391 = vunpack.c.l.b16 %v356
        %v1392 = vunpack.c.l.b16 %v357
        %v1393 = vunpack.c.l.b16 %v358
        %v1394 = vunpack.c.l.b16 %v359
        %v1395 = vunpack.c.l.b16 %v360
        %v1396 = vunpack.c.l.b16 %v361
        %v1397 = vunpack.c.l.b16 %v362
        %v1398 = vunpack.c.l.b16 %v363
        %v1399 = vunpack.c.l.b16 %v364
        %v1400 = vunpack.c.l.b16 %v365
        %v1401 = vunpack.c.l.b16 %v366
        %v1402 = vunpack.c.l.b16 %v367
        %v1403 = vunpack.c.l.b16 %v368
        %v1404 = vunpack.c.l.b16 %v369
        %v1405 = vunpack.c.l.b16 %v370
        %v1406 = vunpack.c.l.b16 %v371
        %v1407 = vunpack.c.l.b16 %v372
        %v1408 = vunpack.c.l.b16 %v373
        %v1409 = vunpack.c.l.b16 %v374
        %v1410 = vunpack.c.l.b16 %v375
        %v1411 = vunpack.c.l.b16 %v376
        %v1412 = vunpack.c.l.b16 %v377
        %v1413 = vunpack.c.l.b16 %v378
        %v1414 = vunpack.c.l.b16 %v379
        %v1415 = vunpack.c.l.b16 %v380
        %v1416 = vunpack.c.l.b16 %v381
        %v1417 = vunpack.c.l.b16 %v382
        %v1418 = vunpack.c.l.b16 %v383
        %v1419 = vunpack.c.l.b16 %v384
        %v1420 = vunpack.c.l.b16 %v385
        %v1421 = vunpack.c.l.b16 %v386
        %v1422 = vunpack.c.l.b16 %v387
        %v1423 = vunpack.c.l.b16 %v388
        %v1424 = vunpack.c.l.b16 %v389
        %v1425 = vunpack.c.l.b16 %v390
        %v1426 = vunpack.c.l.b16 %v391
        %v1427 = vunpack.c.l.b16 %v392
        %v1428 = vunpack.c.l.b16 %v393
        %v1429 = vunpack.c.l.b16 %v394
        %v1430 = vunpack.c.l.b16 %v395
        %v1431 = vunpack.c.l.b16 %v396
        %v1432 = vunpack.c.l.b16 %v397
        %v1433 = vunpack.c.l.b16 %v398
        %v1434 = vunpack.c.l.b16 %v399
        %v1435 = vunpack.c.l.b16 %v400
        %v1436 = vunpack.c.l.b16 %v401
        %v1437 = vunpack.c.l.b16 %v402
        %v1438 = vunpack.c.l.b16 %v403
        %v1439 = vunpack.c.l.b16 %v404
        %v1440 = vunpack.c.l.b16 %v405
        %v1441 = vunpack.c.l.b16 %v406
        %v1442 = vunpack.c.l.b16 %v407
        %v1443 = vunpack.c.l.b16 %v408
        %v1444 = vunpack.c.l.b16 %v409
        %v1445 = vunpack.c.l.b16 %v410
        %v1446 = vunpack.c.l.b16 %v411
        %v1447 = vunpack.c.l.b16 %v412
        %v1448 = vunpack.c.l.b16 %v413
        %v1449 = vunpack.c.l.b16 %v414
        %v1450 = vunpack.c.l.b16 %v415
        %v1451 = vunpack.c.l.b16 %v416
        %v1452 = vunpack.c.l.b16 %v417
        %v1453 = vunpack.c.l.b16 %v418
        %v1454 = vunpack.c.l.b16 %v419
        %v1455 = vunpack.c.l.b16 %v420
        %v1456 = vunpack.c.l.b16 %v421
        %v1457 = vunpack.c.l.b16 %v422
        %v1458 = vunpack.c.l.b16 %v423
        %v1459 = vunpack.c.l.b16 %v424
        %v1460 = vunpack.c.l.b16 %v425
        %v1461 = vunpack.c.l.b16 %v426
        %v1462 = vunpack.c.l.b16 %v427
        %v1463 = vunpack.c.l.b16 %v428
        %v1464 = vunpack.c.l.b16 %v429
        %v1465 = vunpack.c.l.b16 %v430
        %v1466 = vunpack.c.l.b16 %v431
        %v1467 = vunpack.c.l.b16 %v432
        %v1468 = vunpack.c.l.b16 %v433
        %v1469 = vunpack.c.l.b16 %v434
        %v1470 = vunpack.c.l.b16 %v435
        %v1471 = vunpack.c.l.b16 %v436
        %v1472 = vunpack.c.l.b16 %v437
        %v1473 = vunpack.c.l.b16 %v438
        %v1474 = vunpack.c.l.b16 %v439
        %v1475 = vunpack.c.l.b16 %v440
        %v1476 = vunpack.c.l.b16 %v441
        %v1477 = vunpack.c.l.b16 %v442
        %v1478 = vunpack.c.l.b16 %v443
        %v1479 = vunpack.c.l.b16 %v444
        %v1480 = vunpack.c.l.b16 %v445
        %v1481 = vunpack.c.l.b16 %v446
        %v1482 = vunpack.c.l.b16 %v447
        %v1483 = vunpack.c.l.b16 %v448
        %v1484 = vunpack.c.l.b16 %v449
        %v1485 = vunpack.c.l.b16 %v450
        %v1486 = vunpack.c.l.b16 %v451
        %v1487 = vunpack.c.l.b16 %v452
        %v1488 = vunpack.c.l.b16 %v453
        %v1489 = vunpack.c.l.b16 %v454
        %v1490 = vunpack.c.l.b16 %v455
        %v1491 = vunpack.c.l.b16 %v456
        %v1492 = vunpack.c.l.b16 %v457
        %v1493 = vunpack.c.l.b16 %v458
        %v1494 = vunpack.c.l.b16 %v459
        %v1495 = vunpack.c.l.b16 %v460
        %v1496 = vunpack.c.l.b16 %v461
        %v1497 = vunpack.c.l.b16 %v462
        %v1498 = vunpack.c.l.b16 %v463
        %v1499 = vunpack.c.l.b16 %v464
        %v1500 = vunpack.c.l.b16 %v465
        %v1501 = vunpack.c.l.b16 %v466
        %v1502 = vunpack.c.l.b16 %v467
        %v1503 = vunpack.c.l.b16 %v468
        %v1504 = vunpack.c.l.b16 %v469
        %v1505 = vunpack.c.l.b16 %v470
        %v1506 = vunpack.c.l.b16 %v471
        %v1507 = vunpack.c.l.b16 %v472
        %v1508 = vunpack.c.l.b16 %v473
        %v1509 = vunpack.c.l.b16 %v474
        %v1510 = vunpack.c.l.b16 %v475
        %v1511 = vunpack.c.l.b16 %v476
        %v1512 = vunpack.c.l.b16 %v477
        %v1513 = vunpack.c.l.b16 %v478
        %v1514 = vunpack.c.l.b16 %v479
        %v1515 = vunpack.c.l.b16 %v480
        %v1516 = vunpack.c.l.b16 %v481
        %v1517 = vunpack.c.l.b16 %v482
        %v1518 = vunpack.c.l.b16 %v483
        %v1519 = vunpack.c.l.b16 %v484
        %v1520 = vunpack.c.l.b16 %v485
        %v1521 = vunpack.c.l.b16 %v486
        %v1522 = vunpack.c.l.b16 %v487
        %v1523 = vunpack.c.l.b16 %v488
        %v1524 = vunpack.c.l.b16 %v489
        %v1525 = vunpack.c.l.b16 %v490
        %v1526 = vunpack.c.l.b16 %v491
        %v1527 = vunpack.c.l.b16 %v492
        %v1528 = vunpack.c.l.b16 %v493
        %v1529 = vunpack.c.l.b16 %v494
        %v1530 = vunpack.c.l.b16 %v495
        %v1531 = vunpack.c.l.b16 %v496
        %v1532 = vunpack.c.l.b16 %v497
        %v1533 = vunpack.c.l.b16 %v498
        %v1534 = vunpack.c.l.b16 %v499
        %v1535 = vunpack.c.l.b16 %v500
        %v1536 = vunpack.c.l.b16 %v501
        %v1537 = vunpack.c.l.b16 %v502
        %v1538 = vunpack.c.l.b16 %v503
        %v1539 = vunpack.c.l.b16 %v504
        %v1540 = vunpack.c.l.b16 %v505
        %v1541 = vunpack.c.l.b16 %v506
        %v1542 = vunpack.c.l.b16 %v507
        %v1543 = vunpack.c.l.b16 %v508
        %v1544 = vunpack.c.l.b16 %v509
        %v1545 = vunpack.c.l.b16 %v510
        %v1546 = vunpack.c.l.b16 %v511
        %v1547 = vunpack.c.l.b16 %v512
        %v1548 = vunpack.c.l.b16 %v513
        %v1549 = vunpack.c.l.b16 %v514
        %v1550 = vunpack.c.l.b16 %v515
        %v1551 = vunpack.c.l.b16 %v516
        %v1552 = vunpack.c.l.b16 %v517
        %v1553 = vunpack.c.l.b16 %v518
        %v1554 = vunpack.c.l.b16 %v519
        %v1555 = vunpack.c.l.b16 %v520
        %v1556 = vunpack.c.l.b16 %v521
        %v1557 = vunpack.c.l.b16 %v522
        %v1558 = vunpack.c.l.b16 %v523
        %v1559 = vunpack.c.l.b16 %v524
        %v1560 = vunpack.c.l.b16 %v525
        %v1561 = vunpack.c.l.b16 %v526
        %v1562 = vunpack.c.l.b16 %v527
        %v1563 = vunpack.c.l.b16 %v528
        %v1564 = vunpack.c.l.b16 %v529
        %v1565 = vunpack.c.l.b16 %v530
        %v1566 = vunpack.c.l.b16 %v531
        %v1567 = vunpack.c.l.b16 %v532
        %v1568 = vunpack.c.l.b16 %v533
        %v1569 = vunpack.c.l.b16 %v534
        %v1570 = vunpack.c.l.b16 %v535
        %v1571 = vunpack.c.l.b16 %v536
        %v1572 = vunpack.c.l.b16 %v537
        %v1573 = vunpack.c.l.b16 %v538
        %v1574 = vunpack.c.l.b16 %v539
        %v1575 = vunpack.c.l.b16 %v540
        %v1576 = vunpack.c.l.b16 %v541
        %v1577 = vunpack.c.l.b16 %v542
        %v1578 = vunpack.c.l.b16 %v543
        %v1579 = vunpack.c.l.b16 %v544
        %v1580 = vunpack.c.l.b16 %v545
        %v1581 = vunpack.c.l.b16 %v546
        %v1582 = vunpack.c.l.b16 %v547
        %v1583 = vunpack.c.l.b16 %v548
        %v1584 = vunpack.c.l.b16 %v549
        %v1585 = vunpack.c.l.b16 %v550
        %v1586 = vunpack.c.l.b16 %v551
        %v1587 = vunpack.c.l.b16 %v552
        %v1588 = vunpack.c.l.b16 %v553
        %v1589 = vunpack.c.l.b16 %v554
        %v1590 = vunpack.c.l.b16 %v555
        %v1591 = vunpack.c.l.b16 %v556
        %v1592 = vunpack.c.l.b16 %v557
        %v1593 = vunpack.c.l.b16 %v558
        %v1594 = vunpack.c.l.b16 %v559
        %v1595 = vunpack.c.l.b16 %v560
        %v1596 = vunpack.c.l.b16 %v561
        %v1597 = vunpack.c.l.b16 %v562
        %v1598 = vunpack.c.l.b16 %v563
        %v1599 = vunpack.c.l.b16 %v564
        %v1600 = vunpack.c.l.b16 %v565
        %v1601 = vunpack.c.l.b16 %v566
        %v1602 = vunpack.c.l.b16 %v567
        %v1603 = vunpack.c.l.b16 %v568
        %v1604 = vunpack.c.l.b16 %v569
        %v1605 = vunpack.c.l.b16 %v570
        %v1606 = vunpack.c.l.b16 %v571
        %v1607 = vunpack.c.l.b16 %v572
        %v1608 = vunpack.c.l.b16 %v573
        %v1609 = vunpack.c.l.b16 %v574
        %v1610 = vunpack.c.l.b16 %v575
        %v1611 = vunpack.c.l.b16 %v576
        %v1612 = vunpack.c.l.b16 %v577
        %v1613 = vunpack.c.l.b16 %v578
        %v1614 = vunpack.c.l.b16 %v579
        %v1615 = vunpack.c.l.b16 %v580
        %v1616 = vunpack.c.l.b16 %v581
        %v1617 = vunpack.c.l.b16 %v582
        %v1618 = vunpack.c.l.b16 %v583
        %v1619 = vunpack.c.l.b16 %v584
        %v1620 = vunpack.c.l.b16 %v585
        %v1621 = vunpack.c.l.b16 %v586
        %v1622 = vunpack.c.l.b16 %v587
        %v1623 = vunpack.c.l.b16 %v588
        %v1624 = vunpack.c.l.b16 %v589
        %v1625 = vunpack.c.l.b16 %v590
        %v1626 = vunpack.c.l.b16 %v591
        %v1627 = vunpack.c.l.b16 %v592
        %v1628 = vunpack.c.l.b16 %v593
        %v1629 = vunpack.c.l.b16 %v594
        %v1630 = vunpack.c.l.b16 %v595
        %v1631 = vunpack.c.l.b16 %v596
        %v1632 = vunpack.c.l.b16 %v597
        %v1633 = vunpack.c.l.b16 %v598
        %v1634 = vunpack.c.l.b16 %v599
        %v1635 = vunpack.c.l.b16 %v600
        %v1636 = vunpack.c.l.b16 %v601
        %v1637 = vunpack.c.l.b16 %v602
        %v1638 = vunpack.c.l.b16 %v603
        %v1639 = vunpack.c.l.b16 %v604
        %v1640 = vunpack.c.l.b16 %v605
        %v1641 = vunpack.c.l.b16 %v606
        %v1642 = vunpack.c.l.b16 %v607
        %v1643 = vunpack.c.l.b16 %v608
        %v1644 = vunpack.c.l.b16 %v609
        %v1645 = vunpack.c.l.b16 %v610
        %v1646 = vunpack.c.l.b16 %v611
        %v1647 = vunpack.c.l.b16 %v612
        %v1648 = vunpack.c.l.b16 %v613
        %v1649 = vunpack.c.l.b16 %v614
        %v1650 = vunpack.c.l.b16 %v615
        %v1651 = vunpack.c.l.b16 %v616
        %v1652 = vunpack.c.l.b16 %v617
        %v1653 = vunpack.c.l.b16 %v618
        %v1654 = vunpack.c.l.b16 %v619
        %v1655 = vunpack.c.l.b16 %v620
        %v1656 = vunpack.c.l.b16 %v621
        %v1657 = vunpack.c.l.b16 %v622
        %v1658 = vunpack.c.l.b16 %v623
        %v1659 = vunpack.c.l.b16 %v624
        %v1660 = vunpack.c.l.b16 %v625
        %v1661 = vunpack.c.l.b16 %v626
        %v1662 = vunpack.c.l.b16 %v627
        %v1663 = vunpack.c.l.b16 %v628
        %v1664 = vunpack.c.l.b16 %v629
        %v1665 = vunpack.c.l.b16 %v630
        %v1666 = vunpack.c.l.b16 %v631
        %v1667 = vunpack.c.l.b16 %v632
        %v1668 = vunpack.c.l.b16 %v633
        %v1669 = vunpack.c.l.b16 %v634
        %v1670 = vunpack.c.l.b16 %v635
        %v1671 = vunpack.c.l.b16 %v636
        %v1672 = vunpack.c.l.b16 %v637
        %v1673 = vunpack.c.l.b16 %v638
        %v1674 = vunpack.c.l.b16 %v639
        %v1675 = vunpack.c.l.b16 %v640
        %v1676 = vunpack.c.l.b16 %v641
        %v1677 = vunpack.c.l.b16 %v642
        %v1678 = vunpack.c.l.b16 %v643
        %v1679 = vunpack.c.l.b16 %v644
        %v1680 = vunpack.c.l.b16 %v645
        %v1681 = vunpack.c.l.b16 %v646
        %v1682 = vunpack.c.l.b16 %v647
        %v1683 = vunpack.c.l.b16 %v648
        %v1684 = vunpack.c.l.b16 %v649
        %v1685 = vunpack.c.l.b16 %v650
        %v1686 = vunpack.c.l.b16 %v651
        %v1687 = vunpack.c.l.b16 %v652
        %v1688 = vunpack.c.l.b16 %v653
        %v1689 = vunpack.c.l.b16 %v654
        %v1690 = vunpack.c.l.b16 %v655
        %v1691 = vunpack.c.l.b16 %v656
        %v1692 = vunpack.c.l.b16 %v657
        %v1693 = vunpack.c.l.b16 %v658
        %v1694 = vunpack.c.l.b16 %v659
        %v1695 = vunpack.c.l.b16 %v660
        %v1696 = vunpack.c.l.b16 %v661
        %v1697 = vunpack.c.l.b16 %v662
        %v1698 = vunpack.c.l.b16 %v663
        %v1699 = vunpack.c.l.b16 %v664
        %v1700 = vunpack.c.l.b16 %v665
        %v1701 = vunpack.c.l.b16 %v666
        %v1702 = vunpack.c.l.b16 %v667
        %v1703 = vunpack.c.l.b16 %v668
        %v1704 = vunpack.c.l.b16 %v669
        %v1705 = vunpack.c.l.b16 %v670
        %v1706 = vunpack.c.l.b16 %v671
        %v1707 = vunpack.c.l.b16 %v672
        %v1708 = vunpack.c.l.b16 %v673
        %v1709 = vunpack.c.l.b16 %v674
        %v1710 = vunpack.c.l.b16 %v675
        %v1711 = vunpack.c.l.b16 %v676
        %v1712 = vunpack.c.l.b16 %v677
        %v1713 = vunpack.c.l.b16 %v678
        %v1714 = vunpack.c.l.b16 %v679
        %v1715 = vunpack.c.l.b16 %v680
        %v1716 = vunpack.c.l.b16 %v681
        %v1717 = vunpack.c.l.b16 %v682
        %v1718 = vunpack.c.l.b16 %v683
        %v1719 = vunpack.c.l.b16 %v684
        %v1720 = vunpack.c.l.b16 %v685
        %v1721 = vunpack.c.l.b16 %v686
        %v1722 = vunpack.c.l.b16 %v687
        %v1723 = vunpack.c.l.b16 %v688
        %v1724 = vunpack.c.l.b16 %v689
        %v1725 = vunpack.c.l.b16 %v690
        %v1726 = vunpack.c.l.b16 %v691
        %v1727 = vunpack.c.l.b16 %v692
        %v1728 = vunpack.c.l.b16 %v693
        %v1729 = vunpack.c.l.b16 %v694
        %v1730 = vunpack.c.l.b16 %v695
        %v1731 = vunpack.c.l.b16 %v696
        %v1732 = vunpack.c.l.b16 %v697
        %v1733 = vunpack.c.l.b16 %v698
        %v1734 = vunpack.c.l.b16 %v699
        %v1735 = vunpack.c.l.b16 %v700
        %v1736 = vunpack.c.l.b16 %v701
        %v1737 = vunpack.c.l.b16 %v702
        %v1738 = vunpack.c.l.b16 %v703
        %v1739 = vunpack.c.l.b16 %v704
        %v1740 = vpack.c.b16 %v1229, %v1228
        %v1741 = vpack.c.b16 %v1231, %v1230
        %v1742 = vpack.c.b16 %v1233, %v1232
        %v1743 = vpack.c.b16 %v1235, %v1234
        %v1744 = vpack.c.b16 %v1237, %v1236
        %v1745 = vpack.c.b16 %v1239, %v1238
        %v1746 = vpack.c.b16 %v1241, %v1240
        %v1747 = vpack.c.b16 %v1243, %v1242
        %v1748 = vpack.c.b16 %v1245, %v1244
        %v1749 = vpack.c.b16 %v1247, %v1246
        %v1750 = vpack.c.b16 %v1249, %v1248
        %v1751 = vpack.c.b16 %v1251, %v1250
        %v1752 = vpack.c.b16 %v1253, %v1252
        %v1753 = vpack.c.b16 %v1255, %v1254
        %v1754 = vpack.c.b16 %v1257, %v1256
        %v1755 = vpack.c.b16 %v1259, %v1258
        %v1756 = vpack.c.b16 %v1261, %v1260
        %v1757 = vpack.c.b16 %v1263, %v1262
        %v1758 = vpack.c.b16 %v1265, %v1264
        %v1759 = vpack.c.b16 %v1267, %v1266
        %v1760 = vpack.c.b16 %v1269, %v1268
        %v1761 = vpack.c.b16 %v1271, %v1270
        %v1762 = vpack.c.b16 %v1273, %v1272
        %v1763 = vpack.c.b16 %v1275, %v1274
        %v1764 = vpack.c.b16 %v1277, %v1276
        %v1765 = vpack.c.b16 %v1279, %v1278
        %v1766 = vpack.c.b16 %v1281, %v1280
        %v1767 = vpack.c.b16 %v1283, %v1282
        %v1768 = vpack.c.b16 %v1285, %v1284
        %v1769 = vpack.c.b16 %v1287, %v1286
        %v1770 = vpack.c.b16 %v1289, %v1288
        %v1771 = vpack.c.b16 %v1291, %v1290
        %v1772 = vpack.c.b16 %v1293, %v1292
        %v1773 = vpack.c.b16 %v1295, %v1294
        %v1774 = vpack.c.b16 %v1297, %v1296
        %v1775 = vpack.c.b16 %v1299, %v1298
        %v1776 = vpack.c.b16 %v1301, %v1300
        %v1777 = vpack.c.b16 %v1303, %v1302
        %v1778 = vpack.c.b16 %v1305, %v1304
        %v1779 = vpack.c.b16 %v1307, %v1306
        %v1780 = vpack.c.b16 %v1309, %v1308
        %v1781 = vpack.c.b16 %v1311, %v1310
        %v1782 = vpack.c.b16 %v1313, %v1312
        %v1783 = vpack.c.b16 %v1315, %v1314
        %v1784 = vpack.c.b16 %v1317, %v1316
        %v1785 = vpack.c.b16 %v1319, %v1318
        %v1786 = vpack.c.b16 %v1321, %v1320
        %v1787 = vpack.c.b16 %v1323, %v1322
        %v1788 = vpack.c.b16 %v1325, %v1324
        %v1789 = vpack.c.b16 %v1327, %v1326
        %v1790 = vpack.c.b16 %v1329, %v1328
        %v1791 = vpack.c.b16 %v1331, %v1330
        %v1792 = vpack.c.b16 %v1333, %v1332
        %v1793 = vpack.c.b16 %v1335, %v1334
        %v1794 = vpack.c.b16 %v1337, %v1336
        %v1795 = vpack.c.b16 %v1339, %v1338
        %v1796 = vpack.c.b16 %v1341, %v1340
        %v1797 = vpack.c.b16 %v1343, %v1342
        %v1798 = vpack.c.b16 %v1345, %v1344
        %v1799 = vpack.c.b16 %v1347, %v1346
        %v1800 = vpack.c.b16 %v1349, %v1348
        %v1801 = vpack.c.b16 %v1351, %v1350
        %v1802 = vpack.c.b16 %v1353, %v1352
        %v1803 = vpack.c.b16 %v1355, %v1354
        %v1804 = vpack.c.b16 %v1357, %v1356
        %v1805 = vpack.c.b16 %v1359, %v1358
        %v1806 = vpack.c.b16 %v1361, %v1360
        %v1807 = vpack.c.b16 %v1363, %v1362
        %v1808 = vpack.c.b16 %v1365, %v1364
        %v1809 = vpack.c.b16 %v1367, %v1366
        %v1810 = vpack.c.b16 %v1369, %v1368
        %v1811 = vpack.c.b16 %v1371, %v1370
        %v1812 = vpack.c.b16 %v1373, %v1372
        %v1813 = vpack.c.b16 %v1375, %v1374
        %v1814 = vpack.c.b16 %v1377, %v1376
        %v1815 = vpack.c.b16 %v1379, %v1378
        %v1816 = vpack.c.b16 %v1381, %v1380
        %v1817 = vpack.c.b16 %v1383, %v1382
        %v1818 = vpack.c.b16 %v1385, %v1384
        %v1819 = vpack.c.b16 %v1387, %v1386
        %v1820 = vpack.c.b16 %v1389, %v1388
        %v1821 = vpack.c.b16 %v1391, %v1390
        %v1822 = vpack.c.b16 %v1393, %v1392
        %v1823 = vpack.c.b16 %v1395, %v1394
        %v1824 = vpack.c.b16 %v1397, %v1396
        %v1825 = vpack.c.b16 %v1399, %v1398
        %v1826 = vpack.c.b16 %v1401, %v1400
        %v1827 = vpack.c.b16 %v1403, %v1402
        %v1828 = vpack.c.b16 %v1405, %v1404
        %v1829 = vpack.c.b16 %v1407, %v1406
        %v1830 = vpack.c.b16 %v1409, %v1408
        %v1831 = vpack.c.b16 %v1411, %v1410
        %v1832 = vpack.c.b16 %v1413, %v1412
        %v1833 = vpack.c.b16 %v1415, %v1414
        %v1834 = vpack.c.b16 %v1417, %v1416
        %v1835 = vpack.c.b16 %v1419, %v1418
        %v1836 = vpack.c.b16 %v1421, %v1420
        %v1837 = vpack.c.b16 %v1423, %v1422
        %v1838 = vpack.c.b16 %v1425, %v1424
        %v1839 = vpack.c.b16 %v1427, %v1426
        %v1840 = vpack.c.b16 %v1429, %v1428
        %v1841 = vpack.c.b16 %v1431, %v1430
        %v1842 = vpack.c.b16 %v1433, %v1432
        %v1843 = vpack.c.b16 %v1435, %v1434
        %v1844 = vpack.c.b16 %v1437, %v1436
        %v1845 = vpack.c.b16 %v1439, %v1438
        %v1846 = vpack.c.b16 %v1441, %v1440
        %v1847 = vpack.c.b16 %v1443, %v1442
        %v1848 = vpack.c.b16 %v1445, %v1444
        %v1849 = vpack.c.b16 %v1447, %v1446
        %v1850 = vpack.c.b16 %v1449, %v1448
        %v1851 = vpack.c.b16 %v1451, %v1450
        %v1852 = vpack.c.b16 %v1453, %v1452
        %v1853 = vpack.c.b16 %v1455, %v1454
        %v1854 = vpack.c.b16 %v1457, %v1456
        %v1855 = vpack.c.b16 %v1459, %v1458
        %v1856 = vpack.c.b16 %v1461, %v1460
        %v1857 = vpack.c.b16 %v1463, %v1462
        %v1858 = vpack.c.b16 %v1465, %v1464
        %v1859 = vpack.c.b16 %v1467, %v1466
        %v1860 = vpack.c.b16 %v1469, %v1468
        %v1861 = vpack.c.b16 %v1471, %v1470
        %v1862 = vpack.c.b16 %v1473, %v1472
        %v1863 = vpack.c.b16 %v1475, %v1474
        %v1864 = vpack.c.b16 %v1477, %v1476
        %v1865 = vpack.c.b16 %v1479, %v1478
        %v1866 = vpack.c.b16 %v1481, %v1480
        %v1867 = vpack.c.b16 %v1483, %v1482
        %v1868 = vpack.c.b16 %v1485, %v1484
        %v1869 = vpack.c.b16 %v1487, %v1486
        %v1870 = vpack.c.b16 %v1489, %v1488
        %v1871 = vpack.c.b16 %v1491, %v1490
        %v1872 = vpack.c.b16 %v1493, %v1492
        %v1873 = vpack.c.b16 %v1495, %v1494
        %v1874 = vpack.c.b16 %v1497, %v1496
        %v1875 = vpack.c.b16 %v1499, %v1498
        %v1876 = vpack.c.b16 %v1501, %v1500
        %v1877 = vpack.c.b16 %v1503, %v1502
        %v1878 = vpack.c.b16 %v1505, %v1504
        %v1879 = vpack.c.b16 %v1507, %v1506
        %v1880 = vpack.c.b16 %v1509, %v1508
        %v1881 = vpack.c.b16 %v1511, %v1510
        %v1882 = vpack.c.b16 %v1513, %v1512
        %v1883 = vpack.c.b16 %v1515, %v1514
        %v1884 = vpack.c.b16 %v1517, %v1516
        %v1885 = vpack.c.b16 %v1519, %v1518
        %v1886 = vpack.c.b16 %v1521, %v1520
        %v1887 = vpack.c.b16 %v1523, %v1522
        %v1888 = vpack.c.b16 %v1525, %v1524
        %v1889 = vpack.c.b16 %v1527, %v1526
        %v1890 = vpack.c.b16 %v1529, %v1528
        %v1891 = vpack.c.b16 %v1531, %v1530
        %v1892 = vpack.c.b16 %v1533, %v1532
        %v1893 = vpack.c.b16 %v1535, %v1534
        %v1894 = vpack.c.b16 %v1537, %v1536
        %v1895 = vpack.c.b16 %v1539, %v1538
        %v1896 = vpack.c.b16 %v1541, %v1540
        %v1897 = vpack.c.b16 %v1543, %v1542
        %v1898 = vpack.c.b16 %v1545, %v1544
        %v1899 = vpack.c.b16 %v1547, %v1546
        %v1900 = vpack.c.b16 %v1549, %v1548
        %v1901 = vpack.c.b16 %v1551, %v1550
        %v1902 = vpack.c.b16 %v1553, %v1552
        %v1903 = vpack.c.b16 %v1555, %v1554
        %v1904 = vpack.c.b16 %v1557, %v1556
        %v1905 = vpack.c.b16 %v1559, %v1558
        %v1906 = vpack.c.b16 %v1561, %v1560
        %v1907 = vpack.c.b16 %v1563, %v1562
        %v1908 = vpack.c.b16 %v1565, %v1564
        %v1909 = vpack.c.b16 %v1567, %v1566
        %v1910 = vpack.c.b16 %v1569, %v1568
        %v1911 = vpack.c.b16 %v1571, %v1570
        %v1912 = vpack.c.b16 %v1573, %v1572
        %v1913 = vpack.c.b16 %v1575, %v1574
        %v1914 = vpack.c.b16 %v1577, %v1576
        %v1915 = vpack.c.b16 %v1579, %v1578
        %v1916 = vpack.c.b16 %v1581, %v1580
        %v1917 = vpack.c.b16 %v1583, %v1582
        %v1918 = vpack.c.b16 %v1585, %v1584
        %v1919 = vpack.c.b16 %v1587, %v1586
        %v1920 = vpack.c.b16 %v1589, %v1588
        %v1921 = vpack.c.b16 %v1591, %v1590
        %v1922 = vpack.c.b16 %v1593, %v1592
        %v1923 = vpack.c.b16 %v1595, %v1594
        %v1924 = vpack.c.b16 %v1597, %v1596
        %v1925 = vpack.c.b16 %v1599, %v1598
        %v1926 = vpack.c.b16 %v1601, %v1600
        %v1927 = vpack.c.b16 %v1603, %v1602
        %v1928 = vpack.c.b16 %v1605, %v1604
        %v1929 = vpack.c.b16 %v1607, %v1606
        %v1930 = vpack.c.b16 %v1609, %v1608
        %v1931 = vpack.c.b16 %v1611, %v1610
        %v1932 = vpack.c.b16 %v1613, %v1612
        %v1933 = vpack.c.b16 %v1615, %v1614
        %v1934 = vpack.c.b16 %v1617, %v1616
        %v1935 = vpack.c.b16 %v1619, %v1618
        %v1936 = vpack.c.b16 %v1621, %v1620
        %v1937 = vpack.c.b16 %v1623, %v1622
        %v1938 = vpack.c.b16 %v1625, %v1624
        %v1939 = vpack.c.b16 %v1627, %v1626
        %v1940 = vpack.c.b16 %v1629, %v1628
        %v1941 = vpack.c.b16 %v1631, %v1630
        %v1942 = vpack.c.b16 %v1633, %v1632
        %v1943 = vpack.c.b16 %v1635, %v1634
        %v1944 = vpack.c.b16 %v1637, %v1636
        %v1945 = vpack.c.b16 %v1639, %v1638
        %v1946 = vpack.c.b16 %v1641, %v1640
        %v1947 = vpack.c.b16 %v1643, %v1642
        %v1948 = vpack.c.b16 %v1645, %v1644
        %v1949 = vpack.c.b16 %v1647, %v1646
        %v1950 = vpack.c.b16 %v1649, %v1648
        %v1951 = vpack.c.b16 %v1651, %v1650
        %v1952 = vpack.c.b16 %v1653, %v1652
        %v1953 = vpack.c.b16 %v1655, %v1654
        %v1954 = vpack.c.b16 %v1657, %v1656
        %v1955 = vpack.c.b16 %v1659, %v1658
        %v1956 = vpack.c.b16 %v1661, %v1660
        %v1957 = vpack.c.b16 %v1663, %v1662
        %v1958 = vpack.c.b16 %v1665, %v1664
        %v1959 = vpack.c.b16 %v1667, %v1666
        %v1960 = vpack.c.b16 %v1669, %v1668
        %v1961 = vpack.c.b16 %v1671, %v1670
        %v1962 = vpack.c.b16 %v1673, %v1672
        %v1963 = vpack.c.b16 %v1675, %v1674
        %v1964 = vpack.c.b16 %v1677, %v1676
        %v1965 = vpack.c.b16 %v1679, %v1678
        %v1966 = vpack.c.b16 %v1681, %v1680
        %v1967 = vpack.c.b16 %v1683, %v1682
        %v1968 = vpack.c.b16 %v1685, %v1684
        %v1969 = vpack.c.b16 %v1687, %v1686
        %v1970 = vpack.c.b16 %v1689, %v1688
        %v1971 = vpack.c.b16 %v1691, %v1690
        %v1972 = vpack.c.b16 %v1693, %v1692
        %v1973 = vpack.c.b16 %v1695, %v1694
        %v1974 = vpack.c.b16 %v1697, %v1696
        %v1975 = vpack.c.b16 %v1699, %v1698
        %v1976 = vpack.c.b16 %v1701, %v1700
        %v1977 = vpack.c.b16 %v1703, %v1702
        %v1978 = vpack.c.b16 %v1705, %v1704
        %v1979 = vpack.c.b16 %v1707, %v1706
        %v1980 = vpack.c.b16 %v1709, %v1708
        %v1981 = vpack.c.b16 %v1711, %v1710
        %v1982 = vpack.c.b16 %v1713, %v1712
        %v1983 = vpack.c.b16 %v1715, %v1714
        %v1984 = vpack.c.b16 %v1717, %v1716
        %v1985 = vpack.c.b16 %v1719, %v1718
        %v1986 = vpack.c.b16 %v1721, %v1720
        %v1987 = vpack.c.b16 %v1723, %v1722
        %v1988 = vpack.c.b16 %v1725, %v1724
        %v1989 = vpack.c.b16 %v1727, %v1726
        %v1990 = vpack.c.b16 %v1729, %v1728
        %v1991 = vpack.c.b16 %v1731, %v1730
        %v1992 = vpack.c.b16 %v1733, %v1732
        %v1993 = vpack.c.b16 %v1735, %v1734
        %v1994 = vpack.c.b16 %v1737, %v1736
        %v1995 = vpack.c.b16 %v1739, %v1738
        %v2000 = vunpack.c.l.b16 %v705
        %v2001 = vunpack.c.l.b16 %v706
        %v2002 = vunpack.c.l.b16 %v707
        %v2003 = vunpack.c.l.b16 %v708
        %v2004 = vpack.c.b16 %v2001, %v2000
        %v2005 = vpack.c.b16 %v2003, %v2002
        %vm2007 = vcmask 220160
        %v2009 = vsel %vm2007, %v1740, 0
        %v2012 = vsel %vm2007, %v1741, 0
        %v2015 = vsel %vm2007, %v1742, 0
        %v2018 = vsel %vm2007, %v1743, 0
        %v2021 = vsel %vm2007, %v1744, 0
        %v2024 = vsel %vm2007, %v1745, 0
        %v2027 = vsel %vm2007, %v1746, 0
        %v2030 = vsel %vm2007, %v1747, 0
        %v2033 = vsel %vm2007, %v1748, 0
        %v2036 = vsel %vm2007, %v1749, 0
        %v2039 = vsel %vm2007, %v1750, 0
        %v2042 = vsel %vm2007, %v1751, 0
        %v2045 = vsel %vm2007, %v1752, 0
        %v2048 = vsel %vm2007, %v1753, 0
        %v2051 = vsel %vm2007, %v1754, 0
        %v2054 = vsel %vm2007, %v1755, 0
        %v2057 = vsel %vm2007, %v1756, 0
        %v2060 = vsel %vm2007, %v1757, 0
        %v2063 = vsel %vm2007, %v1758, 0
        %v2066 = vsel %vm2007, %v1759, 0
        %v2069 = vsel %vm2007, %v1760, 0
        %v2072 = vsel %vm2007, %v1761, 0
        %v2075 = vsel %vm2007, %v1762, 0
        %v2078 = vsel %vm2007, %v1763, 0
        %v2081 = vsel %vm2007, %v1764, 0
        %v2084 = vsel %vm2007, %v1765, 0
        %v2087 = vsel %vm2007, %v1766, 0
        %v2090 = vsel %vm2007, %v1767, 0
        %v2093 = vsel %vm2007, %v1768, 0
        %v2096 = vsel %vm2007, %v1769, 0
        %v2099 = vsel %vm2007, %v1770, 0
        %v2102 = vsel %vm2007, %v1771, 0
        %v2105 = vsel %vm2007, %v1772, 0
        %v2108 = vsel %vm2007, %v1773, 0
        %v2111 = vsel %vm2007, %v1774, 0
        %v2114 = vsel %vm2007, %v1775, 0
        %v2117 = vsel %vm2007, %v1776, 0
        %v2120 = vsel %vm2007, %v1777, 0
        %v2123 = vsel %vm2007, %v1778, 0
        %v2126 = vsel %vm2007, %v1779, 0
        %v2129 = vsel %vm2007, %v1780, 0
        %v2132 = vsel %vm2007, %v1781, 0
        %v2135 = vsel %vm2007, %v1782, 0
        %v2138 = vsel %vm2007, %v1783, 0
        %v2141 = vsel %vm2007, %v1784, 0
        %v2144 = vsel %vm2007, %v1785, 0
        %v2147 = vsel %vm2007, %v1786, 0
        %v2150 = vsel %vm2007, %v1787, 0
        %v2153 = vsel %vm2007, %v1788, 0
        %v2156 = vsel %vm2007, %v1789, 0
        %v2159 = vsel %vm2007, %v1790, 0
        %v2162 = vsel %vm2007, %v1791, 0
        %v2165 = vsel %vm2007, %v1792, 0
        %v2168 = vsel %vm2007, %v1793, 0
        %v2171 = vsel %vm2007, %v1794, 0
        %v2174 = vsel %vm2007, %v1795, 0
        %v2177 = vsel %vm2007, %v1796, 0
        %v2180 = vsel %vm2007, %v1797, 0
        %v2183 = vsel %vm2007, %v1798, 0
        %v2186 = vsel %vm2007, %v1799, 0
        %v2189 = vsel %vm2007, %v1800, 0
        %v2192 = vsel %vm2007, %v1801, 0
        %v2195 = vsel %vm2007, %v1802, 0
        %v2198 = vsel %vm2007, %v1803, 0
        %v2201 = vsel %vm2007, %v1804, 0
        %v2204 = vsel %vm2007, %v1805, 0
        %v2207 = vsel %vm2007, %v1806, 0
        %v2210 = vsel %vm2007, %v1807, 0
        %v2213 = vsel %vm2007, %v1808, 0
        %v2216 = vsel %vm2007, %v1809, 0
        %v2219 = vsel %vm2007, %v1810, 0
        %v2222 = vsel %vm2007, %v1811, 0
        %v2225 = vsel %vm2007, %v1812, 0
        %v2228 = vsel %vm2007, %v1813, 0
        %v2231 = vsel %vm2007, %v1814, 0
        %v2234 = vsel %vm2007, %v1815, 0
        %v2237 = vsel %vm2007, %v1816, 0
        %v2240 = vsel %vm2007, %v1817, 0
        %v2243 = vsel %vm2007, %v1818, 0
        %v2246 = vsel %vm2007, %v1819, 0
        %v2249 = vsel %vm2007, %v1820, 0
        %v2252 = vsel %vm2007, %v1821, 0
        %v2255 = vsel %vm2007, %v1822, 0
        %v2258 = vsel %vm2007, %v1823, 0
        %v2261 = vsel %vm2007, %v1824, 0
        %v2264 = vsel %vm2007, %v1825, 0
        %v2267 = vsel %vm2007, %v1826, 0
        %v2270 = vsel %vm2007, %v1827, 0
        %v2273 = vsel %vm2007, %v1828, 0
        %v2276 = vsel %vm2007, %v1829, 0
        %v2279 = vsel %vm2007, %v1830, 0
        %v2282 = vsel %vm2007, %v1831, 0
        %v2285 = vsel %vm2007, %v1832, 0
        %v2288 = vsel %vm2007, %v1833, 0
        %v2291 = vsel %vm2007, %v1834, 0
        %v2294 = vsel %vm2007, %v1835, 0
        %v2297 = vsel %vm2007, %v1836, 0
        %v2300 = vsel %vm2007, %v1837, 0
        %v2303 = vsel %vm2007, %v1838, 0
        %v2306 = vsel %vm2007, %v1839, 0
        %v2309 = vsel %vm2007, %v1840, 0
        %v2312 = vsel %vm2007, %v1841, 0
        %v2315 = vsel %vm2007, %v1842, 0
        %v2318 = vsel %vm2007, %v1843, 0
        %v2321 = vsel %vm2007, %v1844, 0
        %v2324 = vsel %vm2007, %v1845, 0
        %v2327 = vsel %vm2007, %v1846, 0
        %v2330 = vsel %vm2007, %v1847, 0
        %v2333 = vsel %vm2007, %v1848, 0
        %v2336 = vsel %vm2007, %v1849, 0
        %v2339 = vsel %vm2007, %v1850, 0
        %v2342 = vsel %vm2007, %v1851, 0
        %v2345 = vsel %vm2007, %v1852, 0
        %v2348 = vsel %vm2007, %v1853, 0
        %v2351 = vsel %vm2007, %v1854, 0
        %v2354 = vsel %vm2007, %v1855, 0
        %v2357 = vsel %vm2007, %v1856, 0
        %v2360 = vsel %vm2007, %v1857, 0
        %v2363 = vsel %vm2007, %v1858, 0
        %v2366 = vsel %vm2007, %v1859, 0
        %v2369 = vsel %vm2007, %v1860, 0
        %v2372 = vsel %vm2007, %v1861, 0
        %v2375 = vsel %vm2007, %v1862, 0
        %v2378 = vsel %vm2007, %v1863, 0
        %v2381 = vsel %vm2007, %v1864, 0
        %v2384 = vsel %vm2007, %v1865, 0
        %v2387 = vsel %vm2007, %v1866, 0
        %v2390 = vsel %vm2007, %v1867, 0
        %v2393 = vsel %vm2007, %v1868, 0
        %v2396 = vsel %vm2007, %v1869, 0
        %v2399 = vsel %vm2007, %v1870, 0
        %v2402 = vsel %vm2007, %v1871, 0
        %v2405 = vsel %vm2007, %v1872, 0
        %v2408 = vsel %vm2007, %v1873, 0
        %v2411 = vsel %vm2007, %v1874, 0
        %v2414 = vsel %vm2007, %v1875, 0
        %v2417 = vsel %vm2007, %v1876, 0
        %v2420 = vsel %vm2007, %v1877, 0
        %v2423 = vsel %vm2007, %v1878, 0
        %v2426 = vsel %vm2007, %v1879, 0
        %v2429 = vsel %vm2007, %v1880, 0
        %v2432 = vsel %vm2007, %v1881, 0
        %v2435 = vsel %vm2007, %v1882, 0
        %v2438 = vsel %vm2007, %v1883, 0
        %v2441 = vsel %vm2007, %v1884, 0
        %v2444 = vsel %vm2007, %v1885, 0
        %v2447 = vsel %vm2007, %v1886, 0
        %v2450 = vsel %vm2007, %v1887, 0
        %v2453 = vsel %vm2007, %v1888, 0
        %v2456 = vsel %vm2007, %v1889, 0
        %v2459 = vsel %vm2007, %v1890, 0
        %v2462 = vsel %vm2007, %v1891, 0
        %v2465 = vsel %vm2007, %v1892, 0
        %v2468 = vsel %vm2007, %v1893, 0
        %v2471 = vsel %vm2007, %v1894, 0
        %v2474 = vsel %vm2007, %v1895, 0
        %v2477 = vsel %vm2007, %v1896, 0
        %v2480 = vsel %vm2007, %v1897, 0
        %v2483 = vsel %vm2007, %v1898, 0
        %v2486 = vsel %vm2007, %v1899, 0
        %v2489 = vsel %vm2007, %v1900, 0
        %v2492 = vsel %vm2007, %v1901, 0
        %v2495 = vsel %vm2007, %v1902, 0
        %v2498 = vsel %vm2007, %v1903, 0
        %v2501 = vsel %vm2007, %v1904, 0
        %v2504 = vsel %vm2007, %v1905, 0
        %v2507 = vsel %vm2007, %v1906, 0
        %v2510 = vsel %vm2007, %v1907, 0
        %v2513 = vsel %vm2007, %v1908, 0
        %v2516 = vsel %vm2007, %v1909, 0
        %v2519 = vsel %vm2007, %v1910, 0
        %v2522 = vsel %vm2007, %v1911, 0
        %v2525 = vsel %vm2007, %v1912, 0
        %v2528 = vsel %vm2007, %v1913, 0
        %v2531 = vsel %vm2007, %v1914, 0
        %v2534 = vsel %vm2007, %v1915, 0
        %v2537 = vsel %vm2007, %v1916, 0
        %v2540 = vsel %vm2007, %v1917, 0
        %v2543 = vsel %vm2007, %v1918, 0
        %v2546 = vsel %vm2007, %v1919, 0
        %v2549 = vsel %vm2007, %v1920, 0
        %v2552 = vsel %vm2007, %v1921, 0
        %v2555 = vsel %vm2007, %v1922, 0
        %v2558 = vsel %vm2007, %v1923, 0
        %v2561 = vsel %vm2007, %v1924, 0
        %v2564 = vsel %vm2007, %v1925, 0
        %v2567 = vsel %vm2007, %v1926, 0
        %v2570 = vsel %vm2007, %v1927, 0
        %v2573 = vsel %vm2007, %v1928, 0
        %v2576 = vsel %vm2007, %v1929, 0
        %v2579 = vsel %vm2007, %v1930, 0
        %v2582 = vsel %vm2007, %v1931, 0
        %v2585 = vsel %vm2007, %v1932, 0
        %v2588 = vsel %vm2007, %v1933, 0
        %v2591 = vsel %vm2007, %v1934, 0
        %v2594 = vsel %vm2007, %v1935, 0
        %v2597 = vsel %vm2007, %v1936, 0
        %v2600 = vsel %vm2007, %v1937, 0
        %v2603 = vsel %vm2007, %v1938, 0
        %v2606 = vsel %vm2007, %v1939, 0
        %v2609 = vsel %vm2007, %v1940, 0
        %v2612 = vsel %vm2007, %v1941, 0
        %v2615 = vsel %vm2007, %v1942, 0
        %v2618 = vsel %vm2007, %v1943, 0
        %v2621 = vsel %vm2007, %v1944, 0
        %v2624 = vsel %vm2007, %v1945, 0
        %v2627 = vsel %vm2007, %v1946, 0
        %v2630 = vsel %vm2007, %v1947, 0
        %v2633 = vsel %vm2007, %v1948, 0
        %v2636 = vsel %vm2007, %v1949, 0
        %v2639 = vsel %vm2007, %v1950, 0
        %v2642 = vsel %vm2007, %v1951, 0
        %v2645 = vsel %vm2007, %v1952, 0
        %v2648 = vsel %vm2007, %v1953, 0
        %v2651 = vsel %vm2007, %v1954, 0
        %v2654 = vsel %vm2007, %v1955, 0
        %v2657 = vsel %vm2007, %v1956, 0
        %v2660 = vsel %vm2007, %v1957, 0
        %v2663 = vsel %vm2007, %v1958, 0
        %v2666 = vsel %vm2007, %v1959, 0
        %v2669 = vsel %vm2007, %v1960, 0
        %v2672 = vsel %vm2007, %v1961, 0
        %v2675 = vsel %vm2007, %v1962, 0
        %v2678 = vsel %vm2007, %v1963, 0
        %v2681 = vsel %vm2007, %v1964, 0
        %v2684 = vsel %vm2007, %v1965, 0
        %v2687 = vsel %vm2007, %v1966, 0
        %v2690 = vsel %vm2007, %v1967, 0
        %v2693 = vsel %vm2007, %v1968, 0
        %v2696 = vsel %vm2007, %v1969, 0
        %v2699 = vsel %vm2007, %v1970, 0
        %v2702 = vsel %vm2007, %v1971, 0
        %v2705 = vsel %vm2007, %v1972, 0
        %v2708 = vsel %vm2007, %v1973, 0
        %v2711 = vsel %vm2007, %v1974, 0
        %v2714 = vsel %vm2007, %v1975, 0
        %v2717 = vsel %vm2007, %v1976, 0
        %v2720 = vsel %vm2007, %v1977, 0
        %v2723 = vsel %vm2007, %v1978, 0
        %v2726 = vsel %vm2007, %v1979, 0
        %v2729 = vsel %vm2007, %v1980, 0
        %v2732 = vsel %vm2007, %v1981, 0
        %v2735 = vsel %vm2007, %v1982, 0
        %v2738 = vsel %vm2007, %v1983, 0
        %v2741 = vsel %vm2007, %v1984, 0
        %v2744 = vsel %vm2007, %v1985, 0
        %v2747 = vsel %vm2007, %v1986, 0
        %v2750 = vsel %vm2007, %v1987, 0
        %v2753 = vsel %vm2007, %v1988, 0
        %v2756 = vsel %vm2007, %v1989, 0
        %v2759 = vsel %vm2007, %v1990, 0
        %v2762 = vsel %vm2007, %v1991, 0
        %v2765 = vsel %vm2007, %v1992, 0
        %v2768 = vsel %vm2007, %v1993, 0
        %v2771 = vsel %vm2007, %v1994, 0
        %v2774 = vsel %vm2007, %v1995, 0
        %vm2776 = vcmask 1044480
        %vm2777 = vcmask 1045504
        %v2778 = vsel %vm2776, 4294967295, 65535
        %v2779 = vsel %vm2777, %v2778, 0
        %v2781 = vand.u32 %v2005, %v2779
        %2783 = vmatprep.subr.bf16.mxu0 0
        %2784 = vmatpush1.bf16.msra.mxu0 0
        %2785 = vmatprep.subr.bf16.mxu0 0
        %2786 = vmatpush1.bf16.msra.mxu0 0
        %2787 = vmatprep.subr.bf16.mxu0 0
        %2788 = vmatpush1.bf16.msra.mxu0 0
        %2789 = vmatprep.subr.bf16.mxu0 0
        %2790 = vmatpush1.bf16.msra.mxu0 0
        %2791 = vmatprep.subr.bf16.mxu0 0
        %2792 = vmatpush1.bf16.msra.mxu0 0
        %2793 = vmatprep.subr.bf16.mxu0 0
        %2794 = vmatpush1.bf16.msra.mxu0 0
        %2795 = vmatprep.subr.bf16.mxu0 0
        %2796 = vmatpush1.bf16.msra.mxu0 %v2781
        %2797 = vmatprep.subr.bf16.mxu0 0
        %2798 = vmatpush1.bf16.msra.mxu0 %v2004
        %2799 = vmatprep.subr.bf16.mxu0 0
        %2800 = vmatpush2.bf16.msra.mxu0 0
        %2801 = vmatprep.subr.bf16.mxu0 0
        %2802 = vmatpush2.bf16.msra.mxu0 0
        %2803 = vmatprep.subr.bf16.mxu0 0
        %2804 = vmatpush2.bf16.msra.mxu0 0
        %2805 = vmatprep.subr.bf16.mxu0 0
        %2806 = vmatpush2.bf16.msra.mxu0 0
        %2807 = vmatprep.subr.bf16.mxu0 0
        %2808 = vmatpush2.bf16.msra.mxu0 0
        %2809 = vmatprep.subr.bf16.mxu0 0
        %2810 = vmatpush2.bf16.msra.mxu0 0
        %2811 = vmatprep.subr.bf16.mxu0 0
        %2812 = vmatpush2.bf16.msra.mxu0 0
        %2813 = vmatprep.subr.bf16.mxu0 0
        %2814 = vmatpush2.bf16.msra.mxu0 0
        %2815 = vmatprep.mubr.bf16.mxu0 0
        %2816 = vmatmul.mubr.bf16.gmra.mxu0 %v2009
        %v2817 = vpop.f32.mrf.mxu0
        %v2818 = vadd.f32 %v714, %v2817
        %v2819 = vpop.f32.mrf.mxu0
        %v2820 = vpop.f32.mrf.mxu0
        %v2821 = vadd.f32 %v714, %v2820
        %v2822 = vpop.f32.mrf.mxu0
        %2823 = vmatprep.mubr.bf16.mxu0 0
        %2824 = vmatmul.mubr.bf16.gmra.mxu0 %v2012
        %v2825 = vpop.f32.mrf.mxu0
        %v2826 = vadd.f32 %v714, %v2825
        %v2827 = vpop.f32.mrf.mxu0
        %v2828 = vpop.f32.mrf.mxu0
        %v2829 = vadd.f32 %v714, %v2828
        %v2830 = vpop.f32.mrf.mxu0
        %2831 = vmatprep.mubr.bf16.mxu0 0
        %2832 = vmatmul.mubr.bf16.gmra.mxu0 %v2015
        %v2833 = vpop.f32.mrf.mxu0
        %v2834 = vadd.f32 %v714, %v2833
        %v2835 = vpop.f32.mrf.mxu0
        %v2836 = vpop.f32.mrf.mxu0
        %v2837 = vadd.f32 %v714, %v2836
        %v2838 = vpop.f32.mrf.mxu0
        %2839 = vmatprep.mubr.bf16.mxu0 0
        %2840 = vmatmul.mubr.bf16.gmra.mxu0 %v2018
        %v2841 = vpop.f32.mrf.mxu0
        %v2842 = vadd.f32 %v714, %v2841
        %v2843 = vpop.f32.mrf.mxu0
        %v2844 = vpop.f32.mrf.mxu0
        %v2845 = vadd.f32 %v714, %v2844
        %v2846 = vpop.f32.mrf.mxu0
        %2847 = vmatprep.mubr.bf16.mxu0 0
        %2848 = vmatmul.mubr.bf16.gmra.mxu0 %v2021
        %v2849 = vpop.f32.mrf.mxu0
        %v2850 = vadd.f32 %v714, %v2849
        %v2851 = vpop.f32.mrf.mxu0
        %v2852 = vpop.f32.mrf.mxu0
        %v2853 = vadd.f32 %v714, %v2852
        %v2854 = vpop.f32.mrf.mxu0
        %2855 = vmatprep.mubr.bf16.mxu0 0
        %2856 = vmatmul.mubr.bf16.gmra.mxu0 %v2024
        %v2857 = vpop.f32.mrf.mxu0
        %v2858 = vadd.f32 %v714, %v2857
        %v2859 = vpop.f32.mrf.mxu0
        %v2860 = vpop.f32.mrf.mxu0
        %v2861 = vadd.f32 %v714, %v2860
        %v2862 = vpop.f32.mrf.mxu0
        %2863 = vmatprep.mubr.bf16.mxu0 0
        %2864 = vmatmul.mubr.bf16.gmra.mxu0 %v2027
        %v2865 = vpop.f32.mrf.mxu0
        %v2866 = vadd.f32 %v714, %v2865
        %v2867 = vpop.f32.mrf.mxu0
        %v2868 = vpop.f32.mrf.mxu0
        %v2869 = vadd.f32 %v714, %v2868
        %v2870 = vpop.f32.mrf.mxu0
        %2871 = vmatprep.mubr.bf16.mxu0 0
        %2872 = vmatmul.mubr.bf16.gmra.mxu0 %v2030
        %v2873 = vpop.f32.mrf.mxu0
        %v2874 = vadd.f32 %v714, %v2873
        %v2875 = vpop.f32.mrf.mxu0
        %v2876 = vpop.f32.mrf.mxu0
        %v2877 = vadd.f32 %v714, %v2876
        %v2878 = vpop.f32.mrf.mxu0
        %2879 = vmatprep.mubr.bf16.mxu0 0
        %2880 = vmatmul.mubr.bf16.gmra.mxu0 %v2033
        %v2881 = vpop.f32.mrf.mxu0
        %v2882 = vadd.f32 %v714, %v2881
        %v2883 = vpop.f32.mrf.mxu0
        %v2884 = vpop.f32.mrf.mxu0
        %v2885 = vadd.f32 %v714, %v2884
        %v2886 = vpop.f32.mrf.mxu0
        %2887 = vmatprep.mubr.bf16.mxu0 0
        %2888 = vmatmul.mubr.bf16.gmra.mxu0 %v2036
        %v2889 = vpop.f32.mrf.mxu0
        %v2890 = vadd.f32 %v714, %v2889
        %v2891 = vpop.f32.mrf.mxu0
        %v2892 = vpop.f32.mrf.mxu0
        %v2893 = vadd.f32 %v714, %v2892
        %v2894 = vpop.f32.mrf.mxu0
        %2895 = vmatprep.mubr.bf16.mxu0 0
        %2896 = vmatmul.mubr.bf16.gmra.mxu0 %v2039
        %v2897 = vpop.f32.mrf.mxu0
        %v2898 = vadd.f32 %v714, %v2897
        %v2899 = vpop.f32.mrf.mxu0
        %v2900 = vpop.f32.mrf.mxu0
        %v2901 = vadd.f32 %v714, %v2900
        %v2902 = vpop.f32.mrf.mxu0
        %2903 = vmatprep.mubr.bf16.mxu0 0
        %2904 = vmatmul.mubr.bf16.gmra.mxu0 %v2042
        %v2905 = vpop.f32.mrf.mxu0
        %v2906 = vadd.f32 %v714, %v2905
        %v2907 = vpop.f32.mrf.mxu0
        %v2908 = vpop.f32.mrf.mxu0
        %v2909 = vadd.f32 %v714, %v2908
        %v2910 = vpop.f32.mrf.mxu0
        %2911 = vmatprep.mubr.bf16.mxu0 0
        %2912 = vmatmul.mubr.bf16.gmra.mxu0 %v2045
        %v2913 = vpop.f32.mrf.mxu0
        %v2914 = vadd.f32 %v714, %v2913
        %v2915 = vpop.f32.mrf.mxu0
        %v2916 = vpop.f32.mrf.mxu0
        %v2917 = vadd.f32 %v714, %v2916
        %v2918 = vpop.f32.mrf.mxu0
        %2919 = vmatprep.mubr.bf16.mxu0 0
        %2920 = vmatmul.mubr.bf16.gmra.mxu0 %v2048
        %v2921 = vpop.f32.mrf.mxu0
        %v2922 = vadd.f32 %v714, %v2921
        %v2923 = vpop.f32.mrf.mxu0
        %v2924 = vpop.f32.mrf.mxu0
        %v2925 = vadd.f32 %v714, %v2924
        %v2926 = vpop.f32.mrf.mxu0
        %2927 = vmatprep.mubr.bf16.mxu0 0
        %2928 = vmatmul.mubr.bf16.gmra.mxu0 %v2051
        %v2929 = vpop.f32.mrf.mxu0
        %v2930 = vadd.f32 %v714, %v2929
        %v2931 = vpop.f32.mrf.mxu0
        %v2932 = vpop.f32.mrf.mxu0
        %v2933 = vadd.f32 %v714, %v2932
        %v2934 = vpop.f32.mrf.mxu0
        %2935 = vmatprep.mubr.bf16.mxu0 0
        %2936 = vmatmul.mubr.bf16.gmra.mxu0 %v2054
        %v2937 = vpop.f32.mrf.mxu0
        %v2938 = vadd.f32 %v714, %v2937
        %v2939 = vpop.f32.mrf.mxu0
        %v2940 = vpop.f32.mrf.mxu0
        %v2941 = vadd.f32 %v714, %v2940
        %v2942 = vpop.f32.mrf.mxu0
        %2943 = vmatprep.mubr.bf16.mxu0 0
        %2944 = vmatmul.mubr.bf16.gmra.mxu0 %v2057
        %v2945 = vpop.f32.mrf.mxu0
        %v2946 = vadd.f32 %v714, %v2945
        %v2947 = vpop.f32.mrf.mxu0
        %v2948 = vpop.f32.mrf.mxu0
        %v2949 = vadd.f32 %v714, %v2948
        %v2950 = vpop.f32.mrf.mxu0
        %2951 = vmatprep.mubr.bf16.mxu0 0
        %2952 = vmatmul.mubr.bf16.gmra.mxu0 %v2060
        %v2953 = vpop.f32.mrf.mxu0
        %v2954 = vadd.f32 %v714, %v2953
        %v2955 = vpop.f32.mrf.mxu0
        %v2956 = vpop.f32.mrf.mxu0
        %v2957 = vadd.f32 %v714, %v2956
        %v2958 = vpop.f32.mrf.mxu0
        %2959 = vmatprep.mubr.bf16.mxu0 0
        %2960 = vmatmul.mubr.bf16.gmra.mxu0 %v2063
        %v2961 = vpop.f32.mrf.mxu0
        %v2962 = vadd.f32 %v714, %v2961
        %v2963 = vpop.f32.mrf.mxu0
        %v2964 = vpop.f32.mrf.mxu0
        %v2965 = vadd.f32 %v714, %v2964
        %v2966 = vpop.f32.mrf.mxu0
        %2967 = vmatprep.mubr.bf16.mxu0 0
        %2968 = vmatmul.mubr.bf16.gmra.mxu0 %v2066
        %v2969 = vpop.f32.mrf.mxu0
        %v2970 = vadd.f32 %v714, %v2969
        %v2971 = vpop.f32.mrf.mxu0
        %v2972 = vpop.f32.mrf.mxu0
        %v2973 = vadd.f32 %v714, %v2972
        %v2974 = vpop.f32.mrf.mxu0
        %2975 = vmatprep.mubr.bf16.mxu0 0
        %2976 = vmatmul.mubr.bf16.gmra.mxu0 %v2069
        %v2977 = vpop.f32.mrf.mxu0
        %v2978 = vadd.f32 %v714, %v2977
        %v2979 = vpop.f32.mrf.mxu0
        %v2980 = vpop.f32.mrf.mxu0
        %v2981 = vadd.f32 %v714, %v2980
        %v2982 = vpop.f32.mrf.mxu0
        %2983 = vmatprep.mubr.bf16.mxu0 0
        %2984 = vmatmul.mubr.bf16.gmra.mxu0 %v2072
        %v2985 = vpop.f32.mrf.mxu0
        %v2986 = vadd.f32 %v714, %v2985
        %v2987 = vpop.f32.mrf.mxu0
        %v2988 = vpop.f32.mrf.mxu0
        %v2989 = vadd.f32 %v714, %v2988
        %v2990 = vpop.f32.mrf.mxu0
        %2991 = vmatprep.mubr.bf16.mxu0 0
        %2992 = vmatmul.mubr.bf16.gmra.mxu0 %v2075
        %v2993 = vpop.f32.mrf.mxu0
        %v2994 = vadd.f32 %v714, %v2993
        %v2995 = vpop.f32.mrf.mxu0
        %v2996 = vpop.f32.mrf.mxu0
        %v2997 = vadd.f32 %v714, %v2996
        %v2998 = vpop.f32.mrf.mxu0
        %2999 = vmatprep.mubr.bf16.mxu0 0
        %3000 = vmatmul.mubr.bf16.gmra.mxu0 %v2078
        %v3001 = vpop.f32.mrf.mxu0
        %v3002 = vadd.f32 %v714, %v3001
        %v3003 = vpop.f32.mrf.mxu0
        %v3004 = vpop.f32.mrf.mxu0
        %v3005 = vadd.f32 %v714, %v3004
        %v3006 = vpop.f32.mrf.mxu0
        %3007 = vmatprep.mubr.bf16.mxu0 0
        %3008 = vmatmul.mubr.bf16.gmra.mxu0 %v2081
        %v3009 = vpop.f32.mrf.mxu0
        %v3010 = vadd.f32 %v714, %v3009
        %v3011 = vpop.f32.mrf.mxu0
        %v3012 = vpop.f32.mrf.mxu0
        %v3013 = vadd.f32 %v714, %v3012
        %v3014 = vpop.f32.mrf.mxu0
        %3015 = vmatprep.mubr.bf16.mxu0 0
        %3016 = vmatmul.mubr.bf16.gmra.mxu0 %v2084
        %v3017 = vpop.f32.mrf.mxu0
        %v3018 = vadd.f32 %v714, %v3017
        %v3019 = vpop.f32.mrf.mxu0
        %v3020 = vpop.f32.mrf.mxu0
        %v3021 = vadd.f32 %v714, %v3020
        %v3022 = vpop.f32.mrf.mxu0
        %3023 = vmatprep.mubr.bf16.mxu0 0
        %3024 = vmatmul.mubr.bf16.gmra.mxu0 %v2087
        %v3025 = vpop.f32.mrf.mxu0
        %v3026 = vadd.f32 %v714, %v3025
        %v3027 = vpop.f32.mrf.mxu0
        %v3028 = vpop.f32.mrf.mxu0
        %v3029 = vadd.f32 %v714, %v3028
        %v3030 = vpop.f32.mrf.mxu0
        %3031 = vmatprep.mubr.bf16.mxu0 0
        %3032 = vmatmul.mubr.bf16.gmra.mxu0 %v2090
        %v3033 = vpop.f32.mrf.mxu0
        %v3034 = vadd.f32 %v714, %v3033
        %v3035 = vpop.f32.mrf.mxu0
        %v3036 = vpop.f32.mrf.mxu0
        %v3037 = vadd.f32 %v714, %v3036
        %v3038 = vpop.f32.mrf.mxu0
        %3039 = vmatprep.mubr.bf16.mxu0 0
        %3040 = vmatmul.mubr.bf16.gmra.mxu0 %v2093
        %v3041 = vpop.f32.mrf.mxu0
        %v3042 = vadd.f32 %v714, %v3041
        %v3043 = vpop.f32.mrf.mxu0
        %v3044 = vpop.f32.mrf.mxu0
        %v3045 = vadd.f32 %v714, %v3044
        %v3046 = vpop.f32.mrf.mxu0
        %3047 = vmatprep.mubr.bf16.mxu0 0
        %3048 = vmatmul.mubr.bf16.gmra.mxu0 %v2096
        %v3049 = vpop.f32.mrf.mxu0
        %v3050 = vadd.f32 %v714, %v3049
        %v3051 = vpop.f32.mrf.mxu0
        %v3052 = vpop.f32.mrf.mxu0
        %v3053 = vadd.f32 %v714, %v3052
        %v3054 = vpop.f32.mrf.mxu0
        %3055 = vmatprep.mubr.bf16.mxu0 0
        %3056 = vmatmul.mubr.bf16.gmra.mxu0 %v2099
        %v3057 = vpop.f32.mrf.mxu0
        %v3058 = vadd.f32 %v714, %v3057
        %v3059 = vpop.f32.mrf.mxu0
        %v3060 = vpop.f32.mrf.mxu0
        %v3061 = vadd.f32 %v714, %v3060
        %v3062 = vpop.f32.mrf.mxu0
        %3063 = vmatprep.mubr.bf16.mxu0 0
        %3064 = vmatmul.mubr.bf16.gmra.mxu0 %v2102
        %v3065 = vpop.f32.mrf.mxu0
        %v3066 = vadd.f32 %v714, %v3065
        %v3067 = vpop.f32.mrf.mxu0
        %v3068 = vpop.f32.mrf.mxu0
        %v3069 = vadd.f32 %v714, %v3068
        %v3070 = vpop.f32.mrf.mxu0
        %3071 = vmatprep.mubr.bf16.mxu0 0
        %3072 = vmatmul.mubr.bf16.gmra.mxu0 %v2105
        %v3073 = vpop.f32.mrf.mxu0
        %v3074 = vadd.f32 %v714, %v3073
        %v3075 = vpop.f32.mrf.mxu0
        %v3076 = vpop.f32.mrf.mxu0
        %v3077 = vadd.f32 %v714, %v3076
        %v3078 = vpop.f32.mrf.mxu0
        %3079 = vmatprep.mubr.bf16.mxu0 0
        %3080 = vmatmul.mubr.bf16.gmra.mxu0 %v2108
        %v3081 = vpop.f32.mrf.mxu0
        %v3082 = vadd.f32 %v714, %v3081
        %v3083 = vpop.f32.mrf.mxu0
        %v3084 = vpop.f32.mrf.mxu0
        %v3085 = vadd.f32 %v714, %v3084
        %v3086 = vpop.f32.mrf.mxu0
        %3087 = vmatprep.mubr.bf16.mxu0 0
        %3088 = vmatmul.mubr.bf16.gmra.mxu0 %v2111
        %v3089 = vpop.f32.mrf.mxu0
        %v3090 = vadd.f32 %v714, %v3089
        %v3091 = vpop.f32.mrf.mxu0
        %v3092 = vpop.f32.mrf.mxu0
        %v3093 = vadd.f32 %v714, %v3092
        %v3094 = vpop.f32.mrf.mxu0
        %3095 = vmatprep.mubr.bf16.mxu0 0
        %3096 = vmatmul.mubr.bf16.gmra.mxu0 %v2114
        %v3097 = vpop.f32.mrf.mxu0
        %v3098 = vadd.f32 %v714, %v3097
        %v3099 = vpop.f32.mrf.mxu0
        %v3100 = vpop.f32.mrf.mxu0
        %v3101 = vadd.f32 %v714, %v3100
        %v3102 = vpop.f32.mrf.mxu0
        %3103 = vmatprep.mubr.bf16.mxu0 0
        %3104 = vmatmul.mubr.bf16.gmra.mxu0 %v2117
        %v3105 = vpop.f32.mrf.mxu0
        %v3106 = vadd.f32 %v714, %v3105
        %v3107 = vpop.f32.mrf.mxu0
        %v3108 = vpop.f32.mrf.mxu0
        %v3109 = vadd.f32 %v714, %v3108
        %v3110 = vpop.f32.mrf.mxu0
        %3111 = vmatprep.mubr.bf16.mxu0 0
        %3112 = vmatmul.mubr.bf16.gmra.mxu0 %v2120
        %v3113 = vpop.f32.mrf.mxu0
        %v3114 = vadd.f32 %v714, %v3113
        %v3115 = vpop.f32.mrf.mxu0
        %v3116 = vpop.f32.mrf.mxu0
        %v3117 = vadd.f32 %v714, %v3116
        %v3118 = vpop.f32.mrf.mxu0
        %3119 = vmatprep.mubr.bf16.mxu0 0
        %3120 = vmatmul.mubr.bf16.gmra.mxu0 %v2123
        %v3121 = vpop.f32.mrf.mxu0
        %v3122 = vadd.f32 %v714, %v3121
        %v3123 = vpop.f32.mrf.mxu0
        %v3124 = vpop.f32.mrf.mxu0
        %v3125 = vadd.f32 %v714, %v3124
        %v3126 = vpop.f32.mrf.mxu0
        %3127 = vmatprep.mubr.bf16.mxu0 0
        %3128 = vmatmul.mubr.bf16.gmra.mxu0 %v2126
        %v3129 = vpop.f32.mrf.mxu0
        %v3130 = vadd.f32 %v714, %v3129
        %v3131 = vpop.f32.mrf.mxu0
        %v3132 = vpop.f32.mrf.mxu0
        %v3133 = vadd.f32 %v714, %v3132
        %v3134 = vpop.f32.mrf.mxu0
        %3135 = vmatprep.mubr.bf16.mxu0 0
        %3136 = vmatmul.mubr.bf16.gmra.mxu0 %v2129
        %v3137 = vpop.f32.mrf.mxu0
        %v3138 = vadd.f32 %v714, %v3137
        %v3139 = vpop.f32.mrf.mxu0
        %v3140 = vpop.f32.mrf.mxu0
        %v3141 = vadd.f32 %v714, %v3140
        %v3142 = vpop.f32.mrf.mxu0
        %3143 = vmatprep.mubr.bf16.mxu0 0
        %3144 = vmatmul.mubr.bf16.gmra.mxu0 %v2132
        %v3145 = vpop.f32.mrf.mxu0
        %v3146 = vadd.f32 %v714, %v3145
        %v3147 = vpop.f32.mrf.mxu0
        %v3148 = vpop.f32.mrf.mxu0
        %v3149 = vadd.f32 %v714, %v3148
        %v3150 = vpop.f32.mrf.mxu0
        %3151 = vmatprep.mubr.bf16.mxu0 0
        %3152 = vmatmul.mubr.bf16.gmra.mxu0 %v2135
        %v3153 = vpop.f32.mrf.mxu0
        %v3154 = vadd.f32 %v714, %v3153
        %v3155 = vpop.f32.mrf.mxu0
        %v3156 = vpop.f32.mrf.mxu0
        %v3157 = vadd.f32 %v714, %v3156
        %v3158 = vpop.f32.mrf.mxu0
        %3159 = vmatprep.mubr.bf16.mxu0 0
        %3160 = vmatmul.mubr.bf16.gmra.mxu0 %v2138
        %v3161 = vpop.f32.mrf.mxu0
        %v3162 = vadd.f32 %v714, %v3161
        %v3163 = vpop.f32.mrf.mxu0
        %v3164 = vpop.f32.mrf.mxu0
        %v3165 = vadd.f32 %v714, %v3164
        %v3166 = vpop.f32.mrf.mxu0
        %3167 = vmatprep.mubr.bf16.mxu0 0
        %3168 = vmatmul.mubr.bf16.gmra.mxu0 %v2141
        %v3169 = vpop.f32.mrf.mxu0
        %v3170 = vadd.f32 %v714, %v3169
        %v3171 = vpop.f32.mrf.mxu0
        %v3172 = vpop.f32.mrf.mxu0
        %v3173 = vadd.f32 %v714, %v3172
        %v3174 = vpop.f32.mrf.mxu0
        %3175 = vmatprep.mubr.bf16.mxu0 0
        %3176 = vmatmul.mubr.bf16.gmra.mxu0 %v2144
        %v3177 = vpop.f32.mrf.mxu0
        %v3178 = vadd.f32 %v714, %v3177
        %v3179 = vpop.f32.mrf.mxu0
        %v3180 = vpop.f32.mrf.mxu0
        %v3181 = vadd.f32 %v714, %v3180
        %v3182 = vpop.f32.mrf.mxu0
        %3183 = vmatprep.mubr.bf16.mxu0 0
        %3184 = vmatmul.mubr.bf16.gmra.mxu0 %v2147
        %v3185 = vpop.f32.mrf.mxu0
        %v3186 = vadd.f32 %v714, %v3185
        %v3187 = vpop.f32.mrf.mxu0
        %v3188 = vpop.f32.mrf.mxu0
        %v3189 = vadd.f32 %v714, %v3188
        %v3190 = vpop.f32.mrf.mxu0
        %3191 = vmatprep.mubr.bf16.mxu0 0
        %3192 = vmatmul.mubr.bf16.gmra.mxu0 %v2150
        %v3193 = vpop.f32.mrf.mxu0
        %v3194 = vadd.f32 %v714, %v3193
        %v3195 = vpop.f32.mrf.mxu0
        %v3196 = vpop.f32.mrf.mxu0
        %v3197 = vadd.f32 %v714, %v3196
        %v3198 = vpop.f32.mrf.mxu0
        %3199 = vmatprep.mubr.bf16.mxu0 0
        %3200 = vmatmul.mubr.bf16.gmra.mxu0 %v2153
        %v3201 = vpop.f32.mrf.mxu0
        %v3202 = vadd.f32 %v714, %v3201
        %v3203 = vpop.f32.mrf.mxu0
        %v3204 = vpop.f32.mrf.mxu0
        %v3205 = vadd.f32 %v714, %v3204
        %v3206 = vpop.f32.mrf.mxu0
        %3207 = vmatprep.mubr.bf16.mxu0 0
        %3208 = vmatmul.mubr.bf16.gmra.mxu0 %v2156
        %v3209 = vpop.f32.mrf.mxu0
        %v3210 = vadd.f32 %v714, %v3209
        %v3211 = vpop.f32.mrf.mxu0
        %v3212 = vpop.f32.mrf.mxu0
        %v3213 = vadd.f32 %v714, %v3212
        %v3214 = vpop.f32.mrf.mxu0
        %3215 = vmatprep.mubr.bf16.mxu0 0
        %3216 = vmatmul.mubr.bf16.gmra.mxu0 %v2159
        %v3217 = vpop.f32.mrf.mxu0
        %v3218 = vadd.f32 %v714, %v3217
        %v3219 = vpop.f32.mrf.mxu0
        %v3220 = vpop.f32.mrf.mxu0
        %v3221 = vadd.f32 %v714, %v3220
        %v3222 = vpop.f32.mrf.mxu0
        %3223 = vmatprep.mubr.bf16.mxu0 0
        %3224 = vmatmul.mubr.bf16.gmra.mxu0 %v2162
        %v3225 = vpop.f32.mrf.mxu0
        %v3226 = vadd.f32 %v714, %v3225
        %v3227 = vpop.f32.mrf.mxu0
        %v3228 = vpop.f32.mrf.mxu0
        %v3229 = vadd.f32 %v714, %v3228
        %v3230 = vpop.f32.mrf.mxu0
        %3231 = vmatprep.mubr.bf16.mxu0 0
        %3232 = vmatmul.mubr.bf16.gmra.mxu0 %v2165
        %v3233 = vpop.f32.mrf.mxu0
        %v3234 = vadd.f32 %v714, %v3233
        %v3235 = vpop.f32.mrf.mxu0
        %v3236 = vpop.f32.mrf.mxu0
        %v3237 = vadd.f32 %v714, %v3236
        %v3238 = vpop.f32.mrf.mxu0
        %3239 = vmatprep.mubr.bf16.mxu0 0
        %3240 = vmatmul.mubr.bf16.gmra.mxu0 %v2168
        %v3241 = vpop.f32.mrf.mxu0
        %v3242 = vadd.f32 %v714, %v3241
        %v3243 = vpop.f32.mrf.mxu0
        %v3244 = vpop.f32.mrf.mxu0
        %v3245 = vadd.f32 %v714, %v3244
        %v3246 = vpop.f32.mrf.mxu0
        %3247 = vmatprep.mubr.bf16.mxu0 0
        %3248 = vmatmul.mubr.bf16.gmra.mxu0 %v2171
        %v3249 = vpop.f32.mrf.mxu0
        %v3250 = vadd.f32 %v714, %v3249
        %v3251 = vpop.f32.mrf.mxu0
        %v3252 = vpop.f32.mrf.mxu0
        %v3253 = vadd.f32 %v714, %v3252
        %v3254 = vpop.f32.mrf.mxu0
        %3255 = vmatprep.mubr.bf16.mxu0 0
        %3256 = vmatmul.mubr.bf16.gmra.mxu0 %v2174
        %v3257 = vpop.f32.mrf.mxu0
        %v3258 = vadd.f32 %v714, %v3257
        %v3259 = vpop.f32.mrf.mxu0
        %v3260 = vpop.f32.mrf.mxu0
        %v3261 = vadd.f32 %v714, %v3260
        %v3262 = vpop.f32.mrf.mxu0
        %3263 = vmatprep.mubr.bf16.mxu0 0
        %3264 = vmatmul.mubr.bf16.gmra.mxu0 %v2177
        %v3265 = vpop.f32.mrf.mxu0
        %v3266 = vadd.f32 %v714, %v3265
        %v3267 = vpop.f32.mrf.mxu0
        %v3268 = vpop.f32.mrf.mxu0
        %v3269 = vadd.f32 %v714, %v3268
        %v3270 = vpop.f32.mrf.mxu0
        %3271 = vmatprep.mubr.bf16.mxu0 0
        %3272 = vmatmul.mubr.bf16.gmra.mxu0 %v2180
        %v3273 = vpop.f32.mrf.mxu0
        %v3274 = vadd.f32 %v714, %v3273
        %v3275 = vpop.f32.mrf.mxu0
        %v3276 = vpop.f32.mrf.mxu0
        %v3277 = vadd.f32 %v714, %v3276
        %v3278 = vpop.f32.mrf.mxu0
        %3279 = vmatprep.mubr.bf16.mxu0 0
        %3280 = vmatmul.mubr.bf16.gmra.mxu0 %v2183
        %v3281 = vpop.f32.mrf.mxu0
        %v3282 = vadd.f32 %v714, %v3281
        %v3283 = vpop.f32.mrf.mxu0
        %v3284 = vpop.f32.mrf.mxu0
        %v3285 = vadd.f32 %v714, %v3284
        %v3286 = vpop.f32.mrf.mxu0
        %3287 = vmatprep.mubr.bf16.mxu0 0
        %3288 = vmatmul.mubr.bf16.gmra.mxu0 %v2186
        %v3289 = vpop.f32.mrf.mxu0
        %v3290 = vadd.f32 %v714, %v3289
        %v3291 = vpop.f32.mrf.mxu0
        %v3292 = vpop.f32.mrf.mxu0
        %v3293 = vadd.f32 %v714, %v3292
        %v3294 = vpop.f32.mrf.mxu0
        %3295 = vmatprep.mubr.bf16.mxu0 0
        %3296 = vmatmul.mubr.bf16.gmra.mxu0 %v2189
        %v3297 = vpop.f32.mrf.mxu0
        %v3298 = vadd.f32 %v714, %v3297
        %v3299 = vpop.f32.mrf.mxu0
        %v3300 = vpop.f32.mrf.mxu0
        %v3301 = vadd.f32 %v714, %v3300
        %v3302 = vpop.f32.mrf.mxu0
        %3303 = vmatprep.mubr.bf16.mxu0 0
        %3304 = vmatmul.mubr.bf16.gmra.mxu0 %v2192
        %v3305 = vpop.f32.mrf.mxu0
        %v3306 = vadd.f32 %v714, %v3305
        %v3307 = vpop.f32.mrf.mxu0
        %v3308 = vpop.f32.mrf.mxu0
        %v3309 = vadd.f32 %v714, %v3308
        %v3310 = vpop.f32.mrf.mxu0
        %3311 = vmatprep.mubr.bf16.mxu0 0
        %3312 = vmatmul.mubr.bf16.gmra.mxu0 %v2195
        %v3313 = vpop.f32.mrf.mxu0
        %v3314 = vadd.f32 %v714, %v3313
        %v3315 = vpop.f32.mrf.mxu0
        %v3316 = vpop.f32.mrf.mxu0
        %v3317 = vadd.f32 %v714, %v3316
        %v3318 = vpop.f32.mrf.mxu0
        %3319 = vmatprep.mubr.bf16.mxu0 0
        %3320 = vmatmul.mubr.bf16.gmra.mxu0 %v2198
        %v3321 = vpop.f32.mrf.mxu0
        %v3322 = vadd.f32 %v714, %v3321
        %v3323 = vpop.f32.mrf.mxu0
        %v3324 = vpop.f32.mrf.mxu0
        %v3325 = vadd.f32 %v714, %v3324
        %v3326 = vpop.f32.mrf.mxu0
        %3327 = vmatprep.mubr.bf16.mxu0 0
        %3328 = vmatmul.mubr.bf16.gmra.mxu0 %v2201
        %v3329 = vpop.f32.mrf.mxu0
        %v3330 = vadd.f32 %v714, %v3329
        %v3331 = vpop.f32.mrf.mxu0
        %v3332 = vpop.f32.mrf.mxu0
        %v3333 = vadd.f32 %v714, %v3332
        %v3334 = vpop.f32.mrf.mxu0
        %3335 = vmatprep.mubr.bf16.mxu0 0
        %3336 = vmatmul.mubr.bf16.gmra.mxu0 %v2204
        %v3337 = vpop.f32.mrf.mxu0
        %v3338 = vadd.f32 %v714, %v3337
        %v3339 = vpop.f32.mrf.mxu0
        %v3340 = vpop.f32.mrf.mxu0
        %v3341 = vadd.f32 %v714, %v3340
        %v3342 = vpop.f32.mrf.mxu0
        %3343 = vmatprep.mubr.bf16.mxu0 0
        %3344 = vmatmul.mubr.bf16.gmra.mxu0 %v2207
        %v3345 = vpop.f32.mrf.mxu0
        %v3346 = vadd.f32 %v714, %v3345
        %v3347 = vpop.f32.mrf.mxu0
        %v3348 = vpop.f32.mrf.mxu0
        %v3349 = vadd.f32 %v714, %v3348
        %v3350 = vpop.f32.mrf.mxu0
        %3351 = vmatprep.mubr.bf16.mxu0 0
        %3352 = vmatmul.mubr.bf16.gmra.mxu0 %v2210
        %v3353 = vpop.f32.mrf.mxu0
        %v3354 = vadd.f32 %v714, %v3353
        %v3355 = vpop.f32.mrf.mxu0
        %v3356 = vpop.f32.mrf.mxu0
        %v3357 = vadd.f32 %v714, %v3356
        %v3358 = vpop.f32.mrf.mxu0
        %3359 = vmatprep.mubr.bf16.mxu0 0
        %3360 = vmatmul.mubr.bf16.gmra.mxu0 %v2213
        %v3361 = vpop.f32.mrf.mxu0
        %v3362 = vadd.f32 %v714, %v3361
        %v3363 = vpop.f32.mrf.mxu0
        %v3364 = vpop.f32.mrf.mxu0
        %v3365 = vadd.f32 %v714, %v3364
        %v3366 = vpop.f32.mrf.mxu0
        %3367 = vmatprep.mubr.bf16.mxu0 0
        %3368 = vmatmul.mubr.bf16.gmra.mxu0 %v2216
        %v3369 = vpop.f32.mrf.mxu0
        %v3370 = vadd.f32 %v714, %v3369
        %v3371 = vpop.f32.mrf.mxu0
        %v3372 = vpop.f32.mrf.mxu0
        %v3373 = vadd.f32 %v714, %v3372
        %v3374 = vpop.f32.mrf.mxu0
        %3375 = vmatprep.mubr.bf16.mxu0 0
        %3376 = vmatmul.mubr.bf16.gmra.mxu0 %v2219
        %v3377 = vpop.f32.mrf.mxu0
        %v3378 = vadd.f32 %v714, %v3377
        %v3379 = vpop.f32.mrf.mxu0
        %v3380 = vpop.f32.mrf.mxu0
        %v3381 = vadd.f32 %v714, %v3380
        %v3382 = vpop.f32.mrf.mxu0
        %3383 = vmatprep.mubr.bf16.mxu0 0
        %3384 = vmatmul.mubr.bf16.gmra.mxu0 %v2222
        %v3385 = vpop.f32.mrf.mxu0
        %v3386 = vadd.f32 %v714, %v3385
        %v3387 = vpop.f32.mrf.mxu0
        %v3388 = vpop.f32.mrf.mxu0
        %v3389 = vadd.f32 %v714, %v3388
        %v3390 = vpop.f32.mrf.mxu0
        %3391 = vmatprep.mubr.bf16.mxu0 0
        %3392 = vmatmul.mubr.bf16.gmra.mxu0 %v2225
        %v3393 = vpop.f32.mrf.mxu0
        %v3394 = vadd.f32 %v714, %v3393
        %v3395 = vpop.f32.mrf.mxu0
        %v3396 = vpop.f32.mrf.mxu0
        %v3397 = vadd.f32 %v714, %v3396
        %v3398 = vpop.f32.mrf.mxu0
        %3399 = vmatprep.mubr.bf16.mxu0 0
        %3400 = vmatmul.mubr.bf16.gmra.mxu0 %v2228
        %v3401 = vpop.f32.mrf.mxu0
        %v3402 = vadd.f32 %v714, %v3401
        %v3403 = vpop.f32.mrf.mxu0
        %v3404 = vpop.f32.mrf.mxu0
        %v3405 = vadd.f32 %v714, %v3404
        %v3406 = vpop.f32.mrf.mxu0
        %3407 = vmatprep.mubr.bf16.mxu0 0
        %3408 = vmatmul.mubr.bf16.gmra.mxu0 %v2231
        %v3409 = vpop.f32.mrf.mxu0
        %v3410 = vadd.f32 %v714, %v3409
        %v3411 = vpop.f32.mrf.mxu0
        %v3412 = vpop.f32.mrf.mxu0
        %v3413 = vadd.f32 %v714, %v3412
        %v3414 = vpop.f32.mrf.mxu0
        %3415 = vmatprep.mubr.bf16.mxu0 0
        %3416 = vmatmul.mubr.bf16.gmra.mxu0 %v2234
        %v3417 = vpop.f32.mrf.mxu0
        %v3418 = vadd.f32 %v714, %v3417
        %v3419 = vpop.f32.mrf.mxu0
        %v3420 = vpop.f32.mrf.mxu0
        %v3421 = vadd.f32 %v714, %v3420
        %v3422 = vpop.f32.mrf.mxu0
        %3423 = vmatprep.mubr.bf16.mxu0 0
        %3424 = vmatmul.mubr.bf16.gmra.mxu0 %v2237
        %v3425 = vpop.f32.mrf.mxu0
        %v3426 = vadd.f32 %v714, %v3425
        %v3427 = vpop.f32.mrf.mxu0
        %v3428 = vpop.f32.mrf.mxu0
        %v3429 = vadd.f32 %v714, %v3428
        %v3430 = vpop.f32.mrf.mxu0
        %3431 = vmatprep.mubr.bf16.mxu0 0
        %3432 = vmatmul.mubr.bf16.gmra.mxu0 %v2240
        %v3433 = vpop.f32.mrf.mxu0
        %v3434 = vadd.f32 %v714, %v3433
        %v3435 = vpop.f32.mrf.mxu0
        %v3436 = vpop.f32.mrf.mxu0
        %v3437 = vadd.f32 %v714, %v3436
        %v3438 = vpop.f32.mrf.mxu0
        %3439 = vmatprep.mubr.bf16.mxu0 0
        %3440 = vmatmul.mubr.bf16.gmra.mxu0 %v2243
        %v3441 = vpop.f32.mrf.mxu0
        %v3442 = vadd.f32 %v714, %v3441
        %v3443 = vpop.f32.mrf.mxu0
        %v3444 = vpop.f32.mrf.mxu0
        %v3445 = vadd.f32 %v714, %v3444
        %v3446 = vpop.f32.mrf.mxu0
        %3447 = vmatprep.mubr.bf16.mxu0 0
        %3448 = vmatmul.mubr.bf16.gmra.mxu0 %v2246
        %v3449 = vpop.f32.mrf.mxu0
        %v3450 = vadd.f32 %v714, %v3449
        %v3451 = vpop.f32.mrf.mxu0
        %v3452 = vpop.f32.mrf.mxu0
        %v3453 = vadd.f32 %v714, %v3452
        %v3454 = vpop.f32.mrf.mxu0
        %3455 = vmatprep.mubr.bf16.mxu0 0
        %3456 = vmatmul.mubr.bf16.gmra.mxu0 %v2249
        %v3457 = vpop.f32.mrf.mxu0
        %v3458 = vadd.f32 %v714, %v3457
        %v3459 = vpop.f32.mrf.mxu0
        %v3460 = vpop.f32.mrf.mxu0
        %v3461 = vadd.f32 %v714, %v3460
        %v3462 = vpop.f32.mrf.mxu0
        %3463 = vmatprep.mubr.bf16.mxu0 0
        %3464 = vmatmul.mubr.bf16.gmra.mxu0 %v2252
        %v3465 = vpop.f32.mrf.mxu0
        %v3466 = vadd.f32 %v714, %v3465
        %v3467 = vpop.f32.mrf.mxu0
        %v3468 = vpop.f32.mrf.mxu0
        %v3469 = vadd.f32 %v714, %v3468
        %v3470 = vpop.f32.mrf.mxu0
        %3471 = vmatprep.mubr.bf16.mxu0 0
        %3472 = vmatmul.mubr.bf16.gmra.mxu0 %v2255
        %v3473 = vpop.f32.mrf.mxu0
        %v3474 = vadd.f32 %v714, %v3473
        %v3475 = vpop.f32.mrf.mxu0
        %v3476 = vpop.f32.mrf.mxu0
        %v3477 = vadd.f32 %v714, %v3476
        %v3478 = vpop.f32.mrf.mxu0
        %3479 = vmatprep.mubr.bf16.mxu0 0
        %3480 = vmatmul.mubr.bf16.gmra.mxu0 %v2258
        %v3481 = vpop.f32.mrf.mxu0
        %v3482 = vadd.f32 %v714, %v3481
        %v3483 = vpop.f32.mrf.mxu0
        %v3484 = vpop.f32.mrf.mxu0
        %v3485 = vadd.f32 %v714, %v3484
        %v3486 = vpop.f32.mrf.mxu0
        %3487 = vmatprep.mubr.bf16.mxu0 0
        %3488 = vmatmul.mubr.bf16.gmra.mxu0 %v2261
        %v3489 = vpop.f32.mrf.mxu0
        %v3490 = vadd.f32 %v714, %v3489
        %v3491 = vpop.f32.mrf.mxu0
        %v3492 = vpop.f32.mrf.mxu0
        %v3493 = vadd.f32 %v714, %v3492
        %v3494 = vpop.f32.mrf.mxu0
        %3495 = vmatprep.mubr.bf16.mxu0 0
        %3496 = vmatmul.mubr.bf16.gmra.mxu0 %v2264
        %v3497 = vpop.f32.mrf.mxu0
        %v3498 = vadd.f32 %v714, %v3497
        %v3499 = vpop.f32.mrf.mxu0
        %v3500 = vpop.f32.mrf.mxu0
        %v3501 = vadd.f32 %v714, %v3500
        %v3502 = vpop.f32.mrf.mxu0
        %3503 = vmatprep.mubr.bf16.mxu0 0
        %3504 = vmatmul.mubr.bf16.gmra.mxu0 %v2267
        %v3505 = vpop.f32.mrf.mxu0
        %v3506 = vadd.f32 %v714, %v3505
        %v3507 = vpop.f32.mrf.mxu0
        %v3508 = vpop.f32.mrf.mxu0
        %v3509 = vadd.f32 %v714, %v3508
        %v3510 = vpop.f32.mrf.mxu0
        %3511 = vmatprep.mubr.bf16.mxu0 0
        %3512 = vmatmul.mubr.bf16.gmra.mxu0 %v2270
        %v3513 = vpop.f32.mrf.mxu0
        %v3514 = vadd.f32 %v714, %v3513
        %v3515 = vpop.f32.mrf.mxu0
        %v3516 = vpop.f32.mrf.mxu0
        %v3517 = vadd.f32 %v714, %v3516
        %v3518 = vpop.f32.mrf.mxu0
        %3519 = vmatprep.mubr.bf16.mxu0 0
        %3520 = vmatmul.mubr.bf16.gmra.mxu0 %v2273
        %v3521 = vpop.f32.mrf.mxu0
        %v3522 = vadd.f32 %v714, %v3521
        %v3523 = vpop.f32.mrf.mxu0
        %v3524 = vpop.f32.mrf.mxu0
        %v3525 = vadd.f32 %v714, %v3524
        %v3526 = vpop.f32.mrf.mxu0
        %3527 = vmatprep.mubr.bf16.mxu0 0
        %3528 = vmatmul.mubr.bf16.gmra.mxu0 %v2276
        %v3529 = vpop.f32.mrf.mxu0
        %v3530 = vadd.f32 %v714, %v3529
        %v3531 = vpop.f32.mrf.mxu0
        %v3532 = vpop.f32.mrf.mxu0
        %v3533 = vadd.f32 %v714, %v3532
        %v3534 = vpop.f32.mrf.mxu0
        %3535 = vmatprep.mubr.bf16.mxu0 0
        %3536 = vmatmul.mubr.bf16.gmra.mxu0 %v2279
        %v3537 = vpop.f32.mrf.mxu0
        %v3538 = vadd.f32 %v714, %v3537
        %v3539 = vpop.f32.mrf.mxu0
        %v3540 = vpop.f32.mrf.mxu0
        %v3541 = vadd.f32 %v714, %v3540
        %v3542 = vpop.f32.mrf.mxu0
        %3543 = vmatprep.mubr.bf16.mxu0 0
        %3544 = vmatmul.mubr.bf16.gmra.mxu0 %v2282
        %v3545 = vpop.f32.mrf.mxu0
        %v3546 = vadd.f32 %v714, %v3545
        %v3547 = vpop.f32.mrf.mxu0
        %v3548 = vpop.f32.mrf.mxu0
        %v3549 = vadd.f32 %v714, %v3548
        %v3550 = vpop.f32.mrf.mxu0
        %3551 = vmatprep.mubr.bf16.mxu0 0
        %3552 = vmatmul.mubr.bf16.gmra.mxu0 %v2285
        %v3553 = vpop.f32.mrf.mxu0
        %v3554 = vadd.f32 %v714, %v3553
        %v3555 = vpop.f32.mrf.mxu0
        %v3556 = vpop.f32.mrf.mxu0
        %v3557 = vadd.f32 %v714, %v3556
        %v3558 = vpop.f32.mrf.mxu0
        %3559 = vmatprep.mubr.bf16.mxu0 0
        %3560 = vmatmul.mubr.bf16.gmra.mxu0 %v2288
        %v3561 = vpop.f32.mrf.mxu0
        %v3562 = vadd.f32 %v714, %v3561
        %v3563 = vpop.f32.mrf.mxu0
        %v3564 = vpop.f32.mrf.mxu0
        %v3565 = vadd.f32 %v714, %v3564
        %v3566 = vpop.f32.mrf.mxu0
        %3567 = vmatprep.mubr.bf16.mxu0 0
        %3568 = vmatmul.mubr.bf16.gmra.mxu0 %v2291
        %v3569 = vpop.f32.mrf.mxu0
        %v3570 = vadd.f32 %v714, %v3569
        %v3571 = vpop.f32.mrf.mxu0
        %v3572 = vpop.f32.mrf.mxu0
        %v3573 = vadd.f32 %v714, %v3572
        %v3574 = vpop.f32.mrf.mxu0
        %3575 = vmatprep.mubr.bf16.mxu0 0
        %3576 = vmatmul.mubr.bf16.gmra.mxu0 %v2294
        %v3577 = vpop.f32.mrf.mxu0
        %v3578 = vadd.f32 %v714, %v3577
        %v3579 = vpop.f32.mrf.mxu0
        %v3580 = vpop.f32.mrf.mxu0
        %v3581 = vadd.f32 %v714, %v3580
        %v3582 = vpop.f32.mrf.mxu0
        %3583 = vmatprep.mubr.bf16.mxu0 0
        %3584 = vmatmul.mubr.bf16.gmra.mxu0 %v2297
        %v3585 = vpop.f32.mrf.mxu0
        %v3586 = vadd.f32 %v714, %v3585
        %v3587 = vpop.f32.mrf.mxu0
        %v3588 = vpop.f32.mrf.mxu0
        %v3589 = vadd.f32 %v714, %v3588
        %v3590 = vpop.f32.mrf.mxu0
        %3591 = vmatprep.mubr.bf16.mxu0 0
        %3592 = vmatmul.mubr.bf16.gmra.mxu0 %v2300
        %v3593 = vpop.f32.mrf.mxu0
        %v3594 = vadd.f32 %v714, %v3593
        %v3595 = vpop.f32.mrf.mxu0
        %v3596 = vpop.f32.mrf.mxu0
        %v3597 = vadd.f32 %v714, %v3596
        %v3598 = vpop.f32.mrf.mxu0
        %3599 = vmatprep.mubr.bf16.mxu0 0
        %3600 = vmatmul.mubr.bf16.gmra.mxu0 %v2303
        %v3601 = vpop.f32.mrf.mxu0
        %v3602 = vadd.f32 %v714, %v3601
        %v3603 = vpop.f32.mrf.mxu0
        %v3604 = vpop.f32.mrf.mxu0
        %v3605 = vadd.f32 %v714, %v3604
        %v3606 = vpop.f32.mrf.mxu0
        %3607 = vmatprep.mubr.bf16.mxu0 0
        %3608 = vmatmul.mubr.bf16.gmra.mxu0 %v2306
        %v3609 = vpop.f32.mrf.mxu0
        %v3610 = vadd.f32 %v714, %v3609
        %v3611 = vpop.f32.mrf.mxu0
        %v3612 = vpop.f32.mrf.mxu0
        %v3613 = vadd.f32 %v714, %v3612
        %v3614 = vpop.f32.mrf.mxu0
        %3615 = vmatprep.mubr.bf16.mxu0 0
        %3616 = vmatmul.mubr.bf16.gmra.mxu0 %v2309
        %v3617 = vpop.f32.mrf.mxu0
        %v3618 = vadd.f32 %v714, %v3617
        %v3619 = vpop.f32.mrf.mxu0
        %v3620 = vpop.f32.mrf.mxu0
        %v3621 = vadd.f32 %v714, %v3620
        %v3622 = vpop.f32.mrf.mxu0
        %3623 = vmatprep.mubr.bf16.mxu0 0
        %3624 = vmatmul.mubr.bf16.gmra.mxu0 %v2312
        %v3625 = vpop.f32.mrf.mxu0
        %v3626 = vadd.f32 %v714, %v3625
        %v3627 = vpop.f32.mrf.mxu0
        %v3628 = vpop.f32.mrf.mxu0
        %v3629 = vadd.f32 %v714, %v3628
        %v3630 = vpop.f32.mrf.mxu0
        %3631 = vmatprep.mubr.bf16.mxu0 0
        %3632 = vmatmul.mubr.bf16.gmra.mxu0 %v2315
        %v3633 = vpop.f32.mrf.mxu0
        %v3634 = vadd.f32 %v714, %v3633
        %v3635 = vpop.f32.mrf.mxu0
        %v3636 = vpop.f32.mrf.mxu0
        %v3637 = vadd.f32 %v714, %v3636
        %v3638 = vpop.f32.mrf.mxu0
        %3639 = vmatprep.mubr.bf16.mxu0 0
        %3640 = vmatmul.mubr.bf16.gmra.mxu0 %v2318
        %v3641 = vpop.f32.mrf.mxu0
        %v3642 = vadd.f32 %v714, %v3641
        %v3643 = vpop.f32.mrf.mxu0
        %v3644 = vpop.f32.mrf.mxu0
        %v3645 = vadd.f32 %v714, %v3644
        %v3646 = vpop.f32.mrf.mxu0
        %3647 = vmatprep.mubr.bf16.mxu0 0
        %3648 = vmatmul.mubr.bf16.gmra.mxu0 %v2321
        %v3649 = vpop.f32.mrf.mxu0
        %v3650 = vadd.f32 %v714, %v3649
        %v3651 = vpop.f32.mrf.mxu0
        %v3652 = vpop.f32.mrf.mxu0
        %v3653 = vadd.f32 %v714, %v3652
        %v3654 = vpop.f32.mrf.mxu0
        %3655 = vmatprep.mubr.bf16.mxu0 0
        %3656 = vmatmul.mubr.bf16.gmra.mxu0 %v2324
        %v3657 = vpop.f32.mrf.mxu0
        %v3658 = vadd.f32 %v714, %v3657
        %v3659 = vpop.f32.mrf.mxu0
        %v3660 = vpop.f32.mrf.mxu0
        %v3661 = vadd.f32 %v714, %v3660
        %v3662 = vpop.f32.mrf.mxu0
        %3663 = vmatprep.mubr.bf16.mxu0 0
        %3664 = vmatmul.mubr.bf16.gmra.mxu0 %v2327
        %v3665 = vpop.f32.mrf.mxu0
        %v3666 = vadd.f32 %v714, %v3665
        %v3667 = vpop.f32.mrf.mxu0
        %v3668 = vpop.f32.mrf.mxu0
        %v3669 = vadd.f32 %v714, %v3668
        %v3670 = vpop.f32.mrf.mxu0
        %3671 = vmatprep.mubr.bf16.mxu0 0
        %3672 = vmatmul.mubr.bf16.gmra.mxu0 %v2330
        %v3673 = vpop.f32.mrf.mxu0
        %v3674 = vadd.f32 %v714, %v3673
        %v3675 = vpop.f32.mrf.mxu0
        %v3676 = vpop.f32.mrf.mxu0
        %v3677 = vadd.f32 %v714, %v3676
        %v3678 = vpop.f32.mrf.mxu0
        %3679 = vmatprep.mubr.bf16.mxu0 0
        %3680 = vmatmul.mubr.bf16.gmra.mxu0 %v2333
        %v3681 = vpop.f32.mrf.mxu0
        %v3682 = vadd.f32 %v714, %v3681
        %v3683 = vpop.f32.mrf.mxu0
        %v3684 = vpop.f32.mrf.mxu0
        %v3685 = vadd.f32 %v714, %v3684
        %v3686 = vpop.f32.mrf.mxu0
        %3687 = vmatprep.mubr.bf16.mxu0 0
        %3688 = vmatmul.mubr.bf16.gmra.mxu0 %v2336
        %v3689 = vpop.f32.mrf.mxu0
        %v3690 = vadd.f32 %v714, %v3689
        %v3691 = vpop.f32.mrf.mxu0
        %v3692 = vpop.f32.mrf.mxu0
        %v3693 = vadd.f32 %v714, %v3692
        %v3694 = vpop.f32.mrf.mxu0
        %3695 = vmatprep.mubr.bf16.mxu0 0
        %3696 = vmatmul.mubr.bf16.gmra.mxu0 %v2339
        %v3697 = vpop.f32.mrf.mxu0
        %v3698 = vadd.f32 %v714, %v3697
        %v3699 = vpop.f32.mrf.mxu0
        %v3700 = vpop.f32.mrf.mxu0
        %v3701 = vadd.f32 %v714, %v3700
        %v3702 = vpop.f32.mrf.mxu0
        %3703 = vmatprep.mubr.bf16.mxu0 0
        %3704 = vmatmul.mubr.bf16.gmra.mxu0 %v2342
        %v3705 = vpop.f32.mrf.mxu0
        %v3706 = vadd.f32 %v714, %v3705
        %v3707 = vpop.f32.mrf.mxu0
        %v3708 = vpop.f32.mrf.mxu0
        %v3709 = vadd.f32 %v714, %v3708
        %v3710 = vpop.f32.mrf.mxu0
        %3711 = vmatprep.mubr.bf16.mxu0 0
        %3712 = vmatmul.mubr.bf16.gmra.mxu0 %v2345
        %v3713 = vpop.f32.mrf.mxu0
        %v3714 = vadd.f32 %v714, %v3713
        %v3715 = vpop.f32.mrf.mxu0
        %v3716 = vpop.f32.mrf.mxu0
        %v3717 = vadd.f32 %v714, %v3716
        %v3718 = vpop.f32.mrf.mxu0
        %3719 = vmatprep.mubr.bf16.mxu0 0
        %3720 = vmatmul.mubr.bf16.gmra.mxu0 %v2348
        %v3721 = vpop.f32.mrf.mxu0
        %v3722 = vadd.f32 %v714, %v3721
        %v3723 = vpop.f32.mrf.mxu0
        %v3724 = vpop.f32.mrf.mxu0
        %v3725 = vadd.f32 %v714, %v3724
        %v3726 = vpop.f32.mrf.mxu0
        %3727 = vmatprep.mubr.bf16.mxu0 0
        %3728 = vmatmul.mubr.bf16.gmra.mxu0 %v2351
        %v3729 = vpop.f32.mrf.mxu0
        %v3730 = vadd.f32 %v714, %v3729
        %v3731 = vpop.f32.mrf.mxu0
        %v3732 = vpop.f32.mrf.mxu0
        %v3733 = vadd.f32 %v714, %v3732
        %v3734 = vpop.f32.mrf.mxu0
        %3735 = vmatprep.mubr.bf16.mxu0 0
        %3736 = vmatmul.mubr.bf16.gmra.mxu0 %v2354
        %v3737 = vpop.f32.mrf.mxu0
        %v3738 = vadd.f32 %v714, %v3737
        %v3739 = vpop.f32.mrf.mxu0
        %v3740 = vpop.f32.mrf.mxu0
        %v3741 = vadd.f32 %v714, %v3740
        %v3742 = vpop.f32.mrf.mxu0
        %3743 = vmatprep.mubr.bf16.mxu0 0
        %3744 = vmatmul.mubr.bf16.gmra.mxu0 %v2357
        %v3745 = vpop.f32.mrf.mxu0
        %v3746 = vadd.f32 %v714, %v3745
        %v3747 = vpop.f32.mrf.mxu0
        %v3748 = vpop.f32.mrf.mxu0
        %v3749 = vadd.f32 %v714, %v3748
        %v3750 = vpop.f32.mrf.mxu0
        %3751 = vmatprep.mubr.bf16.mxu0 0
        %3752 = vmatmul.mubr.bf16.gmra.mxu0 %v2360
        %v3753 = vpop.f32.mrf.mxu0
        %v3754 = vadd.f32 %v714, %v3753
        %v3755 = vpop.f32.mrf.mxu0
        %v3756 = vpop.f32.mrf.mxu0
        %v3757 = vadd.f32 %v714, %v3756
        %v3758 = vpop.f32.mrf.mxu0
        %3759 = vmatprep.mubr.bf16.mxu0 0
        %3760 = vmatmul.mubr.bf16.gmra.mxu0 %v2363
        %v3761 = vpop.f32.mrf.mxu0
        %v3762 = vadd.f32 %v714, %v3761
        %v3763 = vpop.f32.mrf.mxu0
        %v3764 = vpop.f32.mrf.mxu0
        %v3765 = vadd.f32 %v714, %v3764
        %v3766 = vpop.f32.mrf.mxu0
        %3767 = vmatprep.mubr.bf16.mxu0 0
        %3768 = vmatmul.mubr.bf16.gmra.mxu0 %v2366
        %v3769 = vpop.f32.mrf.mxu0
        %v3770 = vadd.f32 %v714, %v3769
        %v3771 = vpop.f32.mrf.mxu0
        %v3772 = vpop.f32.mrf.mxu0
        %v3773 = vadd.f32 %v714, %v3772
        %v3774 = vpop.f32.mrf.mxu0
        %3775 = vmatprep.mubr.bf16.mxu0 0
        %3776 = vmatmul.mubr.bf16.gmra.mxu0 %v2369
        %v3777 = vpop.f32.mrf.mxu0
        %v3778 = vadd.f32 %v714, %v3777
        %v3779 = vpop.f32.mrf.mxu0
        %v3780 = vpop.f32.mrf.mxu0
        %v3781 = vadd.f32 %v714, %v3780
        %v3782 = vpop.f32.mrf.mxu0
        %3783 = vmatprep.mubr.bf16.mxu0 0
        %3784 = vmatmul.mubr.bf16.gmra.mxu0 %v2372
        %v3785 = vpop.f32.mrf.mxu0
        %v3786 = vadd.f32 %v714, %v3785
        %v3787 = vpop.f32.mrf.mxu0
        %v3788 = vpop.f32.mrf.mxu0
        %v3789 = vadd.f32 %v714, %v3788
        %v3790 = vpop.f32.mrf.mxu0
        %3791 = vmatprep.mubr.bf16.mxu0 0
        %3792 = vmatmul.mubr.bf16.gmra.mxu0 %v2375
        %v3793 = vpop.f32.mrf.mxu0
        %v3794 = vadd.f32 %v714, %v3793
        %v3795 = vpop.f32.mrf.mxu0
        %v3796 = vpop.f32.mrf.mxu0
        %v3797 = vadd.f32 %v714, %v3796
        %v3798 = vpop.f32.mrf.mxu0
        %3799 = vmatprep.mubr.bf16.mxu0 0
        %3800 = vmatmul.mubr.bf16.gmra.mxu0 %v2378
        %v3801 = vpop.f32.mrf.mxu0
        %v3802 = vadd.f32 %v714, %v3801
        %v3803 = vpop.f32.mrf.mxu0
        %v3804 = vpop.f32.mrf.mxu0
        %v3805 = vadd.f32 %v714, %v3804
        %v3806 = vpop.f32.mrf.mxu0
        %3807 = vmatprep.mubr.bf16.mxu0 0
        %3808 = vmatmul.mubr.bf16.gmra.mxu0 %v2381
        %v3809 = vpop.f32.mrf.mxu0
        %v3810 = vadd.f32 %v714, %v3809
        %v3811 = vpop.f32.mrf.mxu0
        %v3812 = vpop.f32.mrf.mxu0
        %v3813 = vadd.f32 %v714, %v3812
        %v3814 = vpop.f32.mrf.mxu0
        %3815 = vmatprep.mubr.bf16.mxu0 0
        %3816 = vmatmul.mubr.bf16.gmra.mxu0 %v2384
        %v3817 = vpop.f32.mrf.mxu0
        %v3818 = vadd.f32 %v714, %v3817
        %v3819 = vpop.f32.mrf.mxu0
        %v3820 = vpop.f32.mrf.mxu0
        %v3821 = vadd.f32 %v714, %v3820
        %v3822 = vpop.f32.mrf.mxu0
        %3823 = vmatprep.mubr.bf16.mxu0 0
        %3824 = vmatmul.mubr.bf16.gmra.mxu0 %v2387
        %v3825 = vpop.f32.mrf.mxu0
        %v3826 = vadd.f32 %v714, %v3825
        %v3827 = vpop.f32.mrf.mxu0
        %v3828 = vpop.f32.mrf.mxu0
        %v3829 = vadd.f32 %v714, %v3828
        %v3830 = vpop.f32.mrf.mxu0
        %3831 = vmatprep.mubr.bf16.mxu0 0
        %3832 = vmatmul.mubr.bf16.gmra.mxu0 %v2390
        %v3833 = vpop.f32.mrf.mxu0
        %v3834 = vadd.f32 %v714, %v3833
        %v3835 = vpop.f32.mrf.mxu0
        %v3836 = vpop.f32.mrf.mxu0
        %v3837 = vadd.f32 %v714, %v3836
        %v3838 = vpop.f32.mrf.mxu0
        %3839 = vmatprep.mubr.bf16.mxu0 0
        %3840 = vmatmul.mubr.bf16.gmra.mxu0 %v2393
        %v3841 = vpop.f32.mrf.mxu0
        %v3842 = vadd.f32 %v714, %v3841
        %v3843 = vpop.f32.mrf.mxu0
        %v3844 = vpop.f32.mrf.mxu0
        %v3845 = vadd.f32 %v714, %v3844
        %v3846 = vpop.f32.mrf.mxu0
        %3847 = vmatprep.mubr.bf16.mxu0 0
        %3848 = vmatmul.mubr.bf16.gmra.mxu0 %v2396
        %v3849 = vpop.f32.mrf.mxu0
        %v3850 = vadd.f32 %v714, %v3849
        %v3851 = vpop.f32.mrf.mxu0
        %v3852 = vpop.f32.mrf.mxu0
        %v3853 = vadd.f32 %v714, %v3852
        %v3854 = vpop.f32.mrf.mxu0
        %3855 = vmatprep.mubr.bf16.mxu0 0
        %3856 = vmatmul.mubr.bf16.gmra.mxu0 %v2399
        %v3857 = vpop.f32.mrf.mxu0
        %v3858 = vadd.f32 %v714, %v3857
        %v3859 = vpop.f32.mrf.mxu0
        %v3860 = vpop.f32.mrf.mxu0
        %v3861 = vadd.f32 %v714, %v3860
        %v3862 = vpop.f32.mrf.mxu0
        %3863 = vmatprep.mubr.bf16.mxu0 0
        %3864 = vmatmul.mubr.bf16.gmra.mxu0 %v2402
        %v3865 = vpop.f32.mrf.mxu0
        %v3866 = vadd.f32 %v714, %v3865
        %v3867 = vpop.f32.mrf.mxu0
        %v3868 = vpop.f32.mrf.mxu0
        %v3869 = vadd.f32 %v714, %v3868
        %v3870 = vpop.f32.mrf.mxu0
        %3871 = vmatprep.mubr.bf16.mxu0 0
        %3872 = vmatmul.mubr.bf16.gmra.mxu0 %v2405
        %v3873 = vpop.f32.mrf.mxu0
        %v3874 = vadd.f32 %v714, %v3873
        %v3875 = vpop.f32.mrf.mxu0
        %v3876 = vpop.f32.mrf.mxu0
        %v3877 = vadd.f32 %v714, %v3876
        %v3878 = vpop.f32.mrf.mxu0
        %3879 = vmatprep.mubr.bf16.mxu0 0
        %3880 = vmatmul.mubr.bf16.gmra.mxu0 %v2408
        %v3881 = vpop.f32.mrf.mxu0
        %v3882 = vadd.f32 %v714, %v3881
        %v3883 = vpop.f32.mrf.mxu0
        %v3884 = vpop.f32.mrf.mxu0
        %v3885 = vadd.f32 %v714, %v3884
        %v3886 = vpop.f32.mrf.mxu0
        %3887 = vmatprep.mubr.bf16.mxu0 0
        %3888 = vmatmul.mubr.bf16.gmra.mxu0 %v2411
        %v3889 = vpop.f32.mrf.mxu0
        %v3890 = vadd.f32 %v714, %v3889
        %v3891 = vpop.f32.mrf.mxu0
        %v3892 = vpop.f32.mrf.mxu0
        %v3893 = vadd.f32 %v714, %v3892
        %v3894 = vpop.f32.mrf.mxu0
        %3895 = vmatprep.mubr.bf16.mxu0 0
        %3896 = vmatmul.mubr.bf16.gmra.mxu0 %v2414
        %v3897 = vpop.f32.mrf.mxu0
        %v3898 = vadd.f32 %v714, %v3897
        %v3899 = vpop.f32.mrf.mxu0
        %v3900 = vpop.f32.mrf.mxu0
        %v3901 = vadd.f32 %v714, %v3900
        %v3902 = vpop.f32.mrf.mxu0
        %3903 = vmatprep.mubr.bf16.mxu0 0
        %3904 = vmatmul.mubr.bf16.gmra.mxu0 %v2417
        %v3905 = vpop.f32.mrf.mxu0
        %v3906 = vadd.f32 %v714, %v3905
        %v3907 = vpop.f32.mrf.mxu0
        %v3908 = vpop.f32.mrf.mxu0
        %v3909 = vadd.f32 %v714, %v3908
        %v3910 = vpop.f32.mrf.mxu0
        %3911 = vmatprep.mubr.bf16.mxu0 0
        %3912 = vmatmul.mubr.bf16.gmra.mxu0 %v2420
        %v3913 = vpop.f32.mrf.mxu0
        %v3914 = vadd.f32 %v714, %v3913
        %v3915 = vpop.f32.mrf.mxu0
        %v3916 = vpop.f32.mrf.mxu0
        %v3917 = vadd.f32 %v714, %v3916
        %v3918 = vpop.f32.mrf.mxu0
        %3919 = vmatprep.mubr.bf16.mxu0 0
        %3920 = vmatmul.mubr.bf16.gmra.mxu0 %v2423
        %v3921 = vpop.f32.mrf.mxu0
        %v3922 = vadd.f32 %v714, %v3921
        %v3923 = vpop.f32.mrf.mxu0
        %v3924 = vpop.f32.mrf.mxu0
        %v3925 = vadd.f32 %v714, %v3924
        %v3926 = vpop.f32.mrf.mxu0
        %3927 = vmatprep.mubr.bf16.mxu0 0
        %3928 = vmatmul.mubr.bf16.gmra.mxu0 %v2426
        %v3929 = vpop.f32.mrf.mxu0
        %v3930 = vadd.f32 %v714, %v3929
        %v3931 = vpop.f32.mrf.mxu0
        %v3932 = vpop.f32.mrf.mxu0
        %v3933 = vadd.f32 %v714, %v3932
        %v3934 = vpop.f32.mrf.mxu0
        %3935 = vmatprep.mubr.bf16.mxu0 0
        %3936 = vmatmul.mubr.bf16.gmra.mxu0 %v2429
        %v3937 = vpop.f32.mrf.mxu0
        %v3938 = vadd.f32 %v714, %v3937
        %v3939 = vpop.f32.mrf.mxu0
        %v3940 = vpop.f32.mrf.mxu0
        %v3941 = vadd.f32 %v714, %v3940
        %v3942 = vpop.f32.mrf.mxu0
        %3943 = vmatprep.mubr.bf16.mxu0 0
        %3944 = vmatmul.mubr.bf16.gmra.mxu0 %v2432
        %v3945 = vpop.f32.mrf.mxu0
        %v3946 = vadd.f32 %v714, %v3945
        %v3947 = vpop.f32.mrf.mxu0
        %v3948 = vpop.f32.mrf.mxu0
        %v3949 = vadd.f32 %v714, %v3948
        %v3950 = vpop.f32.mrf.mxu0
        %3951 = vmatprep.mubr.bf16.mxu0 0
        %3952 = vmatmul.mubr.bf16.gmra.mxu0 %v2435
        %v3953 = vpop.f32.mrf.mxu0
        %v3954 = vadd.f32 %v714, %v3953
        %v3955 = vpop.f32.mrf.mxu0
        %v3956 = vpop.f32.mrf.mxu0
        %v3957 = vadd.f32 %v714, %v3956
        %v3958 = vpop.f32.mrf.mxu0
        %3959 = vmatprep.mubr.bf16.mxu0 0
        %3960 = vmatmul.mubr.bf16.gmra.mxu0 %v2438
        %v3961 = vpop.f32.mrf.mxu0
        %v3962 = vadd.f32 %v714, %v3961
        %v3963 = vpop.f32.mrf.mxu0
        %v3964 = vpop.f32.mrf.mxu0
        %v3965 = vadd.f32 %v714, %v3964
        %v3966 = vpop.f32.mrf.mxu0
        %3967 = vmatprep.mubr.bf16.mxu0 0
        %3968 = vmatmul.mubr.bf16.gmra.mxu0 %v2441
        %v3969 = vpop.f32.mrf.mxu0
        %v3970 = vadd.f32 %v714, %v3969
        %v3971 = vpop.f32.mrf.mxu0
        %v3972 = vpop.f32.mrf.mxu0
        %v3973 = vadd.f32 %v714, %v3972
        %v3974 = vpop.f32.mrf.mxu0
        %3975 = vmatprep.mubr.bf16.mxu0 0
        %3976 = vmatmul.mubr.bf16.gmra.mxu0 %v2444
        %v3977 = vpop.f32.mrf.mxu0
        %v3978 = vadd.f32 %v714, %v3977
        %v3979 = vpop.f32.mrf.mxu0
        %v3980 = vpop.f32.mrf.mxu0
        %v3981 = vadd.f32 %v714, %v3980
        %v3982 = vpop.f32.mrf.mxu0
        %3983 = vmatprep.mubr.bf16.mxu0 0
        %3984 = vmatmul.mubr.bf16.gmra.mxu0 %v2447
        %v3985 = vpop.f32.mrf.mxu0
        %v3986 = vadd.f32 %v714, %v3985
        %v3987 = vpop.f32.mrf.mxu0
        %v3988 = vpop.f32.mrf.mxu0
        %v3989 = vadd.f32 %v714, %v3988
        %v3990 = vpop.f32.mrf.mxu0
        %3991 = vmatprep.mubr.bf16.mxu0 0
        %3992 = vmatmul.mubr.bf16.gmra.mxu0 %v2450
        %v3993 = vpop.f32.mrf.mxu0
        %v3994 = vadd.f32 %v714, %v3993
        %v3995 = vpop.f32.mrf.mxu0
        %v3996 = vpop.f32.mrf.mxu0
        %v3997 = vadd.f32 %v714, %v3996
        %v3998 = vpop.f32.mrf.mxu0
        %3999 = vmatprep.mubr.bf16.mxu0 0
        %4000 = vmatmul.mubr.bf16.gmra.mxu0 %v2453
        %v4001 = vpop.f32.mrf.mxu0
        %v4002 = vadd.f32 %v714, %v4001
        %v4003 = vpop.f32.mrf.mxu0
        %v4004 = vpop.f32.mrf.mxu0
        %v4005 = vadd.f32 %v714, %v4004
        %v4006 = vpop.f32.mrf.mxu0
        %4007 = vmatprep.mubr.bf16.mxu0 0
        %4008 = vmatmul.mubr.bf16.gmra.mxu0 %v2456
        %v4009 = vpop.f32.mrf.mxu0
        %v4010 = vadd.f32 %v714, %v4009
        %v4011 = vpop.f32.mrf.mxu0
        %v4012 = vpop.f32.mrf.mxu0
        %v4013 = vadd.f32 %v714, %v4012
        %v4014 = vpop.f32.mrf.mxu0
        %4015 = vmatprep.mubr.bf16.mxu0 0
        %4016 = vmatmul.mubr.bf16.gmra.mxu0 %v2459
        %v4017 = vpop.f32.mrf.mxu0
        %v4018 = vadd.f32 %v714, %v4017
        %v4019 = vpop.f32.mrf.mxu0
        %v4020 = vpop.f32.mrf.mxu0
        %v4021 = vadd.f32 %v714, %v4020
        %v4022 = vpop.f32.mrf.mxu0
        %4023 = vmatprep.mubr.bf16.mxu0 0
        %4024 = vmatmul.mubr.bf16.gmra.mxu0 %v2462
        %v4025 = vpop.f32.mrf.mxu0
        %v4026 = vadd.f32 %v714, %v4025
        %v4027 = vpop.f32.mrf.mxu0
        %v4028 = vpop.f32.mrf.mxu0
        %v4029 = vadd.f32 %v714, %v4028
        %v4030 = vpop.f32.mrf.mxu0
        %4031 = vmatprep.mubr.bf16.mxu0 0
        %4032 = vmatmul.mubr.bf16.gmra.mxu0 %v2465
        %v4033 = vpop.f32.mrf.mxu0
        %v4034 = vadd.f32 %v714, %v4033
        %v4035 = vpop.f32.mrf.mxu0
        %v4036 = vpop.f32.mrf.mxu0
        %v4037 = vadd.f32 %v714, %v4036
        %v4038 = vpop.f32.mrf.mxu0
        %4039 = vmatprep.mubr.bf16.mxu0 0
        %4040 = vmatmul.mubr.bf16.gmra.mxu0 %v2468
        %v4041 = vpop.f32.mrf.mxu0
        %v4042 = vadd.f32 %v714, %v4041
        %v4043 = vpop.f32.mrf.mxu0
        %v4044 = vpop.f32.mrf.mxu0
        %v4045 = vadd.f32 %v714, %v4044
        %v4046 = vpop.f32.mrf.mxu0
        %4047 = vmatprep.mubr.bf16.mxu0 0
        %4048 = vmatmul.mubr.bf16.gmra.mxu0 %v2471
        %v4049 = vpop.f32.mrf.mxu0
        %v4050 = vadd.f32 %v714, %v4049
        %v4051 = vpop.f32.mrf.mxu0
        %v4052 = vpop.f32.mrf.mxu0
        %v4053 = vadd.f32 %v714, %v4052
        %v4054 = vpop.f32.mrf.mxu0
        %4055 = vmatprep.mubr.bf16.mxu0 0
        %4056 = vmatmul.mubr.bf16.gmra.mxu0 %v2474
        %v4057 = vpop.f32.mrf.mxu0
        %v4058 = vadd.f32 %v714, %v4057
        %v4059 = vpop.f32.mrf.mxu0
        %v4060 = vpop.f32.mrf.mxu0
        %v4061 = vadd.f32 %v714, %v4060
        %v4062 = vpop.f32.mrf.mxu0
        %4063 = vmatprep.mubr.bf16.mxu0 0
        %4064 = vmatmul.mubr.bf16.gmra.mxu0 %v2477
        %v4065 = vpop.f32.mrf.mxu0
        %v4066 = vadd.f32 %v714, %v4065
        %v4067 = vpop.f32.mrf.mxu0
        %v4068 = vpop.f32.mrf.mxu0
        %v4069 = vadd.f32 %v714, %v4068
        %v4070 = vpop.f32.mrf.mxu0
        %4071 = vmatprep.mubr.bf16.mxu0 0
        %4072 = vmatmul.mubr.bf16.gmra.mxu0 %v2480
        %v4073 = vpop.f32.mrf.mxu0
        %v4074 = vadd.f32 %v714, %v4073
        %v4075 = vpop.f32.mrf.mxu0
        %v4076 = vpop.f32.mrf.mxu0
        %v4077 = vadd.f32 %v714, %v4076
        %v4078 = vpop.f32.mrf.mxu0
        %4079 = vmatprep.mubr.bf16.mxu0 0
        %4080 = vmatmul.mubr.bf16.gmra.mxu0 %v2483
        %v4081 = vpop.f32.mrf.mxu0
        %v4082 = vadd.f32 %v714, %v4081
        %v4083 = vpop.f32.mrf.mxu0
        %v4084 = vpop.f32.mrf.mxu0
        %v4085 = vadd.f32 %v714, %v4084
        %v4086 = vpop.f32.mrf.mxu0
        %4087 = vmatprep.mubr.bf16.mxu0 0
        %4088 = vmatmul.mubr.bf16.gmra.mxu0 %v2486
        %v4089 = vpop.f32.mrf.mxu0
        %v4090 = vadd.f32 %v714, %v4089
        %v4091 = vpop.f32.mrf.mxu0
        %v4092 = vpop.f32.mrf.mxu0
        %v4093 = vadd.f32 %v714, %v4092
        %v4094 = vpop.f32.mrf.mxu0
        %4095 = vmatprep.mubr.bf16.mxu0 0
        %4096 = vmatmul.mubr.bf16.gmra.mxu0 %v2489
        %v4097 = vpop.f32.mrf.mxu0
        %v4098 = vadd.f32 %v714, %v4097
        %v4099 = vpop.f32.mrf.mxu0
        %v4100 = vpop.f32.mrf.mxu0
        %v4101 = vadd.f32 %v714, %v4100
        %v4102 = vpop.f32.mrf.mxu0
        %4103 = vmatprep.mubr.bf16.mxu0 0
        %4104 = vmatmul.mubr.bf16.gmra.mxu0 %v2492
        %v4105 = vpop.f32.mrf.mxu0
        %v4106 = vadd.f32 %v714, %v4105
        %v4107 = vpop.f32.mrf.mxu0
        %v4108 = vpop.f32.mrf.mxu0
        %v4109 = vadd.f32 %v714, %v4108
        %v4110 = vpop.f32.mrf.mxu0
        %4111 = vmatprep.mubr.bf16.mxu0 0
        %4112 = vmatmul.mubr.bf16.gmra.mxu0 %v2495
        %v4113 = vpop.f32.mrf.mxu0
        %v4114 = vadd.f32 %v714, %v4113
        %v4115 = vpop.f32.mrf.mxu0
        %v4116 = vpop.f32.mrf.mxu0
        %v4117 = vadd.f32 %v714, %v4116
        %v4118 = vpop.f32.mrf.mxu0
        %4119 = vmatprep.mubr.bf16.mxu0 0
        %4120 = vmatmul.mubr.bf16.gmra.mxu0 %v2498
        %v4121 = vpop.f32.mrf.mxu0
        %v4122 = vadd.f32 %v714, %v4121
        %v4123 = vpop.f32.mrf.mxu0
        %v4124 = vpop.f32.mrf.mxu0
        %v4125 = vadd.f32 %v714, %v4124
        %v4126 = vpop.f32.mrf.mxu0
        %4127 = vmatprep.mubr.bf16.mxu0 0
        %4128 = vmatmul.mubr.bf16.gmra.mxu0 %v2501
        %v4129 = vpop.f32.mrf.mxu0
        %v4130 = vadd.f32 %v714, %v4129
        %v4131 = vpop.f32.mrf.mxu0
        %v4132 = vpop.f32.mrf.mxu0
        %v4133 = vadd.f32 %v714, %v4132
        %v4134 = vpop.f32.mrf.mxu0
        %4135 = vmatprep.mubr.bf16.mxu0 0
        %4136 = vmatmul.mubr.bf16.gmra.mxu0 %v2504
        %v4137 = vpop.f32.mrf.mxu0
        %v4138 = vadd.f32 %v714, %v4137
        %v4139 = vpop.f32.mrf.mxu0
        %v4140 = vpop.f32.mrf.mxu0
        %v4141 = vadd.f32 %v714, %v4140
        %v4142 = vpop.f32.mrf.mxu0
        %4143 = vmatprep.mubr.bf16.mxu0 0
        %4144 = vmatmul.mubr.bf16.gmra.mxu0 %v2507
        %v4145 = vpop.f32.mrf.mxu0
        %v4146 = vadd.f32 %v714, %v4145
        %v4147 = vpop.f32.mrf.mxu0
        %v4148 = vpop.f32.mrf.mxu0
        %v4149 = vadd.f32 %v714, %v4148
        %v4150 = vpop.f32.mrf.mxu0
        %4151 = vmatprep.mubr.bf16.mxu0 0
        %4152 = vmatmul.mubr.bf16.gmra.mxu0 %v2510
        %v4153 = vpop.f32.mrf.mxu0
        %v4154 = vadd.f32 %v714, %v4153
        %v4155 = vpop.f32.mrf.mxu0
        %v4156 = vpop.f32.mrf.mxu0
        %v4157 = vadd.f32 %v714, %v4156
        %v4158 = vpop.f32.mrf.mxu0
        %4159 = vmatprep.mubr.bf16.mxu0 0
        %4160 = vmatmul.mubr.bf16.gmra.mxu0 %v2513
        %v4161 = vpop.f32.mrf.mxu0
        %v4162 = vadd.f32 %v714, %v4161
        %v4163 = vpop.f32.mrf.mxu0
        %v4164 = vpop.f32.mrf.mxu0
        %v4165 = vadd.f32 %v714, %v4164
        %v4166 = vpop.f32.mrf.mxu0
        %4167 = vmatprep.mubr.bf16.mxu0 0
        %4168 = vmatmul.mubr.bf16.gmra.mxu0 %v2516
        %v4169 = vpop.f32.mrf.mxu0
        %v4170 = vadd.f32 %v714, %v4169
        %v4171 = vpop.f32.mrf.mxu0
        %v4172 = vpop.f32.mrf.mxu0
        %v4173 = vadd.f32 %v714, %v4172
        %v4174 = vpop.f32.mrf.mxu0
        %4175 = vmatprep.mubr.bf16.mxu0 0
        %4176 = vmatmul.mubr.bf16.gmra.mxu0 %v2519
        %v4177 = vpop.f32.mrf.mxu0
        %v4178 = vadd.f32 %v714, %v4177
        %v4179 = vpop.f32.mrf.mxu0
        %v4180 = vpop.f32.mrf.mxu0
        %v4181 = vadd.f32 %v714, %v4180
        %v4182 = vpop.f32.mrf.mxu0
        %4183 = vmatprep.mubr.bf16.mxu0 0
        %4184 = vmatmul.mubr.bf16.gmra.mxu0 %v2522
        %v4185 = vpop.f32.mrf.mxu0
        %v4186 = vadd.f32 %v714, %v4185
        %v4187 = vpop.f32.mrf.mxu0
        %v4188 = vpop.f32.mrf.mxu0
        %v4189 = vadd.f32 %v714, %v4188
        %v4190 = vpop.f32.mrf.mxu0
        %4191 = vmatprep.mubr.bf16.mxu0 0
        %4192 = vmatmul.mubr.bf16.gmra.mxu0 %v2525
        %v4193 = vpop.f32.mrf.mxu0
        %v4194 = vadd.f32 %v714, %v4193
        %v4195 = vpop.f32.mrf.mxu0
        %v4196 = vpop.f32.mrf.mxu0
        %v4197 = vadd.f32 %v714, %v4196
        %v4198 = vpop.f32.mrf.mxu0
        %4199 = vmatprep.mubr.bf16.mxu0 0
        %4200 = vmatmul.mubr.bf16.gmra.mxu0 %v2528
        %v4201 = vpop.f32.mrf.mxu0
        %v4202 = vadd.f32 %v714, %v4201
        %v4203 = vpop.f32.mrf.mxu0
        %v4204 = vpop.f32.mrf.mxu0
        %v4205 = vadd.f32 %v714, %v4204
        %v4206 = vpop.f32.mrf.mxu0
        %4207 = vmatprep.mubr.bf16.mxu0 0
        %4208 = vmatmul.mubr.bf16.gmra.mxu0 %v2531
        %v4209 = vpop.f32.mrf.mxu0
        %v4210 = vadd.f32 %v714, %v4209
        %v4211 = vpop.f32.mrf.mxu0
        %v4212 = vpop.f32.mrf.mxu0
        %v4213 = vadd.f32 %v714, %v4212
        %v4214 = vpop.f32.mrf.mxu0
        %4215 = vmatprep.mubr.bf16.mxu0 0
        %4216 = vmatmul.mubr.bf16.gmra.mxu0 %v2534
        %v4217 = vpop.f32.mrf.mxu0
        %v4218 = vadd.f32 %v714, %v4217
        %v4219 = vpop.f32.mrf.mxu0
        %v4220 = vpop.f32.mrf.mxu0
        %v4221 = vadd.f32 %v714, %v4220
        %v4222 = vpop.f32.mrf.mxu0
        %4223 = vmatprep.mubr.bf16.mxu0 0
        %4224 = vmatmul.mubr.bf16.gmra.mxu0 %v2537
        %v4225 = vpop.f32.mrf.mxu0
        %v4226 = vadd.f32 %v714, %v4225
        %v4227 = vpop.f32.mrf.mxu0
        %v4228 = vpop.f32.mrf.mxu0
        %v4229 = vadd.f32 %v714, %v4228
        %v4230 = vpop.f32.mrf.mxu0
        %4231 = vmatprep.mubr.bf16.mxu0 0
        %4232 = vmatmul.mubr.bf16.gmra.mxu0 %v2540
        %v4233 = vpop.f32.mrf.mxu0
        %v4234 = vadd.f32 %v714, %v4233
        %v4235 = vpop.f32.mrf.mxu0
        %v4236 = vpop.f32.mrf.mxu0
        %v4237 = vadd.f32 %v714, %v4236
        %v4238 = vpop.f32.mrf.mxu0
        %4239 = vmatprep.mubr.bf16.mxu0 0
        %4240 = vmatmul.mubr.bf16.gmra.mxu0 %v2543
        %v4241 = vpop.f32.mrf.mxu0
        %v4242 = vadd.f32 %v714, %v4241
        %v4243 = vpop.f32.mrf.mxu0
        %v4244 = vpop.f32.mrf.mxu0
        %v4245 = vadd.f32 %v714, %v4244
        %v4246 = vpop.f32.mrf.mxu0
        %4247 = vmatprep.mubr.bf16.mxu0 0
        %4248 = vmatmul.mubr.bf16.gmra.mxu0 %v2546
        %v4249 = vpop.f32.mrf.mxu0
        %v4250 = vadd.f32 %v714, %v4249
        %v4251 = vpop.f32.mrf.mxu0
        %v4252 = vpop.f32.mrf.mxu0
        %v4253 = vadd.f32 %v714, %v4252
        %v4254 = vpop.f32.mrf.mxu0
        %4255 = vmatprep.mubr.bf16.mxu0 0
        %4256 = vmatmul.mubr.bf16.gmra.mxu0 %v2549
        %v4257 = vpop.f32.mrf.mxu0
        %v4258 = vadd.f32 %v714, %v4257
        %v4259 = vpop.f32.mrf.mxu0
        %v4260 = vpop.f32.mrf.mxu0
        %v4261 = vadd.f32 %v714, %v4260
        %v4262 = vpop.f32.mrf.mxu0
        %4263 = vmatprep.mubr.bf16.mxu0 0
        %4264 = vmatmul.mubr.bf16.gmra.mxu0 %v2552
        %v4265 = vpop.f32.mrf.mxu0
        %v4266 = vadd.f32 %v714, %v4265
        %v4267 = vpop.f32.mrf.mxu0
        %v4268 = vpop.f32.mrf.mxu0
        %v4269 = vadd.f32 %v714, %v4268
        %v4270 = vpop.f32.mrf.mxu0
        %4271 = vmatprep.mubr.bf16.mxu0 0
        %4272 = vmatmul.mubr.bf16.gmra.mxu0 %v2555
        %v4273 = vpop.f32.mrf.mxu0
        %v4274 = vadd.f32 %v714, %v4273
        %v4275 = vpop.f32.mrf.mxu0
        %v4276 = vpop.f32.mrf.mxu0
        %v4277 = vadd.f32 %v714, %v4276
        %v4278 = vpop.f32.mrf.mxu0
        %4279 = vmatprep.mubr.bf16.mxu0 0
        %4280 = vmatmul.mubr.bf16.gmra.mxu0 %v2558
        %v4281 = vpop.f32.mrf.mxu0
        %v4282 = vadd.f32 %v714, %v4281
        %v4283 = vpop.f32.mrf.mxu0
        %v4284 = vpop.f32.mrf.mxu0
        %v4285 = vadd.f32 %v714, %v4284
        %v4286 = vpop.f32.mrf.mxu0
        %4287 = vmatprep.mubr.bf16.mxu0 0
        %4288 = vmatmul.mubr.bf16.gmra.mxu0 %v2561
        %v4289 = vpop.f32.mrf.mxu0
        %v4290 = vadd.f32 %v714, %v4289
        %v4291 = vpop.f32.mrf.mxu0
        %v4292 = vpop.f32.mrf.mxu0
        %v4293 = vadd.f32 %v714, %v4292
        %v4294 = vpop.f32.mrf.mxu0
        %4295 = vmatprep.mubr.bf16.mxu0 0
        %4296 = vmatmul.mubr.bf16.gmra.mxu0 %v2564
        %v4297 = vpop.f32.mrf.mxu0
        %v4298 = vadd.f32 %v714, %v4297
        %v4299 = vpop.f32.mrf.mxu0
        %v4300 = vpop.f32.mrf.mxu0
        %v4301 = vadd.f32 %v714, %v4300
        %v4302 = vpop.f32.mrf.mxu0
        %4303 = vmatprep.mubr.bf16.mxu0 0
        %4304 = vmatmul.mubr.bf16.gmra.mxu0 %v2567
        %v4305 = vpop.f32.mrf.mxu0
        %v4306 = vadd.f32 %v714, %v4305
        %v4307 = vpop.f32.mrf.mxu0
        %v4308 = vpop.f32.mrf.mxu0
        %v4309 = vadd.f32 %v714, %v4308
        %v4310 = vpop.f32.mrf.mxu0
        %4311 = vmatprep.mubr.bf16.mxu0 0
        %4312 = vmatmul.mubr.bf16.gmra.mxu0 %v2570
        %v4313 = vpop.f32.mrf.mxu0
        %v4314 = vadd.f32 %v714, %v4313
        %v4315 = vpop.f32.mrf.mxu0
        %v4316 = vpop.f32.mrf.mxu0
        %v4317 = vadd.f32 %v714, %v4316
        %v4318 = vpop.f32.mrf.mxu0
        %4319 = vmatprep.mubr.bf16.mxu0 0
        %4320 = vmatmul.mubr.bf16.gmra.mxu0 %v2573
        %v4321 = vpop.f32.mrf.mxu0
        %v4322 = vadd.f32 %v714, %v4321
        %v4323 = vpop.f32.mrf.mxu0
        %v4324 = vpop.f32.mrf.mxu0
        %v4325 = vadd.f32 %v714, %v4324
        %v4326 = vpop.f32.mrf.mxu0
        %4327 = vmatprep.mubr.bf16.mxu0 0
        %4328 = vmatmul.mubr.bf16.gmra.mxu0 %v2576
        %v4329 = vpop.f32.mrf.mxu0
        %v4330 = vadd.f32 %v714, %v4329
        %v4331 = vpop.f32.mrf.mxu0
        %v4332 = vpop.f32.mrf.mxu0
        %v4333 = vadd.f32 %v714, %v4332
        %v4334 = vpop.f32.mrf.mxu0
        %4335 = vmatprep.mubr.bf16.mxu0 0
        %4336 = vmatmul.mubr.bf16.gmra.mxu0 %v2579
        %v4337 = vpop.f32.mrf.mxu0
        %v4338 = vadd.f32 %v714, %v4337
        %v4339 = vpop.f32.mrf.mxu0
        %v4340 = vpop.f32.mrf.mxu0
        %v4341 = vadd.f32 %v714, %v4340
        %v4342 = vpop.f32.mrf.mxu0
        %4343 = vmatprep.mubr.bf16.mxu0 0
        %4344 = vmatmul.mubr.bf16.gmra.mxu0 %v2582
        %v4345 = vpop.f32.mrf.mxu0
        %v4346 = vadd.f32 %v714, %v4345
        %v4347 = vpop.f32.mrf.mxu0
        %v4348 = vpop.f32.mrf.mxu0
        %v4349 = vadd.f32 %v714, %v4348
        %v4350 = vpop.f32.mrf.mxu0
        %4351 = vmatprep.mubr.bf16.mxu0 0
        %4352 = vmatmul.mubr.bf16.gmra.mxu0 %v2585
        %v4353 = vpop.f32.mrf.mxu0
        %v4354 = vadd.f32 %v714, %v4353
        %v4355 = vpop.f32.mrf.mxu0
        %v4356 = vpop.f32.mrf.mxu0
        %v4357 = vadd.f32 %v714, %v4356
        %v4358 = vpop.f32.mrf.mxu0
        %4359 = vmatprep.mubr.bf16.mxu0 0
        %4360 = vmatmul.mubr.bf16.gmra.mxu0 %v2588
        %v4361 = vpop.f32.mrf.mxu0
        %v4362 = vadd.f32 %v714, %v4361
        %v4363 = vpop.f32.mrf.mxu0
        %v4364 = vpop.f32.mrf.mxu0
        %v4365 = vadd.f32 %v714, %v4364
        %v4366 = vpop.f32.mrf.mxu0
        %4367 = vmatprep.mubr.bf16.mxu0 0
        %4368 = vmatmul.mubr.bf16.gmra.mxu0 %v2591
        %v4369 = vpop.f32.mrf.mxu0
        %v4370 = vadd.f32 %v714, %v4369
        %v4371 = vpop.f32.mrf.mxu0
        %v4372 = vpop.f32.mrf.mxu0
        %v4373 = vadd.f32 %v714, %v4372
        %v4374 = vpop.f32.mrf.mxu0
        %4375 = vmatprep.mubr.bf16.mxu0 0
        %4376 = vmatmul.mubr.bf16.gmra.mxu0 %v2594
        %v4377 = vpop.f32.mrf.mxu0
        %v4378 = vadd.f32 %v714, %v4377
        %v4379 = vpop.f32.mrf.mxu0
        %v4380 = vpop.f32.mrf.mxu0
        %v4381 = vadd.f32 %v714, %v4380
        %v4382 = vpop.f32.mrf.mxu0
        %4383 = vmatprep.mubr.bf16.mxu0 0
        %4384 = vmatmul.mubr.bf16.gmra.mxu0 %v2597
        %v4385 = vpop.f32.mrf.mxu0
        %v4386 = vadd.f32 %v714, %v4385
        %v4387 = vpop.f32.mrf.mxu0
        %v4388 = vpop.f32.mrf.mxu0
        %v4389 = vadd.f32 %v714, %v4388
        %v4390 = vpop.f32.mrf.mxu0
        %4391 = vmatprep.mubr.bf16.mxu0 0
        %4392 = vmatmul.mubr.bf16.gmra.mxu0 %v2600
        %v4393 = vpop.f32.mrf.mxu0
        %v4394 = vadd.f32 %v714, %v4393
        %v4395 = vpop.f32.mrf.mxu0
        %v4396 = vpop.f32.mrf.mxu0
        %v4397 = vadd.f32 %v714, %v4396
        %v4398 = vpop.f32.mrf.mxu0
        %4399 = vmatprep.mubr.bf16.mxu0 0
        %4400 = vmatmul.mubr.bf16.gmra.mxu0 %v2603
        %v4401 = vpop.f32.mrf.mxu0
        %v4402 = vadd.f32 %v714, %v4401
        %v4403 = vpop.f32.mrf.mxu0
        %v4404 = vpop.f32.mrf.mxu0
        %v4405 = vadd.f32 %v714, %v4404
        %v4406 = vpop.f32.mrf.mxu0
        %4407 = vmatprep.mubr.bf16.mxu0 0
        %4408 = vmatmul.mubr.bf16.gmra.mxu0 %v2606
        %v4409 = vpop.f32.mrf.mxu0
        %v4410 = vadd.f32 %v714, %v4409
        %v4411 = vpop.f32.mrf.mxu0
        %v4412 = vpop.f32.mrf.mxu0
        %v4413 = vadd.f32 %v714, %v4412
        %v4414 = vpop.f32.mrf.mxu0
        %4415 = vmatprep.mubr.bf16.mxu0 0
        %4416 = vmatmul.mubr.bf16.gmra.mxu0 %v2609
        %v4417 = vpop.f32.mrf.mxu0
        %v4418 = vadd.f32 %v714, %v4417
        %v4419 = vpop.f32.mrf.mxu0
        %v4420 = vpop.f32.mrf.mxu0
        %v4421 = vadd.f32 %v714, %v4420
        %v4422 = vpop.f32.mrf.mxu0
        %4423 = vmatprep.mubr.bf16.mxu0 0
        %4424 = vmatmul.mubr.bf16.gmra.mxu0 %v2612
        %v4425 = vpop.f32.mrf.mxu0
        %v4426 = vadd.f32 %v714, %v4425
        %v4427 = vpop.f32.mrf.mxu0
        %v4428 = vpop.f32.mrf.mxu0
        %v4429 = vadd.f32 %v714, %v4428
        %v4430 = vpop.f32.mrf.mxu0
        %4431 = vmatprep.mubr.bf16.mxu0 0
        %4432 = vmatmul.mubr.bf16.gmra.mxu0 %v2615
        %v4433 = vpop.f32.mrf.mxu0
        %v4434 = vadd.f32 %v714, %v4433
        %v4435 = vpop.f32.mrf.mxu0
        %v4436 = vpop.f32.mrf.mxu0
        %v4437 = vadd.f32 %v714, %v4436
        %v4438 = vpop.f32.mrf.mxu0
        %4439 = vmatprep.mubr.bf16.mxu0 0
        %4440 = vmatmul.mubr.bf16.gmra.mxu0 %v2618
        %v4441 = vpop.f32.mrf.mxu0
        %v4442 = vadd.f32 %v714, %v4441
        %v4443 = vpop.f32.mrf.mxu0
        %v4444 = vpop.f32.mrf.mxu0
        %v4445 = vadd.f32 %v714, %v4444
        %v4446 = vpop.f32.mrf.mxu0
        %4447 = vmatprep.mubr.bf16.mxu0 0
        %4448 = vmatmul.mubr.bf16.gmra.mxu0 %v2621
        %v4449 = vpop.f32.mrf.mxu0
        %v4450 = vadd.f32 %v714, %v4449
        %v4451 = vpop.f32.mrf.mxu0
        %v4452 = vpop.f32.mrf.mxu0
        %v4453 = vadd.f32 %v714, %v4452
        %v4454 = vpop.f32.mrf.mxu0
        %4455 = vmatprep.mubr.bf16.mxu0 0
        %4456 = vmatmul.mubr.bf16.gmra.mxu0 %v2624
        %v4457 = vpop.f32.mrf.mxu0
        %v4458 = vadd.f32 %v714, %v4457
        %v4459 = vpop.f32.mrf.mxu0
        %v4460 = vpop.f32.mrf.mxu0
        %v4461 = vadd.f32 %v714, %v4460
        %v4462 = vpop.f32.mrf.mxu0
        %4463 = vmatprep.mubr.bf16.mxu0 0
        %4464 = vmatmul.mubr.bf16.gmra.mxu0 %v2627
        %v4465 = vpop.f32.mrf.mxu0
        %v4466 = vadd.f32 %v714, %v4465
        %v4467 = vpop.f32.mrf.mxu0
        %v4468 = vpop.f32.mrf.mxu0
        %v4469 = vadd.f32 %v714, %v4468
        %v4470 = vpop.f32.mrf.mxu0
        %4471 = vmatprep.mubr.bf16.mxu0 0
        %4472 = vmatmul.mubr.bf16.gmra.mxu0 %v2630
        %v4473 = vpop.f32.mrf.mxu0
        %v4474 = vadd.f32 %v714, %v4473
        %v4475 = vpop.f32.mrf.mxu0
        %v4476 = vpop.f32.mrf.mxu0
        %v4477 = vadd.f32 %v714, %v4476
        %v4478 = vpop.f32.mrf.mxu0
        %4479 = vmatprep.mubr.bf16.mxu0 0
        %4480 = vmatmul.mubr.bf16.gmra.mxu0 %v2633
        %v4481 = vpop.f32.mrf.mxu0
        %v4482 = vadd.f32 %v714, %v4481
        %v4483 = vpop.f32.mrf.mxu0
        %v4484 = vpop.f32.mrf.mxu0
        %v4485 = vadd.f32 %v714, %v4484
        %v4486 = vpop.f32.mrf.mxu0
        %4487 = vmatprep.mubr.bf16.mxu0 0
        %4488 = vmatmul.mubr.bf16.gmra.mxu0 %v2636
        %v4489 = vpop.f32.mrf.mxu0
        %v4490 = vadd.f32 %v714, %v4489
        %v4491 = vpop.f32.mrf.mxu0
        %v4492 = vpop.f32.mrf.mxu0
        %v4493 = vadd.f32 %v714, %v4492
        %v4494 = vpop.f32.mrf.mxu0
        %4495 = vmatprep.mubr.bf16.mxu0 0
        %4496 = vmatmul.mubr.bf16.gmra.mxu0 %v2639
        %v4497 = vpop.f32.mrf.mxu0
        %v4498 = vadd.f32 %v714, %v4497
        %v4499 = vpop.f32.mrf.mxu0
        %v4500 = vpop.f32.mrf.mxu0
        %v4501 = vadd.f32 %v714, %v4500
        %v4502 = vpop.f32.mrf.mxu0
        %4503 = vmatprep.mubr.bf16.mxu0 0
        %4504 = vmatmul.mubr.bf16.gmra.mxu0 %v2642
        %v4505 = vpop.f32.mrf.mxu0
        %v4506 = vadd.f32 %v714, %v4505
        %v4507 = vpop.f32.mrf.mxu0
        %v4508 = vpop.f32.mrf.mxu0
        %v4509 = vadd.f32 %v714, %v4508
        %v4510 = vpop.f32.mrf.mxu0
        %4511 = vmatprep.mubr.bf16.mxu0 0
        %4512 = vmatmul.mubr.bf16.gmra.mxu0 %v2645
        %v4513 = vpop.f32.mrf.mxu0
        %v4514 = vadd.f32 %v714, %v4513
        %v4515 = vpop.f32.mrf.mxu0
        %v4516 = vpop.f32.mrf.mxu0
        %v4517 = vadd.f32 %v714, %v4516
        %v4518 = vpop.f32.mrf.mxu0
        %4519 = vmatprep.mubr.bf16.mxu0 0
        %4520 = vmatmul.mubr.bf16.gmra.mxu0 %v2648
        %v4521 = vpop.f32.mrf.mxu0
        %v4522 = vadd.f32 %v714, %v4521
        %v4523 = vpop.f32.mrf.mxu0
        %v4524 = vpop.f32.mrf.mxu0
        %v4525 = vadd.f32 %v714, %v4524
        %v4526 = vpop.f32.mrf.mxu0
        %4527 = vmatprep.mubr.bf16.mxu0 0
        %4528 = vmatmul.mubr.bf16.gmra.mxu0 %v2651
        %v4529 = vpop.f32.mrf.mxu0
        %v4530 = vadd.f32 %v714, %v4529
        %v4531 = vpop.f32.mrf.mxu0
        %v4532 = vpop.f32.mrf.mxu0
        %v4533 = vadd.f32 %v714, %v4532
        %v4534 = vpop.f32.mrf.mxu0
        %4535 = vmatprep.mubr.bf16.mxu0 0
        %4536 = vmatmul.mubr.bf16.gmra.mxu0 %v2654
        %v4537 = vpop.f32.mrf.mxu0
        %v4538 = vadd.f32 %v714, %v4537
        %v4539 = vpop.f32.mrf.mxu0
        %v4540 = vpop.f32.mrf.mxu0
        %v4541 = vadd.f32 %v714, %v4540
        %v4542 = vpop.f32.mrf.mxu0
        %4543 = vmatprep.mubr.bf16.mxu0 0
        %4544 = vmatmul.mubr.bf16.gmra.mxu0 %v2657
        %v4545 = vpop.f32.mrf.mxu0
        %v4546 = vadd.f32 %v714, %v4545
        %v4547 = vpop.f32.mrf.mxu0
        %v4548 = vpop.f32.mrf.mxu0
        %v4549 = vadd.f32 %v714, %v4548
        %v4550 = vpop.f32.mrf.mxu0
        %4551 = vmatprep.mubr.bf16.mxu0 0
        %4552 = vmatmul.mubr.bf16.gmra.mxu0 %v2660
        %v4553 = vpop.f32.mrf.mxu0
        %v4554 = vadd.f32 %v714, %v4553
        %v4555 = vpop.f32.mrf.mxu0
        %v4556 = vpop.f32.mrf.mxu0
        %v4557 = vadd.f32 %v714, %v4556
        %v4558 = vpop.f32.mrf.mxu0
        %4559 = vmatprep.mubr.bf16.mxu0 0
        %4560 = vmatmul.mubr.bf16.gmra.mxu0 %v2663
        %v4561 = vpop.f32.mrf.mxu0
        %v4562 = vadd.f32 %v714, %v4561
        %v4563 = vpop.f32.mrf.mxu0
        %v4564 = vpop.f32.mrf.mxu0
        %v4565 = vadd.f32 %v714, %v4564
        %v4566 = vpop.f32.mrf.mxu0
        %4567 = vmatprep.mubr.bf16.mxu0 0
        %4568 = vmatmul.mubr.bf16.gmra.mxu0 %v2666
        %v4569 = vpop.f32.mrf.mxu0
        %v4570 = vadd.f32 %v714, %v4569
        %v4571 = vpop.f32.mrf.mxu0
        %v4572 = vpop.f32.mrf.mxu0
        %v4573 = vadd.f32 %v714, %v4572
        %v4574 = vpop.f32.mrf.mxu0
        %4575 = vmatprep.mubr.bf16.mxu0 0
        %4576 = vmatmul.mubr.bf16.gmra.mxu0 %v2669
        %v4577 = vpop.f32.mrf.mxu0
        %v4578 = vadd.f32 %v714, %v4577
        %v4579 = vpop.f32.mrf.mxu0
        %v4580 = vpop.f32.mrf.mxu0
        %v4581 = vadd.f32 %v714, %v4580
        %v4582 = vpop.f32.mrf.mxu0
        %4583 = vmatprep.mubr.bf16.mxu0 0
        %4584 = vmatmul.mubr.bf16.gmra.mxu0 %v2672
        %v4585 = vpop.f32.mrf.mxu0
        %v4586 = vadd.f32 %v714, %v4585
        %v4587 = vpop.f32.mrf.mxu0
        %v4588 = vpop.f32.mrf.mxu0
        %v4589 = vadd.f32 %v714, %v4588
        %v4590 = vpop.f32.mrf.mxu0
        %4591 = vmatprep.mubr.bf16.mxu0 0
        %4592 = vmatmul.mubr.bf16.gmra.mxu0 %v2675
        %v4593 = vpop.f32.mrf.mxu0
        %v4594 = vadd.f32 %v714, %v4593
        %v4595 = vpop.f32.mrf.mxu0
        %v4596 = vpop.f32.mrf.mxu0
        %v4597 = vadd.f32 %v714, %v4596
        %v4598 = vpop.f32.mrf.mxu0
        %4599 = vmatprep.mubr.bf16.mxu0 0
        %4600 = vmatmul.mubr.bf16.gmra.mxu0 %v2678
        %v4601 = vpop.f32.mrf.mxu0
        %v4602 = vadd.f32 %v714, %v4601
        %v4603 = vpop.f32.mrf.mxu0
        %v4604 = vpop.f32.mrf.mxu0
        %v4605 = vadd.f32 %v714, %v4604
        %v4606 = vpop.f32.mrf.mxu0
        %4607 = vmatprep.mubr.bf16.mxu0 0
        %4608 = vmatmul.mubr.bf16.gmra.mxu0 %v2681
        %v4609 = vpop.f32.mrf.mxu0
        %v4610 = vadd.f32 %v714, %v4609
        %v4611 = vpop.f32.mrf.mxu0
        %v4612 = vpop.f32.mrf.mxu0
        %v4613 = vadd.f32 %v714, %v4612
        %v4614 = vpop.f32.mrf.mxu0
        %4615 = vmatprep.mubr.bf16.mxu0 0
        %4616 = vmatmul.mubr.bf16.gmra.mxu0 %v2684
        %v4617 = vpop.f32.mrf.mxu0
        %v4618 = vadd.f32 %v714, %v4617
        %v4619 = vpop.f32.mrf.mxu0
        %v4620 = vpop.f32.mrf.mxu0
        %v4621 = vadd.f32 %v714, %v4620
        %v4622 = vpop.f32.mrf.mxu0
        %4623 = vmatprep.mubr.bf16.mxu0 0
        %4624 = vmatmul.mubr.bf16.gmra.mxu0 %v2687
        %v4625 = vpop.f32.mrf.mxu0
        %v4626 = vadd.f32 %v714, %v4625
        %v4627 = vpop.f32.mrf.mxu0
        %v4628 = vpop.f32.mrf.mxu0
        %v4629 = vadd.f32 %v714, %v4628
        %v4630 = vpop.f32.mrf.mxu0
        %4631 = vmatprep.mubr.bf16.mxu0 0
        %4632 = vmatmul.mubr.bf16.gmra.mxu0 %v2690
        %v4633 = vpop.f32.mrf.mxu0
        %v4634 = vadd.f32 %v714, %v4633
        %v4635 = vpop.f32.mrf.mxu0
        %v4636 = vpop.f32.mrf.mxu0
        %v4637 = vadd.f32 %v714, %v4636
        %v4638 = vpop.f32.mrf.mxu0
        %4639 = vmatprep.mubr.bf16.mxu0 0
        %4640 = vmatmul.mubr.bf16.gmra.mxu0 %v2693
        %v4641 = vpop.f32.mrf.mxu0
        %v4642 = vadd.f32 %v714, %v4641
        %v4643 = vpop.f32.mrf.mxu0
        %v4644 = vpop.f32.mrf.mxu0
        %v4645 = vadd.f32 %v714, %v4644
        %v4646 = vpop.f32.mrf.mxu0
        %4647 = vmatprep.mubr.bf16.mxu0 0
        %4648 = vmatmul.mubr.bf16.gmra.mxu0 %v2696
        %v4649 = vpop.f32.mrf.mxu0
        %v4650 = vadd.f32 %v714, %v4649
        %v4651 = vpop.f32.mrf.mxu0
        %v4652 = vpop.f32.mrf.mxu0
        %v4653 = vadd.f32 %v714, %v4652
        %v4654 = vpop.f32.mrf.mxu0
        %4655 = vmatprep.mubr.bf16.mxu0 0
        %4656 = vmatmul.mubr.bf16.gmra.mxu0 %v2699
        %v4657 = vpop.f32.mrf.mxu0
        %v4658 = vadd.f32 %v714, %v4657
        %v4659 = vpop.f32.mrf.mxu0
        %v4660 = vpop.f32.mrf.mxu0
        %v4661 = vadd.f32 %v714, %v4660
        %v4662 = vpop.f32.mrf.mxu0
        %4663 = vmatprep.mubr.bf16.mxu0 0
        %4664 = vmatmul.mubr.bf16.gmra.mxu0 %v2702
        %v4665 = vpop.f32.mrf.mxu0
        %v4666 = vadd.f32 %v714, %v4665
        %v4667 = vpop.f32.mrf.mxu0
        %v4668 = vpop.f32.mrf.mxu0
        %v4669 = vadd.f32 %v714, %v4668
        %v4670 = vpop.f32.mrf.mxu0
        %4671 = vmatprep.mubr.bf16.mxu0 0
        %4672 = vmatmul.mubr.bf16.gmra.mxu0 %v2705
        %v4673 = vpop.f32.mrf.mxu0
        %v4674 = vadd.f32 %v714, %v4673
        %v4675 = vpop.f32.mrf.mxu0
        %v4676 = vpop.f32.mrf.mxu0
        %v4677 = vadd.f32 %v714, %v4676
        %v4678 = vpop.f32.mrf.mxu0
        %4679 = vmatprep.mubr.bf16.mxu0 0
        %4680 = vmatmul.mubr.bf16.gmra.mxu0 %v2708
        %v4681 = vpop.f32.mrf.mxu0
        %v4682 = vadd.f32 %v714, %v4681
        %v4683 = vpop.f32.mrf.mxu0
        %v4684 = vpop.f32.mrf.mxu0
        %v4685 = vadd.f32 %v714, %v4684
        %v4686 = vpop.f32.mrf.mxu0
        %4687 = vmatprep.mubr.bf16.mxu0 0
        %4688 = vmatmul.mubr.bf16.gmra.mxu0 %v2711
        %v4689 = vpop.f32.mrf.mxu0
        %v4690 = vadd.f32 %v714, %v4689
        %v4691 = vpop.f32.mrf.mxu0
        %v4692 = vpop.f32.mrf.mxu0
        %v4693 = vadd.f32 %v714, %v4692
        %v4694 = vpop.f32.mrf.mxu0
        %4695 = vmatprep.mubr.bf16.mxu0 0
        %4696 = vmatmul.mubr.bf16.gmra.mxu0 %v2714
        %v4697 = vpop.f32.mrf.mxu0
        %v4698 = vadd.f32 %v714, %v4697
        %v4699 = vpop.f32.mrf.mxu0
        %v4700 = vpop.f32.mrf.mxu0
        %v4701 = vadd.f32 %v714, %v4700
        %v4702 = vpop.f32.mrf.mxu0
        %4703 = vmatprep.mubr.bf16.mxu0 0
        %4704 = vmatmul.mubr.bf16.gmra.mxu0 %v2717
        %v4705 = vpop.f32.mrf.mxu0
        %v4706 = vadd.f32 %v714, %v4705
        %v4707 = vpop.f32.mrf.mxu0
        %v4708 = vpop.f32.mrf.mxu0
        %v4709 = vadd.f32 %v714, %v4708
        %v4710 = vpop.f32.mrf.mxu0
        %4711 = vmatprep.mubr.bf16.mxu0 0
        %4712 = vmatmul.mubr.bf16.gmra.mxu0 %v2720
        %v4713 = vpop.f32.mrf.mxu0
        %v4714 = vadd.f32 %v714, %v4713
        %v4715 = vpop.f32.mrf.mxu0
        %v4716 = vpop.f32.mrf.mxu0
        %v4717 = vadd.f32 %v714, %v4716
        %v4718 = vpop.f32.mrf.mxu0
        %4719 = vmatprep.mubr.bf16.mxu0 0
        %4720 = vmatmul.mubr.bf16.gmra.mxu0 %v2723
        %v4721 = vpop.f32.mrf.mxu0
        %v4722 = vadd.f32 %v714, %v4721
        %v4723 = vpop.f32.mrf.mxu0
        %v4724 = vpop.f32.mrf.mxu0
        %v4725 = vadd.f32 %v714, %v4724
        %v4726 = vpop.f32.mrf.mxu0
        %4727 = vmatprep.mubr.bf16.mxu0 0
        %4728 = vmatmul.mubr.bf16.gmra.mxu0 %v2726
        %v4729 = vpop.f32.mrf.mxu0
        %v4730 = vadd.f32 %v714, %v4729
        %v4731 = vpop.f32.mrf.mxu0
        %v4732 = vpop.f32.mrf.mxu0
        %v4733 = vadd.f32 %v714, %v4732
        %v4734 = vpop.f32.mrf.mxu0
        %4735 = vmatprep.mubr.bf16.mxu0 0
        %4736 = vmatmul.mubr.bf16.gmra.mxu0 %v2729
        %v4737 = vpop.f32.mrf.mxu0
        %v4738 = vadd.f32 %v714, %v4737
        %v4739 = vpop.f32.mrf.mxu0
        %v4740 = vpop.f32.mrf.mxu0
        %v4741 = vadd.f32 %v714, %v4740
        %v4742 = vpop.f32.mrf.mxu0
        %4743 = vmatprep.mubr.bf16.mxu0 0
        %4744 = vmatmul.mubr.bf16.gmra.mxu0 %v2732
        %v4745 = vpop.f32.mrf.mxu0
        %v4746 = vadd.f32 %v714, %v4745
        %v4747 = vpop.f32.mrf.mxu0
        %v4748 = vpop.f32.mrf.mxu0
        %v4749 = vadd.f32 %v714, %v4748
        %v4750 = vpop.f32.mrf.mxu0
        %4751 = vmatprep.mubr.bf16.mxu0 0
        %4752 = vmatmul.mubr.bf16.gmra.mxu0 %v2735
        %v4753 = vpop.f32.mrf.mxu0
        %v4754 = vadd.f32 %v714, %v4753
        %v4755 = vpop.f32.mrf.mxu0
        %v4756 = vpop.f32.mrf.mxu0
        %v4757 = vadd.f32 %v714, %v4756
        %v4758 = vpop.f32.mrf.mxu0
        %4759 = vmatprep.mubr.bf16.mxu0 0
        %4760 = vmatmul.mubr.bf16.gmra.mxu0 %v2738
        %v4761 = vpop.f32.mrf.mxu0
        %v4762 = vadd.f32 %v714, %v4761
        %v4763 = vpop.f32.mrf.mxu0
        %v4764 = vpop.f32.mrf.mxu0
        %v4765 = vadd.f32 %v714, %v4764
        %v4766 = vpop.f32.mrf.mxu0
        %4767 = vmatprep.mubr.bf16.mxu0 0
        %4768 = vmatmul.mubr.bf16.gmra.mxu0 %v2741
        %v4769 = vpop.f32.mrf.mxu0
        %v4770 = vadd.f32 %v714, %v4769
        %v4771 = vpop.f32.mrf.mxu0
        %v4772 = vpop.f32.mrf.mxu0
        %v4773 = vadd.f32 %v714, %v4772
        %v4774 = vpop.f32.mrf.mxu0
        %4775 = vmatprep.mubr.bf16.mxu0 0
        %4776 = vmatmul.mubr.bf16.gmra.mxu0 %v2744
        %v4777 = vpop.f32.mrf.mxu0
        %v4778 = vadd.f32 %v714, %v4777
        %v4779 = vpop.f32.mrf.mxu0
        %v4780 = vpop.f32.mrf.mxu0
        %v4781 = vadd.f32 %v714, %v4780
        %v4782 = vpop.f32.mrf.mxu0
        %4783 = vmatprep.mubr.bf16.mxu0 0
        %4784 = vmatmul.mubr.bf16.gmra.mxu0 %v2747
        %v4785 = vpop.f32.mrf.mxu0
        %v4786 = vadd.f32 %v714, %v4785
        %v4787 = vpop.f32.mrf.mxu0
        %v4788 = vpop.f32.mrf.mxu0
        %v4789 = vadd.f32 %v714, %v4788
        %v4790 = vpop.f32.mrf.mxu0
        %4791 = vmatprep.mubr.bf16.mxu0 0
        %4792 = vmatmul.mubr.bf16.gmra.mxu0 %v2750
        %v4793 = vpop.f32.mrf.mxu0
        %v4794 = vadd.f32 %v714, %v4793
        %v4795 = vpop.f32.mrf.mxu0
        %v4796 = vpop.f32.mrf.mxu0
        %v4797 = vadd.f32 %v714, %v4796
        %v4798 = vpop.f32.mrf.mxu0
        %4799 = vmatprep.mubr.bf16.mxu0 0
        %4800 = vmatmul.mubr.bf16.gmra.mxu0 %v2753
        %v4801 = vpop.f32.mrf.mxu0
        %v4802 = vadd.f32 %v714, %v4801
        %v4803 = vpop.f32.mrf.mxu0
        %v4804 = vpop.f32.mrf.mxu0
        %v4805 = vadd.f32 %v714, %v4804
        %v4806 = vpop.f32.mrf.mxu0
        %4807 = vmatprep.mubr.bf16.mxu0 0
        %4808 = vmatmul.mubr.bf16.gmra.mxu0 %v2756
        %v4809 = vpop.f32.mrf.mxu0
        %v4810 = vadd.f32 %v714, %v4809
        %v4811 = vpop.f32.mrf.mxu0
        %v4812 = vpop.f32.mrf.mxu0
        %v4813 = vadd.f32 %v714, %v4812
        %v4814 = vpop.f32.mrf.mxu0
        %4815 = vmatprep.mubr.bf16.mxu0 0
        %4816 = vmatmul.mubr.bf16.gmra.mxu0 %v2759
        %v4817 = vpop.f32.mrf.mxu0
        %v4818 = vadd.f32 %v714, %v4817
        %v4819 = vpop.f32.mrf.mxu0
        %v4820 = vpop.f32.mrf.mxu0
        %v4821 = vadd.f32 %v714, %v4820
        %v4822 = vpop.f32.mrf.mxu0
        %4823 = vmatprep.mubr.bf16.mxu0 0
        %4824 = vmatmul.mubr.bf16.gmra.mxu0 %v2762
        %v4825 = vpop.f32.mrf.mxu0
        %v4826 = vadd.f32 %v714, %v4825
        %v4827 = vpop.f32.mrf.mxu0
        %v4828 = vpop.f32.mrf.mxu0
        %v4829 = vadd.f32 %v714, %v4828
        %v4830 = vpop.f32.mrf.mxu0
        %4831 = vmatprep.mubr.bf16.mxu0 0
        %4832 = vmatmul.mubr.bf16.gmra.mxu0 %v2765
        %v4833 = vpop.f32.mrf.mxu0
        %v4834 = vadd.f32 %v714, %v4833
        %v4835 = vpop.f32.mrf.mxu0
        %v4836 = vpop.f32.mrf.mxu0
        %v4837 = vadd.f32 %v714, %v4836
        %v4838 = vpop.f32.mrf.mxu0
        %4839 = vmatprep.mubr.bf16.mxu0 0
        %4840 = vmatmul.mubr.bf16.gmra.mxu0 %v2768
        %v4841 = vpop.f32.mrf.mxu0
        %v4842 = vadd.f32 %v714, %v4841
        %v4843 = vpop.f32.mrf.mxu0
        %v4844 = vpop.f32.mrf.mxu0
        %v4845 = vadd.f32 %v714, %v4844
        %v4846 = vpop.f32.mrf.mxu0
        %4847 = vmatprep.mubr.bf16.mxu0 0
        %4848 = vmatmul.mubr.bf16.gmra.mxu0 %v2771
        %v4849 = vpop.f32.mrf.mxu0
        %v4850 = vadd.f32 %v714, %v4849
        %v4851 = vpop.f32.mrf.mxu0
        %v4852 = vpop.f32.mrf.mxu0
        %v4853 = vadd.f32 %v714, %v4852
        %v4854 = vpop.f32.mrf.mxu0
        %4855 = vmatprep.mubr.bf16.mxu0 0
        %4856 = vmatmul.mubr.bf16.gmra.mxu0 %v2774
        %v4857 = vpop.f32.mrf.mxu0
        %v4858 = vadd.f32 %v714, %v4857
        %v4859 = vpop.f32.mrf.mxu0
        %v4860 = vpop.f32.mrf.mxu0
        %v4861 = vadd.f32 %v714, %v4860
        %v4862 = vpop.f32.mrf.mxu0
        %4863 = vdwg.mxu0
        %v4864 = vsub.f32 0.0, %v2818
        %v4865 = vsub.f32 0.0, %v2821
        %v4866 = vsub.f32 0.0, %v2826
        %v4867 = vsub.f32 0.0, %v2829
        %v4868 = vsub.f32 0.0, %v2834
        %v4869 = vsub.f32 0.0, %v2837
        %v4870 = vsub.f32 0.0, %v2842
        %v4871 = vsub.f32 0.0, %v2845
        %v4872 = vsub.f32 0.0, %v2850
        %v4873 = vsub.f32 0.0, %v2853
        %v4874 = vsub.f32 0.0, %v2858
        %v4875 = vsub.f32 0.0, %v2861
        %v4876 = vsub.f32 0.0, %v2866
        %v4877 = vsub.f32 0.0, %v2869
        %v4878 = vsub.f32 0.0, %v2874
        %v4879 = vsub.f32 0.0, %v2877
        %v4880 = vsub.f32 0.0, %v2882
        %v4881 = vsub.f32 0.0, %v2885
        %v4882 = vsub.f32 0.0, %v2890
        %v4883 = vsub.f32 0.0, %v2893
        %v4884 = vsub.f32 0.0, %v2898
        %v4885 = vsub.f32 0.0, %v2901
        %v4886 = vsub.f32 0.0, %v2906
        %v4887 = vsub.f32 0.0, %v2909
        %v4888 = vsub.f32 0.0, %v2914
        %v4889 = vsub.f32 0.0, %v2917
        %v4890 = vsub.f32 0.0, %v2922
        %v4891 = vsub.f32 0.0, %v2925
        %v4892 = vsub.f32 0.0, %v2930
        %v4893 = vsub.f32 0.0, %v2933
        %v4894 = vsub.f32 0.0, %v2938
        %v4895 = vsub.f32 0.0, %v2941
        %v4896 = vsub.f32 0.0, %v2946
        %v4897 = vsub.f32 0.0, %v2949
        %v4898 = vsub.f32 0.0, %v2954
        %v4899 = vsub.f32 0.0, %v2957
        %v4900 = vsub.f32 0.0, %v2962
        %v4901 = vsub.f32 0.0, %v2965
        %v4902 = vsub.f32 0.0, %v2970
        %v4903 = vsub.f32 0.0, %v2973
        %v4904 = vsub.f32 0.0, %v2978
        %v4905 = vsub.f32 0.0, %v2981
        %v4906 = vsub.f32 0.0, %v2986
        %v4907 = vsub.f32 0.0, %v2989
        %v4908 = vsub.f32 0.0, %v2994
        %v4909 = vsub.f32 0.0, %v2997
        %v4910 = vsub.f32 0.0, %v3002
        %v4911 = vsub.f32 0.0, %v3005
        %v4912 = vsub.f32 0.0, %v3010
        %v4913 = vsub.f32 0.0, %v3013
        %v4914 = vsub.f32 0.0, %v3018
        %v4915 = vsub.f32 0.0, %v3021
        %v4916 = vsub.f32 0.0, %v3026
        %v4917 = vsub.f32 0.0, %v3029
        %v4918 = vsub.f32 0.0, %v3034
        %v4919 = vsub.f32 0.0, %v3037
        %v4920 = vsub.f32 0.0, %v3042
        %v4921 = vsub.f32 0.0, %v3045
        %v4922 = vsub.f32 0.0, %v3050
        %v4923 = vsub.f32 0.0, %v3053
        %v4924 = vsub.f32 0.0, %v3058
        %v4925 = vsub.f32 0.0, %v3061
        %v4926 = vsub.f32 0.0, %v3066
        %v4927 = vsub.f32 0.0, %v3069
        %v4928 = vsub.f32 0.0, %v3074
        %v4929 = vsub.f32 0.0, %v3077
        %v4930 = vsub.f32 0.0, %v3082
        %v4931 = vsub.f32 0.0, %v3085
        %v4932 = vsub.f32 0.0, %v3090
        %v4933 = vsub.f32 0.0, %v3093
        %v4934 = vsub.f32 0.0, %v3098
        %v4935 = vsub.f32 0.0, %v3101
        %v4936 = vsub.f32 0.0, %v3106
        %v4937 = vsub.f32 0.0, %v3109
        %v4938 = vsub.f32 0.0, %v3114
        %v4939 = vsub.f32 0.0, %v3117
        %v4940 = vsub.f32 0.0, %v3122
        %v4941 = vsub.f32 0.0, %v3125
        %v4942 = vsub.f32 0.0, %v3130
        %v4943 = vsub.f32 0.0, %v3133
        %v4944 = vsub.f32 0.0, %v3138
        %v4945 = vsub.f32 0.0, %v3141
        %v4946 = vsub.f32 0.0, %v3146
        %v4947 = vsub.f32 0.0, %v3149
        %v4948 = vsub.f32 0.0, %v3154
        %v4949 = vsub.f32 0.0, %v3157
        %v4950 = vsub.f32 0.0, %v3162
        %v4951 = vsub.f32 0.0, %v3165
        %v4952 = vsub.f32 0.0, %v3170
        %v4953 = vsub.f32 0.0, %v3173
        %v4954 = vsub.f32 0.0, %v3178
        %v4955 = vsub.f32 0.0, %v3181
        %v4956 = vsub.f32 0.0, %v3186
        %v4957 = vsub.f32 0.0, %v3189
        %v4958 = vsub.f32 0.0, %v3194
        %v4959 = vsub.f32 0.0, %v3197
        %v4960 = vsub.f32 0.0, %v3202
        %v4961 = vsub.f32 0.0, %v3205
        %v4962 = vsub.f32 0.0, %v3210
        %v4963 = vsub.f32 0.0, %v3213
        %v4964 = vsub.f32 0.0, %v3218
        %v4965 = vsub.f32 0.0, %v3221
        %v4966 = vsub.f32 0.0, %v3226
        %v4967 = vsub.f32 0.0, %v3229
        %v4968 = vsub.f32 0.0, %v3234
        %v4969 = vsub.f32 0.0, %v3237
        %v4970 = vsub.f32 0.0, %v3242
        %v4971 = vsub.f32 0.0, %v3245
        %v4972 = vsub.f32 0.0, %v3250
        %v4973 = vsub.f32 0.0, %v3253
        %v4974 = vsub.f32 0.0, %v3258
        %v4975 = vsub.f32 0.0, %v3261
        %v4976 = vsub.f32 0.0, %v3266
        %v4977 = vsub.f32 0.0, %v3269
        %v4978 = vsub.f32 0.0, %v3274
        %v4979 = vsub.f32 0.0, %v3277
        %v4980 = vsub.f32 0.0, %v3282
        %v4981 = vsub.f32 0.0, %v3285
        %v4982 = vsub.f32 0.0, %v3290
        %v4983 = vsub.f32 0.0, %v3293
        %v4984 = vsub.f32 0.0, %v3298
        %v4985 = vsub.f32 0.0, %v3301
        %v4986 = vsub.f32 0.0, %v3306
        %v4987 = vsub.f32 0.0, %v3309
        %v4988 = vsub.f32 0.0, %v3314
        %v4989 = vsub.f32 0.0, %v3317
        %v4990 = vsub.f32 0.0, %v3322
        %v4991 = vsub.f32 0.0, %v3325
        %v4992 = vsub.f32 0.0, %v3330
        %v4993 = vsub.f32 0.0, %v3333
        %v4994 = vsub.f32 0.0, %v3338
        %v4995 = vsub.f32 0.0, %v3341
        %v4996 = vsub.f32 0.0, %v3346
        %v4997 = vsub.f32 0.0, %v3349
        %v4998 = vsub.f32 0.0, %v3354
        %v4999 = vsub.f32 0.0, %v3357
        %v5000 = vsub.f32 0.0, %v3362
        %v5001 = vsub.f32 0.0, %v3365
        %v5002 = vsub.f32 0.0, %v3370
        %v5003 = vsub.f32 0.0, %v3373
        %v5004 = vsub.f32 0.0, %v3378
        %v5005 = vsub.f32 0.0, %v3381
        %v5006 = vsub.f32 0.0, %v3386
        %v5007 = vsub.f32 0.0, %v3389
        %v5008 = vsub.f32 0.0, %v3394
        %v5009 = vsub.f32 0.0, %v3397
        %v5010 = vsub.f32 0.0, %v3402
        %v5011 = vsub.f32 0.0, %v3405
        %v5012 = vsub.f32 0.0, %v3410
        %v5013 = vsub.f32 0.0, %v3413
        %v5014 = vsub.f32 0.0, %v3418
        %v5015 = vsub.f32 0.0, %v3421
        %v5016 = vsub.f32 0.0, %v3426
        %v5017 = vsub.f32 0.0, %v3429
        %v5018 = vsub.f32 0.0, %v3434
        %v5019 = vsub.f32 0.0, %v3437
        %v5020 = vsub.f32 0.0, %v3442
        %v5021 = vsub.f32 0.0, %v3445
        %v5022 = vsub.f32 0.0, %v3450
        %v5023 = vsub.f32 0.0, %v3453
        %v5024 = vsub.f32 0.0, %v3458
        %v5025 = vsub.f32 0.0, %v3461
        %v5026 = vsub.f32 0.0, %v3466
        %v5027 = vsub.f32 0.0, %v3469
        %v5028 = vsub.f32 0.0, %v3474
        %v5029 = vsub.f32 0.0, %v3477
        %v5030 = vsub.f32 0.0, %v3482
        %v5031 = vsub.f32 0.0, %v3485
        %v5032 = vsub.f32 0.0, %v3490
        %v5033 = vsub.f32 0.0, %v3493
        %v5034 = vsub.f32 0.0, %v3498
        %v5035 = vsub.f32 0.0, %v3501
        %v5036 = vsub.f32 0.0, %v3506
        %v5037 = vsub.f32 0.0, %v3509
        %v5038 = vsub.f32 0.0, %v3514
        %v5039 = vsub.f32 0.0, %v3517
        %v5040 = vsub.f32 0.0, %v3522
        %v5041 = vsub.f32 0.0, %v3525
        %v5042 = vsub.f32 0.0, %v3530
        %v5043 = vsub.f32 0.0, %v3533
        %v5044 = vsub.f32 0.0, %v3538
        %v5045 = vsub.f32 0.0, %v3541
        %v5046 = vsub.f32 0.0, %v3546
        %v5047 = vsub.f32 0.0, %v3549
        %v5048 = vsub.f32 0.0, %v3554
        %v5049 = vsub.f32 0.0, %v3557
        %v5050 = vsub.f32 0.0, %v3562
        %v5051 = vsub.f32 0.0, %v3565
        %v5052 = vsub.f32 0.0, %v3570
        %v5053 = vsub.f32 0.0, %v3573
        %v5054 = vsub.f32 0.0, %v3578
        %v5055 = vsub.f32 0.0, %v3581
        %v5056 = vsub.f32 0.0, %v3586
        %v5057 = vsub.f32 0.0, %v3589
        %v5058 = vsub.f32 0.0, %v3594
        %v5059 = vsub.f32 0.0, %v3597
        %v5060 = vsub.f32 0.0, %v3602
        %v5061 = vsub.f32 0.0, %v3605
        %v5062 = vsub.f32 0.0, %v3610
        %v5063 = vsub.f32 0.0, %v3613
        %v5064 = vsub.f32 0.0, %v3618
        %v5065 = vsub.f32 0.0, %v3621
        %v5066 = vsub.f32 0.0, %v3626
        %v5067 = vsub.f32 0.0, %v3629
        %v5068 = vsub.f32 0.0, %v3634
        %v5069 = vsub.f32 0.0, %v3637
        %v5070 = vsub.f32 0.0, %v3642
        %v5071 = vsub.f32 0.0, %v3645
        %v5072 = vsub.f32 0.0, %v3650
        %v5073 = vsub.f32 0.0, %v3653
        %v5074 = vsub.f32 0.0, %v3658
        %v5075 = vsub.f32 0.0, %v3661
        %v5076 = vsub.f32 0.0, %v3666
        %v5077 = vsub.f32 0.0, %v3669
        %v5078 = vsub.f32 0.0, %v3674
        %v5079 = vsub.f32 0.0, %v3677
        %v5080 = vsub.f32 0.0, %v3682
        %v5081 = vsub.f32 0.0, %v3685
        %v5082 = vsub.f32 0.0, %v3690
        %v5083 = vsub.f32 0.0, %v3693
        %v5084 = vsub.f32 0.0, %v3698
        %v5085 = vsub.f32 0.0, %v3701
        %v5086 = vsub.f32 0.0, %v3706
        %v5087 = vsub.f32 0.0, %v3709
        %v5088 = vsub.f32 0.0, %v3714
        %v5089 = vsub.f32 0.0, %v3717
        %v5090 = vsub.f32 0.0, %v3722
        %v5091 = vsub.f32 0.0, %v3725
        %v5092 = vsub.f32 0.0, %v3730
        %v5093 = vsub.f32 0.0, %v3733
        %v5094 = vsub.f32 0.0, %v3738
        %v5095 = vsub.f32 0.0, %v3741
        %v5096 = vsub.f32 0.0, %v3746
        %v5097 = vsub.f32 0.0, %v3749
        %v5098 = vsub.f32 0.0, %v3754
        %v5099 = vsub.f32 0.0, %v3757
        %v5100 = vsub.f32 0.0, %v3762
        %v5101 = vsub.f32 0.0, %v3765
        %v5102 = vsub.f32 0.0, %v3770
        %v5103 = vsub.f32 0.0, %v3773
        %v5104 = vsub.f32 0.0, %v3778
        %v5105 = vsub.f32 0.0, %v3781
        %v5106 = vsub.f32 0.0, %v3786
        %v5107 = vsub.f32 0.0, %v3789
        %v5108 = vsub.f32 0.0, %v3794
        %v5109 = vsub.f32 0.0, %v3797
        %v5110 = vsub.f32 0.0, %v3802
        %v5111 = vsub.f32 0.0, %v3805
        %v5112 = vsub.f32 0.0, %v3810
        %v5113 = vsub.f32 0.0, %v3813
        %v5114 = vsub.f32 0.0, %v3818
        %v5115 = vsub.f32 0.0, %v3821
        %v5116 = vsub.f32 0.0, %v3826
        %v5117 = vsub.f32 0.0, %v3829
        %v5118 = vsub.f32 0.0, %v3834
        %v5119 = vsub.f32 0.0, %v3837
        %v5120 = vsub.f32 0.0, %v3842
        %v5121 = vsub.f32 0.0, %v3845
        %v5122 = vsub.f32 0.0, %v3850
        %v5123 = vsub.f32 0.0, %v3853
        %v5124 = vsub.f32 0.0, %v3858
        %v5125 = vsub.f32 0.0, %v3861
        %v5126 = vsub.f32 0.0, %v3866
        %v5127 = vsub.f32 0.0, %v3869
        %v5128 = vsub.f32 0.0, %v3874
        %v5129 = vsub.f32 0.0, %v3877
        %v5130 = vsub.f32 0.0, %v3882
        %v5131 = vsub.f32 0.0, %v3885
        %v5132 = vsub.f32 0.0, %v3890
        %v5133 = vsub.f32 0.0, %v3893
        %v5134 = vsub.f32 0.0, %v3898
        %v5135 = vsub.f32 0.0, %v3901
        %v5136 = vsub.f32 0.0, %v3906
        %v5137 = vsub.f32 0.0, %v3909
        %v5138 = vsub.f32 0.0, %v3914
        %v5139 = vsub.f32 0.0, %v3917
        %v5140 = vsub.f32 0.0, %v3922
        %v5141 = vsub.f32 0.0, %v3925
        %v5142 = vsub.f32 0.0, %v3930
        %v5143 = vsub.f32 0.0, %v3933
        %v5144 = vsub.f32 0.0, %v3938
        %v5145 = vsub.f32 0.0, %v3941
        %v5146 = vsub.f32 0.0, %v3946
        %v5147 = vsub.f32 0.0, %v3949
        %v5148 = vsub.f32 0.0, %v3954
        %v5149 = vsub.f32 0.0, %v3957
        %v5150 = vsub.f32 0.0, %v3962
        %v5151 = vsub.f32 0.0, %v3965
        %v5152 = vsub.f32 0.0, %v3970
        %v5153 = vsub.f32 0.0, %v3973
        %v5154 = vsub.f32 0.0, %v3978
        %v5155 = vsub.f32 0.0, %v3981
        %v5156 = vsub.f32 0.0, %v3986
        %v5157 = vsub.f32 0.0, %v3989
        %v5158 = vsub.f32 0.0, %v3994
        %v5159 = vsub.f32 0.0, %v3997
        %v5160 = vsub.f32 0.0, %v4002
        %v5161 = vsub.f32 0.0, %v4005
        %v5162 = vsub.f32 0.0, %v4010
        %v5163 = vsub.f32 0.0, %v4013
        %v5164 = vsub.f32 0.0, %v4018
        %v5165 = vsub.f32 0.0, %v4021
        %v5166 = vsub.f32 0.0, %v4026
        %v5167 = vsub.f32 0.0, %v4029
        %v5168 = vsub.f32 0.0, %v4034
        %v5169 = vsub.f32 0.0, %v4037
        %v5170 = vsub.f32 0.0, %v4042
        %v5171 = vsub.f32 0.0, %v4045
        %v5172 = vsub.f32 0.0, %v4050
        %v5173 = vsub.f32 0.0, %v4053
        %v5174 = vsub.f32 0.0, %v4058
        %v5175 = vsub.f32 0.0, %v4061
        %v5176 = vsub.f32 0.0, %v4066
        %v5177 = vsub.f32 0.0, %v4069
        %v5178 = vsub.f32 0.0, %v4074
        %v5179 = vsub.f32 0.0, %v4077
        %v5180 = vsub.f32 0.0, %v4082
        %v5181 = vsub.f32 0.0, %v4085
        %v5182 = vsub.f32 0.0, %v4090
        %v5183 = vsub.f32 0.0, %v4093
        %v5184 = vsub.f32 0.0, %v4098
        %v5185 = vsub.f32 0.0, %v4101
        %v5186 = vsub.f32 0.0, %v4106
        %v5187 = vsub.f32 0.0, %v4109
        %v5188 = vsub.f32 0.0, %v4114
        %v5189 = vsub.f32 0.0, %v4117
        %v5190 = vsub.f32 0.0, %v4122
        %v5191 = vsub.f32 0.0, %v4125
        %v5192 = vsub.f32 0.0, %v4130
        %v5193 = vsub.f32 0.0, %v4133
        %v5194 = vsub.f32 0.0, %v4138
        %v5195 = vsub.f32 0.0, %v4141
        %v5196 = vsub.f32 0.0, %v4146
        %v5197 = vsub.f32 0.0, %v4149
        %v5198 = vsub.f32 0.0, %v4154
        %v5199 = vsub.f32 0.0, %v4157
        %v5200 = vsub.f32 0.0, %v4162
        %v5201 = vsub.f32 0.0, %v4165
        %v5202 = vsub.f32 0.0, %v4170
        %v5203 = vsub.f32 0.0, %v4173
        %v5204 = vsub.f32 0.0, %v4178
        %v5205 = vsub.f32 0.0, %v4181
        %v5206 = vsub.f32 0.0, %v4186
        %v5207 = vsub.f32 0.0, %v4189
        %v5208 = vsub.f32 0.0, %v4194
        %v5209 = vsub.f32 0.0, %v4197
        %v5210 = vsub.f32 0.0, %v4202
        %v5211 = vsub.f32 0.0, %v4205
        %v5212 = vsub.f32 0.0, %v4210
        %v5213 = vsub.f32 0.0, %v4213
        %v5214 = vsub.f32 0.0, %v4218
        %v5215 = vsub.f32 0.0, %v4221
        %v5216 = vsub.f32 0.0, %v4226
        %v5217 = vsub.f32 0.0, %v4229
        %v5218 = vsub.f32 0.0, %v4234
        %v5219 = vsub.f32 0.0, %v4237
        %v5220 = vsub.f32 0.0, %v4242
        %v5221 = vsub.f32 0.0, %v4245
        %v5222 = vsub.f32 0.0, %v4250
        %v5223 = vsub.f32 0.0, %v4253
        %v5224 = vsub.f32 0.0, %v4258
        %v5225 = vsub.f32 0.0, %v4261
        %v5226 = vsub.f32 0.0, %v4266
        %v5227 = vsub.f32 0.0, %v4269
        %v5228 = vsub.f32 0.0, %v4274
        %v5229 = vsub.f32 0.0, %v4277
        %v5230 = vsub.f32 0.0, %v4282
        %v5231 = vsub.f32 0.0, %v4285
        %v5232 = vsub.f32 0.0, %v4290
        %v5233 = vsub.f32 0.0, %v4293
        %v5234 = vsub.f32 0.0, %v4298
        %v5235 = vsub.f32 0.0, %v4301
        %v5236 = vsub.f32 0.0, %v4306
        %v5237 = vsub.f32 0.0, %v4309
        %v5238 = vsub.f32 0.0, %v4314
        %v5239 = vsub.f32 0.0, %v4317
        %v5240 = vsub.f32 0.0, %v4322
        %v5241 = vsub.f32 0.0, %v4325
        %v5242 = vsub.f32 0.0, %v4330
        %v5243 = vsub.f32 0.0, %v4333
        %v5244 = vsub.f32 0.0, %v4338
        %v5245 = vsub.f32 0.0, %v4341
        %v5246 = vsub.f32 0.0, %v4346
        %v5247 = vsub.f32 0.0, %v4349
        %v5248 = vsub.f32 0.0, %v4354
        %v5249 = vsub.f32 0.0, %v4357
        %v5250 = vsub.f32 0.0, %v4362
        %v5251 = vsub.f32 0.0, %v4365
        %v5252 = vsub.f32 0.0, %v4370
        %v5253 = vsub.f32 0.0, %v4373
        %v5254 = vsub.f32 0.0, %v4378
        %v5255 = vsub.f32 0.0, %v4381
        %v5256 = vsub.f32 0.0, %v4386
        %v5257 = vsub.f32 0.0, %v4389
        %v5258 = vsub.f32 0.0, %v4394
        %v5259 = vsub.f32 0.0, %v4397
        %v5260 = vsub.f32 0.0, %v4402
        %v5261 = vsub.f32 0.0, %v4405
        %v5262 = vsub.f32 0.0, %v4410
        %v5263 = vsub.f32 0.0, %v4413
        %v5264 = vsub.f32 0.0, %v4418
        %v5265 = vsub.f32 0.0, %v4421
        %v5266 = vsub.f32 0.0, %v4426
        %v5267 = vsub.f32 0.0, %v4429
        %v5268 = vsub.f32 0.0, %v4434
        %v5269 = vsub.f32 0.0, %v4437
        %v5270 = vsub.f32 0.0, %v4442
        %v5271 = vsub.f32 0.0, %v4445
        %v5272 = vsub.f32 0.0, %v4450
        %v5273 = vsub.f32 0.0, %v4453
        %v5274 = vsub.f32 0.0, %v4458
        %v5275 = vsub.f32 0.0, %v4461
        %v5276 = vsub.f32 0.0, %v4466
        %v5277 = vsub.f32 0.0, %v4469
        %v5278 = vsub.f32 0.0, %v4474
        %v5279 = vsub.f32 0.0, %v4477
        %v5280 = vsub.f32 0.0, %v4482
        %v5281 = vsub.f32 0.0, %v4485
        %v5282 = vsub.f32 0.0, %v4490
        %v5283 = vsub.f32 0.0, %v4493
        %v5284 = vsub.f32 0.0, %v4498
        %v5285 = vsub.f32 0.0, %v4501
        %v5286 = vsub.f32 0.0, %v4506
        %v5287 = vsub.f32 0.0, %v4509
        %v5288 = vsub.f32 0.0, %v4514
        %v5289 = vsub.f32 0.0, %v4517
        %v5290 = vsub.f32 0.0, %v4522
        %v5291 = vsub.f32 0.0, %v4525
        %v5292 = vsub.f32 0.0, %v4530
        %v5293 = vsub.f32 0.0, %v4533
        %v5294 = vsub.f32 0.0, %v4538
        %v5295 = vsub.f32 0.0, %v4541
        %v5296 = vsub.f32 0.0, %v4546
        %v5297 = vsub.f32 0.0, %v4549
        %v5298 = vsub.f32 0.0, %v4554
        %v5299 = vsub.f32 0.0, %v4557
        %v5300 = vsub.f32 0.0, %v4562
        %v5301 = vsub.f32 0.0, %v4565
        %v5302 = vsub.f32 0.0, %v4570
        %v5303 = vsub.f32 0.0, %v4573
        %v5304 = vsub.f32 0.0, %v4578
        %v5305 = vsub.f32 0.0, %v4581
        %v5306 = vsub.f32 0.0, %v4586
        %v5307 = vsub.f32 0.0, %v4589
        %v5308 = vsub.f32 0.0, %v4594
        %v5309 = vsub.f32 0.0, %v4597
        %v5310 = vsub.f32 0.0, %v4602
        %v5311 = vsub.f32 0.0, %v4605
        %v5312 = vsub.f32 0.0, %v4610
        %v5313 = vsub.f32 0.0, %v4613
        %v5314 = vsub.f32 0.0, %v4618
        %v5315 = vsub.f32 0.0, %v4621
        %v5316 = vsub.f32 0.0, %v4626
        %v5317 = vsub.f32 0.0, %v4629
        %v5318 = vsub.f32 0.0, %v4634
        %v5319 = vsub.f32 0.0, %v4637
        %v5320 = vsub.f32 0.0, %v4642
        %v5321 = vsub.f32 0.0, %v4645
        %v5322 = vsub.f32 0.0, %v4650
        %v5323 = vsub.f32 0.0, %v4653
        %v5324 = vsub.f32 0.0, %v4658
        %v5325 = vsub.f32 0.0, %v4661
        %v5326 = vsub.f32 0.0, %v4666
        %v5327 = vsub.f32 0.0, %v4669
        %v5328 = vsub.f32 0.0, %v4674
        %v5329 = vsub.f32 0.0, %v4677
        %v5330 = vsub.f32 0.0, %v4682
        %v5331 = vsub.f32 0.0, %v4685
        %v5332 = vsub.f32 0.0, %v4690
        %v5333 = vsub.f32 0.0, %v4693
        %v5334 = vsub.f32 0.0, %v4698
        %v5335 = vsub.f32 0.0, %v4701
        %v5336 = vsub.f32 0.0, %v4706
        %v5337 = vsub.f32 0.0, %v4709
        %v5338 = vsub.f32 0.0, %v4714
        %v5339 = vsub.f32 0.0, %v4717
        %v5340 = vsub.f32 0.0, %v4722
        %v5341 = vsub.f32 0.0, %v4725
        %v5342 = vsub.f32 0.0, %v4730
        %v5343 = vsub.f32 0.0, %v4733
        %v5344 = vsub.f32 0.0, %v4738
        %v5345 = vsub.f32 0.0, %v4741
        %v5346 = vsub.f32 0.0, %v4746
        %v5347 = vsub.f32 0.0, %v4749
        %v5348 = vsub.f32 0.0, %v4754
        %v5349 = vsub.f32 0.0, %v4757
        %v5350 = vsub.f32 0.0, %v4762
        %v5351 = vsub.f32 0.0, %v4765
        %v5352 = vsub.f32 0.0, %v4770
        %v5353 = vsub.f32 0.0, %v4773
        %v5354 = vsub.f32 0.0, %v4778
        %v5355 = vsub.f32 0.0, %v4781
        %v5356 = vsub.f32 0.0, %v4786
        %v5357 = vsub.f32 0.0, %v4789
        %v5358 = vsub.f32 0.0, %v4794
        %v5359 = vsub.f32 0.0, %v4797
        %v5360 = vsub.f32 0.0, %v4802
        %v5361 = vsub.f32 0.0, %v4805
        %v5362 = vsub.f32 0.0, %v4810
        %v5363 = vsub.f32 0.0, %v4813
        %v5364 = vsub.f32 0.0, %v4818
        %v5365 = vsub.f32 0.0, %v4821
        %v5366 = vsub.f32 0.0, %v4826
        %v5367 = vsub.f32 0.0, %v4829
        %v5368 = vsub.f32 0.0, %v4834
        %v5369 = vsub.f32 0.0, %v4837
        %v5370 = vsub.f32 0.0, %v4842
        %v5371 = vsub.f32 0.0, %v4845
        %v5372 = vsub.f32 0.0, %v4850
        %v5373 = vsub.f32 0.0, %v4853
        %v5374 = vsub.f32 0.0, %v4858
        %v5375 = vsub.f32 0.0, %v4861
        %v5376 = vmul.f32 %v4864, 1.442695
        %v5377 = vpow.pop %v5376
        %v5378 = vmul.f32 %v4865, 1.442695
        %v5379 = vpow.pop %v5378
        %v5380 = vmul.f32 %v4866, 1.442695
        %v5381 = vpow.pop %v5380
        %v5382 = vmul.f32 %v4867, 1.442695
        %v5383 = vpow.pop %v5382
        %v5384 = vmul.f32 %v4868, 1.442695
        %v5385 = vpow.pop %v5384
        %v5386 = vmul.f32 %v4869, 1.442695
        %v5387 = vpow.pop %v5386
        %v5388 = vmul.f32 %v4870, 1.442695
        %v5389 = vpow.pop %v5388
        %v5390 = vmul.f32 %v4871, 1.442695
        %v5391 = vpow.pop %v5390
        %v5392 = vmul.f32 %v4872, 1.442695
        %v5393 = vpow.pop %v5392
        %v5394 = vmul.f32 %v4873, 1.442695
        %v5395 = vpow.pop %v5394
        %v5396 = vmul.f32 %v4874, 1.442695
        %v5397 = vpow.pop %v5396
        %v5398 = vmul.f32 %v4875, 1.442695
        %v5399 = vpow.pop %v5398
        %v5400 = vmul.f32 %v4876, 1.442695
        %v5401 = vpow.pop %v5400
        %v5402 = vmul.f32 %v4877, 1.442695
        %v5403 = vpow.pop %v5402
        %v5404 = vmul.f32 %v4878, 1.442695
        %v5405 = vpow.pop %v5404
        %v5406 = vmul.f32 %v4879, 1.442695
        %v5407 = vpow.pop %v5406
        %v5408 = vmul.f32 %v4880, 1.442695
        %v5409 = vpow.pop %v5408
        %v5410 = vmul.f32 %v4881, 1.442695
        %v5411 = vpow.pop %v5410
        %v5412 = vmul.f32 %v4882, 1.442695
        %v5413 = vpow.pop %v5412
        %v5414 = vmul.f32 %v4883, 1.442695
        %v5415 = vpow.pop %v5414
        %v5416 = vmul.f32 %v4884, 1.442695
        %v5417 = vpow.pop %v5416
        %v5418 = vmul.f32 %v4885, 1.442695
        %v5419 = vpow.pop %v5418
        %v5420 = vmul.f32 %v4886, 1.442695
        %v5421 = vpow.pop %v5420
        %v5422 = vmul.f32 %v4887, 1.442695
        %v5423 = vpow.pop %v5422
        %v5424 = vmul.f32 %v4888, 1.442695
        %v5425 = vpow.pop %v5424
        %v5426 = vmul.f32 %v4889, 1.442695
        %v5427 = vpow.pop %v5426
        %v5428 = vmul.f32 %v4890, 1.442695
        %v5429 = vpow.pop %v5428
        %v5430 = vmul.f32 %v4891, 1.442695
        %v5431 = vpow.pop %v5430
        %v5432 = vmul.f32 %v4892, 1.442695
        %v5433 = vpow.pop %v5432
        %v5434 = vmul.f32 %v4893, 1.442695
        %v5435 = vpow.pop %v5434
        %v5436 = vmul.f32 %v4894, 1.442695
        %v5437 = vpow.pop %v5436
        %v5438 = vmul.f32 %v4895, 1.442695
        %v5439 = vpow.pop %v5438
        %v5440 = vmul.f32 %v4896, 1.442695
        %v5441 = vpow.pop %v5440
        %v5442 = vmul.f32 %v4897, 1.442695
        %v5443 = vpow.pop %v5442
        %v5444 = vmul.f32 %v4898, 1.442695
        %v5445 = vpow.pop %v5444
        %v5446 = vmul.f32 %v4899, 1.442695
        %v5447 = vpow.pop %v5446
        %v5448 = vmul.f32 %v4900, 1.442695
        %v5449 = vpow.pop %v5448
        %v5450 = vmul.f32 %v4901, 1.442695
        %v5451 = vpow.pop %v5450
        %v5452 = vmul.f32 %v4902, 1.442695
        %v5453 = vpow.pop %v5452
        %v5454 = vmul.f32 %v4903, 1.442695
        %v5455 = vpow.pop %v5454
        %v5456 = vmul.f32 %v4904, 1.442695
        %v5457 = vpow.pop %v5456
        %v5458 = vmul.f32 %v4905, 1.442695
        %v5459 = vpow.pop %v5458
        %v5460 = vmul.f32 %v4906, 1.442695
        %v5461 = vpow.pop %v5460
        %v5462 = vmul.f32 %v4907, 1.442695
        %v5463 = vpow.pop %v5462
        %v5464 = vmul.f32 %v4908, 1.442695
        %v5465 = vpow.pop %v5464
        %v5466 = vmul.f32 %v4909, 1.442695
        %v5467 = vpow.pop %v5466
        %v5468 = vmul.f32 %v4910, 1.442695
        %v5469 = vpow.pop %v5468
        %v5470 = vmul.f32 %v4911, 1.442695
        %v5471 = vpow.pop %v5470
        %v5472 = vmul.f32 %v4912, 1.442695
        %v5473 = vpow.pop %v5472
        %v5474 = vmul.f32 %v4913, 1.442695
        %v5475 = vpow.pop %v5474
        %v5476 = vmul.f32 %v4914, 1.442695
        %v5477 = vpow.pop %v5476
        %v5478 = vmul.f32 %v4915, 1.442695
        %v5479 = vpow.pop %v5478
        %v5480 = vmul.f32 %v4916, 1.442695
        %v5481 = vpow.pop %v5480
        %v5482 = vmul.f32 %v4917, 1.442695
        %v5483 = vpow.pop %v5482
        %v5484 = vmul.f32 %v4918, 1.442695
        %v5485 = vpow.pop %v5484
        %v5486 = vmul.f32 %v4919, 1.442695
        %v5487 = vpow.pop %v5486
        %v5488 = vmul.f32 %v4920, 1.442695
        %v5489 = vpow.pop %v5488
        %v5490 = vmul.f32 %v4921, 1.442695
        %v5491 = vpow.pop %v5490
        %v5492 = vmul.f32 %v4922, 1.442695
        %v5493 = vpow.pop %v5492
        %v5494 = vmul.f32 %v4923, 1.442695
        %v5495 = vpow.pop %v5494
        %v5496 = vmul.f32 %v4924, 1.442695
        %v5497 = vpow.pop %v5496
        %v5498 = vmul.f32 %v4925, 1.442695
        %v5499 = vpow.pop %v5498
        %v5500 = vmul.f32 %v4926, 1.442695
        %v5501 = vpow.pop %v5500
        %v5502 = vmul.f32 %v4927, 1.442695
        %v5503 = vpow.pop %v5502
        %v5504 = vmul.f32 %v4928, 1.442695
        %v5505 = vpow.pop %v5504
        %v5506 = vmul.f32 %v4929, 1.442695
        %v5507 = vpow.pop %v5506
        %v5508 = vmul.f32 %v4930, 1.442695
        %v5509 = vpow.pop %v5508
        %v5510 = vmul.f32 %v4931, 1.442695
        %v5511 = vpow.pop %v5510
        %v5512 = vmul.f32 %v4932, 1.442695
        %v5513 = vpow.pop %v5512
        %v5514 = vmul.f32 %v4933, 1.442695
        %v5515 = vpow.pop %v5514
        %v5516 = vmul.f32 %v4934, 1.442695
        %v5517 = vpow.pop %v5516
        %v5518 = vmul.f32 %v4935, 1.442695
        %v5519 = vpow.pop %v5518
        %v5520 = vmul.f32 %v4936, 1.442695
        %v5521 = vpow.pop %v5520
        %v5522 = vmul.f32 %v4937, 1.442695
        %v5523 = vpow.pop %v5522
        %v5524 = vmul.f32 %v4938, 1.442695
        %v5525 = vpow.pop %v5524
        %v5526 = vmul.f32 %v4939, 1.442695
        %v5527 = vpow.pop %v5526
        %v5528 = vmul.f32 %v4940, 1.442695
        %v5529 = vpow.pop %v5528
        %v5530 = vmul.f32 %v4941, 1.442695
        %v5531 = vpow.pop %v5530
        %v5532 = vmul.f32 %v4942, 1.442695
        %v5533 = vpow.pop %v5532
        %v5534 = vmul.f32 %v4943, 1.442695
        %v5535 = vpow.pop %v5534
        %v5536 = vmul.f32 %v4944, 1.442695
        %v5537 = vpow.pop %v5536
        %v5538 = vmul.f32 %v4945, 1.442695
        %v5539 = vpow.pop %v5538
        %v5540 = vmul.f32 %v4946, 1.442695
        %v5541 = vpow.pop %v5540
        %v5542 = vmul.f32 %v4947, 1.442695
        %v5543 = vpow.pop %v5542
        %v5544 = vmul.f32 %v4948, 1.442695
        %v5545 = vpow.pop %v5544
        %v5546 = vmul.f32 %v4949, 1.442695
        %v5547 = vpow.pop %v5546
        %v5548 = vmul.f32 %v4950, 1.442695
        %v5549 = vpow.pop %v5548
        %v5550 = vmul.f32 %v4951, 1.442695
        %v5551 = vpow.pop %v5550
        %v5552 = vmul.f32 %v4952, 1.442695
        %v5553 = vpow.pop %v5552
        %v5554 = vmul.f32 %v4953, 1.442695
        %v5555 = vpow.pop %v5554
        %v5556 = vmul.f32 %v4954, 1.442695
        %v5557 = vpow.pop %v5556
        %v5558 = vmul.f32 %v4955, 1.442695
        %v5559 = vpow.pop %v5558
        %v5560 = vmul.f32 %v4956, 1.442695
        %v5561 = vpow.pop %v5560
        %v5562 = vmul.f32 %v4957, 1.442695
        %v5563 = vpow.pop %v5562
        %v5564 = vmul.f32 %v4958, 1.442695
        %v5565 = vpow.pop %v5564
        %v5566 = vmul.f32 %v4959, 1.442695
        %v5567 = vpow.pop %v5566
        %v5568 = vmul.f32 %v4960, 1.442695
        %v5569 = vpow.pop %v5568
        %v5570 = vmul.f32 %v4961, 1.442695
        %v5571 = vpow.pop %v5570
        %v5572 = vmul.f32 %v4962, 1.442695
        %v5573 = vpow.pop %v5572
        %v5574 = vmul.f32 %v4963, 1.442695
        %v5575 = vpow.pop %v5574
        %v5576 = vmul.f32 %v4964, 1.442695
        %v5577 = vpow.pop %v5576
        %v5578 = vmul.f32 %v4965, 1.442695
        %v5579 = vpow.pop %v5578
        %v5580 = vmul.f32 %v4966, 1.442695
        %v5581 = vpow.pop %v5580
        %v5582 = vmul.f32 %v4967, 1.442695
        %v5583 = vpow.pop %v5582
        %v5584 = vmul.f32 %v4968, 1.442695
        %v5585 = vpow.pop %v5584
        %v5586 = vmul.f32 %v4969, 1.442695
        %v5587 = vpow.pop %v5586
        %v5588 = vmul.f32 %v4970, 1.442695
        %v5589 = vpow.pop %v5588
        %v5590 = vmul.f32 %v4971, 1.442695
        %v5591 = vpow.pop %v5590
        %v5592 = vmul.f32 %v4972, 1.442695
        %v5593 = vpow.pop %v5592
        %v5594 = vmul.f32 %v4973, 1.442695
        %v5595 = vpow.pop %v5594
        %v5596 = vmul.f32 %v4974, 1.442695
        %v5597 = vpow.pop %v5596
        %v5598 = vmul.f32 %v4975, 1.442695
        %v5599 = vpow.pop %v5598
        %v5600 = vmul.f32 %v4976, 1.442695
        %v5601 = vpow.pop %v5600
        %v5602 = vmul.f32 %v4977, 1.442695
        %v5603 = vpow.pop %v5602
        %v5604 = vmul.f32 %v4978, 1.442695
        %v5605 = vpow.pop %v5604
        %v5606 = vmul.f32 %v4979, 1.442695
        %v5607 = vpow.pop %v5606
        %v5608 = vmul.f32 %v4980, 1.442695
        %v5609 = vpow.pop %v5608
        %v5610 = vmul.f32 %v4981, 1.442695
        %v5611 = vpow.pop %v5610
        %v5612 = vmul.f32 %v4982, 1.442695
        %v5613 = vpow.pop %v5612
        %v5614 = vmul.f32 %v4983, 1.442695
        %v5615 = vpow.pop %v5614
        %v5616 = vmul.f32 %v4984, 1.442695
        %v5617 = vpow.pop %v5616
        %v5618 = vmul.f32 %v4985, 1.442695
        %v5619 = vpow.pop %v5618
        %v5620 = vmul.f32 %v4986, 1.442695
        %v5621 = vpow.pop %v5620
        %v5622 = vmul.f32 %v4987, 1.442695
        %v5623 = vpow.pop %v5622
        %v5624 = vmul.f32 %v4988, 1.442695
        %v5625 = vpow.pop %v5624
        %v5626 = vmul.f32 %v4989, 1.442695
        %v5627 = vpow.pop %v5626
        %v5628 = vmul.f32 %v4990, 1.442695
        %v5629 = vpow.pop %v5628
        %v5630 = vmul.f32 %v4991, 1.442695
        %v5631 = vpow.pop %v5630
        %v5632 = vmul.f32 %v4992, 1.442695
        %v5633 = vpow.pop %v5632
        %v5634 = vmul.f32 %v4993, 1.442695
        %v5635 = vpow.pop %v5634
        %v5636 = vmul.f32 %v4994, 1.442695
        %v5637 = vpow.pop %v5636
        %v5638 = vmul.f32 %v4995, 1.442695
        %v5639 = vpow.pop %v5638
        %v5640 = vmul.f32 %v4996, 1.442695
        %v5641 = vpow.pop %v5640
        %v5642 = vmul.f32 %v4997, 1.442695
        %v5643 = vpow.pop %v5642
        %v5644 = vmul.f32 %v4998, 1.442695
        %v5645 = vpow.pop %v5644
        %v5646 = vmul.f32 %v4999, 1.442695
        %v5647 = vpow.pop %v5646
        %v5648 = vmul.f32 %v5000, 1.442695
        %v5649 = vpow.pop %v5648
        %v5650 = vmul.f32 %v5001, 1.442695
        %v5651 = vpow.pop %v5650
        %v5652 = vmul.f32 %v5002, 1.442695
        %v5653 = vpow.pop %v5652
        %v5654 = vmul.f32 %v5003, 1.442695
        %v5655 = vpow.pop %v5654
        %v5656 = vmul.f32 %v5004, 1.442695
        %v5657 = vpow.pop %v5656
        %v5658 = vmul.f32 %v5005, 1.442695
        %v5659 = vpow.pop %v5658
        %v5660 = vmul.f32 %v5006, 1.442695
        %v5661 = vpow.pop %v5660
        %v5662 = vmul.f32 %v5007, 1.442695
        %v5663 = vpow.pop %v5662
        %v5664 = vmul.f32 %v5008, 1.442695
        %v5665 = vpow.pop %v5664
        %v5666 = vmul.f32 %v5009, 1.442695
        %v5667 = vpow.pop %v5666
        %v5668 = vmul.f32 %v5010, 1.442695
        %v5669 = vpow.pop %v5668
        %v5670 = vmul.f32 %v5011, 1.442695
        %v5671 = vpow.pop %v5670
        %v5672 = vmul.f32 %v5012, 1.442695
        %v5673 = vpow.pop %v5672
        %v5674 = vmul.f32 %v5013, 1.442695
        %v5675 = vpow.pop %v5674
        %v5676 = vmul.f32 %v5014, 1.442695
        %v5677 = vpow.pop %v5676
        %v5678 = vmul.f32 %v5015, 1.442695
        %v5679 = vpow.pop %v5678
        %v5680 = vmul.f32 %v5016, 1.442695
        %v5681 = vpow.pop %v5680
        %v5682 = vmul.f32 %v5017, 1.442695
        %v5683 = vpow.pop %v5682
        %v5684 = vmul.f32 %v5018, 1.442695
        %v5685 = vpow.pop %v5684
        %v5686 = vmul.f32 %v5019, 1.442695
        %v5687 = vpow.pop %v5686
        %v5688 = vmul.f32 %v5020, 1.442695
        %v5689 = vpow.pop %v5688
        %v5690 = vmul.f32 %v5021, 1.442695
        %v5691 = vpow.pop %v5690
        %v5692 = vmul.f32 %v5022, 1.442695
        %v5693 = vpow.pop %v5692
        %v5694 = vmul.f32 %v5023, 1.442695
        %v5695 = vpow.pop %v5694
        %v5696 = vmul.f32 %v5024, 1.442695
        %v5697 = vpow.pop %v5696
        %v5698 = vmul.f32 %v5025, 1.442695
        %v5699 = vpow.pop %v5698
        %v5700 = vmul.f32 %v5026, 1.442695
        %v5701 = vpow.pop %v5700
        %v5702 = vmul.f32 %v5027, 1.442695
        %v5703 = vpow.pop %v5702
        %v5704 = vmul.f32 %v5028, 1.442695
        %v5705 = vpow.pop %v5704
        %v5706 = vmul.f32 %v5029, 1.442695
        %v5707 = vpow.pop %v5706
        %v5708 = vmul.f32 %v5030, 1.442695
        %v5709 = vpow.pop %v5708
        %v5710 = vmul.f32 %v5031, 1.442695
        %v5711 = vpow.pop %v5710
        %v5712 = vmul.f32 %v5032, 1.442695
        %v5713 = vpow.pop %v5712
        %v5714 = vmul.f32 %v5033, 1.442695
        %v5715 = vpow.pop %v5714
        %v5716 = vmul.f32 %v5034, 1.442695
        %v5717 = vpow.pop %v5716
        %v5718 = vmul.f32 %v5035, 1.442695
        %v5719 = vpow.pop %v5718
        %v5720 = vmul.f32 %v5036, 1.442695
        %v5721 = vpow.pop %v5720
        %v5722 = vmul.f32 %v5037, 1.442695
        %v5723 = vpow.pop %v5722
        %v5724 = vmul.f32 %v5038, 1.442695
        %v5725 = vpow.pop %v5724
        %v5726 = vmul.f32 %v5039, 1.442695
        %v5727 = vpow.pop %v5726
        %v5728 = vmul.f32 %v5040, 1.442695
        %v5729 = vpow.pop %v5728
        %v5730 = vmul.f32 %v5041, 1.442695
        %v5731 = vpow.pop %v5730
        %v5732 = vmul.f32 %v5042, 1.442695
        %v5733 = vpow.pop %v5732
        %v5734 = vmul.f32 %v5043, 1.442695
        %v5735 = vpow.pop %v5734
        %v5736 = vmul.f32 %v5044, 1.442695
        %v5737 = vpow.pop %v5736
        %v5738 = vmul.f32 %v5045, 1.442695
        %v5739 = vpow.pop %v5738
        %v5740 = vmul.f32 %v5046, 1.442695
        %v5741 = vpow.pop %v5740
        %v5742 = vmul.f32 %v5047, 1.442695
        %v5743 = vpow.pop %v5742
        %v5744 = vmul.f32 %v5048, 1.442695
        %v5745 = vpow.pop %v5744
        %v5746 = vmul.f32 %v5049, 1.442695
        %v5747 = vpow.pop %v5746
        %v5748 = vmul.f32 %v5050, 1.442695
        %v5749 = vpow.pop %v5748
        %v5750 = vmul.f32 %v5051, 1.442695
        %v5751 = vpow.pop %v5750
        %v5752 = vmul.f32 %v5052, 1.442695
        %v5753 = vpow.pop %v5752
        %v5754 = vmul.f32 %v5053, 1.442695
        %v5755 = vpow.pop %v5754
        %v5756 = vmul.f32 %v5054, 1.442695
        %v5757 = vpow.pop %v5756
        %v5758 = vmul.f32 %v5055, 1.442695
        %v5759 = vpow.pop %v5758
        %v5760 = vmul.f32 %v5056, 1.442695
        %v5761 = vpow.pop %v5760
        %v5762 = vmul.f32 %v5057, 1.442695
        %v5763 = vpow.pop %v5762
        %v5764 = vmul.f32 %v5058, 1.442695
        %v5765 = vpow.pop %v5764
        %v5766 = vmul.f32 %v5059, 1.442695
        %v5767 = vpow.pop %v5766
        %v5768 = vmul.f32 %v5060, 1.442695
        %v5769 = vpow.pop %v5768
        %v5770 = vmul.f32 %v5061, 1.442695
        %v5771 = vpow.pop %v5770
        %v5772 = vmul.f32 %v5062, 1.442695
        %v5773 = vpow.pop %v5772
        %v5774 = vmul.f32 %v5063, 1.442695
        %v5775 = vpow.pop %v5774
        %v5776 = vmul.f32 %v5064, 1.442695
        %v5777 = vpow.pop %v5776
        %v5778 = vmul.f32 %v5065, 1.442695
        %v5779 = vpow.pop %v5778
        %v5780 = vmul.f32 %v5066, 1.442695
        %v5781 = vpow.pop %v5780
        %v5782 = vmul.f32 %v5067, 1.442695
        %v5783 = vpow.pop %v5782
        %v5784 = vmul.f32 %v5068, 1.442695
        %v5785 = vpow.pop %v5784
        %v5786 = vmul.f32 %v5069, 1.442695
        %v5787 = vpow.pop %v5786
        %v5788 = vmul.f32 %v5070, 1.442695
        %v5789 = vpow.pop %v5788
        %v5790 = vmul.f32 %v5071, 1.442695
        %v5791 = vpow.pop %v5790
        %v5792 = vmul.f32 %v5072, 1.442695
        %v5793 = vpow.pop %v5792
        %v5794 = vmul.f32 %v5073, 1.442695
        %v5795 = vpow.pop %v5794
        %v5796 = vmul.f32 %v5074, 1.442695
        %v5797 = vpow.pop %v5796
        %v5798 = vmul.f32 %v5075, 1.442695
        %v5799 = vpow.pop %v5798
        %v5800 = vmul.f32 %v5076, 1.442695
        %v5801 = vpow.pop %v5800
        %v5802 = vmul.f32 %v5077, 1.442695
        %v5803 = vpow.pop %v5802
        %v5804 = vmul.f32 %v5078, 1.442695
        %v5805 = vpow.pop %v5804
        %v5806 = vmul.f32 %v5079, 1.442695
        %v5807 = vpow.pop %v5806
        %v5808 = vmul.f32 %v5080, 1.442695
        %v5809 = vpow.pop %v5808
        %v5810 = vmul.f32 %v5081, 1.442695
        %v5811 = vpow.pop %v5810
        %v5812 = vmul.f32 %v5082, 1.442695
        %v5813 = vpow.pop %v5812
        %v5814 = vmul.f32 %v5083, 1.442695
        %v5815 = vpow.pop %v5814
        %v5816 = vmul.f32 %v5084, 1.442695
        %v5817 = vpow.pop %v5816
        %v5818 = vmul.f32 %v5085, 1.442695
        %v5819 = vpow.pop %v5818
        %v5820 = vmul.f32 %v5086, 1.442695
        %v5821 = vpow.pop %v5820
        %v5822 = vmul.f32 %v5087, 1.442695
        %v5823 = vpow.pop %v5822
        %v5824 = vmul.f32 %v5088, 1.442695
        %v5825 = vpow.pop %v5824
        %v5826 = vmul.f32 %v5089, 1.442695
        %v5827 = vpow.pop %v5826
        %v5828 = vmul.f32 %v5090, 1.442695
        %v5829 = vpow.pop %v5828
        %v5830 = vmul.f32 %v5091, 1.442695
        %v5831 = vpow.pop %v5830
        %v5832 = vmul.f32 %v5092, 1.442695
        %v5833 = vpow.pop %v5832
        %v5834 = vmul.f32 %v5093, 1.442695
        %v5835 = vpow.pop %v5834
        %v5836 = vmul.f32 %v5094, 1.442695
        %v5837 = vpow.pop %v5836
        %v5838 = vmul.f32 %v5095, 1.442695
        %v5839 = vpow.pop %v5838
        %v5840 = vmul.f32 %v5096, 1.442695
        %v5841 = vpow.pop %v5840
        %v5842 = vmul.f32 %v5097, 1.442695
        %v5843 = vpow.pop %v5842
        %v5844 = vmul.f32 %v5098, 1.442695
        %v5845 = vpow.pop %v5844
        %v5846 = vmul.f32 %v5099, 1.442695
        %v5847 = vpow.pop %v5846
        %v5848 = vmul.f32 %v5100, 1.442695
        %v5849 = vpow.pop %v5848
        %v5850 = vmul.f32 %v5101, 1.442695
        %v5851 = vpow.pop %v5850
        %v5852 = vmul.f32 %v5102, 1.442695
        %v5853 = vpow.pop %v5852
        %v5854 = vmul.f32 %v5103, 1.442695
        %v5855 = vpow.pop %v5854
        %v5856 = vmul.f32 %v5104, 1.442695
        %v5857 = vpow.pop %v5856
        %v5858 = vmul.f32 %v5105, 1.442695
        %v5859 = vpow.pop %v5858
        %v5860 = vmul.f32 %v5106, 1.442695
        %v5861 = vpow.pop %v5860
        %v5862 = vmul.f32 %v5107, 1.442695
        %v5863 = vpow.pop %v5862
        %v5864 = vmul.f32 %v5108, 1.442695
        %v5865 = vpow.pop %v5864
        %v5866 = vmul.f32 %v5109, 1.442695
        %v5867 = vpow.pop %v5866
        %v5868 = vmul.f32 %v5110, 1.442695
        %v5869 = vpow.pop %v5868
        %v5870 = vmul.f32 %v5111, 1.442695
        %v5871 = vpow.pop %v5870
        %v5872 = vmul.f32 %v5112, 1.442695
        %v5873 = vpow.pop %v5872
        %v5874 = vmul.f32 %v5113, 1.442695
        %v5875 = vpow.pop %v5874
        %v5876 = vmul.f32 %v5114, 1.442695
        %v5877 = vpow.pop %v5876
        %v5878 = vmul.f32 %v5115, 1.442695
        %v5879 = vpow.pop %v5878
        %v5880 = vmul.f32 %v5116, 1.442695
        %v5881 = vpow.pop %v5880
        %v5882 = vmul.f32 %v5117, 1.442695
        %v5883 = vpow.pop %v5882
        %v5884 = vmul.f32 %v5118, 1.442695
        %v5885 = vpow.pop %v5884
        %v5886 = vmul.f32 %v5119, 1.442695
        %v5887 = vpow.pop %v5886
        %v5888 = vmul.f32 %v5120, 1.442695
        %v5889 = vpow.pop %v5888
        %v5890 = vmul.f32 %v5121, 1.442695
        %v5891 = vpow.pop %v5890
        %v5892 = vmul.f32 %v5122, 1.442695
        %v5893 = vpow.pop %v5892
        %v5894 = vmul.f32 %v5123, 1.442695
        %v5895 = vpow.pop %v5894
        %v5896 = vmul.f32 %v5124, 1.442695
        %v5897 = vpow.pop %v5896
        %v5898 = vmul.f32 %v5125, 1.442695
        %v5899 = vpow.pop %v5898
        %v5900 = vmul.f32 %v5126, 1.442695
        %v5901 = vpow.pop %v5900
        %v5902 = vmul.f32 %v5127, 1.442695
        %v5903 = vpow.pop %v5902
        %v5904 = vmul.f32 %v5128, 1.442695
        %v5905 = vpow.pop %v5904
        %v5906 = vmul.f32 %v5129, 1.442695
        %v5907 = vpow.pop %v5906
        %v5908 = vmul.f32 %v5130, 1.442695
        %v5909 = vpow.pop %v5908
        %v5910 = vmul.f32 %v5131, 1.442695
        %v5911 = vpow.pop %v5910
        %v5912 = vmul.f32 %v5132, 1.442695
        %v5913 = vpow.pop %v5912
        %v5914 = vmul.f32 %v5133, 1.442695
        %v5915 = vpow.pop %v5914
        %v5916 = vmul.f32 %v5134, 1.442695
        %v5917 = vpow.pop %v5916
        %v5918 = vmul.f32 %v5135, 1.442695
        %v5919 = vpow.pop %v5918
        %v5920 = vmul.f32 %v5136, 1.442695
        %v5921 = vpow.pop %v5920
        %v5922 = vmul.f32 %v5137, 1.442695
        %v5923 = vpow.pop %v5922
        %v5924 = vmul.f32 %v5138, 1.442695
        %v5925 = vpow.pop %v5924
        %v5926 = vmul.f32 %v5139, 1.442695
        %v5927 = vpow.pop %v5926
        %v5928 = vmul.f32 %v5140, 1.442695
        %v5929 = vpow.pop %v5928
        %v5930 = vmul.f32 %v5141, 1.442695
        %v5931 = vpow.pop %v5930
        %v5932 = vmul.f32 %v5142, 1.442695
        %v5933 = vpow.pop %v5932
        %v5934 = vmul.f32 %v5143, 1.442695
        %v5935 = vpow.pop %v5934
        %v5936 = vmul.f32 %v5144, 1.442695
        %v5937 = vpow.pop %v5936
        %v5938 = vmul.f32 %v5145, 1.442695
        %v5939 = vpow.pop %v5938
        %v5940 = vmul.f32 %v5146, 1.442695
        %v5941 = vpow.pop %v5940
        %v5942 = vmul.f32 %v5147, 1.442695
        %v5943 = vpow.pop %v5942
        %v5944 = vmul.f32 %v5148, 1.442695
        %v5945 = vpow.pop %v5944
        %v5946 = vmul.f32 %v5149, 1.442695
        %v5947 = vpow.pop %v5946
        %v5948 = vmul.f32 %v5150, 1.442695
        %v5949 = vpow.pop %v5948
        %v5950 = vmul.f32 %v5151, 1.442695
        %v5951 = vpow.pop %v5950
        %v5952 = vmul.f32 %v5152, 1.442695
        %v5953 = vpow.pop %v5952
        %v5954 = vmul.f32 %v5153, 1.442695
        %v5955 = vpow.pop %v5954
        %v5956 = vmul.f32 %v5154, 1.442695
        %v5957 = vpow.pop %v5956
        %v5958 = vmul.f32 %v5155, 1.442695
        %v5959 = vpow.pop %v5958
        %v5960 = vmul.f32 %v5156, 1.442695
        %v5961 = vpow.pop %v5960
        %v5962 = vmul.f32 %v5157, 1.442695
        %v5963 = vpow.pop %v5962
        %v5964 = vmul.f32 %v5158, 1.442695
        %v5965 = vpow.pop %v5964
        %v5966 = vmul.f32 %v5159, 1.442695
        %v5967 = vpow.pop %v5966
        %v5968 = vmul.f32 %v5160, 1.442695
        %v5969 = vpow.pop %v5968
        %v5970 = vmul.f32 %v5161, 1.442695
        %v5971 = vpow.pop %v5970
        %v5972 = vmul.f32 %v5162, 1.442695
        %v5973 = vpow.pop %v5972
        %v5974 = vmul.f32 %v5163, 1.442695
        %v5975 = vpow.pop %v5974
        %v5976 = vmul.f32 %v5164, 1.442695
        %v5977 = vpow.pop %v5976
        %v5978 = vmul.f32 %v5165, 1.442695
        %v5979 = vpow.pop %v5978
        %v5980 = vmul.f32 %v5166, 1.442695
        %v5981 = vpow.pop %v5980
        %v5982 = vmul.f32 %v5167, 1.442695
        %v5983 = vpow.pop %v5982
        %v5984 = vmul.f32 %v5168, 1.442695
        %v5985 = vpow.pop %v5984
        %v5986 = vmul.f32 %v5169, 1.442695
        %v5987 = vpow.pop %v5986
        %v5988 = vmul.f32 %v5170, 1.442695
        %v5989 = vpow.pop %v5988
        %v5990 = vmul.f32 %v5171, 1.442695
        %v5991 = vpow.pop %v5990
        %v5992 = vmul.f32 %v5172, 1.442695
        %v5993 = vpow.pop %v5992
        %v5994 = vmul.f32 %v5173, 1.442695
        %v5995 = vpow.pop %v5994
        %v5996 = vmul.f32 %v5174, 1.442695
        %v5997 = vpow.pop %v5996
        %v5998 = vmul.f32 %v5175, 1.442695
        %v5999 = vpow.pop %v5998
        %v6000 = vmul.f32 %v5176, 1.442695
        %v6001 = vpow.pop %v6000
        %v6002 = vmul.f32 %v5177, 1.442695
        %v6003 = vpow.pop %v6002
        %v6004 = vmul.f32 %v5178, 1.442695
        %v6005 = vpow.pop %v6004
        %v6006 = vmul.f32 %v5179, 1.442695
        %v6007 = vpow.pop %v6006
        %v6008 = vmul.f32 %v5180, 1.442695
        %v6009 = vpow.pop %v6008
        %v6010 = vmul.f32 %v5181, 1.442695
        %v6011 = vpow.pop %v6010
        %v6012 = vmul.f32 %v5182, 1.442695
        %v6013 = vpow.pop %v6012
        %v6014 = vmul.f32 %v5183, 1.442695
        %v6015 = vpow.pop %v6014
        %v6016 = vmul.f32 %v5184, 1.442695
        %v6017 = vpow.pop %v6016
        %v6018 = vmul.f32 %v5185, 1.442695
        %v6019 = vpow.pop %v6018
        %v6020 = vmul.f32 %v5186, 1.442695
        %v6021 = vpow.pop %v6020
        %v6022 = vmul.f32 %v5187, 1.442695
        %v6023 = vpow.pop %v6022
        %v6024 = vmul.f32 %v5188, 1.442695
        %v6025 = vpow.pop %v6024
        %v6026 = vmul.f32 %v5189, 1.442695
        %v6027 = vpow.pop %v6026
        %v6028 = vmul.f32 %v5190, 1.442695
        %v6029 = vpow.pop %v6028
        %v6030 = vmul.f32 %v5191, 1.442695
        %v6031 = vpow.pop %v6030
        %v6032 = vmul.f32 %v5192, 1.442695
        %v6033 = vpow.pop %v6032
        %v6034 = vmul.f32 %v5193, 1.442695
        %v6035 = vpow.pop %v6034
        %v6036 = vmul.f32 %v5194, 1.442695
        %v6037 = vpow.pop %v6036
        %v6038 = vmul.f32 %v5195, 1.442695
        %v6039 = vpow.pop %v6038
        %v6040 = vmul.f32 %v5196, 1.442695
        %v6041 = vpow.pop %v6040
        %v6042 = vmul.f32 %v5197, 1.442695
        %v6043 = vpow.pop %v6042
        %v6044 = vmul.f32 %v5198, 1.442695
        %v6045 = vpow.pop %v6044
        %v6046 = vmul.f32 %v5199, 1.442695
        %v6047 = vpow.pop %v6046
        %v6048 = vmul.f32 %v5200, 1.442695
        %v6049 = vpow.pop %v6048
        %v6050 = vmul.f32 %v5201, 1.442695
        %v6051 = vpow.pop %v6050
        %v6052 = vmul.f32 %v5202, 1.442695
        %v6053 = vpow.pop %v6052
        %v6054 = vmul.f32 %v5203, 1.442695
        %v6055 = vpow.pop %v6054
        %v6056 = vmul.f32 %v5204, 1.442695
        %v6057 = vpow.pop %v6056
        %v6058 = vmul.f32 %v5205, 1.442695
        %v6059 = vpow.pop %v6058
        %v6060 = vmul.f32 %v5206, 1.442695
        %v6061 = vpow.pop %v6060
        %v6062 = vmul.f32 %v5207, 1.442695
        %v6063 = vpow.pop %v6062
        %v6064 = vmul.f32 %v5208, 1.442695
        %v6065 = vpow.pop %v6064
        %v6066 = vmul.f32 %v5209, 1.442695
        %v6067 = vpow.pop %v6066
        %v6068 = vmul.f32 %v5210, 1.442695
        %v6069 = vpow.pop %v6068
        %v6070 = vmul.f32 %v5211, 1.442695
        %v6071 = vpow.pop %v6070
        %v6072 = vmul.f32 %v5212, 1.442695
        %v6073 = vpow.pop %v6072
        %v6074 = vmul.f32 %v5213, 1.442695
        %v6075 = vpow.pop %v6074
        %v6076 = vmul.f32 %v5214, 1.442695
        %v6077 = vpow.pop %v6076
        %v6078 = vmul.f32 %v5215, 1.442695
        %v6079 = vpow.pop %v6078
        %v6080 = vmul.f32 %v5216, 1.442695
        %v6081 = vpow.pop %v6080
        %v6082 = vmul.f32 %v5217, 1.442695
        %v6083 = vpow.pop %v6082
        %v6084 = vmul.f32 %v5218, 1.442695
        %v6085 = vpow.pop %v6084
        %v6086 = vmul.f32 %v5219, 1.442695
        %v6087 = vpow.pop %v6086
        %v6088 = vmul.f32 %v5220, 1.442695
        %v6089 = vpow.pop %v6088
        %v6090 = vmul.f32 %v5221, 1.442695
        %v6091 = vpow.pop %v6090
        %v6092 = vmul.f32 %v5222, 1.442695
        %v6093 = vpow.pop %v6092
        %v6094 = vmul.f32 %v5223, 1.442695
        %v6095 = vpow.pop %v6094
        %v6096 = vmul.f32 %v5224, 1.442695
        %v6097 = vpow.pop %v6096
        %v6098 = vmul.f32 %v5225, 1.442695
        %v6099 = vpow.pop %v6098
        %v6100 = vmul.f32 %v5226, 1.442695
        %v6101 = vpow.pop %v6100
        %v6102 = vmul.f32 %v5227, 1.442695
        %v6103 = vpow.pop %v6102
        %v6104 = vmul.f32 %v5228, 1.442695
        %v6105 = vpow.pop %v6104
        %v6106 = vmul.f32 %v5229, 1.442695
        %v6107 = vpow.pop %v6106
        %v6108 = vmul.f32 %v5230, 1.442695
        %v6109 = vpow.pop %v6108
        %v6110 = vmul.f32 %v5231, 1.442695
        %v6111 = vpow.pop %v6110
        %v6112 = vmul.f32 %v5232, 1.442695
        %v6113 = vpow.pop %v6112
        %v6114 = vmul.f32 %v5233, 1.442695
        %v6115 = vpow.pop %v6114
        %v6116 = vmul.f32 %v5234, 1.442695
        %v6117 = vpow.pop %v6116
        %v6118 = vmul.f32 %v5235, 1.442695
        %v6119 = vpow.pop %v6118
        %v6120 = vmul.f32 %v5236, 1.442695
        %v6121 = vpow.pop %v6120
        %v6122 = vmul.f32 %v5237, 1.442695
        %v6123 = vpow.pop %v6122
        %v6124 = vmul.f32 %v5238, 1.442695
        %v6125 = vpow.pop %v6124
        %v6126 = vmul.f32 %v5239, 1.442695
        %v6127 = vpow.pop %v6126
        %v6128 = vmul.f32 %v5240, 1.442695
        %v6129 = vpow.pop %v6128
        %v6130 = vmul.f32 %v5241, 1.442695
        %v6131 = vpow.pop %v6130
        %v6132 = vmul.f32 %v5242, 1.442695
        %v6133 = vpow.pop %v6132
        %v6134 = vmul.f32 %v5243, 1.442695
        %v6135 = vpow.pop %v6134
        %v6136 = vmul.f32 %v5244, 1.442695
        %v6137 = vpow.pop %v6136
        %v6138 = vmul.f32 %v5245, 1.442695
        %v6139 = vpow.pop %v6138
        %v6140 = vmul.f32 %v5246, 1.442695
        %v6141 = vpow.pop %v6140
        %v6142 = vmul.f32 %v5247, 1.442695
        %v6143 = vpow.pop %v6142
        %v6144 = vmul.f32 %v5248, 1.442695
        %v6145 = vpow.pop %v6144
        %v6146 = vmul.f32 %v5249, 1.442695
        %v6147 = vpow.pop %v6146
        %v6148 = vmul.f32 %v5250, 1.442695
        %v6149 = vpow.pop %v6148
        %v6150 = vmul.f32 %v5251, 1.442695
        %v6151 = vpow.pop %v6150
        %v6152 = vmul.f32 %v5252, 1.442695
        %v6153 = vpow.pop %v6152
        %v6154 = vmul.f32 %v5253, 1.442695
        %v6155 = vpow.pop %v6154
        %v6156 = vmul.f32 %v5254, 1.442695
        %v6157 = vpow.pop %v6156
        %v6158 = vmul.f32 %v5255, 1.442695
        %v6159 = vpow.pop %v6158
        %v6160 = vmul.f32 %v5256, 1.442695
        %v6161 = vpow.pop %v6160
        %v6162 = vmul.f32 %v5257, 1.442695
        %v6163 = vpow.pop %v6162
        %v6164 = vmul.f32 %v5258, 1.442695
        %v6165 = vpow.pop %v6164
        %v6166 = vmul.f32 %v5259, 1.442695
        %v6167 = vpow.pop %v6166
        %v6168 = vmul.f32 %v5260, 1.442695
        %v6169 = vpow.pop %v6168
        %v6170 = vmul.f32 %v5261, 1.442695
        %v6171 = vpow.pop %v6170
        %v6172 = vmul.f32 %v5262, 1.442695
        %v6173 = vpow.pop %v6172
        %v6174 = vmul.f32 %v5263, 1.442695
        %v6175 = vpow.pop %v6174
        %v6176 = vmul.f32 %v5264, 1.442695
        %v6177 = vpow.pop %v6176
        %v6178 = vmul.f32 %v5265, 1.442695
        %v6179 = vpow.pop %v6178
        %v6180 = vmul.f32 %v5266, 1.442695
        %v6181 = vpow.pop %v6180
        %v6182 = vmul.f32 %v5267, 1.442695
        %v6183 = vpow.pop %v6182
        %v6184 = vmul.f32 %v5268, 1.442695
        %v6185 = vpow.pop %v6184
        %v6186 = vmul.f32 %v5269, 1.442695
        %v6187 = vpow.pop %v6186
        %v6188 = vmul.f32 %v5270, 1.442695
        %v6189 = vpow.pop %v6188
        %v6190 = vmul.f32 %v5271, 1.442695
        %v6191 = vpow.pop %v6190
        %v6192 = vmul.f32 %v5272, 1.442695
        %v6193 = vpow.pop %v6192
        %v6194 = vmul.f32 %v5273, 1.442695
        %v6195 = vpow.pop %v6194
        %v6196 = vmul.f32 %v5274, 1.442695
        %v6197 = vpow.pop %v6196
        %v6198 = vmul.f32 %v5275, 1.442695
        %v6199 = vpow.pop %v6198
        %v6200 = vmul.f32 %v5276, 1.442695
        %v6201 = vpow.pop %v6200
        %v6202 = vmul.f32 %v5277, 1.442695
        %v6203 = vpow.pop %v6202
        %v6204 = vmul.f32 %v5278, 1.442695
        %v6205 = vpow.pop %v6204
        %v6206 = vmul.f32 %v5279, 1.442695
        %v6207 = vpow.pop %v6206
        %v6208 = vmul.f32 %v5280, 1.442695
        %v6209 = vpow.pop %v6208
        %v6210 = vmul.f32 %v5281, 1.442695
        %v6211 = vpow.pop %v6210
        %v6212 = vmul.f32 %v5282, 1.442695
        %v6213 = vpow.pop %v6212
        %v6214 = vmul.f32 %v5283, 1.442695
        %v6215 = vpow.pop %v6214
        %v6216 = vmul.f32 %v5284, 1.442695
        %v6217 = vpow.pop %v6216
        %v6218 = vmul.f32 %v5285, 1.442695
        %v6219 = vpow.pop %v6218
        %v6220 = vmul.f32 %v5286, 1.442695
        %v6221 = vpow.pop %v6220
        %v6222 = vmul.f32 %v5287, 1.442695
        %v6223 = vpow.pop %v6222
        %v6224 = vmul.f32 %v5288, 1.442695
        %v6225 = vpow.pop %v6224
        %v6226 = vmul.f32 %v5289, 1.442695
        %v6227 = vpow.pop %v6226
        %v6228 = vmul.f32 %v5290, 1.442695
        %v6229 = vpow.pop %v6228
        %v6230 = vmul.f32 %v5291, 1.442695
        %v6231 = vpow.pop %v6230
        %v6232 = vmul.f32 %v5292, 1.442695
        %v6233 = vpow.pop %v6232
        %v6234 = vmul.f32 %v5293, 1.442695
        %v6235 = vpow.pop %v6234
        %v6236 = vmul.f32 %v5294, 1.442695
        %v6237 = vpow.pop %v6236
        %v6238 = vmul.f32 %v5295, 1.442695
        %v6239 = vpow.pop %v6238
        %v6240 = vmul.f32 %v5296, 1.442695
        %v6241 = vpow.pop %v6240
        %v6242 = vmul.f32 %v5297, 1.442695
        %v6243 = vpow.pop %v6242
        %v6244 = vmul.f32 %v5298, 1.442695
        %v6245 = vpow.pop %v6244
        %v6246 = vmul.f32 %v5299, 1.442695
        %v6247 = vpow.pop %v6246
        %v6248 = vmul.f32 %v5300, 1.442695
        %v6249 = vpow.pop %v6248
        %v6250 = vmul.f32 %v5301, 1.442695
        %v6251 = vpow.pop %v6250
        %v6252 = vmul.f32 %v5302, 1.442695
        %v6253 = vpow.pop %v6252
        %v6254 = vmul.f32 %v5303, 1.442695
        %v6255 = vpow.pop %v6254
        %v6256 = vmul.f32 %v5304, 1.442695
        %v6257 = vpow.pop %v6256
        %v6258 = vmul.f32 %v5305, 1.442695
        %v6259 = vpow.pop %v6258
        %v6260 = vmul.f32 %v5306, 1.442695
        %v6261 = vpow.pop %v6260
        %v6262 = vmul.f32 %v5307, 1.442695
        %v6263 = vpow.pop %v6262
        %v6264 = vmul.f32 %v5308, 1.442695
        %v6265 = vpow.pop %v6264
        %v6266 = vmul.f32 %v5309, 1.442695
        %v6267 = vpow.pop %v6266
        %v6268 = vmul.f32 %v5310, 1.442695
        %v6269 = vpow.pop %v6268
        %v6270 = vmul.f32 %v5311, 1.442695
        %v6271 = vpow.pop %v6270
        %v6272 = vmul.f32 %v5312, 1.442695
        %v6273 = vpow.pop %v6272
        %v6274 = vmul.f32 %v5313, 1.442695
        %v6275 = vpow.pop %v6274
        %v6276 = vmul.f32 %v5314, 1.442695
        %v6277 = vpow.pop %v6276
        %v6278 = vmul.f32 %v5315, 1.442695
        %v6279 = vpow.pop %v6278
        %v6280 = vmul.f32 %v5316, 1.442695
        %v6281 = vpow.pop %v6280
        %v6282 = vmul.f32 %v5317, 1.442695
        %v6283 = vpow.pop %v6282
        %v6284 = vmul.f32 %v5318, 1.442695
        %v6285 = vpow.pop %v6284
        %v6286 = vmul.f32 %v5319, 1.442695
        %v6287 = vpow.pop %v6286
        %v6288 = vmul.f32 %v5320, 1.442695
        %v6289 = vpow.pop %v6288
        %v6290 = vmul.f32 %v5321, 1.442695
        %v6291 = vpow.pop %v6290
        %v6292 = vmul.f32 %v5322, 1.442695
        %v6293 = vpow.pop %v6292
        %v6294 = vmul.f32 %v5323, 1.442695
        %v6295 = vpow.pop %v6294
        %v6296 = vmul.f32 %v5324, 1.442695
        %v6297 = vpow.pop %v6296
        %v6298 = vmul.f32 %v5325, 1.442695
        %v6299 = vpow.pop %v6298
        %v6300 = vmul.f32 %v5326, 1.442695
        %v6301 = vpow.pop %v6300
        %v6302 = vmul.f32 %v5327, 1.442695
        %v6303 = vpow.pop %v6302
        %v6304 = vmul.f32 %v5328, 1.442695
        %v6305 = vpow.pop %v6304
        %v6306 = vmul.f32 %v5329, 1.442695
        %v6307 = vpow.pop %v6306
        %v6308 = vmul.f32 %v5330, 1.442695
        %v6309 = vpow.pop %v6308
        %v6310 = vmul.f32 %v5331, 1.442695
        %v6311 = vpow.pop %v6310
        %v6312 = vmul.f32 %v5332, 1.442695
        %v6313 = vpow.pop %v6312
        %v6314 = vmul.f32 %v5333, 1.442695
        %v6315 = vpow.pop %v6314
        %v6316 = vmul.f32 %v5334, 1.442695
        %v6317 = vpow.pop %v6316
        %v6318 = vmul.f32 %v5335, 1.442695
        %v6319 = vpow.pop %v6318
        %v6320 = vmul.f32 %v5336, 1.442695
        %v6321 = vpow.pop %v6320
        %v6322 = vmul.f32 %v5337, 1.442695
        %v6323 = vpow.pop %v6322
        %v6324 = vmul.f32 %v5338, 1.442695
        %v6325 = vpow.pop %v6324
        %v6326 = vmul.f32 %v5339, 1.442695
        %v6327 = vpow.pop %v6326
        %v6328 = vmul.f32 %v5340, 1.442695
        %v6329 = vpow.pop %v6328
        %v6330 = vmul.f32 %v5341, 1.442695
        %v6331 = vpow.pop %v6330
        %v6332 = vmul.f32 %v5342, 1.442695
        %v6333 = vpow.pop %v6332
        %v6334 = vmul.f32 %v5343, 1.442695
        %v6335 = vpow.pop %v6334
        %v6336 = vmul.f32 %v5344, 1.442695
        %v6337 = vpow.pop %v6336
        %v6338 = vmul.f32 %v5345, 1.442695
        %v6339 = vpow.pop %v6338
        %v6340 = vmul.f32 %v5346, 1.442695
        %v6341 = vpow.pop %v6340
        %v6342 = vmul.f32 %v5347, 1.442695
        %v6343 = vpow.pop %v6342
        %v6344 = vmul.f32 %v5348, 1.442695
        %v6345 = vpow.pop %v6344
        %v6346 = vmul.f32 %v5349, 1.442695
        %v6347 = vpow.pop %v6346
        %v6348 = vmul.f32 %v5350, 1.442695
        %v6349 = vpow.pop %v6348
        %v6350 = vmul.f32 %v5351, 1.442695
        %v6351 = vpow.pop %v6350
        %v6352 = vmul.f32 %v5352, 1.442695
        %v6353 = vpow.pop %v6352
        %v6354 = vmul.f32 %v5353, 1.442695
        %v6355 = vpow.pop %v6354
        %v6356 = vmul.f32 %v5354, 1.442695
        %v6357 = vpow.pop %v6356
        %v6358 = vmul.f32 %v5355, 1.442695
        %v6359 = vpow.pop %v6358
        %v6360 = vmul.f32 %v5356, 1.442695
        %v6361 = vpow.pop %v6360
        %v6362 = vmul.f32 %v5357, 1.442695
        %v6363 = vpow.pop %v6362
        %v6364 = vmul.f32 %v5358, 1.442695
        %v6365 = vpow.pop %v6364
        %v6366 = vmul.f32 %v5359, 1.442695
        %v6367 = vpow.pop %v6366
        %v6368 = vmul.f32 %v5360, 1.442695
        %v6369 = vpow.pop %v6368
        %v6370 = vmul.f32 %v5361, 1.442695
        %v6371 = vpow.pop %v6370
        %v6372 = vmul.f32 %v5362, 1.442695
        %v6373 = vpow.pop %v6372
        %v6374 = vmul.f32 %v5363, 1.442695
        %v6375 = vpow.pop %v6374
        %v6376 = vmul.f32 %v5364, 1.442695
        %v6377 = vpow.pop %v6376
        %v6378 = vmul.f32 %v5365, 1.442695
        %v6379 = vpow.pop %v6378
        %v6380 = vmul.f32 %v5366, 1.442695
        %v6381 = vpow.pop %v6380
        %v6382 = vmul.f32 %v5367, 1.442695
        %v6383 = vpow.pop %v6382
        %v6384 = vmul.f32 %v5368, 1.442695
        %v6385 = vpow.pop %v6384
        %v6386 = vmul.f32 %v5369, 1.442695
        %v6387 = vpow.pop %v6386
        %v6388 = vmul.f32 %v5370, 1.442695
        %v6389 = vpow.pop %v6388
        %v6390 = vmul.f32 %v5371, 1.442695
        %v6391 = vpow.pop %v6390
        %v6392 = vmul.f32 %v5372, 1.442695
        %v6393 = vpow.pop %v6392
        %v6394 = vmul.f32 %v5373, 1.442695
        %v6395 = vpow.pop %v6394
        %v6396 = vmul.f32 %v5374, 1.442695
        %v6397 = vpow.pop %v6396
        %v6398 = vmul.f32 %v5375, 1.442695
        %v6399 = vpow.pop %v6398
        %v6400 = vadd.f32 %v5377, 1.0
        %v6401 = vadd.f32 %v5379, 1.0
        %v6402 = vadd.f32 %v5381, 1.0
        %v6403 = vadd.f32 %v5383, 1.0
        %v6404 = vadd.f32 %v5385, 1.0
        %v6405 = vadd.f32 %v5387, 1.0
        %v6406 = vadd.f32 %v5389, 1.0
        %v6407 = vadd.f32 %v5391, 1.0
        %v6408 = vadd.f32 %v5393, 1.0
        %v6409 = vadd.f32 %v5395, 1.0
        %v6410 = vadd.f32 %v5397, 1.0
        %v6411 = vadd.f32 %v5399, 1.0
        %v6412 = vadd.f32 %v5401, 1.0
        %v6413 = vadd.f32 %v5403, 1.0
        %v6414 = vadd.f32 %v5405, 1.0
        %v6415 = vadd.f32 %v5407, 1.0
        %v6416 = vadd.f32 %v5409, 1.0
        %v6417 = vadd.f32 %v5411, 1.0
        %v6418 = vadd.f32 %v5413, 1.0
        %v6419 = vadd.f32 %v5415, 1.0
        %v6420 = vadd.f32 %v5417, 1.0
        %v6421 = vadd.f32 %v5419, 1.0
        %v6422 = vadd.f32 %v5421, 1.0
        %v6423 = vadd.f32 %v5423, 1.0
        %v6424 = vadd.f32 %v5425, 1.0
        %v6425 = vadd.f32 %v5427, 1.0
        %v6426 = vadd.f32 %v5429, 1.0
        %v6427 = vadd.f32 %v5431, 1.0
        %v6428 = vadd.f32 %v5433, 1.0
        %v6429 = vadd.f32 %v5435, 1.0
        %v6430 = vadd.f32 %v5437, 1.0
        %v6431 = vadd.f32 %v5439, 1.0
        %v6432 = vadd.f32 %v5441, 1.0
        %v6433 = vadd.f32 %v5443, 1.0
        %v6434 = vadd.f32 %v5445, 1.0
        %v6435 = vadd.f32 %v5447, 1.0
        %v6436 = vadd.f32 %v5449, 1.0
        %v6437 = vadd.f32 %v5451, 1.0
        %v6438 = vadd.f32 %v5453, 1.0
        %v6439 = vadd.f32 %v5455, 1.0
        %v6440 = vadd.f32 %v5457, 1.0
        %v6441 = vadd.f32 %v5459, 1.0
        %v6442 = vadd.f32 %v5461, 1.0
        %v6443 = vadd.f32 %v5463, 1.0
        %v6444 = vadd.f32 %v5465, 1.0
        %v6445 = vadd.f32 %v5467, 1.0
        %v6446 = vadd.f32 %v5469, 1.0
        %v6447 = vadd.f32 %v5471, 1.0
        %v6448 = vadd.f32 %v5473, 1.0
        %v6449 = vadd.f32 %v5475, 1.0
        %v6450 = vadd.f32 %v5477, 1.0
        %v6451 = vadd.f32 %v5479, 1.0
        %v6452 = vadd.f32 %v5481, 1.0
        %v6453 = vadd.f32 %v5483, 1.0
        %v6454 = vadd.f32 %v5485, 1.0
        %v6455 = vadd.f32 %v5487, 1.0
        %v6456 = vadd.f32 %v5489, 1.0
        %v6457 = vadd.f32 %v5491, 1.0
        %v6458 = vadd.f32 %v5493, 1.0
        %v6459 = vadd.f32 %v5495, 1.0
        %v6460 = vadd.f32 %v5497, 1.0
        %v6461 = vadd.f32 %v5499, 1.0
        %v6462 = vadd.f32 %v5501, 1.0
        %v6463 = vadd.f32 %v5503, 1.0
        %v6464 = vadd.f32 %v5505, 1.0
        %v6465 = vadd.f32 %v5507, 1.0
        %v6466 = vadd.f32 %v5509, 1.0
        %v6467 = vadd.f32 %v5511, 1.0
        %v6468 = vadd.f32 %v5513, 1.0
        %v6469 = vadd.f32 %v5515, 1.0
        %v6470 = vadd.f32 %v5517, 1.0
        %v6471 = vadd.f32 %v5519, 1.0
        %v6472 = vadd.f32 %v5521, 1.0
        %v6473 = vadd.f32 %v5523, 1.0
        %v6474 = vadd.f32 %v5525, 1.0
        %v6475 = vadd.f32 %v5527, 1.0
        %v6476 = vadd.f32 %v5529, 1.0
        %v6477 = vadd.f32 %v5531, 1.0
        %v6478 = vadd.f32 %v5533, 1.0
        %v6479 = vadd.f32 %v5535, 1.0
        %v6480 = vadd.f32 %v5537, 1.0
        %v6481 = vadd.f32 %v5539, 1.0
        %v6482 = vadd.f32 %v5541, 1.0
        %v6483 = vadd.f32 %v5543, 1.0
        %v6484 = vadd.f32 %v5545, 1.0
        %v6485 = vadd.f32 %v5547, 1.0
        %v6486 = vadd.f32 %v5549, 1.0
        %v6487 = vadd.f32 %v5551, 1.0
        %v6488 = vadd.f32 %v5553, 1.0
        %v6489 = vadd.f32 %v5555, 1.0
        %v6490 = vadd.f32 %v5557, 1.0
        %v6491 = vadd.f32 %v5559, 1.0
        %v6492 = vadd.f32 %v5561, 1.0
        %v6493 = vadd.f32 %v5563, 1.0
        %v6494 = vadd.f32 %v5565, 1.0
        %v6495 = vadd.f32 %v5567, 1.0
        %v6496 = vadd.f32 %v5569, 1.0
        %v6497 = vadd.f32 %v5571, 1.0
        %v6498 = vadd.f32 %v5573, 1.0
        %v6499 = vadd.f32 %v5575, 1.0
        %v6500 = vadd.f32 %v5577, 1.0
        %v6501 = vadd.f32 %v5579, 1.0
        %v6502 = vadd.f32 %v5581, 1.0
        %v6503 = vadd.f32 %v5583, 1.0
        %v6504 = vadd.f32 %v5585, 1.0
        %v6505 = vadd.f32 %v5587, 1.0
        %v6506 = vadd.f32 %v5589, 1.0
        %v6507 = vadd.f32 %v5591, 1.0
        %v6508 = vadd.f32 %v5593, 1.0
        %v6509 = vadd.f32 %v5595, 1.0
        %v6510 = vadd.f32 %v5597, 1.0
        %v6511 = vadd.f32 %v5599, 1.0
        %v6512 = vadd.f32 %v5601, 1.0
        %v6513 = vadd.f32 %v5603, 1.0
        %v6514 = vadd.f32 %v5605, 1.0
        %v6515 = vadd.f32 %v5607, 1.0
        %v6516 = vadd.f32 %v5609, 1.0
        %v6517 = vadd.f32 %v5611, 1.0
        %v6518 = vadd.f32 %v5613, 1.0
        %v6519 = vadd.f32 %v5615, 1.0
        %v6520 = vadd.f32 %v5617, 1.0
        %v6521 = vadd.f32 %v5619, 1.0
        %v6522 = vadd.f32 %v5621, 1.0
        %v6523 = vadd.f32 %v5623, 1.0
        %v6524 = vadd.f32 %v5625, 1.0
        %v6525 = vadd.f32 %v5627, 1.0
        %v6526 = vadd.f32 %v5629, 1.0
        %v6527 = vadd.f32 %v5631, 1.0
        %v6528 = vadd.f32 %v5633, 1.0
        %v6529 = vadd.f32 %v5635, 1.0
        %v6530 = vadd.f32 %v5637, 1.0
        %v6531 = vadd.f32 %v5639, 1.0
        %v6532 = vadd.f32 %v5641, 1.0
        %v6533 = vadd.f32 %v5643, 1.0
        %v6534 = vadd.f32 %v5645, 1.0
        %v6535 = vadd.f32 %v5647, 1.0
        %v6536 = vadd.f32 %v5649, 1.0
        %v6537 = vadd.f32 %v5651, 1.0
        %v6538 = vadd.f32 %v5653, 1.0
        %v6539 = vadd.f32 %v5655, 1.0
        %v6540 = vadd.f32 %v5657, 1.0
        %v6541 = vadd.f32 %v5659, 1.0
        %v6542 = vadd.f32 %v5661, 1.0
        %v6543 = vadd.f32 %v5663, 1.0
        %v6544 = vadd.f32 %v5665, 1.0
        %v6545 = vadd.f32 %v5667, 1.0
        %v6546 = vadd.f32 %v5669, 1.0
        %v6547 = vadd.f32 %v5671, 1.0
        %v6548 = vadd.f32 %v5673, 1.0
        %v6549 = vadd.f32 %v5675, 1.0
        %v6550 = vadd.f32 %v5677, 1.0
        %v6551 = vadd.f32 %v5679, 1.0
        %v6552 = vadd.f32 %v5681, 1.0
        %v6553 = vadd.f32 %v5683, 1.0
        %v6554 = vadd.f32 %v5685, 1.0
        %v6555 = vadd.f32 %v5687, 1.0
        %v6556 = vadd.f32 %v5689, 1.0
        %v6557 = vadd.f32 %v5691, 1.0
        %v6558 = vadd.f32 %v5693, 1.0
        %v6559 = vadd.f32 %v5695, 1.0
        %v6560 = vadd.f32 %v5697, 1.0
        %v6561 = vadd.f32 %v5699, 1.0
        %v6562 = vadd.f32 %v5701, 1.0
        %v6563 = vadd.f32 %v5703, 1.0
        %v6564 = vadd.f32 %v5705, 1.0
        %v6565 = vadd.f32 %v5707, 1.0
        %v6566 = vadd.f32 %v5709, 1.0
        %v6567 = vadd.f32 %v5711, 1.0
        %v6568 = vadd.f32 %v5713, 1.0
        %v6569 = vadd.f32 %v5715, 1.0
        %v6570 = vadd.f32 %v5717, 1.0
        %v6571 = vadd.f32 %v5719, 1.0
        %v6572 = vadd.f32 %v5721, 1.0
        %v6573 = vadd.f32 %v5723, 1.0
        %v6574 = vadd.f32 %v5725, 1.0
        %v6575 = vadd.f32 %v5727, 1.0
        %v6576 = vadd.f32 %v5729, 1.0
        %v6577 = vadd.f32 %v5731, 1.0
        %v6578 = vadd.f32 %v5733, 1.0
        %v6579 = vadd.f32 %v5735, 1.0
        %v6580 = vadd.f32 %v5737, 1.0
        %v6581 = vadd.f32 %v5739, 1.0
        %v6582 = vadd.f32 %v5741, 1.0
        %v6583 = vadd.f32 %v5743, 1.0
        %v6584 = vadd.f32 %v5745, 1.0
        %v6585 = vadd.f32 %v5747, 1.0
        %v6586 = vadd.f32 %v5749, 1.0
        %v6587 = vadd.f32 %v5751, 1.0
        %v6588 = vadd.f32 %v5753, 1.0
        %v6589 = vadd.f32 %v5755, 1.0
        %v6590 = vadd.f32 %v5757, 1.0
        %v6591 = vadd.f32 %v5759, 1.0
        %v6592 = vadd.f32 %v5761, 1.0
        %v6593 = vadd.f32 %v5763, 1.0
        %v6594 = vadd.f32 %v5765, 1.0
        %v6595 = vadd.f32 %v5767, 1.0
        %v6596 = vadd.f32 %v5769, 1.0
        %v6597 = vadd.f32 %v5771, 1.0
        %v6598 = vadd.f32 %v5773, 1.0
        %v6599 = vadd.f32 %v5775, 1.0
        %v6600 = vadd.f32 %v5777, 1.0
        %v6601 = vadd.f32 %v5779, 1.0
        %v6602 = vadd.f32 %v5781, 1.0
        %v6603 = vadd.f32 %v5783, 1.0
        %v6604 = vadd.f32 %v5785, 1.0
        %v6605 = vadd.f32 %v5787, 1.0
        %v6606 = vadd.f32 %v5789, 1.0
        %v6607 = vadd.f32 %v5791, 1.0
        %v6608 = vadd.f32 %v5793, 1.0
        %v6609 = vadd.f32 %v5795, 1.0
        %v6610 = vadd.f32 %v5797, 1.0
        %v6611 = vadd.f32 %v5799, 1.0
        %v6612 = vadd.f32 %v5801, 1.0
        %v6613 = vadd.f32 %v5803, 1.0
        %v6614 = vadd.f32 %v5805, 1.0
        %v6615 = vadd.f32 %v5807, 1.0
        %v6616 = vadd.f32 %v5809, 1.0
        %v6617 = vadd.f32 %v5811, 1.0
        %v6618 = vadd.f32 %v5813, 1.0
        %v6619 = vadd.f32 %v5815, 1.0
        %v6620 = vadd.f32 %v5817, 1.0
        %v6621 = vadd.f32 %v5819, 1.0
        %v6622 = vadd.f32 %v5821, 1.0
        %v6623 = vadd.f32 %v5823, 1.0
        %v6624 = vadd.f32 %v5825, 1.0
        %v6625 = vadd.f32 %v5827, 1.0
        %v6626 = vadd.f32 %v5829, 1.0
        %v6627 = vadd.f32 %v5831, 1.0
        %v6628 = vadd.f32 %v5833, 1.0
        %v6629 = vadd.f32 %v5835, 1.0
        %v6630 = vadd.f32 %v5837, 1.0
        %v6631 = vadd.f32 %v5839, 1.0
        %v6632 = vadd.f32 %v5841, 1.0
        %v6633 = vadd.f32 %v5843, 1.0
        %v6634 = vadd.f32 %v5845, 1.0
        %v6635 = vadd.f32 %v5847, 1.0
        %v6636 = vadd.f32 %v5849, 1.0
        %v6637 = vadd.f32 %v5851, 1.0
        %v6638 = vadd.f32 %v5853, 1.0
        %v6639 = vadd.f32 %v5855, 1.0
        %v6640 = vadd.f32 %v5857, 1.0
        %v6641 = vadd.f32 %v5859, 1.0
        %v6642 = vadd.f32 %v5861, 1.0
        %v6643 = vadd.f32 %v5863, 1.0
        %v6644 = vadd.f32 %v5865, 1.0
        %v6645 = vadd.f32 %v5867, 1.0
        %v6646 = vadd.f32 %v5869, 1.0
        %v6647 = vadd.f32 %v5871, 1.0
        %v6648 = vadd.f32 %v5873, 1.0
        %v6649 = vadd.f32 %v5875, 1.0
        %v6650 = vadd.f32 %v5877, 1.0
        %v6651 = vadd.f32 %v5879, 1.0
        %v6652 = vadd.f32 %v5881, 1.0
        %v6653 = vadd.f32 %v5883, 1.0
        %v6654 = vadd.f32 %v5885, 1.0
        %v6655 = vadd.f32 %v5887, 1.0
        %v6656 = vadd.f32 %v5889, 1.0
        %v6657 = vadd.f32 %v5891, 1.0
        %v6658 = vadd.f32 %v5893, 1.0
        %v6659 = vadd.f32 %v5895, 1.0
        %v6660 = vadd.f32 %v5897, 1.0
        %v6661 = vadd.f32 %v5899, 1.0
        %v6662 = vadd.f32 %v5901, 1.0
        %v6663 = vadd.f32 %v5903, 1.0
        %v6664 = vadd.f32 %v5905, 1.0
        %v6665 = vadd.f32 %v5907, 1.0
        %v6666 = vadd.f32 %v5909, 1.0
        %v6667 = vadd.f32 %v5911, 1.0
        %v6668 = vadd.f32 %v5913, 1.0
        %v6669 = vadd.f32 %v5915, 1.0
        %v6670 = vadd.f32 %v5917, 1.0
        %v6671 = vadd.f32 %v5919, 1.0
        %v6672 = vadd.f32 %v5921, 1.0
        %v6673 = vadd.f32 %v5923, 1.0
        %v6674 = vadd.f32 %v5925, 1.0
        %v6675 = vadd.f32 %v5927, 1.0
        %v6676 = vadd.f32 %v5929, 1.0
        %v6677 = vadd.f32 %v5931, 1.0
        %v6678 = vadd.f32 %v5933, 1.0
        %v6679 = vadd.f32 %v5935, 1.0
        %v6680 = vadd.f32 %v5937, 1.0
        %v6681 = vadd.f32 %v5939, 1.0
        %v6682 = vadd.f32 %v5941, 1.0
        %v6683 = vadd.f32 %v5943, 1.0
        %v6684 = vadd.f32 %v5945, 1.0
        %v6685 = vadd.f32 %v5947, 1.0
        %v6686 = vadd.f32 %v5949, 1.0
        %v6687 = vadd.f32 %v5951, 1.0
        %v6688 = vadd.f32 %v5953, 1.0
        %v6689 = vadd.f32 %v5955, 1.0
        %v6690 = vadd.f32 %v5957, 1.0
        %v6691 = vadd.f32 %v5959, 1.0
        %v6692 = vadd.f32 %v5961, 1.0
        %v6693 = vadd.f32 %v5963, 1.0
        %v6694 = vadd.f32 %v5965, 1.0
        %v6695 = vadd.f32 %v5967, 1.0
        %v6696 = vadd.f32 %v5969, 1.0
        %v6697 = vadd.f32 %v5971, 1.0
        %v6698 = vadd.f32 %v5973, 1.0
        %v6699 = vadd.f32 %v5975, 1.0
        %v6700 = vadd.f32 %v5977, 1.0
        %v6701 = vadd.f32 %v5979, 1.0
        %v6702 = vadd.f32 %v5981, 1.0
        %v6703 = vadd.f32 %v5983, 1.0
        %v6704 = vadd.f32 %v5985, 1.0
        %v6705 = vadd.f32 %v5987, 1.0
        %v6706 = vadd.f32 %v5989, 1.0
        %v6707 = vadd.f32 %v5991, 1.0
        %v6708 = vadd.f32 %v5993, 1.0
        %v6709 = vadd.f32 %v5995, 1.0
        %v6710 = vadd.f32 %v5997, 1.0
        %v6711 = vadd.f32 %v5999, 1.0
        %v6712 = vadd.f32 %v6001, 1.0
        %v6713 = vadd.f32 %v6003, 1.0
        %v6714 = vadd.f32 %v6005, 1.0
        %v6715 = vadd.f32 %v6007, 1.0
        %v6716 = vadd.f32 %v6009, 1.0
        %v6717 = vadd.f32 %v6011, 1.0
        %v6718 = vadd.f32 %v6013, 1.0
        %v6719 = vadd.f32 %v6015, 1.0
        %v6720 = vadd.f32 %v6017, 1.0
        %v6721 = vadd.f32 %v6019, 1.0
        %v6722 = vadd.f32 %v6021, 1.0
        %v6723 = vadd.f32 %v6023, 1.0
        %v6724 = vadd.f32 %v6025, 1.0
        %v6725 = vadd.f32 %v6027, 1.0
        %v6726 = vadd.f32 %v6029, 1.0
        %v6727 = vadd.f32 %v6031, 1.0
        %v6728 = vadd.f32 %v6033, 1.0
        %v6729 = vadd.f32 %v6035, 1.0
        %v6730 = vadd.f32 %v6037, 1.0
        %v6731 = vadd.f32 %v6039, 1.0
        %v6732 = vadd.f32 %v6041, 1.0
        %v6733 = vadd.f32 %v6043, 1.0
        %v6734 = vadd.f32 %v6045, 1.0
        %v6735 = vadd.f32 %v6047, 1.0
        %v6736 = vadd.f32 %v6049, 1.0
        %v6737 = vadd.f32 %v6051, 1.0
        %v6738 = vadd.f32 %v6053, 1.0
        %v6739 = vadd.f32 %v6055, 1.0
        %v6740 = vadd.f32 %v6057, 1.0
        %v6741 = vadd.f32 %v6059, 1.0
        %v6742 = vadd.f32 %v6061, 1.0
        %v6743 = vadd.f32 %v6063, 1.0
        %v6744 = vadd.f32 %v6065, 1.0
        %v6745 = vadd.f32 %v6067, 1.0
        %v6746 = vadd.f32 %v6069, 1.0
        %v6747 = vadd.f32 %v6071, 1.0
        %v6748 = vadd.f32 %v6073, 1.0
        %v6749 = vadd.f32 %v6075, 1.0
        %v6750 = vadd.f32 %v6077, 1.0
        %v6751 = vadd.f32 %v6079, 1.0
        %v6752 = vadd.f32 %v6081, 1.0
        %v6753 = vadd.f32 %v6083, 1.0
        %v6754 = vadd.f32 %v6085, 1.0
        %v6755 = vadd.f32 %v6087, 1.0
        %v6756 = vadd.f32 %v6089, 1.0
        %v6757 = vadd.f32 %v6091, 1.0
        %v6758 = vadd.f32 %v6093, 1.0
        %v6759 = vadd.f32 %v6095, 1.0
        %v6760 = vadd.f32 %v6097, 1.0
        %v6761 = vadd.f32 %v6099, 1.0
        %v6762 = vadd.f32 %v6101, 1.0
        %v6763 = vadd.f32 %v6103, 1.0
        %v6764 = vadd.f32 %v6105, 1.0
        %v6765 = vadd.f32 %v6107, 1.0
        %v6766 = vadd.f32 %v6109, 1.0
        %v6767 = vadd.f32 %v6111, 1.0
        %v6768 = vadd.f32 %v6113, 1.0
        %v6769 = vadd.f32 %v6115, 1.0
        %v6770 = vadd.f32 %v6117, 1.0
        %v6771 = vadd.f32 %v6119, 1.0
        %v6772 = vadd.f32 %v6121, 1.0
        %v6773 = vadd.f32 %v6123, 1.0
        %v6774 = vadd.f32 %v6125, 1.0
        %v6775 = vadd.f32 %v6127, 1.0
        %v6776 = vadd.f32 %v6129, 1.0
        %v6777 = vadd.f32 %v6131, 1.0
        %v6778 = vadd.f32 %v6133, 1.0
        %v6779 = vadd.f32 %v6135, 1.0
        %v6780 = vadd.f32 %v6137, 1.0
        %v6781 = vadd.f32 %v6139, 1.0
        %v6782 = vadd.f32 %v6141, 1.0
        %v6783 = vadd.f32 %v6143, 1.0
        %v6784 = vadd.f32 %v6145, 1.0
        %v6785 = vadd.f32 %v6147, 1.0
        %v6786 = vadd.f32 %v6149, 1.0
        %v6787 = vadd.f32 %v6151, 1.0
        %v6788 = vadd.f32 %v6153, 1.0
        %v6789 = vadd.f32 %v6155, 1.0
        %v6790 = vadd.f32 %v6157, 1.0
        %v6791 = vadd.f32 %v6159, 1.0
        %v6792 = vadd.f32 %v6161, 1.0
        %v6793 = vadd.f32 %v6163, 1.0
        %v6794 = vadd.f32 %v6165, 1.0
        %v6795 = vadd.f32 %v6167, 1.0
        %v6796 = vadd.f32 %v6169, 1.0
        %v6797 = vadd.f32 %v6171, 1.0
        %v6798 = vadd.f32 %v6173, 1.0
        %v6799 = vadd.f32 %v6175, 1.0
        %v6800 = vadd.f32 %v6177, 1.0
        %v6801 = vadd.f32 %v6179, 1.0
        %v6802 = vadd.f32 %v6181, 1.0
        %v6803 = vadd.f32 %v6183, 1.0
        %v6804 = vadd.f32 %v6185, 1.0
        %v6805 = vadd.f32 %v6187, 1.0
        %v6806 = vadd.f32 %v6189, 1.0
        %v6807 = vadd.f32 %v6191, 1.0
        %v6808 = vadd.f32 %v6193, 1.0
        %v6809 = vadd.f32 %v6195, 1.0
        %v6810 = vadd.f32 %v6197, 1.0
        %v6811 = vadd.f32 %v6199, 1.0
        %v6812 = vadd.f32 %v6201, 1.0
        %v6813 = vadd.f32 %v6203, 1.0
        %v6814 = vadd.f32 %v6205, 1.0
        %v6815 = vadd.f32 %v6207, 1.0
        %v6816 = vadd.f32 %v6209, 1.0
        %v6817 = vadd.f32 %v6211, 1.0
        %v6818 = vadd.f32 %v6213, 1.0
        %v6819 = vadd.f32 %v6215, 1.0
        %v6820 = vadd.f32 %v6217, 1.0
        %v6821 = vadd.f32 %v6219, 1.0
        %v6822 = vadd.f32 %v6221, 1.0
        %v6823 = vadd.f32 %v6223, 1.0
        %v6824 = vadd.f32 %v6225, 1.0
        %v6825 = vadd.f32 %v6227, 1.0
        %v6826 = vadd.f32 %v6229, 1.0
        %v6827 = vadd.f32 %v6231, 1.0
        %v6828 = vadd.f32 %v6233, 1.0
        %v6829 = vadd.f32 %v6235, 1.0
        %v6830 = vadd.f32 %v6237, 1.0
        %v6831 = vadd.f32 %v6239, 1.0
        %v6832 = vadd.f32 %v6241, 1.0
        %v6833 = vadd.f32 %v6243, 1.0
        %v6834 = vadd.f32 %v6245, 1.0
        %v6835 = vadd.f32 %v6247, 1.0
        %v6836 = vadd.f32 %v6249, 1.0
        %v6837 = vadd.f32 %v6251, 1.0
        %v6838 = vadd.f32 %v6253, 1.0
        %v6839 = vadd.f32 %v6255, 1.0
        %v6840 = vadd.f32 %v6257, 1.0
        %v6841 = vadd.f32 %v6259, 1.0
        %v6842 = vadd.f32 %v6261, 1.0
        %v6843 = vadd.f32 %v6263, 1.0
        %v6844 = vadd.f32 %v6265, 1.0
        %v6845 = vadd.f32 %v6267, 1.0
        %v6846 = vadd.f32 %v6269, 1.0
        %v6847 = vadd.f32 %v6271, 1.0
        %v6848 = vadd.f32 %v6273, 1.0
        %v6849 = vadd.f32 %v6275, 1.0
        %v6850 = vadd.f32 %v6277, 1.0
        %v6851 = vadd.f32 %v6279, 1.0
        %v6852 = vadd.f32 %v6281, 1.0
        %v6853 = vadd.f32 %v6283, 1.0
        %v6854 = vadd.f32 %v6285, 1.0
        %v6855 = vadd.f32 %v6287, 1.0
        %v6856 = vadd.f32 %v6289, 1.0
        %v6857 = vadd.f32 %v6291, 1.0
        %v6858 = vadd.f32 %v6293, 1.0
        %v6859 = vadd.f32 %v6295, 1.0
        %v6860 = vadd.f32 %v6297, 1.0
        %v6861 = vadd.f32 %v6299, 1.0
        %v6862 = vadd.f32 %v6301, 1.0
        %v6863 = vadd.f32 %v6303, 1.0
        %v6864 = vadd.f32 %v6305, 1.0
        %v6865 = vadd.f32 %v6307, 1.0
        %v6866 = vadd.f32 %v6309, 1.0
        %v6867 = vadd.f32 %v6311, 1.0
        %v6868 = vadd.f32 %v6313, 1.0
        %v6869 = vadd.f32 %v6315, 1.0
        %v6870 = vadd.f32 %v6317, 1.0
        %v6871 = vadd.f32 %v6319, 1.0
        %v6872 = vadd.f32 %v6321, 1.0
        %v6873 = vadd.f32 %v6323, 1.0
        %v6874 = vadd.f32 %v6325, 1.0
        %v6875 = vadd.f32 %v6327, 1.0
        %v6876 = vadd.f32 %v6329, 1.0
        %v6877 = vadd.f32 %v6331, 1.0
        %v6878 = vadd.f32 %v6333, 1.0
        %v6879 = vadd.f32 %v6335, 1.0
        %v6880 = vadd.f32 %v6337, 1.0
        %v6881 = vadd.f32 %v6339, 1.0
        %v6882 = vadd.f32 %v6341, 1.0
        %v6883 = vadd.f32 %v6343, 1.0
        %v6884 = vadd.f32 %v6345, 1.0
        %v6885 = vadd.f32 %v6347, 1.0
        %v6886 = vadd.f32 %v6349, 1.0
        %v6887 = vadd.f32 %v6351, 1.0
        %v6888 = vadd.f32 %v6353, 1.0
        %v6889 = vadd.f32 %v6355, 1.0
        %v6890 = vadd.f32 %v6357, 1.0
        %v6891 = vadd.f32 %v6359, 1.0
        %v6892 = vadd.f32 %v6361, 1.0
        %v6893 = vadd.f32 %v6363, 1.0
        %v6894 = vadd.f32 %v6365, 1.0
        %v6895 = vadd.f32 %v6367, 1.0
        %v6896 = vadd.f32 %v6369, 1.0
        %v6897 = vadd.f32 %v6371, 1.0
        %v6898 = vadd.f32 %v6373, 1.0
        %v6899 = vadd.f32 %v6375, 1.0
        %v6900 = vadd.f32 %v6377, 1.0
        %v6901 = vadd.f32 %v6379, 1.0
        %v6902 = vadd.f32 %v6381, 1.0
        %v6903 = vadd.f32 %v6383, 1.0
        %v6904 = vadd.f32 %v6385, 1.0
        %v6905 = vadd.f32 %v6387, 1.0
        %v6906 = vadd.f32 %v6389, 1.0
        %v6907 = vadd.f32 %v6391, 1.0
        %v6908 = vadd.f32 %v6393, 1.0
        %v6909 = vadd.f32 %v6395, 1.0
        %v6910 = vadd.f32 %v6397, 1.0
        %v6911 = vadd.f32 %v6399, 1.0
        %v6912 = vrcp.pop %v6400
        %v6913 = vrcp.pop %v6401
        %v6914 = vrcp.pop %v6402
        %v6915 = vrcp.pop %v6403
        %v6916 = vrcp.pop %v6404
        %v6917 = vrcp.pop %v6405
        %v6918 = vrcp.pop %v6406
        %v6919 = vrcp.pop %v6407
        %v6920 = vrcp.pop %v6408
        %v6921 = vrcp.pop %v6409
        %v6922 = vrcp.pop %v6410
        %v6923 = vrcp.pop %v6411
        %v6924 = vrcp.pop %v6412
        %v6925 = vrcp.pop %v6413
        %v6926 = vrcp.pop %v6414
        %v6927 = vrcp.pop %v6415
        %v6928 = vrcp.pop %v6416
        %v6929 = vrcp.pop %v6417
        %v6930 = vrcp.pop %v6418
        %v6931 = vrcp.pop %v6419
        %v6932 = vrcp.pop %v6420
        %v6933 = vrcp.pop %v6421
        %v6934 = vrcp.pop %v6422
        %v6935 = vrcp.pop %v6423
        %v6936 = vrcp.pop %v6424
        %v6937 = vrcp.pop %v6425
        %v6938 = vrcp.pop %v6426
        %v6939 = vrcp.pop %v6427
        %v6940 = vrcp.pop %v6428
        %v6941 = vrcp.pop %v6429
        %v6942 = vrcp.pop %v6430
        %v6943 = vrcp.pop %v6431
        %v6944 = vrcp.pop %v6432
        %v6945 = vrcp.pop %v6433
        %v6946 = vrcp.pop %v6434
        %v6947 = vrcp.pop %v6435
        %v6948 = vrcp.pop %v6436
        %v6949 = vrcp.pop %v6437
        %v6950 = vrcp.pop %v6438
        %v6951 = vrcp.pop %v6439
        %v6952 = vrcp.pop %v6440
        %v6953 = vrcp.pop %v6441
        %v6954 = vrcp.pop %v6442
        %v6955 = vrcp.pop %v6443
        %v6956 = vrcp.pop %v6444
        %v6957 = vrcp.pop %v6445
        %v6958 = vrcp.pop %v6446
        %v6959 = vrcp.pop %v6447
        %v6960 = vrcp.pop %v6448
        %v6961 = vrcp.pop %v6449
        %v6962 = vrcp.pop %v6450
        %v6963 = vrcp.pop %v6451
        %v6964 = vrcp.pop %v6452
        %v6965 = vrcp.pop %v6453
        %v6966 = vrcp.pop %v6454
        %v6967 = vrcp.pop %v6455
        %v6968 = vrcp.pop %v6456
        %v6969 = vrcp.pop %v6457
        %v6970 = vrcp.pop %v6458
        %v6971 = vrcp.pop %v6459
        %v6972 = vrcp.pop %v6460
        %v6973 = vrcp.pop %v6461
        %v6974 = vrcp.pop %v6462
        %v6975 = vrcp.pop %v6463
        %v6976 = vrcp.pop %v6464
        %v6977 = vrcp.pop %v6465
        %v6978 = vrcp.pop %v6466
        %v6979 = vrcp.pop %v6467
        %v6980 = vrcp.pop %v6468
        %v6981 = vrcp.pop %v6469
        %v6982 = vrcp.pop %v6470
        %v6983 = vrcp.pop %v6471
        %v6984 = vrcp.pop %v6472
        %v6985 = vrcp.pop %v6473
        %v6986 = vrcp.pop %v6474
        %v6987 = vrcp.pop %v6475
        %v6988 = vrcp.pop %v6476
        %v6989 = vrcp.pop %v6477
        %v6990 = vrcp.pop %v6478
        %v6991 = vrcp.pop %v6479
        %v6992 = vrcp.pop %v6480
        %v6993 = vrcp.pop %v6481
        %v6994 = vrcp.pop %v6482
        %v6995 = vrcp.pop %v6483
        %v6996 = vrcp.pop %v6484
        %v6997 = vrcp.pop %v6485
        %v6998 = vrcp.pop %v6486
        %v6999 = vrcp.pop %v6487
        %v7000 = vrcp.pop %v6488
        %v7001 = vrcp.pop %v6489
        %v7002 = vrcp.pop %v6490
        %v7003 = vrcp.pop %v6491
        %v7004 = vrcp.pop %v6492
        %v7005 = vrcp.pop %v6493
        %v7006 = vrcp.pop %v6494
        %v7007 = vrcp.pop %v6495
        %v7008 = vrcp.pop %v6496
        %v7009 = vrcp.pop %v6497
        %v7010 = vrcp.pop %v6498
        %v7011 = vrcp.pop %v6499
        %v7012 = vrcp.pop %v6500
        %v7013 = vrcp.pop %v6501
        %v7014 = vrcp.pop %v6502
        %v7015 = vrcp.pop %v6503
        %v7016 = vrcp.pop %v6504
        %v7017 = vrcp.pop %v6505
        %v7018 = vrcp.pop %v6506
        %v7019 = vrcp.pop %v6507
        %v7020 = vrcp.pop %v6508
        %v7021 = vrcp.pop %v6509
        %v7022 = vrcp.pop %v6510
        %v7023 = vrcp.pop %v6511
        %v7024 = vrcp.pop %v6512
        %v7025 = vrcp.pop %v6513
        %v7026 = vrcp.pop %v6514
        %v7027 = vrcp.pop %v6515
        %v7028 = vrcp.pop %v6516
        %v7029 = vrcp.pop %v6517
        %v7030 = vrcp.pop %v6518
        %v7031 = vrcp.pop %v6519
        %v7032 = vrcp.pop %v6520
        %v7033 = vrcp.pop %v6521
        %v7034 = vrcp.pop %v6522
        %v7035 = vrcp.pop %v6523
        %v7036 = vrcp.pop %v6524
        %v7037 = vrcp.pop %v6525
        %v7038 = vrcp.pop %v6526
        %v7039 = vrcp.pop %v6527
        %v7040 = vrcp.pop %v6528
        %v7041 = vrcp.pop %v6529
        %v7042 = vrcp.pop %v6530
        %v7043 = vrcp.pop %v6531
        %v7044 = vrcp.pop %v6532
        %v7045 = vrcp.pop %v6533
        %v7046 = vrcp.pop %v6534
        %v7047 = vrcp.pop %v6535
        %v7048 = vrcp.pop %v6536
        %v7049 = vrcp.pop %v6537
        %v7050 = vrcp.pop %v6538
        %v7051 = vrcp.pop %v6539
        %v7052 = vrcp.pop %v6540
        %v7053 = vrcp.pop %v6541
        %v7054 = vrcp.pop %v6542
        %v7055 = vrcp.pop %v6543
        %v7056 = vrcp.pop %v6544
        %v7057 = vrcp.pop %v6545
        %v7058 = vrcp.pop %v6546
        %v7059 = vrcp.pop %v6547
        %v7060 = vrcp.pop %v6548
        %v7061 = vrcp.pop %v6549
        %v7062 = vrcp.pop %v6550
        %v7063 = vrcp.pop %v6551
        %v7064 = vrcp.pop %v6552
        %v7065 = vrcp.pop %v6553
        %v7066 = vrcp.pop %v6554
        %v7067 = vrcp.pop %v6555
        %v7068 = vrcp.pop %v6556
        %v7069 = vrcp.pop %v6557
        %v7070 = vrcp.pop %v6558
        %v7071 = vrcp.pop %v6559
        %v7072 = vrcp.pop %v6560
        %v7073 = vrcp.pop %v6561
        %v7074 = vrcp.pop %v6562
        %v7075 = vrcp.pop %v6563
        %v7076 = vrcp.pop %v6564
        %v7077 = vrcp.pop %v6565
        %v7078 = vrcp.pop %v6566
        %v7079 = vrcp.pop %v6567
        %v7080 = vrcp.pop %v6568
        %v7081 = vrcp.pop %v6569
        %v7082 = vrcp.pop %v6570
        %v7083 = vrcp.pop %v6571
        %v7084 = vrcp.pop %v6572
        %v7085 = vrcp.pop %v6573
        %v7086 = vrcp.pop %v6574
        %v7087 = vrcp.pop %v6575
        %v7088 = vrcp.pop %v6576
        %v7089 = vrcp.pop %v6577
        %v7090 = vrcp.pop %v6578
        %v7091 = vrcp.pop %v6579
        %v7092 = vrcp.pop %v6580
        %v7093 = vrcp.pop %v6581
        %v7094 = vrcp.pop %v6582
        %v7095 = vrcp.pop %v6583
        %v7096 = vrcp.pop %v6584
        %v7097 = vrcp.pop %v6585
        %v7098 = vrcp.pop %v6586
        %v7099 = vrcp.pop %v6587
        %v7100 = vrcp.pop %v6588
        %v7101 = vrcp.pop %v6589
        %v7102 = vrcp.pop %v6590
        %v7103 = vrcp.pop %v6591
        %v7104 = vrcp.pop %v6592
        %v7105 = vrcp.pop %v6593
        %v7106 = vrcp.pop %v6594
        %v7107 = vrcp.pop %v6595
        %v7108 = vrcp.pop %v6596
        %v7109 = vrcp.pop %v6597
        %v7110 = vrcp.pop %v6598
        %v7111 = vrcp.pop %v6599
        %v7112 = vrcp.pop %v6600
        %v7113 = vrcp.pop %v6601
        %v7114 = vrcp.pop %v6602
        %v7115 = vrcp.pop %v6603
        %v7116 = vrcp.pop %v6604
        %v7117 = vrcp.pop %v6605
        %v7118 = vrcp.pop %v6606
        %v7119 = vrcp.pop %v6607
        %v7120 = vrcp.pop %v6608
        %v7121 = vrcp.pop %v6609
        %v7122 = vrcp.pop %v6610
        %v7123 = vrcp.pop %v6611
        %v7124 = vrcp.pop %v6612
        %v7125 = vrcp.pop %v6613
        %v7126 = vrcp.pop %v6614
        %v7127 = vrcp.pop %v6615
        %v7128 = vrcp.pop %v6616
        %v7129 = vrcp.pop %v6617
        %v7130 = vrcp.pop %v6618
        %v7131 = vrcp.pop %v6619
        %v7132 = vrcp.pop %v6620
        %v7133 = vrcp.pop %v6621
        %v7134 = vrcp.pop %v6622
        %v7135 = vrcp.pop %v6623
        %v7136 = vrcp.pop %v6624
        %v7137 = vrcp.pop %v6625
        %v7138 = vrcp.pop %v6626
        %v7139 = vrcp.pop %v6627
        %v7140 = vrcp.pop %v6628
        %v7141 = vrcp.pop %v6629
        %v7142 = vrcp.pop %v6630
        %v7143 = vrcp.pop %v6631
        %v7144 = vrcp.pop %v6632
        %v7145 = vrcp.pop %v6633
        %v7146 = vrcp.pop %v6634
        %v7147 = vrcp.pop %v6635
        %v7148 = vrcp.pop %v6636
        %v7149 = vrcp.pop %v6637
        %v7150 = vrcp.pop %v6638
        %v7151 = vrcp.pop %v6639
        %v7152 = vrcp.pop %v6640
        %v7153 = vrcp.pop %v6641
        %v7154 = vrcp.pop %v6642
        %v7155 = vrcp.pop %v6643
        %v7156 = vrcp.pop %v6644
        %v7157 = vrcp.pop %v6645
        %v7158 = vrcp.pop %v6646
        %v7159 = vrcp.pop %v6647
        %v7160 = vrcp.pop %v6648
        %v7161 = vrcp.pop %v6649
        %v7162 = vrcp.pop %v6650
        %v7163 = vrcp.pop %v6651
        %v7164 = vrcp.pop %v6652
        %v7165 = vrcp.pop %v6653
        %v7166 = vrcp.pop %v6654
        %v7167 = vrcp.pop %v6655
        %v7168 = vrcp.pop %v6656
        %v7169 = vrcp.pop %v6657
        %v7170 = vrcp.pop %v6658
        %v7171 = vrcp.pop %v6659
        %v7172 = vrcp.pop %v6660
        %v7173 = vrcp.pop %v6661
        %v7174 = vrcp.pop %v6662
        %v7175 = vrcp.pop %v6663
        %v7176 = vrcp.pop %v6664
        %v7177 = vrcp.pop %v6665
        %v7178 = vrcp.pop %v6666
        %v7179 = vrcp.pop %v6667
        %v7180 = vrcp.pop %v6668
        %v7181 = vrcp.pop %v6669
        %v7182 = vrcp.pop %v6670
        %v7183 = vrcp.pop %v6671
        %v7184 = vrcp.pop %v6672
        %v7185 = vrcp.pop %v6673
        %v7186 = vrcp.pop %v6674
        %v7187 = vrcp.pop %v6675
        %v7188 = vrcp.pop %v6676
        %v7189 = vrcp.pop %v6677
        %v7190 = vrcp.pop %v6678
        %v7191 = vrcp.pop %v6679
        %v7192 = vrcp.pop %v6680
        %v7193 = vrcp.pop %v6681
        %v7194 = vrcp.pop %v6682
        %v7195 = vrcp.pop %v6683
        %v7196 = vrcp.pop %v6684
        %v7197 = vrcp.pop %v6685
        %v7198 = vrcp.pop %v6686
        %v7199 = vrcp.pop %v6687
        %v7200 = vrcp.pop %v6688
        %v7201 = vrcp.pop %v6689
        %v7202 = vrcp.pop %v6690
        %v7203 = vrcp.pop %v6691
        %v7204 = vrcp.pop %v6692
        %v7205 = vrcp.pop %v6693
        %v7206 = vrcp.pop %v6694
        %v7207 = vrcp.pop %v6695
        %v7208 = vrcp.pop %v6696
        %v7209 = vrcp.pop %v6697
        %v7210 = vrcp.pop %v6698
        %v7211 = vrcp.pop %v6699
        %v7212 = vrcp.pop %v6700
        %v7213 = vrcp.pop %v6701
        %v7214 = vrcp.pop %v6702
        %v7215 = vrcp.pop %v6703
        %v7216 = vrcp.pop %v6704
        %v7217 = vrcp.pop %v6705
        %v7218 = vrcp.pop %v6706
        %v7219 = vrcp.pop %v6707
        %v7220 = vrcp.pop %v6708
        %v7221 = vrcp.pop %v6709
        %v7222 = vrcp.pop %v6710
        %v7223 = vrcp.pop %v6711
        %v7224 = vrcp.pop %v6712
        %v7225 = vrcp.pop %v6713
        %v7226 = vrcp.pop %v6714
        %v7227 = vrcp.pop %v6715
        %v7228 = vrcp.pop %v6716
        %v7229 = vrcp.pop %v6717
        %v7230 = vrcp.pop %v6718
        %v7231 = vrcp.pop %v6719
        %v7232 = vrcp.pop %v6720
        %v7233 = vrcp.pop %v6721
        %v7234 = vrcp.pop %v6722
        %v7235 = vrcp.pop %v6723
        %v7236 = vrcp.pop %v6724
        %v7237 = vrcp.pop %v6725
        %v7238 = vrcp.pop %v6726
        %v7239 = vrcp.pop %v6727
        %v7240 = vrcp.pop %v6728
        %v7241 = vrcp.pop %v6729
        %v7242 = vrcp.pop %v6730
        %v7243 = vrcp.pop %v6731
        %v7244 = vrcp.pop %v6732
        %v7245 = vrcp.pop %v6733
        %v7246 = vrcp.pop %v6734
        %v7247 = vrcp.pop %v6735
        %v7248 = vrcp.pop %v6736
        %v7249 = vrcp.pop %v6737
        %v7250 = vrcp.pop %v6738
        %v7251 = vrcp.pop %v6739
        %v7252 = vrcp.pop %v6740
        %v7253 = vrcp.pop %v6741
        %v7254 = vrcp.pop %v6742
        %v7255 = vrcp.pop %v6743
        %v7256 = vrcp.pop %v6744
        %v7257 = vrcp.pop %v6745
        %v7258 = vrcp.pop %v6746
        %v7259 = vrcp.pop %v6747
        %v7260 = vrcp.pop %v6748
        %v7261 = vrcp.pop %v6749
        %v7262 = vrcp.pop %v6750
        %v7263 = vrcp.pop %v6751
        %v7264 = vrcp.pop %v6752
        %v7265 = vrcp.pop %v6753
        %v7266 = vrcp.pop %v6754
        %v7267 = vrcp.pop %v6755
        %v7268 = vrcp.pop %v6756
        %v7269 = vrcp.pop %v6757
        %v7270 = vrcp.pop %v6758
        %v7271 = vrcp.pop %v6759
        %v7272 = vrcp.pop %v6760
        %v7273 = vrcp.pop %v6761
        %v7274 = vrcp.pop %v6762
        %v7275 = vrcp.pop %v6763
        %v7276 = vrcp.pop %v6764
        %v7277 = vrcp.pop %v6765
        %v7278 = vrcp.pop %v6766
        %v7279 = vrcp.pop %v6767
        %v7280 = vrcp.pop %v6768
        %v7281 = vrcp.pop %v6769
        %v7282 = vrcp.pop %v6770
        %v7283 = vrcp.pop %v6771
        %v7284 = vrcp.pop %v6772
        %v7285 = vrcp.pop %v6773
        %v7286 = vrcp.pop %v6774
        %v7287 = vrcp.pop %v6775
        %v7288 = vrcp.pop %v6776
        %v7289 = vrcp.pop %v6777
        %v7290 = vrcp.pop %v6778
        %v7291 = vrcp.pop %v6779
        %v7292 = vrcp.pop %v6780
        %v7293 = vrcp.pop %v6781
        %v7294 = vrcp.pop %v6782
        %v7295 = vrcp.pop %v6783
        %v7296 = vrcp.pop %v6784
        %v7297 = vrcp.pop %v6785
        %v7298 = vrcp.pop %v6786
        %v7299 = vrcp.pop %v6787
        %v7300 = vrcp.pop %v6788
        %v7301 = vrcp.pop %v6789
        %v7302 = vrcp.pop %v6790
        %v7303 = vrcp.pop %v6791
        %v7304 = vrcp.pop %v6792
        %v7305 = vrcp.pop %v6793
        %v7306 = vrcp.pop %v6794
        %v7307 = vrcp.pop %v6795
        %v7308 = vrcp.pop %v6796
        %v7309 = vrcp.pop %v6797
        %v7310 = vrcp.pop %v6798
        %v7311 = vrcp.pop %v6799
        %v7312 = vrcp.pop %v6800
        %v7313 = vrcp.pop %v6801
        %v7314 = vrcp.pop %v6802
        %v7315 = vrcp.pop %v6803
        %v7316 = vrcp.pop %v6804
        %v7317 = vrcp.pop %v6805
        %v7318 = vrcp.pop %v6806
        %v7319 = vrcp.pop %v6807
        %v7320 = vrcp.pop %v6808
        %v7321 = vrcp.pop %v6809
        %v7322 = vrcp.pop %v6810
        %v7323 = vrcp.pop %v6811
        %v7324 = vrcp.pop %v6812
        %v7325 = vrcp.pop %v6813
        %v7326 = vrcp.pop %v6814
        %v7327 = vrcp.pop %v6815
        %v7328 = vrcp.pop %v6816
        %v7329 = vrcp.pop %v6817
        %v7330 = vrcp.pop %v6818
        %v7331 = vrcp.pop %v6819
        %v7332 = vrcp.pop %v6820
        %v7333 = vrcp.pop %v6821
        %v7334 = vrcp.pop %v6822
        %v7335 = vrcp.pop %v6823
        %v7336 = vrcp.pop %v6824
        %v7337 = vrcp.pop %v6825
        %v7338 = vrcp.pop %v6826
        %v7339 = vrcp.pop %v6827
        %v7340 = vrcp.pop %v6828
        %v7341 = vrcp.pop %v6829
        %v7342 = vrcp.pop %v6830
        %v7343 = vrcp.pop %v6831
        %v7344 = vrcp.pop %v6832
        %v7345 = vrcp.pop %v6833
        %v7346 = vrcp.pop %v6834
        %v7347 = vrcp.pop %v6835
        %v7348 = vrcp.pop %v6836
        %v7349 = vrcp.pop %v6837
        %v7350 = vrcp.pop %v6838
        %v7351 = vrcp.pop %v6839
        %v7352 = vrcp.pop %v6840
        %v7353 = vrcp.pop %v6841
        %v7354 = vrcp.pop %v6842
        %v7355 = vrcp.pop %v6843
        %v7356 = vrcp.pop %v6844
        %v7357 = vrcp.pop %v6845
        %v7358 = vrcp.pop %v6846
        %v7359 = vrcp.pop %v6847
        %v7360 = vrcp.pop %v6848
        %v7361 = vrcp.pop %v6849
        %v7362 = vrcp.pop %v6850
        %v7363 = vrcp.pop %v6851
        %v7364 = vrcp.pop %v6852
        %v7365 = vrcp.pop %v6853
        %v7366 = vrcp.pop %v6854
        %v7367 = vrcp.pop %v6855
        %v7368 = vrcp.pop %v6856
        %v7369 = vrcp.pop %v6857
        %v7370 = vrcp.pop %v6858
        %v7371 = vrcp.pop %v6859
        %v7372 = vrcp.pop %v6860
        %v7373 = vrcp.pop %v6861
        %v7374 = vrcp.pop %v6862
        %v7375 = vrcp.pop %v6863
        %v7376 = vrcp.pop %v6864
        %v7377 = vrcp.pop %v6865
        %v7378 = vrcp.pop %v6866
        %v7379 = vrcp.pop %v6867
        %v7380 = vrcp.pop %v6868
        %v7381 = vrcp.pop %v6869
        %v7382 = vrcp.pop %v6870
        %v7383 = vrcp.pop %v6871
        %v7384 = vrcp.pop %v6872
        %v7385 = vrcp.pop %v6873
        %v7386 = vrcp.pop %v6874
        %v7387 = vrcp.pop %v6875
        %v7388 = vrcp.pop %v6876
        %v7389 = vrcp.pop %v6877
        %v7390 = vrcp.pop %v6878
        %v7391 = vrcp.pop %v6879
        %v7392 = vrcp.pop %v6880
        %v7393 = vrcp.pop %v6881
        %v7394 = vrcp.pop %v6882
        %v7395 = vrcp.pop %v6883
        %v7396 = vrcp.pop %v6884
        %v7397 = vrcp.pop %v6885
        %v7398 = vrcp.pop %v6886
        %v7399 = vrcp.pop %v6887
        %v7400 = vrcp.pop %v6888
        %v7401 = vrcp.pop %v6889
        %v7402 = vrcp.pop %v6890
        %v7403 = vrcp.pop %v6891
        %v7404 = vrcp.pop %v6892
        %v7405 = vrcp.pop %v6893
        %v7406 = vrcp.pop %v6894
        %v7407 = vrcp.pop %v6895
        %v7408 = vrcp.pop %v6896
        %v7409 = vrcp.pop %v6897
        %v7410 = vrcp.pop %v6898
        %v7411 = vrcp.pop %v6899
        %v7412 = vrcp.pop %v6900
        %v7413 = vrcp.pop %v6901
        %v7414 = vrcp.pop %v6902
        %v7415 = vrcp.pop %v6903
        %v7416 = vrcp.pop %v6904
        %v7417 = vrcp.pop %v6905
        %v7418 = vrcp.pop %v6906
        %v7419 = vrcp.pop %v6907
        %v7420 = vrcp.pop %v6908
        %v7421 = vrcp.pop %v6909
        %v7422 = vrcp.pop %v6910
        %v7423 = vrcp.pop %v6911
        %v7424 = vmul.f32 %v2818, %v6912
        %v7425 = vmul.f32 %v2821, %v6913
        %v7426 = vmul.f32 %v2826, %v6914
        %v7427 = vmul.f32 %v2829, %v6915
        %v7428 = vmul.f32 %v2834, %v6916
        %v7429 = vmul.f32 %v2837, %v6917
        %v7430 = vmul.f32 %v2842, %v6918
        %v7431 = vmul.f32 %v2845, %v6919
        %v7432 = vmul.f32 %v2850, %v6920
        %v7433 = vmul.f32 %v2853, %v6921
        %v7434 = vmul.f32 %v2858, %v6922
        %v7435 = vmul.f32 %v2861, %v6923
        %v7436 = vmul.f32 %v2866, %v6924
        %v7437 = vmul.f32 %v2869, %v6925
        %v7438 = vmul.f32 %v2874, %v6926
        %v7439 = vmul.f32 %v2877, %v6927
        %v7440 = vmul.f32 %v2882, %v6928
        %v7441 = vmul.f32 %v2885, %v6929
        %v7442 = vmul.f32 %v2890, %v6930
        %v7443 = vmul.f32 %v2893, %v6931
        %v7444 = vmul.f32 %v2898, %v6932
        %v7445 = vmul.f32 %v2901, %v6933
        %v7446 = vmul.f32 %v2906, %v6934
        %v7447 = vmul.f32 %v2909, %v6935
        %v7448 = vmul.f32 %v2914, %v6936
        %v7449 = vmul.f32 %v2917, %v6937
        %v7450 = vmul.f32 %v2922, %v6938
        %v7451 = vmul.f32 %v2925, %v6939
        %v7452 = vmul.f32 %v2930, %v6940
        %v7453 = vmul.f32 %v2933, %v6941
        %v7454 = vmul.f32 %v2938, %v6942
        %v7455 = vmul.f32 %v2941, %v6943
        %v7456 = vmul.f32 %v2946, %v6944
        %v7457 = vmul.f32 %v2949, %v6945
        %v7458 = vmul.f32 %v2954, %v6946
        %v7459 = vmul.f32 %v2957, %v6947
        %v7460 = vmul.f32 %v2962, %v6948
        %v7461 = vmul.f32 %v2965, %v6949
        %v7462 = vmul.f32 %v2970, %v6950
        %v7463 = vmul.f32 %v2973, %v6951
        %v7464 = vmul.f32 %v2978, %v6952
        %v7465 = vmul.f32 %v2981, %v6953
        %v7466 = vmul.f32 %v2986, %v6954
        %v7467 = vmul.f32 %v2989, %v6955
        %v7468 = vmul.f32 %v2994, %v6956
        %v7469 = vmul.f32 %v2997, %v6957
        %v7470 = vmul.f32 %v3002, %v6958
        %v7471 = vmul.f32 %v3005, %v6959
        %v7472 = vmul.f32 %v3010, %v6960
        %v7473 = vmul.f32 %v3013, %v6961
        %v7474 = vmul.f32 %v3018, %v6962
        %v7475 = vmul.f32 %v3021, %v6963
        %v7476 = vmul.f32 %v3026, %v6964
        %v7477 = vmul.f32 %v3029, %v6965
        %v7478 = vmul.f32 %v3034, %v6966
        %v7479 = vmul.f32 %v3037, %v6967
        %v7480 = vmul.f32 %v3042, %v6968
        %v7481 = vmul.f32 %v3045, %v6969
        %v7482 = vmul.f32 %v3050, %v6970
        %v7483 = vmul.f32 %v3053, %v6971
        %v7484 = vmul.f32 %v3058, %v6972
        %v7485 = vmul.f32 %v3061, %v6973
        %v7486 = vmul.f32 %v3066, %v6974
        %v7487 = vmul.f32 %v3069, %v6975
        %v7488 = vmul.f32 %v3074, %v6976
        %v7489 = vmul.f32 %v3077, %v6977
        %v7490 = vmul.f32 %v3082, %v6978
        %v7491 = vmul.f32 %v3085, %v6979
        %v7492 = vmul.f32 %v3090, %v6980
        %v7493 = vmul.f32 %v3093, %v6981
        %v7494 = vmul.f32 %v3098, %v6982
        %v7495 = vmul.f32 %v3101, %v6983
        %v7496 = vmul.f32 %v3106, %v6984
        %v7497 = vmul.f32 %v3109, %v6985
        %v7498 = vmul.f32 %v3114, %v6986
        %v7499 = vmul.f32 %v3117, %v6987
        %v7500 = vmul.f32 %v3122, %v6988
        %v7501 = vmul.f32 %v3125, %v6989
        %v7502 = vmul.f32 %v3130, %v6990
        %v7503 = vmul.f32 %v3133, %v6991
        %v7504 = vmul.f32 %v3138, %v6992
        %v7505 = vmul.f32 %v3141, %v6993
        %v7506 = vmul.f32 %v3146, %v6994
        %v7507 = vmul.f32 %v3149, %v6995
        %v7508 = vmul.f32 %v3154, %v6996
        %v7509 = vmul.f32 %v3157, %v6997
        %v7510 = vmul.f32 %v3162, %v6998
        %v7511 = vmul.f32 %v3165, %v6999
        %v7512 = vmul.f32 %v3170, %v7000
        %v7513 = vmul.f32 %v3173, %v7001
        %v7514 = vmul.f32 %v3178, %v7002
        %v7515 = vmul.f32 %v3181, %v7003
        %v7516 = vmul.f32 %v3186, %v7004
        %v7517 = vmul.f32 %v3189, %v7005
        %v7518 = vmul.f32 %v3194, %v7006
        %v7519 = vmul.f32 %v3197, %v7007
        %v7520 = vmul.f32 %v3202, %v7008
        %v7521 = vmul.f32 %v3205, %v7009
        %v7522 = vmul.f32 %v3210, %v7010
        %v7523 = vmul.f32 %v3213, %v7011
        %v7524 = vmul.f32 %v3218, %v7012
        %v7525 = vmul.f32 %v3221, %v7013
        %v7526 = vmul.f32 %v3226, %v7014
        %v7527 = vmul.f32 %v3229, %v7015
        %v7528 = vmul.f32 %v3234, %v7016
        %v7529 = vmul.f32 %v3237, %v7017
        %v7530 = vmul.f32 %v3242, %v7018
        %v7531 = vmul.f32 %v3245, %v7019
        %v7532 = vmul.f32 %v3250, %v7020
        %v7533 = vmul.f32 %v3253, %v7021
        %v7534 = vmul.f32 %v3258, %v7022
        %v7535 = vmul.f32 %v3261, %v7023
        %v7536 = vmul.f32 %v3266, %v7024
        %v7537 = vmul.f32 %v3269, %v7025
        %v7538 = vmul.f32 %v3274, %v7026
        %v7539 = vmul.f32 %v3277, %v7027
        %v7540 = vmul.f32 %v3282, %v7028
        %v7541 = vmul.f32 %v3285, %v7029
        %v7542 = vmul.f32 %v3290, %v7030
        %v7543 = vmul.f32 %v3293, %v7031
        %v7544 = vmul.f32 %v3298, %v7032
        %v7545 = vmul.f32 %v3301, %v7033
        %v7546 = vmul.f32 %v3306, %v7034
        %v7547 = vmul.f32 %v3309, %v7035
        %v7548 = vmul.f32 %v3314, %v7036
        %v7549 = vmul.f32 %v3317, %v7037
        %v7550 = vmul.f32 %v3322, %v7038
        %v7551 = vmul.f32 %v3325, %v7039
        %v7552 = vmul.f32 %v3330, %v7040
        %v7553 = vmul.f32 %v3333, %v7041
        %v7554 = vmul.f32 %v3338, %v7042
        %v7555 = vmul.f32 %v3341, %v7043
        %v7556 = vmul.f32 %v3346, %v7044
        %v7557 = vmul.f32 %v3349, %v7045
        %v7558 = vmul.f32 %v3354, %v7046
        %v7559 = vmul.f32 %v3357, %v7047
        %v7560 = vmul.f32 %v3362, %v7048
        %v7561 = vmul.f32 %v3365, %v7049
        %v7562 = vmul.f32 %v3370, %v7050
        %v7563 = vmul.f32 %v3373, %v7051
        %v7564 = vmul.f32 %v3378, %v7052
        %v7565 = vmul.f32 %v3381, %v7053
        %v7566 = vmul.f32 %v3386, %v7054
        %v7567 = vmul.f32 %v3389, %v7055
        %v7568 = vmul.f32 %v3394, %v7056
        %v7569 = vmul.f32 %v3397, %v7057
        %v7570 = vmul.f32 %v3402, %v7058
        %v7571 = vmul.f32 %v3405, %v7059
        %v7572 = vmul.f32 %v3410, %v7060
        %v7573 = vmul.f32 %v3413, %v7061
        %v7574 = vmul.f32 %v3418, %v7062
        %v7575 = vmul.f32 %v3421, %v7063
        %v7576 = vmul.f32 %v3426, %v7064
        %v7577 = vmul.f32 %v3429, %v7065
        %v7578 = vmul.f32 %v3434, %v7066
        %v7579 = vmul.f32 %v3437, %v7067
        %v7580 = vmul.f32 %v3442, %v7068
        %v7581 = vmul.f32 %v3445, %v7069
        %v7582 = vmul.f32 %v3450, %v7070
        %v7583 = vmul.f32 %v3453, %v7071
        %v7584 = vmul.f32 %v3458, %v7072
        %v7585 = vmul.f32 %v3461, %v7073
        %v7586 = vmul.f32 %v3466, %v7074
        %v7587 = vmul.f32 %v3469, %v7075
        %v7588 = vmul.f32 %v3474, %v7076
        %v7589 = vmul.f32 %v3477, %v7077
        %v7590 = vmul.f32 %v3482, %v7078
        %v7591 = vmul.f32 %v3485, %v7079
        %v7592 = vmul.f32 %v3490, %v7080
        %v7593 = vmul.f32 %v3493, %v7081
        %v7594 = vmul.f32 %v3498, %v7082
        %v7595 = vmul.f32 %v3501, %v7083
        %v7596 = vmul.f32 %v3506, %v7084
        %v7597 = vmul.f32 %v3509, %v7085
        %v7598 = vmul.f32 %v3514, %v7086
        %v7599 = vmul.f32 %v3517, %v7087
        %v7600 = vmul.f32 %v3522, %v7088
        %v7601 = vmul.f32 %v3525, %v7089
        %v7602 = vmul.f32 %v3530, %v7090
        %v7603 = vmul.f32 %v3533, %v7091
        %v7604 = vmul.f32 %v3538, %v7092
        %v7605 = vmul.f32 %v3541, %v7093
        %v7606 = vmul.f32 %v3546, %v7094
        %v7607 = vmul.f32 %v3549, %v7095
        %v7608 = vmul.f32 %v3554, %v7096
        %v7609 = vmul.f32 %v3557, %v7097
        %v7610 = vmul.f32 %v3562, %v7098
        %v7611 = vmul.f32 %v3565, %v7099
        %v7612 = vmul.f32 %v3570, %v7100
        %v7613 = vmul.f32 %v3573, %v7101
        %v7614 = vmul.f32 %v3578, %v7102
        %v7615 = vmul.f32 %v3581, %v7103
        %v7616 = vmul.f32 %v3586, %v7104
        %v7617 = vmul.f32 %v3589, %v7105
        %v7618 = vmul.f32 %v3594, %v7106
        %v7619 = vmul.f32 %v3597, %v7107
        %v7620 = vmul.f32 %v3602, %v7108
        %v7621 = vmul.f32 %v3605, %v7109
        %v7622 = vmul.f32 %v3610, %v7110
        %v7623 = vmul.f32 %v3613, %v7111
        %v7624 = vmul.f32 %v3618, %v7112
        %v7625 = vmul.f32 %v3621, %v7113
        %v7626 = vmul.f32 %v3626, %v7114
        %v7627 = vmul.f32 %v3629, %v7115
        %v7628 = vmul.f32 %v3634, %v7116
        %v7629 = vmul.f32 %v3637, %v7117
        %v7630 = vmul.f32 %v3642, %v7118
        %v7631 = vmul.f32 %v3645, %v7119
        %v7632 = vmul.f32 %v3650, %v7120
        %v7633 = vmul.f32 %v3653, %v7121
        %v7634 = vmul.f32 %v3658, %v7122
        %v7635 = vmul.f32 %v3661, %v7123
        %v7636 = vmul.f32 %v3666, %v7124
        %v7637 = vmul.f32 %v3669, %v7125
        %v7638 = vmul.f32 %v3674, %v7126
        %v7639 = vmul.f32 %v3677, %v7127
        %v7640 = vmul.f32 %v3682, %v7128
        %v7641 = vmul.f32 %v3685, %v7129
        %v7642 = vmul.f32 %v3690, %v7130
        %v7643 = vmul.f32 %v3693, %v7131
        %v7644 = vmul.f32 %v3698, %v7132
        %v7645 = vmul.f32 %v3701, %v7133
        %v7646 = vmul.f32 %v3706, %v7134
        %v7647 = vmul.f32 %v3709, %v7135
        %v7648 = vmul.f32 %v3714, %v7136
        %v7649 = vmul.f32 %v3717, %v7137
        %v7650 = vmul.f32 %v3722, %v7138
        %v7651 = vmul.f32 %v3725, %v7139
        %v7652 = vmul.f32 %v3730, %v7140
        %v7653 = vmul.f32 %v3733, %v7141
        %v7654 = vmul.f32 %v3738, %v7142
        %v7655 = vmul.f32 %v3741, %v7143
        %v7656 = vmul.f32 %v3746, %v7144
        %v7657 = vmul.f32 %v3749, %v7145
        %v7658 = vmul.f32 %v3754, %v7146
        %v7659 = vmul.f32 %v3757, %v7147
        %v7660 = vmul.f32 %v3762, %v7148
        %v7661 = vmul.f32 %v3765, %v7149
        %v7662 = vmul.f32 %v3770, %v7150
        %v7663 = vmul.f32 %v3773, %v7151
        %v7664 = vmul.f32 %v3778, %v7152
        %v7665 = vmul.f32 %v3781, %v7153
        %v7666 = vmul.f32 %v3786, %v7154
        %v7667 = vmul.f32 %v3789, %v7155
        %v7668 = vmul.f32 %v3794, %v7156
        %v7669 = vmul.f32 %v3797, %v7157
        %v7670 = vmul.f32 %v3802, %v7158
        %v7671 = vmul.f32 %v3805, %v7159
        %v7672 = vmul.f32 %v3810, %v7160
        %v7673 = vmul.f32 %v3813, %v7161
        %v7674 = vmul.f32 %v3818, %v7162
        %v7675 = vmul.f32 %v3821, %v7163
        %v7676 = vmul.f32 %v3826, %v7164
        %v7677 = vmul.f32 %v3829, %v7165
        %v7678 = vmul.f32 %v3834, %v7166
        %v7679 = vmul.f32 %v3837, %v7167
        %v7680 = vmul.f32 %v3842, %v7168
        %v7681 = vmul.f32 %v3845, %v7169
        %v7682 = vmul.f32 %v3850, %v7170
        %v7683 = vmul.f32 %v3853, %v7171
        %v7684 = vmul.f32 %v3858, %v7172
        %v7685 = vmul.f32 %v3861, %v7173
        %v7686 = vmul.f32 %v3866, %v7174
        %v7687 = vmul.f32 %v3869, %v7175
        %v7688 = vmul.f32 %v3874, %v7176
        %v7689 = vmul.f32 %v3877, %v7177
        %v7690 = vmul.f32 %v3882, %v7178
        %v7691 = vmul.f32 %v3885, %v7179
        %v7692 = vmul.f32 %v3890, %v7180
        %v7693 = vmul.f32 %v3893, %v7181
        %v7694 = vmul.f32 %v3898, %v7182
        %v7695 = vmul.f32 %v3901, %v7183
        %v7696 = vmul.f32 %v3906, %v7184
        %v7697 = vmul.f32 %v3909, %v7185
        %v7698 = vmul.f32 %v3914, %v7186
        %v7699 = vmul.f32 %v3917, %v7187
        %v7700 = vmul.f32 %v3922, %v7188
        %v7701 = vmul.f32 %v3925, %v7189
        %v7702 = vmul.f32 %v3930, %v7190
        %v7703 = vmul.f32 %v3933, %v7191
        %v7704 = vmul.f32 %v3938, %v7192
        %v7705 = vmul.f32 %v3941, %v7193
        %v7706 = vmul.f32 %v3946, %v7194
        %v7707 = vmul.f32 %v3949, %v7195
        %v7708 = vmul.f32 %v3954, %v7196
        %v7709 = vmul.f32 %v3957, %v7197
        %v7710 = vmul.f32 %v3962, %v7198
        %v7711 = vmul.f32 %v3965, %v7199
        %v7712 = vmul.f32 %v3970, %v7200
        %v7713 = vmul.f32 %v3973, %v7201
        %v7714 = vmul.f32 %v3978, %v7202
        %v7715 = vmul.f32 %v3981, %v7203
        %v7716 = vmul.f32 %v3986, %v7204
        %v7717 = vmul.f32 %v3989, %v7205
        %v7718 = vmul.f32 %v3994, %v7206
        %v7719 = vmul.f32 %v3997, %v7207
        %v7720 = vmul.f32 %v4002, %v7208
        %v7721 = vmul.f32 %v4005, %v7209
        %v7722 = vmul.f32 %v4010, %v7210
        %v7723 = vmul.f32 %v4013, %v7211
        %v7724 = vmul.f32 %v4018, %v7212
        %v7725 = vmul.f32 %v4021, %v7213
        %v7726 = vmul.f32 %v4026, %v7214
        %v7727 = vmul.f32 %v4029, %v7215
        %v7728 = vmul.f32 %v4034, %v7216
        %v7729 = vmul.f32 %v4037, %v7217
        %v7730 = vmul.f32 %v4042, %v7218
        %v7731 = vmul.f32 %v4045, %v7219
        %v7732 = vmul.f32 %v4050, %v7220
        %v7733 = vmul.f32 %v4053, %v7221
        %v7734 = vmul.f32 %v4058, %v7222
        %v7735 = vmul.f32 %v4061, %v7223
        %v7736 = vmul.f32 %v4066, %v7224
        %v7737 = vmul.f32 %v4069, %v7225
        %v7738 = vmul.f32 %v4074, %v7226
        %v7739 = vmul.f32 %v4077, %v7227
        %v7740 = vmul.f32 %v4082, %v7228
        %v7741 = vmul.f32 %v4085, %v7229
        %v7742 = vmul.f32 %v4090, %v7230
        %v7743 = vmul.f32 %v4093, %v7231
        %v7744 = vmul.f32 %v4098, %v7232
        %v7745 = vmul.f32 %v4101, %v7233
        %v7746 = vmul.f32 %v4106, %v7234
        %v7747 = vmul.f32 %v4109, %v7235
        %v7748 = vmul.f32 %v4114, %v7236
        %v7749 = vmul.f32 %v4117, %v7237
        %v7750 = vmul.f32 %v4122, %v7238
        %v7751 = vmul.f32 %v4125, %v7239
        %v7752 = vmul.f32 %v4130, %v7240
        %v7753 = vmul.f32 %v4133, %v7241
        %v7754 = vmul.f32 %v4138, %v7242
        %v7755 = vmul.f32 %v4141, %v7243
        %v7756 = vmul.f32 %v4146, %v7244
        %v7757 = vmul.f32 %v4149, %v7245
        %v7758 = vmul.f32 %v4154, %v7246
        %v7759 = vmul.f32 %v4157, %v7247
        %v7760 = vmul.f32 %v4162, %v7248
        %v7761 = vmul.f32 %v4165, %v7249
        %v7762 = vmul.f32 %v4170, %v7250
        %v7763 = vmul.f32 %v4173, %v7251
        %v7764 = vmul.f32 %v4178, %v7252
        %v7765 = vmul.f32 %v4181, %v7253
        %v7766 = vmul.f32 %v4186, %v7254
        %v7767 = vmul.f32 %v4189, %v7255
        %v7768 = vmul.f32 %v4194, %v7256
        %v7769 = vmul.f32 %v4197, %v7257
        %v7770 = vmul.f32 %v4202, %v7258
        %v7771 = vmul.f32 %v4205, %v7259
        %v7772 = vmul.f32 %v4210, %v7260
        %v7773 = vmul.f32 %v4213, %v7261
        %v7774 = vmul.f32 %v4218, %v7262
        %v7775 = vmul.f32 %v4221, %v7263
        %v7776 = vmul.f32 %v4226, %v7264
        %v7777 = vmul.f32 %v4229, %v7265
        %v7778 = vmul.f32 %v4234, %v7266
        %v7779 = vmul.f32 %v4237, %v7267
        %v7780 = vmul.f32 %v4242, %v7268
        %v7781 = vmul.f32 %v4245, %v7269
        %v7782 = vmul.f32 %v4250, %v7270
        %v7783 = vmul.f32 %v4253, %v7271
        %v7784 = vmul.f32 %v4258, %v7272
        %v7785 = vmul.f32 %v4261, %v7273
        %v7786 = vmul.f32 %v4266, %v7274
        %v7787 = vmul.f32 %v4269, %v7275
        %v7788 = vmul.f32 %v4274, %v7276
        %v7789 = vmul.f32 %v4277, %v7277
        %v7790 = vmul.f32 %v4282, %v7278
        %v7791 = vmul.f32 %v4285, %v7279
        %v7792 = vmul.f32 %v4290, %v7280
        %v7793 = vmul.f32 %v4293, %v7281
        %v7794 = vmul.f32 %v4298, %v7282
        %v7795 = vmul.f32 %v4301, %v7283
        %v7796 = vmul.f32 %v4306, %v7284
        %v7797 = vmul.f32 %v4309, %v7285
        %v7798 = vmul.f32 %v4314, %v7286
        %v7799 = vmul.f32 %v4317, %v7287
        %v7800 = vmul.f32 %v4322, %v7288
        %v7801 = vmul.f32 %v4325, %v7289
        %v7802 = vmul.f32 %v4330, %v7290
        %v7803 = vmul.f32 %v4333, %v7291
        %v7804 = vmul.f32 %v4338, %v7292
        %v7805 = vmul.f32 %v4341, %v7293
        %v7806 = vmul.f32 %v4346, %v7294
        %v7807 = vmul.f32 %v4349, %v7295
        %v7808 = vmul.f32 %v4354, %v7296
        %v7809 = vmul.f32 %v4357, %v7297
        %v7810 = vmul.f32 %v4362, %v7298
        %v7811 = vmul.f32 %v4365, %v7299
        %v7812 = vmul.f32 %v4370, %v7300
        %v7813 = vmul.f32 %v4373, %v7301
        %v7814 = vmul.f32 %v4378, %v7302
        %v7815 = vmul.f32 %v4381, %v7303
        %v7816 = vmul.f32 %v4386, %v7304
        %v7817 = vmul.f32 %v4389, %v7305
        %v7818 = vmul.f32 %v4394, %v7306
        %v7819 = vmul.f32 %v4397, %v7307
        %v7820 = vmul.f32 %v4402, %v7308
        %v7821 = vmul.f32 %v4405, %v7309
        %v7822 = vmul.f32 %v4410, %v7310
        %v7823 = vmul.f32 %v4413, %v7311
        %v7824 = vmul.f32 %v4418, %v7312
        %v7825 = vmul.f32 %v4421, %v7313
        %v7826 = vmul.f32 %v4426, %v7314
        %v7827 = vmul.f32 %v4429, %v7315
        %v7828 = vmul.f32 %v4434, %v7316
        %v7829 = vmul.f32 %v4437, %v7317
        %v7830 = vmul.f32 %v4442, %v7318
        %v7831 = vmul.f32 %v4445, %v7319
        %v7832 = vmul.f32 %v4450, %v7320
        %v7833 = vmul.f32 %v4453, %v7321
        %v7834 = vmul.f32 %v4458, %v7322
        %v7835 = vmul.f32 %v4461, %v7323
        %v7836 = vmul.f32 %v4466, %v7324
        %v7837 = vmul.f32 %v4469, %v7325
        %v7838 = vmul.f32 %v4474, %v7326
        %v7839 = vmul.f32 %v4477, %v7327
        %v7840 = vmul.f32 %v4482, %v7328
        %v7841 = vmul.f32 %v4485, %v7329
        %v7842 = vmul.f32 %v4490, %v7330
        %v7843 = vmul.f32 %v4493, %v7331
        %v7844 = vmul.f32 %v4498, %v7332
        %v7845 = vmul.f32 %v4501, %v7333
        %v7846 = vmul.f32 %v4506, %v7334
        %v7847 = vmul.f32 %v4509, %v7335
        %v7848 = vmul.f32 %v4514, %v7336
        %v7849 = vmul.f32 %v4517, %v7337
        %v7850 = vmul.f32 %v4522, %v7338
        %v7851 = vmul.f32 %v4525, %v7339
        %v7852 = vmul.f32 %v4530, %v7340
        %v7853 = vmul.f32 %v4533, %v7341
        %v7854 = vmul.f32 %v4538, %v7342
        %v7855 = vmul.f32 %v4541, %v7343
        %v7856 = vmul.f32 %v4546, %v7344
        %v7857 = vmul.f32 %v4549, %v7345
        %v7858 = vmul.f32 %v4554, %v7346
        %v7859 = vmul.f32 %v4557, %v7347
        %v7860 = vmul.f32 %v4562, %v7348
        %v7861 = vmul.f32 %v4565, %v7349
        %v7862 = vmul.f32 %v4570, %v7350
        %v7863 = vmul.f32 %v4573, %v7351
        %v7864 = vmul.f32 %v4578, %v7352
        %v7865 = vmul.f32 %v4581, %v7353
        %v7866 = vmul.f32 %v4586, %v7354
        %v7867 = vmul.f32 %v4589, %v7355
        %v7868 = vmul.f32 %v4594, %v7356
        %v7869 = vmul.f32 %v4597, %v7357
        %v7870 = vmul.f32 %v4602, %v7358
        %v7871 = vmul.f32 %v4605, %v7359
        %v7872 = vmul.f32 %v4610, %v7360
        %v7873 = vmul.f32 %v4613, %v7361
        %v7874 = vmul.f32 %v4618, %v7362
        %v7875 = vmul.f32 %v4621, %v7363
        %v7876 = vmul.f32 %v4626, %v7364
        %v7877 = vmul.f32 %v4629, %v7365
        %v7878 = vmul.f32 %v4634, %v7366
        %v7879 = vmul.f32 %v4637, %v7367
        %v7880 = vmul.f32 %v4642, %v7368
        %v7881 = vmul.f32 %v4645, %v7369
        %v7882 = vmul.f32 %v4650, %v7370
        %v7883 = vmul.f32 %v4653, %v7371
        %v7884 = vmul.f32 %v4658, %v7372
        %v7885 = vmul.f32 %v4661, %v7373
        %v7886 = vmul.f32 %v4666, %v7374
        %v7887 = vmul.f32 %v4669, %v7375
        %v7888 = vmul.f32 %v4674, %v7376
        %v7889 = vmul.f32 %v4677, %v7377
        %v7890 = vmul.f32 %v4682, %v7378
        %v7891 = vmul.f32 %v4685, %v7379
        %v7892 = vmul.f32 %v4690, %v7380
        %v7893 = vmul.f32 %v4693, %v7381
        %v7894 = vmul.f32 %v4698, %v7382
        %v7895 = vmul.f32 %v4701, %v7383
        %v7896 = vmul.f32 %v4706, %v7384
        %v7897 = vmul.f32 %v4709, %v7385
        %v7898 = vmul.f32 %v4714, %v7386
        %v7899 = vmul.f32 %v4717, %v7387
        %v7900 = vmul.f32 %v4722, %v7388
        %v7901 = vmul.f32 %v4725, %v7389
        %v7902 = vmul.f32 %v4730, %v7390
        %v7903 = vmul.f32 %v4733, %v7391
        %v7904 = vmul.f32 %v4738, %v7392
        %v7905 = vmul.f32 %v4741, %v7393
        %v7906 = vmul.f32 %v4746, %v7394
        %v7907 = vmul.f32 %v4749, %v7395
        %v7908 = vmul.f32 %v4754, %v7396
        %v7909 = vmul.f32 %v4757, %v7397
        %v7910 = vmul.f32 %v4762, %v7398
        %v7911 = vmul.f32 %v4765, %v7399
        %v7912 = vmul.f32 %v4770, %v7400
        %v7913 = vmul.f32 %v4773, %v7401
        %v7914 = vmul.f32 %v4778, %v7402
        %v7915 = vmul.f32 %v4781, %v7403
        %v7916 = vmul.f32 %v4786, %v7404
        %v7917 = vmul.f32 %v4789, %v7405
        %v7918 = vmul.f32 %v4794, %v7406
        %v7919 = vmul.f32 %v4797, %v7407
        %v7920 = vmul.f32 %v4802, %v7408
        %v7921 = vmul.f32 %v4805, %v7409
        %v7922 = vmul.f32 %v4810, %v7410
        %v7923 = vmul.f32 %v4813, %v7411
        %v7924 = vmul.f32 %v4818, %v7412
        %v7925 = vmul.f32 %v4821, %v7413
        %v7926 = vmul.f32 %v4826, %v7414
        %v7927 = vmul.f32 %v4829, %v7415
        %v7928 = vmul.f32 %v4834, %v7416
        %v7929 = vmul.f32 %v4837, %v7417
        %v7930 = vmul.f32 %v4842, %v7418
        %v7931 = vmul.f32 %v4845, %v7419
        %v7932 = vmul.f32 %v4850, %v7420
        %v7933 = vmul.f32 %v4853, %v7421
        %v7934 = vmul.f32 %v4858, %v7422
        %v7935 = vmul.f32 %v4861, %v7423
        %v7936 = vpack.c.bf16 %v7425, %v7424
        %v7937 = vpack.c.bf16 %v7427, %v7426
        %v7938 = vpack.c.bf16 %v7429, %v7428
        %v7939 = vpack.c.bf16 %v7431, %v7430
        %v7940 = vpack.c.bf16 %v7433, %v7432
        %v7941 = vpack.c.bf16 %v7435, %v7434
        %v7942 = vpack.c.bf16 %v7437, %v7436
        %v7943 = vpack.c.bf16 %v7439, %v7438
        %v7944 = vpack.c.bf16 %v7441, %v7440
        %v7945 = vpack.c.bf16 %v7443, %v7442
        %v7946 = vpack.c.bf16 %v7445, %v7444
        %v7947 = vpack.c.bf16 %v7447, %v7446
        %v7948 = vpack.c.bf16 %v7449, %v7448
        %v7949 = vpack.c.bf16 %v7451, %v7450
        %v7950 = vpack.c.bf16 %v7453, %v7452
        %v7951 = vpack.c.bf16 %v7455, %v7454
        %v7952 = vpack.c.bf16 %v7457, %v7456
        %v7953 = vpack.c.bf16 %v7459, %v7458
        %v7954 = vpack.c.bf16 %v7461, %v7460
        %v7955 = vpack.c.bf16 %v7463, %v7462
        %v7956 = vpack.c.bf16 %v7465, %v7464
        %v7957 = vpack.c.bf16 %v7467, %v7466
        %v7958 = vpack.c.bf16 %v7469, %v7468
        %v7959 = vpack.c.bf16 %v7471, %v7470
        %v7960 = vpack.c.bf16 %v7473, %v7472
        %v7961 = vpack.c.bf16 %v7475, %v7474
        %v7962 = vpack.c.bf16 %v7477, %v7476
        %v7963 = vpack.c.bf16 %v7479, %v7478
        %v7964 = vpack.c.bf16 %v7481, %v7480
        %v7965 = vpack.c.bf16 %v7483, %v7482
        %v7966 = vpack.c.bf16 %v7485, %v7484
        %v7967 = vpack.c.bf16 %v7487, %v7486
        %v7968 = vpack.c.bf16 %v7489, %v7488
        %v7969 = vpack.c.bf16 %v7491, %v7490
        %v7970 = vpack.c.bf16 %v7493, %v7492
        %v7971 = vpack.c.bf16 %v7495, %v7494
        %v7972 = vpack.c.bf16 %v7497, %v7496
        %v7973 = vpack.c.bf16 %v7499, %v7498
        %v7974 = vpack.c.bf16 %v7501, %v7500
        %v7975 = vpack.c.bf16 %v7503, %v7502
        %v7976 = vpack.c.bf16 %v7505, %v7504
        %v7977 = vpack.c.bf16 %v7507, %v7506
        %v7978 = vpack.c.bf16 %v7509, %v7508
        %v7979 = vpack.c.bf16 %v7511, %v7510
        %v7980 = vpack.c.bf16 %v7513, %v7512
        %v7981 = vpack.c.bf16 %v7515, %v7514
        %v7982 = vpack.c.bf16 %v7517, %v7516
        %v7983 = vpack.c.bf16 %v7519, %v7518
        %v7984 = vpack.c.bf16 %v7521, %v7520
        %v7985 = vpack.c.bf16 %v7523, %v7522
        %v7986 = vpack.c.bf16 %v7525, %v7524
        %v7987 = vpack.c.bf16 %v7527, %v7526
        %v7988 = vpack.c.bf16 %v7529, %v7528
        %v7989 = vpack.c.bf16 %v7531, %v7530
        %v7990 = vpack.c.bf16 %v7533, %v7532
        %v7991 = vpack.c.bf16 %v7535, %v7534
        %v7992 = vpack.c.bf16 %v7537, %v7536
        %v7993 = vpack.c.bf16 %v7539, %v7538
        %v7994 = vpack.c.bf16 %v7541, %v7540
        %v7995 = vpack.c.bf16 %v7543, %v7542
        %v7996 = vpack.c.bf16 %v7545, %v7544
        %v7997 = vpack.c.bf16 %v7547, %v7546
        %v7998 = vpack.c.bf16 %v7549, %v7548
        %v7999 = vpack.c.bf16 %v7551, %v7550
        %v8000 = vpack.c.bf16 %v7553, %v7552
        %v8001 = vpack.c.bf16 %v7555, %v7554
        %v8002 = vpack.c.bf16 %v7557, %v7556
        %v8003 = vpack.c.bf16 %v7559, %v7558
        %v8004 = vpack.c.bf16 %v7561, %v7560
        %v8005 = vpack.c.bf16 %v7563, %v7562
        %v8006 = vpack.c.bf16 %v7565, %v7564
        %v8007 = vpack.c.bf16 %v7567, %v7566
        %v8008 = vpack.c.bf16 %v7569, %v7568
        %v8009 = vpack.c.bf16 %v7571, %v7570
        %v8010 = vpack.c.bf16 %v7573, %v7572
        %v8011 = vpack.c.bf16 %v7575, %v7574
        %v8012 = vpack.c.bf16 %v7577, %v7576
        %v8013 = vpack.c.bf16 %v7579, %v7578
        %v8014 = vpack.c.bf16 %v7581, %v7580
        %v8015 = vpack.c.bf16 %v7583, %v7582
        %v8016 = vpack.c.bf16 %v7585, %v7584
        %v8017 = vpack.c.bf16 %v7587, %v7586
        %v8018 = vpack.c.bf16 %v7589, %v7588
        %v8019 = vpack.c.bf16 %v7591, %v7590
        %v8020 = vpack.c.bf16 %v7593, %v7592
        %v8021 = vpack.c.bf16 %v7595, %v7594
        %v8022 = vpack.c.bf16 %v7597, %v7596
        %v8023 = vpack.c.bf16 %v7599, %v7598
        %v8024 = vpack.c.bf16 %v7601, %v7600
        %v8025 = vpack.c.bf16 %v7603, %v7602
        %v8026 = vpack.c.bf16 %v7605, %v7604
        %v8027 = vpack.c.bf16 %v7607, %v7606
        %v8028 = vpack.c.bf16 %v7609, %v7608
        %v8029 = vpack.c.bf16 %v7611, %v7610
        %v8030 = vpack.c.bf16 %v7613, %v7612
        %v8031 = vpack.c.bf16 %v7615, %v7614
        %v8032 = vpack.c.bf16 %v7617, %v7616
        %v8033 = vpack.c.bf16 %v7619, %v7618
        %v8034 = vpack.c.bf16 %v7621, %v7620
        %v8035 = vpack.c.bf16 %v7623, %v7622
        %v8036 = vpack.c.bf16 %v7625, %v7624
        %v8037 = vpack.c.bf16 %v7627, %v7626
        %v8038 = vpack.c.bf16 %v7629, %v7628
        %v8039 = vpack.c.bf16 %v7631, %v7630
        %v8040 = vpack.c.bf16 %v7633, %v7632
        %v8041 = vpack.c.bf16 %v7635, %v7634
        %v8042 = vpack.c.bf16 %v7637, %v7636
        %v8043 = vpack.c.bf16 %v7639, %v7638
        %v8044 = vpack.c.bf16 %v7641, %v7640
        %v8045 = vpack.c.bf16 %v7643, %v7642
        %v8046 = vpack.c.bf16 %v7645, %v7644
        %v8047 = vpack.c.bf16 %v7647, %v7646
        %v8048 = vpack.c.bf16 %v7649, %v7648
        %v8049 = vpack.c.bf16 %v7651, %v7650
        %v8050 = vpack.c.bf16 %v7653, %v7652
        %v8051 = vpack.c.bf16 %v7655, %v7654
        %v8052 = vpack.c.bf16 %v7657, %v7656
        %v8053 = vpack.c.bf16 %v7659, %v7658
        %v8054 = vpack.c.bf16 %v7661, %v7660
        %v8055 = vpack.c.bf16 %v7663, %v7662
        %v8056 = vpack.c.bf16 %v7665, %v7664
        %v8057 = vpack.c.bf16 %v7667, %v7666
        %v8058 = vpack.c.bf16 %v7669, %v7668
        %v8059 = vpack.c.bf16 %v7671, %v7670
        %v8060 = vpack.c.bf16 %v7673, %v7672
        %v8061 = vpack.c.bf16 %v7675, %v7674
        %v8062 = vpack.c.bf16 %v7677, %v7676
        %v8063 = vpack.c.bf16 %v7679, %v7678
        %v8064 = vpack.c.bf16 %v7681, %v7680
        %v8065 = vpack.c.bf16 %v7683, %v7682
        %v8066 = vpack.c.bf16 %v7685, %v7684
        %v8067 = vpack.c.bf16 %v7687, %v7686
        %v8068 = vpack.c.bf16 %v7689, %v7688
        %v8069 = vpack.c.bf16 %v7691, %v7690
        %v8070 = vpack.c.bf16 %v7693, %v7692
        %v8071 = vpack.c.bf16 %v7695, %v7694
        %v8072 = vpack.c.bf16 %v7697, %v7696
        %v8073 = vpack.c.bf16 %v7699, %v7698
        %v8074 = vpack.c.bf16 %v7701, %v7700
        %v8075 = vpack.c.bf16 %v7703, %v7702
        %v8076 = vpack.c.bf16 %v7705, %v7704
        %v8077 = vpack.c.bf16 %v7707, %v7706
        %v8078 = vpack.c.bf16 %v7709, %v7708
        %v8079 = vpack.c.bf16 %v7711, %v7710
        %v8080 = vpack.c.bf16 %v7713, %v7712
        %v8081 = vpack.c.bf16 %v7715, %v7714
        %v8082 = vpack.c.bf16 %v7717, %v7716
        %v8083 = vpack.c.bf16 %v7719, %v7718
        %v8084 = vpack.c.bf16 %v7721, %v7720
        %v8085 = vpack.c.bf16 %v7723, %v7722
        %v8086 = vpack.c.bf16 %v7725, %v7724
        %v8087 = vpack.c.bf16 %v7727, %v7726
        %v8088 = vpack.c.bf16 %v7729, %v7728
        %v8089 = vpack.c.bf16 %v7731, %v7730
        %v8090 = vpack.c.bf16 %v7733, %v7732
        %v8091 = vpack.c.bf16 %v7735, %v7734
        %v8092 = vpack.c.bf16 %v7737, %v7736
        %v8093 = vpack.c.bf16 %v7739, %v7738
        %v8094 = vpack.c.bf16 %v7741, %v7740
        %v8095 = vpack.c.bf16 %v7743, %v7742
        %v8096 = vpack.c.bf16 %v7745, %v7744
        %v8097 = vpack.c.bf16 %v7747, %v7746
        %v8098 = vpack.c.bf16 %v7749, %v7748
        %v8099 = vpack.c.bf16 %v7751, %v7750
        %v8100 = vpack.c.bf16 %v7753, %v7752
        %v8101 = vpack.c.bf16 %v7755, %v7754
        %v8102 = vpack.c.bf16 %v7757, %v7756
        %v8103 = vpack.c.bf16 %v7759, %v7758
        %v8104 = vpack.c.bf16 %v7761, %v7760
        %v8105 = vpack.c.bf16 %v7763, %v7762
        %v8106 = vpack.c.bf16 %v7765, %v7764
        %v8107 = vpack.c.bf16 %v7767, %v7766
        %v8108 = vpack.c.bf16 %v7769, %v7768
        %v8109 = vpack.c.bf16 %v7771, %v7770
        %v8110 = vpack.c.bf16 %v7773, %v7772
        %v8111 = vpack.c.bf16 %v7775, %v7774
        %v8112 = vpack.c.bf16 %v7777, %v7776
        %v8113 = vpack.c.bf16 %v7779, %v7778
        %v8114 = vpack.c.bf16 %v7781, %v7780
        %v8115 = vpack.c.bf16 %v7783, %v7782
        %v8116 = vpack.c.bf16 %v7785, %v7784
        %v8117 = vpack.c.bf16 %v7787, %v7786
        %v8118 = vpack.c.bf16 %v7789, %v7788
        %v8119 = vpack.c.bf16 %v7791, %v7790
        %v8120 = vpack.c.bf16 %v7793, %v7792
        %v8121 = vpack.c.bf16 %v7795, %v7794
        %v8122 = vpack.c.bf16 %v7797, %v7796
        %v8123 = vpack.c.bf16 %v7799, %v7798
        %v8124 = vpack.c.bf16 %v7801, %v7800
        %v8125 = vpack.c.bf16 %v7803, %v7802
        %v8126 = vpack.c.bf16 %v7805, %v7804
        %v8127 = vpack.c.bf16 %v7807, %v7806
        %v8128 = vpack.c.bf16 %v7809, %v7808
        %v8129 = vpack.c.bf16 %v7811, %v7810
        %v8130 = vpack.c.bf16 %v7813, %v7812
        %v8131 = vpack.c.bf16 %v7815, %v7814
        %v8132 = vpack.c.bf16 %v7817, %v7816
        %v8133 = vpack.c.bf16 %v7819, %v7818
        %v8134 = vpack.c.bf16 %v7821, %v7820
        %v8135 = vpack.c.bf16 %v7823, %v7822
        %v8136 = vpack.c.bf16 %v7825, %v7824
        %v8137 = vpack.c.bf16 %v7827, %v7826
        %v8138 = vpack.c.bf16 %v7829, %v7828
        %v8139 = vpack.c.bf16 %v7831, %v7830
        %v8140 = vpack.c.bf16 %v7833, %v7832
        %v8141 = vpack.c.bf16 %v7835, %v7834
        %v8142 = vpack.c.bf16 %v7837, %v7836
        %v8143 = vpack.c.bf16 %v7839, %v7838
        %v8144 = vpack.c.bf16 %v7841, %v7840
        %v8145 = vpack.c.bf16 %v7843, %v7842
        %v8146 = vpack.c.bf16 %v7845, %v7844
        %v8147 = vpack.c.bf16 %v7847, %v7846
        %v8148 = vpack.c.bf16 %v7849, %v7848
        %v8149 = vpack.c.bf16 %v7851, %v7850
        %v8150 = vpack.c.bf16 %v7853, %v7852
        %v8151 = vpack.c.bf16 %v7855, %v7854
        %v8152 = vpack.c.bf16 %v7857, %v7856
        %v8153 = vpack.c.bf16 %v7859, %v7858
        %v8154 = vpack.c.bf16 %v7861, %v7860
        %v8155 = vpack.c.bf16 %v7863, %v7862
        %v8156 = vpack.c.bf16 %v7865, %v7864
        %v8157 = vpack.c.bf16 %v7867, %v7866
        %v8158 = vpack.c.bf16 %v7869, %v7868
        %v8159 = vpack.c.bf16 %v7871, %v7870
        %v8160 = vpack.c.bf16 %v7873, %v7872
        %v8161 = vpack.c.bf16 %v7875, %v7874
        %v8162 = vpack.c.bf16 %v7877, %v7876
        %v8163 = vpack.c.bf16 %v7879, %v7878
        %v8164 = vpack.c.bf16 %v7881, %v7880
        %v8165 = vpack.c.bf16 %v7883, %v7882
        %v8166 = vpack.c.bf16 %v7885, %v7884
        %v8167 = vpack.c.bf16 %v7887, %v7886
        %v8168 = vpack.c.bf16 %v7889, %v7888
        %v8169 = vpack.c.bf16 %v7891, %v7890
        %v8170 = vpack.c.bf16 %v7893, %v7892
        %v8171 = vpack.c.bf16 %v7895, %v7894
        %v8172 = vpack.c.bf16 %v7897, %v7896
        %v8173 = vpack.c.bf16 %v7899, %v7898
        %v8174 = vpack.c.bf16 %v7901, %v7900
        %v8175 = vpack.c.bf16 %v7903, %v7902
        %v8176 = vpack.c.bf16 %v7905, %v7904
        %v8177 = vpack.c.bf16 %v7907, %v7906
        %v8178 = vpack.c.bf16 %v7909, %v7908
        %v8179 = vpack.c.bf16 %v7911, %v7910
        %v8180 = vpack.c.bf16 %v7913, %v7912
        %v8181 = vpack.c.bf16 %v7915, %v7914
        %v8182 = vpack.c.bf16 %v7917, %v7916
        %v8183 = vpack.c.bf16 %v7919, %v7918
        %v8184 = vpack.c.bf16 %v7921, %v7920
        %v8185 = vpack.c.bf16 %v7923, %v7922
        %v8186 = vpack.c.bf16 %v7925, %v7924
        %v8187 = vpack.c.bf16 %v7927, %v7926
        %v8188 = vpack.c.bf16 %v7929, %v7928
        %v8189 = vpack.c.bf16 %v7931, %v7930
        %v8190 = vpack.c.bf16 %v7933, %v7932
        %v8191 = vpack.c.bf16 %v7935, %v7934
        %v8448 = vunpack.c.l.b16 %v7936
        %v8449 = vunpack.c.h.b16 %v7936
        %v8450 = vunpack.c.l.b16 %v7937
        %v8451 = vunpack.c.h.b16 %v7937
        %v8452 = vunpack.c.l.b16 %v7938
        %v8453 = vunpack.c.h.b16 %v7938
        %v8454 = vunpack.c.l.b16 %v7939
        %v8455 = vunpack.c.h.b16 %v7939
        %v8456 = vunpack.c.l.b16 %v7940
        %v8457 = vunpack.c.h.b16 %v7940
        %v8458 = vunpack.c.l.b16 %v7941
        %v8459 = vunpack.c.h.b16 %v7941
        %v8460 = vunpack.c.l.b16 %v7942
        %v8461 = vunpack.c.h.b16 %v7942
        %v8462 = vunpack.c.l.b16 %v7943
        %v8463 = vunpack.c.h.b16 %v7943
        %v8464 = vunpack.c.l.b16 %v7944
        %v8465 = vunpack.c.h.b16 %v7944
        %v8466 = vunpack.c.l.b16 %v7945
        %v8467 = vunpack.c.h.b16 %v7945
        %v8468 = vunpack.c.l.b16 %v7946
        %v8469 = vunpack.c.h.b16 %v7946
        %v8470 = vunpack.c.l.b16 %v7947
        %v8471 = vunpack.c.h.b16 %v7947
        %v8472 = vunpack.c.l.b16 %v7948
        %v8473 = vunpack.c.h.b16 %v7948
        %v8474 = vunpack.c.l.b16 %v7949
        %v8475 = vunpack.c.h.b16 %v7949
        %v8476 = vunpack.c.l.b16 %v7950
        %v8477 = vunpack.c.h.b16 %v7950
        %v8478 = vunpack.c.l.b16 %v7951
        %v8479 = vunpack.c.h.b16 %v7951
        %v8480 = vunpack.c.l.b16 %v7952
        %v8481 = vunpack.c.h.b16 %v7952
        %v8482 = vunpack.c.l.b16 %v7953
        %v8483 = vunpack.c.h.b16 %v7953
        %v8484 = vunpack.c.l.b16 %v7954
        %v8485 = vunpack.c.h.b16 %v7954
        %v8486 = vunpack.c.l.b16 %v7955
        %v8487 = vunpack.c.h.b16 %v7955
        %v8488 = vunpack.c.l.b16 %v7956
        %v8489 = vunpack.c.h.b16 %v7956
        %v8490 = vunpack.c.l.b16 %v7957
        %v8491 = vunpack.c.h.b16 %v7957
        %v8492 = vunpack.c.l.b16 %v7958
        %v8493 = vunpack.c.h.b16 %v7958
        %v8494 = vunpack.c.l.b16 %v7959
        %v8495 = vunpack.c.h.b16 %v7959
        %v8496 = vunpack.c.l.b16 %v7960
        %v8497 = vunpack.c.h.b16 %v7960
        %v8498 = vunpack.c.l.b16 %v7961
        %v8499 = vunpack.c.h.b16 %v7961
        %v8500 = vunpack.c.l.b16 %v7962
        %v8501 = vunpack.c.h.b16 %v7962
        %v8502 = vunpack.c.l.b16 %v7963
        %v8503 = vunpack.c.h.b16 %v7963
        %v8504 = vunpack.c.l.b16 %v7964
        %v8505 = vunpack.c.h.b16 %v7964
        %v8506 = vunpack.c.l.b16 %v7965
        %v8507 = vunpack.c.h.b16 %v7965
        %v8508 = vunpack.c.l.b16 %v7966
        %v8509 = vunpack.c.h.b16 %v7966
        %v8510 = vunpack.c.l.b16 %v7967
        %v8511 = vunpack.c.h.b16 %v7967
        %v8512 = vunpack.c.l.b16 %v7968
        %v8513 = vunpack.c.h.b16 %v7968
        %v8514 = vunpack.c.l.b16 %v7969
        %v8515 = vunpack.c.h.b16 %v7969
        %v8516 = vunpack.c.l.b16 %v7970
        %v8517 = vunpack.c.h.b16 %v7970
        %v8518 = vunpack.c.l.b16 %v7971
        %v8519 = vunpack.c.h.b16 %v7971
        %v8520 = vunpack.c.l.b16 %v7972
        %v8521 = vunpack.c.h.b16 %v7972
        %v8522 = vunpack.c.l.b16 %v7973
        %v8523 = vunpack.c.h.b16 %v7973
        %v8524 = vunpack.c.l.b16 %v7974
        %v8525 = vunpack.c.h.b16 %v7974
        %v8526 = vunpack.c.l.b16 %v7975
        %v8527 = vunpack.c.h.b16 %v7975
        %v8528 = vunpack.c.l.b16 %v7976
        %v8529 = vunpack.c.h.b16 %v7976
        %v8530 = vunpack.c.l.b16 %v7977
        %v8531 = vunpack.c.h.b16 %v7977
        %v8532 = vunpack.c.l.b16 %v7978
        %v8533 = vunpack.c.h.b16 %v7978
        %v8534 = vunpack.c.l.b16 %v7979
        %v8535 = vunpack.c.h.b16 %v7979
        %v8536 = vunpack.c.l.b16 %v7980
        %v8537 = vunpack.c.h.b16 %v7980
        %v8538 = vunpack.c.l.b16 %v7981
        %v8539 = vunpack.c.h.b16 %v7981
        %v8540 = vunpack.c.l.b16 %v7982
        %v8541 = vunpack.c.h.b16 %v7982
        %v8542 = vunpack.c.l.b16 %v7983
        %v8543 = vunpack.c.h.b16 %v7983
        %v8544 = vunpack.c.l.b16 %v7984
        %v8545 = vunpack.c.h.b16 %v7984
        %v8546 = vunpack.c.l.b16 %v7985
        %v8547 = vunpack.c.h.b16 %v7985
        %v8548 = vunpack.c.l.b16 %v7986
        %v8549 = vunpack.c.h.b16 %v7986
        %v8550 = vunpack.c.l.b16 %v7987
        %v8551 = vunpack.c.h.b16 %v7987
        %v8552 = vunpack.c.l.b16 %v7988
        %v8553 = vunpack.c.h.b16 %v7988
        %v8554 = vunpack.c.l.b16 %v7989
        %v8555 = vunpack.c.h.b16 %v7989
        %v8556 = vunpack.c.l.b16 %v7990
        %v8557 = vunpack.c.h.b16 %v7990
        %v8558 = vunpack.c.l.b16 %v7991
        %v8559 = vunpack.c.h.b16 %v7991
        %v8560 = vunpack.c.l.b16 %v7992
        %v8561 = vunpack.c.h.b16 %v7992
        %v8562 = vunpack.c.l.b16 %v7993
        %v8563 = vunpack.c.h.b16 %v7993
        %v8564 = vunpack.c.l.b16 %v7994
        %v8565 = vunpack.c.h.b16 %v7994
        %v8566 = vunpack.c.l.b16 %v7995
        %v8567 = vunpack.c.h.b16 %v7995
        %v8568 = vunpack.c.l.b16 %v7996
        %v8569 = vunpack.c.h.b16 %v7996
        %v8570 = vunpack.c.l.b16 %v7997
        %v8571 = vunpack.c.h.b16 %v7997
        %v8572 = vunpack.c.l.b16 %v7998
        %v8573 = vunpack.c.h.b16 %v7998
        %v8574 = vunpack.c.l.b16 %v7999
        %v8575 = vunpack.c.h.b16 %v7999
        %v8576 = vunpack.c.l.b16 %v8000
        %v8577 = vunpack.c.h.b16 %v8000
        %v8578 = vunpack.c.l.b16 %v8001
        %v8579 = vunpack.c.h.b16 %v8001
        %v8580 = vunpack.c.l.b16 %v8002
        %v8581 = vunpack.c.h.b16 %v8002
        %v8582 = vunpack.c.l.b16 %v8003
        %v8583 = vunpack.c.h.b16 %v8003
        %v8584 = vunpack.c.l.b16 %v8004
        %v8585 = vunpack.c.h.b16 %v8004
        %v8586 = vunpack.c.l.b16 %v8005
        %v8587 = vunpack.c.h.b16 %v8005
        %v8588 = vunpack.c.l.b16 %v8006
        %v8589 = vunpack.c.h.b16 %v8006
        %v8590 = vunpack.c.l.b16 %v8007
        %v8591 = vunpack.c.h.b16 %v8007
        %v8592 = vunpack.c.l.b16 %v8008
        %v8593 = vunpack.c.h.b16 %v8008
        %v8594 = vunpack.c.l.b16 %v8009
        %v8595 = vunpack.c.h.b16 %v8009
        %v8596 = vunpack.c.l.b16 %v8010
        %v8597 = vunpack.c.h.b16 %v8010
        %v8598 = vunpack.c.l.b16 %v8011
        %v8599 = vunpack.c.h.b16 %v8011
        %v8600 = vunpack.c.l.b16 %v8012
        %v8601 = vunpack.c.h.b16 %v8012
        %v8602 = vunpack.c.l.b16 %v8013
        %v8603 = vunpack.c.h.b16 %v8013
        %v8604 = vunpack.c.l.b16 %v8014
        %v8605 = vunpack.c.h.b16 %v8014
        %v8606 = vunpack.c.l.b16 %v8015
        %v8607 = vunpack.c.h.b16 %v8015
        %v8608 = vunpack.c.l.b16 %v8016
        %v8609 = vunpack.c.h.b16 %v8016
        %v8610 = vunpack.c.l.b16 %v8017
        %v8611 = vunpack.c.h.b16 %v8017
        %v8612 = vunpack.c.l.b16 %v8018
        %v8613 = vunpack.c.h.b16 %v8018
        %v8614 = vunpack.c.l.b16 %v8019
        %v8615 = vunpack.c.h.b16 %v8019
        %v8616 = vunpack.c.l.b16 %v8020
        %v8617 = vunpack.c.h.b16 %v8020
        %v8618 = vunpack.c.l.b16 %v8021
        %v8619 = vunpack.c.h.b16 %v8021
        %v8620 = vunpack.c.l.b16 %v8022
        %v8621 = vunpack.c.h.b16 %v8022
        %v8622 = vunpack.c.l.b16 %v8023
        %v8623 = vunpack.c.h.b16 %v8023
        %v8624 = vunpack.c.l.b16 %v8024
        %v8625 = vunpack.c.h.b16 %v8024
        %v8626 = vunpack.c.l.b16 %v8025
        %v8627 = vunpack.c.h.b16 %v8025
        %v8628 = vunpack.c.l.b16 %v8026
        %v8629 = vunpack.c.h.b16 %v8026
        %v8630 = vunpack.c.l.b16 %v8027
        %v8631 = vunpack.c.h.b16 %v8027
        %v8632 = vunpack.c.l.b16 %v8028
        %v8633 = vunpack.c.h.b16 %v8028
        %v8634 = vunpack.c.l.b16 %v8029
        %v8635 = vunpack.c.h.b16 %v8029
        %v8636 = vunpack.c.l.b16 %v8030
        %v8637 = vunpack.c.h.b16 %v8030
        %v8638 = vunpack.c.l.b16 %v8031
        %v8639 = vunpack.c.h.b16 %v8031
        %v8640 = vunpack.c.l.b16 %v8032
        %v8641 = vunpack.c.h.b16 %v8032
        %v8642 = vunpack.c.l.b16 %v8033
        %v8643 = vunpack.c.h.b16 %v8033
        %v8644 = vunpack.c.l.b16 %v8034
        %v8645 = vunpack.c.h.b16 %v8034
        %v8646 = vunpack.c.l.b16 %v8035
        %v8647 = vunpack.c.h.b16 %v8035
        %v8648 = vunpack.c.l.b16 %v8036
        %v8649 = vunpack.c.h.b16 %v8036
        %v8650 = vunpack.c.l.b16 %v8037
        %v8651 = vunpack.c.h.b16 %v8037
        %v8652 = vunpack.c.l.b16 %v8038
        %v8653 = vunpack.c.h.b16 %v8038
        %v8654 = vunpack.c.l.b16 %v8039
        %v8655 = vunpack.c.h.b16 %v8039
        %v8656 = vunpack.c.l.b16 %v8040
        %v8657 = vunpack.c.h.b16 %v8040
        %v8658 = vunpack.c.l.b16 %v8041
        %v8659 = vunpack.c.h.b16 %v8041
        %v8660 = vunpack.c.l.b16 %v8042
        %v8661 = vunpack.c.h.b16 %v8042
        %v8662 = vunpack.c.l.b16 %v8043
        %v8663 = vunpack.c.h.b16 %v8043
        %v8664 = vunpack.c.l.b16 %v8044
        %v8665 = vunpack.c.h.b16 %v8044
        %v8666 = vunpack.c.l.b16 %v8045
        %v8667 = vunpack.c.h.b16 %v8045
        %v8668 = vunpack.c.l.b16 %v8046
        %v8669 = vunpack.c.h.b16 %v8046
        %v8670 = vunpack.c.l.b16 %v8047
        %v8671 = vunpack.c.h.b16 %v8047
        %v8672 = vunpack.c.l.b16 %v8048
        %v8673 = vunpack.c.h.b16 %v8048
        %v8674 = vunpack.c.l.b16 %v8049
        %v8675 = vunpack.c.h.b16 %v8049
        %v8676 = vunpack.c.l.b16 %v8050
        %v8677 = vunpack.c.h.b16 %v8050
        %v8678 = vunpack.c.l.b16 %v8051
        %v8679 = vunpack.c.h.b16 %v8051
        %v8680 = vunpack.c.l.b16 %v8052
        %v8681 = vunpack.c.h.b16 %v8052
        %v8682 = vunpack.c.l.b16 %v8053
        %v8683 = vunpack.c.h.b16 %v8053
        %v8684 = vunpack.c.l.b16 %v8054
        %v8685 = vunpack.c.h.b16 %v8054
        %v8686 = vunpack.c.l.b16 %v8055
        %v8687 = vunpack.c.h.b16 %v8055
        %v8688 = vunpack.c.l.b16 %v8056
        %v8689 = vunpack.c.h.b16 %v8056
        %v8690 = vunpack.c.l.b16 %v8057
        %v8691 = vunpack.c.h.b16 %v8057
        %v8692 = vunpack.c.l.b16 %v8058
        %v8693 = vunpack.c.h.b16 %v8058
        %v8694 = vunpack.c.l.b16 %v8059
        %v8695 = vunpack.c.h.b16 %v8059
        %v8696 = vunpack.c.l.b16 %v8060
        %v8697 = vunpack.c.h.b16 %v8060
        %v8698 = vunpack.c.l.b16 %v8061
        %v8699 = vunpack.c.h.b16 %v8061
        %v8700 = vunpack.c.l.b16 %v8062
        %v8701 = vunpack.c.h.b16 %v8062
        %v8702 = vunpack.c.l.b16 %v8063
        %v8703 = vunpack.c.h.b16 %v8063
        %v8704 = vunpack.c.l.b16 %v8064
        %v8705 = vunpack.c.h.b16 %v8064
        %v8706 = vunpack.c.l.b16 %v8065
        %v8707 = vunpack.c.h.b16 %v8065
        %v8708 = vunpack.c.l.b16 %v8066
        %v8709 = vunpack.c.h.b16 %v8066
        %v8710 = vunpack.c.l.b16 %v8067
        %v8711 = vunpack.c.h.b16 %v8067
        %v8712 = vunpack.c.l.b16 %v8068
        %v8713 = vunpack.c.h.b16 %v8068
        %v8714 = vunpack.c.l.b16 %v8069
        %v8715 = vunpack.c.h.b16 %v8069
        %v8716 = vunpack.c.l.b16 %v8070
        %v8717 = vunpack.c.h.b16 %v8070
        %v8718 = vunpack.c.l.b16 %v8071
        %v8719 = vunpack.c.h.b16 %v8071
        %v8720 = vunpack.c.l.b16 %v8072
        %v8721 = vunpack.c.h.b16 %v8072
        %v8722 = vunpack.c.l.b16 %v8073
        %v8723 = vunpack.c.h.b16 %v8073
        %v8724 = vunpack.c.l.b16 %v8074
        %v8725 = vunpack.c.h.b16 %v8074
        %v8726 = vunpack.c.l.b16 %v8075
        %v8727 = vunpack.c.h.b16 %v8075
        %v8728 = vunpack.c.l.b16 %v8076
        %v8729 = vunpack.c.h.b16 %v8076
        %v8730 = vunpack.c.l.b16 %v8077
        %v8731 = vunpack.c.h.b16 %v8077
        %v8732 = vunpack.c.l.b16 %v8078
        %v8733 = vunpack.c.h.b16 %v8078
        %v8734 = vunpack.c.l.b16 %v8079
        %v8735 = vunpack.c.h.b16 %v8079
        %v8736 = vunpack.c.l.b16 %v8080
        %v8737 = vunpack.c.h.b16 %v8080
        %v8738 = vunpack.c.l.b16 %v8081
        %v8739 = vunpack.c.h.b16 %v8081
        %v8740 = vunpack.c.l.b16 %v8082
        %v8741 = vunpack.c.h.b16 %v8082
        %v8742 = vunpack.c.l.b16 %v8083
        %v8743 = vunpack.c.h.b16 %v8083
        %v8744 = vunpack.c.l.b16 %v8084
        %v8745 = vunpack.c.h.b16 %v8084
        %v8746 = vunpack.c.l.b16 %v8085
        %v8747 = vunpack.c.h.b16 %v8085
        %v8748 = vunpack.c.l.b16 %v8086
        %v8749 = vunpack.c.h.b16 %v8086
        %v8750 = vunpack.c.l.b16 %v8087
        %v8751 = vunpack.c.h.b16 %v8087
        %v8752 = vunpack.c.l.b16 %v8088
        %v8753 = vunpack.c.h.b16 %v8088
        %v8754 = vunpack.c.l.b16 %v8089
        %v8755 = vunpack.c.h.b16 %v8089
        %v8756 = vunpack.c.l.b16 %v8090
        %v8757 = vunpack.c.h.b16 %v8090
        %v8758 = vunpack.c.l.b16 %v8091
        %v8759 = vunpack.c.h.b16 %v8091
        %v8760 = vunpack.c.l.b16 %v8092
        %v8761 = vunpack.c.h.b16 %v8092
        %v8762 = vunpack.c.l.b16 %v8093
        %v8763 = vunpack.c.h.b16 %v8093
        %v8764 = vunpack.c.l.b16 %v8094
        %v8765 = vunpack.c.h.b16 %v8094
        %v8766 = vunpack.c.l.b16 %v8095
        %v8767 = vunpack.c.h.b16 %v8095
        %v8768 = vunpack.c.l.b16 %v8096
        %v8769 = vunpack.c.h.b16 %v8096
        %v8770 = vunpack.c.l.b16 %v8097
        %v8771 = vunpack.c.h.b16 %v8097
        %v8772 = vunpack.c.l.b16 %v8098
        %v8773 = vunpack.c.h.b16 %v8098
        %v8774 = vunpack.c.l.b16 %v8099
        %v8775 = vunpack.c.h.b16 %v8099
        %v8776 = vunpack.c.l.b16 %v8100
        %v8777 = vunpack.c.h.b16 %v8100
        %v8778 = vunpack.c.l.b16 %v8101
        %v8779 = vunpack.c.h.b16 %v8101
        %v8780 = vunpack.c.l.b16 %v8102
        %v8781 = vunpack.c.h.b16 %v8102
        %v8782 = vunpack.c.l.b16 %v8103
        %v8783 = vunpack.c.h.b16 %v8103
        %v8784 = vunpack.c.l.b16 %v8104
        %v8785 = vunpack.c.h.b16 %v8104
        %v8786 = vunpack.c.l.b16 %v8105
        %v8787 = vunpack.c.h.b16 %v8105
        %v8788 = vunpack.c.l.b16 %v8106
        %v8789 = vunpack.c.h.b16 %v8106
        %v8790 = vunpack.c.l.b16 %v8107
        %v8791 = vunpack.c.h.b16 %v8107
        %v8792 = vunpack.c.l.b16 %v8108
        %v8793 = vunpack.c.h.b16 %v8108
        %v8794 = vunpack.c.l.b16 %v8109
        %v8795 = vunpack.c.h.b16 %v8109
        %v8796 = vunpack.c.l.b16 %v8110
        %v8797 = vunpack.c.h.b16 %v8110
        %v8798 = vunpack.c.l.b16 %v8111
        %v8799 = vunpack.c.h.b16 %v8111
        %v8800 = vunpack.c.l.b16 %v8112
        %v8801 = vunpack.c.h.b16 %v8112
        %v8802 = vunpack.c.l.b16 %v8113
        %v8803 = vunpack.c.h.b16 %v8113
        %v8804 = vunpack.c.l.b16 %v8114
        %v8805 = vunpack.c.h.b16 %v8114
        %v8806 = vunpack.c.l.b16 %v8115
        %v8807 = vunpack.c.h.b16 %v8115
        %v8808 = vunpack.c.l.b16 %v8116
        %v8809 = vunpack.c.h.b16 %v8116
        %v8810 = vunpack.c.l.b16 %v8117
        %v8811 = vunpack.c.h.b16 %v8117
        %v8812 = vunpack.c.l.b16 %v8118
        %v8813 = vunpack.c.h.b16 %v8118
        %v8814 = vunpack.c.l.b16 %v8119
        %v8815 = vunpack.c.h.b16 %v8119
        %v8816 = vunpack.c.l.b16 %v8120
        %v8817 = vunpack.c.h.b16 %v8120
        %v8818 = vunpack.c.l.b16 %v8121
        %v8819 = vunpack.c.h.b16 %v8121
        %v8820 = vunpack.c.l.b16 %v8122
        %v8821 = vunpack.c.h.b16 %v8122
        %v8822 = vunpack.c.l.b16 %v8123
        %v8823 = vunpack.c.h.b16 %v8123
        %v8824 = vunpack.c.l.b16 %v8124
        %v8825 = vunpack.c.h.b16 %v8124
        %v8826 = vunpack.c.l.b16 %v8125
        %v8827 = vunpack.c.h.b16 %v8125
        %v8828 = vunpack.c.l.b16 %v8126
        %v8829 = vunpack.c.h.b16 %v8126
        %v8830 = vunpack.c.l.b16 %v8127
        %v8831 = vunpack.c.h.b16 %v8127
        %v8832 = vunpack.c.l.b16 %v8128
        %v8833 = vunpack.c.h.b16 %v8128
        %v8834 = vunpack.c.l.b16 %v8129
        %v8835 = vunpack.c.h.b16 %v8129
        %v8836 = vunpack.c.l.b16 %v8130
        %v8837 = vunpack.c.h.b16 %v8130
        %v8838 = vunpack.c.l.b16 %v8131
        %v8839 = vunpack.c.h.b16 %v8131
        %v8840 = vunpack.c.l.b16 %v8132
        %v8841 = vunpack.c.h.b16 %v8132
        %v8842 = vunpack.c.l.b16 %v8133
        %v8843 = vunpack.c.h.b16 %v8133
        %v8844 = vunpack.c.l.b16 %v8134
        %v8845 = vunpack.c.h.b16 %v8134
        %v8846 = vunpack.c.l.b16 %v8135
        %v8847 = vunpack.c.h.b16 %v8135
        %v8848 = vunpack.c.l.b16 %v8136
        %v8849 = vunpack.c.h.b16 %v8136
        %v8850 = vunpack.c.l.b16 %v8137
        %v8851 = vunpack.c.h.b16 %v8137
        %v8852 = vunpack.c.l.b16 %v8138
        %v8853 = vunpack.c.h.b16 %v8138
        %v8854 = vunpack.c.l.b16 %v8139
        %v8855 = vunpack.c.h.b16 %v8139
        %v8856 = vunpack.c.l.b16 %v8140
        %v8857 = vunpack.c.h.b16 %v8140
        %v8858 = vunpack.c.l.b16 %v8141
        %v8859 = vunpack.c.h.b16 %v8141
        %v8860 = vunpack.c.l.b16 %v8142
        %v8861 = vunpack.c.h.b16 %v8142
        %v8862 = vunpack.c.l.b16 %v8143
        %v8863 = vunpack.c.h.b16 %v8143
        %v8864 = vunpack.c.l.b16 %v8144
        %v8865 = vunpack.c.h.b16 %v8144
        %v8866 = vunpack.c.l.b16 %v8145
        %v8867 = vunpack.c.h.b16 %v8145
        %v8868 = vunpack.c.l.b16 %v8146
        %v8869 = vunpack.c.h.b16 %v8146
        %v8870 = vunpack.c.l.b16 %v8147
        %v8871 = vunpack.c.h.b16 %v8147
        %v8872 = vunpack.c.l.b16 %v8148
        %v8873 = vunpack.c.h.b16 %v8148
        %v8874 = vunpack.c.l.b16 %v8149
        %v8875 = vunpack.c.h.b16 %v8149
        %v8876 = vunpack.c.l.b16 %v8150
        %v8877 = vunpack.c.h.b16 %v8150
        %v8878 = vunpack.c.l.b16 %v8151
        %v8879 = vunpack.c.h.b16 %v8151
        %v8880 = vunpack.c.l.b16 %v8152
        %v8881 = vunpack.c.h.b16 %v8152
        %v8882 = vunpack.c.l.b16 %v8153
        %v8883 = vunpack.c.h.b16 %v8153
        %v8884 = vunpack.c.l.b16 %v8154
        %v8885 = vunpack.c.h.b16 %v8154
        %v8886 = vunpack.c.l.b16 %v8155
        %v8887 = vunpack.c.h.b16 %v8155
        %v8888 = vunpack.c.l.b16 %v8156
        %v8889 = vunpack.c.h.b16 %v8156
        %v8890 = vunpack.c.l.b16 %v8157
        %v8891 = vunpack.c.h.b16 %v8157
        %v8892 = vunpack.c.l.b16 %v8158
        %v8893 = vunpack.c.h.b16 %v8158
        %v8894 = vunpack.c.l.b16 %v8159
        %v8895 = vunpack.c.h.b16 %v8159
        %v8896 = vunpack.c.l.b16 %v8160
        %v8897 = vunpack.c.h.b16 %v8160
        %v8898 = vunpack.c.l.b16 %v8161
        %v8899 = vunpack.c.h.b16 %v8161
        %v8900 = vunpack.c.l.b16 %v8162
        %v8901 = vunpack.c.h.b16 %v8162
        %v8902 = vunpack.c.l.b16 %v8163
        %v8903 = vunpack.c.h.b16 %v8163
        %v8904 = vunpack.c.l.b16 %v8164
        %v8905 = vunpack.c.h.b16 %v8164
        %v8906 = vunpack.c.l.b16 %v8165
        %v8907 = vunpack.c.h.b16 %v8165
        %v8908 = vunpack.c.l.b16 %v8166
        %v8909 = vunpack.c.h.b16 %v8166
        %v8910 = vunpack.c.l.b16 %v8167
        %v8911 = vunpack.c.h.b16 %v8167
        %v8912 = vunpack.c.l.b16 %v8168
        %v8913 = vunpack.c.h.b16 %v8168
        %v8914 = vunpack.c.l.b16 %v8169
        %v8915 = vunpack.c.h.b16 %v8169
        %v8916 = vunpack.c.l.b16 %v8170
        %v8917 = vunpack.c.h.b16 %v8170
        %v8918 = vunpack.c.l.b16 %v8171
        %v8919 = vunpack.c.h.b16 %v8171
        %v8920 = vunpack.c.l.b16 %v8172
        %v8921 = vunpack.c.h.b16 %v8172
        %v8922 = vunpack.c.l.b16 %v8173
        %v8923 = vunpack.c.h.b16 %v8173
        %v8924 = vunpack.c.l.b16 %v8174
        %v8925 = vunpack.c.h.b16 %v8174
        %v8926 = vunpack.c.l.b16 %v8175
        %v8927 = vunpack.c.h.b16 %v8175
        %v8928 = vunpack.c.l.b16 %v8176
        %v8929 = vunpack.c.h.b16 %v8176
        %v8930 = vunpack.c.l.b16 %v8177
        %v8931 = vunpack.c.h.b16 %v8177
        %v8932 = vunpack.c.l.b16 %v8178
        %v8933 = vunpack.c.h.b16 %v8178
        %v8934 = vunpack.c.l.b16 %v8179
        %v8935 = vunpack.c.h.b16 %v8179
        %v8936 = vunpack.c.l.b16 %v8180
        %v8937 = vunpack.c.h.b16 %v8180
        %v8938 = vunpack.c.l.b16 %v8181
        %v8939 = vunpack.c.h.b16 %v8181
        %v8940 = vunpack.c.l.b16 %v8182
        %v8941 = vunpack.c.h.b16 %v8182
        %v8942 = vunpack.c.l.b16 %v8183
        %v8943 = vunpack.c.h.b16 %v8183
        %v8944 = vunpack.c.l.b16 %v8184
        %v8945 = vunpack.c.h.b16 %v8184
        %v8946 = vunpack.c.l.b16 %v8185
        %v8947 = vunpack.c.h.b16 %v8185
        %v8948 = vunpack.c.l.b16 %v8186
        %v8949 = vunpack.c.h.b16 %v8186
        %v8950 = vunpack.c.l.b16 %v8187
        %v8951 = vunpack.c.h.b16 %v8187
        %v8952 = vunpack.c.l.b16 %v8188
        %v8953 = vunpack.c.h.b16 %v8188
        %v8954 = vunpack.c.l.b16 %v8189
        %v8955 = vunpack.c.h.b16 %v8189
        %v8956 = vunpack.c.l.b16 %v8190
        %v8957 = vunpack.c.h.b16 %v8190
        %v8958 = vunpack.c.l.b16 %v8191
        %v8959 = vunpack.c.h.b16 %v8191
        %v8960 = vpack.c.b16 %v8448, %v8448
        %v8961 = vpack.c.b16 %v8449, %v8449
        %v8962 = vpack.c.b16 %v8450, %v8450
        %v8963 = vpack.c.b16 %v8451, %v8451
        %v8964 = vpack.c.b16 %v8452, %v8452
        %v8965 = vpack.c.b16 %v8453, %v8453
        %v8966 = vpack.c.b16 %v8454, %v8454
        %v8967 = vpack.c.b16 %v8455, %v8455
        %v8968 = vpack.c.b16 %v8456, %v8456
        %v8969 = vpack.c.b16 %v8457, %v8457
        %v8970 = vpack.c.b16 %v8458, %v8458
        %v8971 = vpack.c.b16 %v8459, %v8459
        %v8972 = vpack.c.b16 %v8460, %v8460
        %v8973 = vpack.c.b16 %v8461, %v8461
        %v8974 = vpack.c.b16 %v8462, %v8462
        %v8975 = vpack.c.b16 %v8463, %v8463
        %v8976 = vpack.c.b16 %v8464, %v8464
        %v8977 = vpack.c.b16 %v8465, %v8465
        %v8978 = vpack.c.b16 %v8466, %v8466
        %v8979 = vpack.c.b16 %v8467, %v8467
        %v8980 = vpack.c.b16 %v8468, %v8468
        %v8981 = vpack.c.b16 %v8469, %v8469
        %v8982 = vpack.c.b16 %v8470, %v8470
        %v8983 = vpack.c.b16 %v8471, %v8471
        %v8984 = vpack.c.b16 %v8472, %v8472
        %v8985 = vpack.c.b16 %v8473, %v8473
        %v8986 = vpack.c.b16 %v8474, %v8474
        %v8987 = vpack.c.b16 %v8475, %v8475
        %v8988 = vpack.c.b16 %v8476, %v8476
        %v8989 = vpack.c.b16 %v8477, %v8477
        %v8990 = vpack.c.b16 %v8478, %v8478
        %v8991 = vpack.c.b16 %v8479, %v8479
        %v8992 = vpack.c.b16 %v8480, %v8480
        %v8993 = vpack.c.b16 %v8481, %v8481
        %v8994 = vpack.c.b16 %v8482, %v8482
        %v8995 = vpack.c.b16 %v8483, %v8483
        %v8996 = vpack.c.b16 %v8484, %v8484
        %v8997 = vpack.c.b16 %v8485, %v8485
        %v8998 = vpack.c.b16 %v8486, %v8486
        %v8999 = vpack.c.b16 %v8487, %v8487
        %v9000 = vpack.c.b16 %v8488, %v8488
        %v9001 = vpack.c.b16 %v8489, %v8489
        %v9002 = vpack.c.b16 %v8490, %v8490
        %v9003 = vpack.c.b16 %v8491, %v8491
        %v9004 = vpack.c.b16 %v8492, %v8492
        %v9005 = vpack.c.b16 %v8493, %v8493
        %v9006 = vpack.c.b16 %v8494, %v8494
        %v9007 = vpack.c.b16 %v8495, %v8495
        %v9008 = vpack.c.b16 %v8496, %v8496
        %v9009 = vpack.c.b16 %v8497, %v8497
        %v9010 = vpack.c.b16 %v8498, %v8498
        %v9011 = vpack.c.b16 %v8499, %v8499
        %v9012 = vpack.c.b16 %v8500, %v8500
        %v9013 = vpack.c.b16 %v8501, %v8501
        %v9014 = vpack.c.b16 %v8502, %v8502
        %v9015 = vpack.c.b16 %v8503, %v8503
        %v9016 = vpack.c.b16 %v8504, %v8504
        %v9017 = vpack.c.b16 %v8505, %v8505
        %v9018 = vpack.c.b16 %v8506, %v8506
        %v9019 = vpack.c.b16 %v8507, %v8507
        %v9020 = vpack.c.b16 %v8508, %v8508
        %v9021 = vpack.c.b16 %v8509, %v8509
        %v9022 = vpack.c.b16 %v8510, %v8510
        %v9023 = vpack.c.b16 %v8511, %v8511
        %v9024 = vpack.c.b16 %v8512, %v8512
        %v9025 = vpack.c.b16 %v8513, %v8513
        %v9026 = vpack.c.b16 %v8514, %v8514
        %v9027 = vpack.c.b16 %v8515, %v8515
        %v9028 = vpack.c.b16 %v8516, %v8516
        %v9029 = vpack.c.b16 %v8517, %v8517
        %v9030 = vpack.c.b16 %v8518, %v8518
        %v9031 = vpack.c.b16 %v8519, %v8519
        %v9032 = vpack.c.b16 %v8520, %v8520
        %v9033 = vpack.c.b16 %v8521, %v8521
        %v9034 = vpack.c.b16 %v8522, %v8522
        %v9035 = vpack.c.b16 %v8523, %v8523
        %v9036 = vpack.c.b16 %v8524, %v8524
        %v9037 = vpack.c.b16 %v8525, %v8525
        %v9038 = vpack.c.b16 %v8526, %v8526
        %v9039 = vpack.c.b16 %v8527, %v8527
        %v9040 = vpack.c.b16 %v8528, %v8528
        %v9041 = vpack.c.b16 %v8529, %v8529
        %v9042 = vpack.c.b16 %v8530, %v8530
        %v9043 = vpack.c.b16 %v8531, %v8531
        %v9044 = vpack.c.b16 %v8532, %v8532
        %v9045 = vpack.c.b16 %v8533, %v8533
        %v9046 = vpack.c.b16 %v8534, %v8534
        %v9047 = vpack.c.b16 %v8535, %v8535
        %v9048 = vpack.c.b16 %v8536, %v8536
        %v9049 = vpack.c.b16 %v8537, %v8537
        %v9050 = vpack.c.b16 %v8538, %v8538
        %v9051 = vpack.c.b16 %v8539, %v8539
        %v9052 = vpack.c.b16 %v8540, %v8540
        %v9053 = vpack.c.b16 %v8541, %v8541
        %v9054 = vpack.c.b16 %v8542, %v8542
        %v9055 = vpack.c.b16 %v8543, %v8543
        %v9056 = vpack.c.b16 %v8544, %v8544
        %v9057 = vpack.c.b16 %v8545, %v8545
        %v9058 = vpack.c.b16 %v8546, %v8546
        %v9059 = vpack.c.b16 %v8547, %v8547
        %v9060 = vpack.c.b16 %v8548, %v8548
        %v9061 = vpack.c.b16 %v8549, %v8549
        %v9062 = vpack.c.b16 %v8550, %v8550
        %v9063 = vpack.c.b16 %v8551, %v8551
        %v9064 = vpack.c.b16 %v8552, %v8552
        %v9065 = vpack.c.b16 %v8553, %v8553
        %v9066 = vpack.c.b16 %v8554, %v8554
        %v9067 = vpack.c.b16 %v8555, %v8555
        %v9068 = vpack.c.b16 %v8556, %v8556
        %v9069 = vpack.c.b16 %v8557, %v8557
        %v9070 = vpack.c.b16 %v8558, %v8558
        %v9071 = vpack.c.b16 %v8559, %v8559
        %v9072 = vpack.c.b16 %v8560, %v8560
        %v9073 = vpack.c.b16 %v8561, %v8561
        %v9074 = vpack.c.b16 %v8562, %v8562
        %v9075 = vpack.c.b16 %v8563, %v8563
        %v9076 = vpack.c.b16 %v8564, %v8564
        %v9077 = vpack.c.b16 %v8565, %v8565
        %v9078 = vpack.c.b16 %v8566, %v8566
        %v9079 = vpack.c.b16 %v8567, %v8567
        %v9080 = vpack.c.b16 %v8568, %v8568
        %v9081 = vpack.c.b16 %v8569, %v8569
        %v9082 = vpack.c.b16 %v8570, %v8570
        %v9083 = vpack.c.b16 %v8571, %v8571
        %v9084 = vpack.c.b16 %v8572, %v8572
        %v9085 = vpack.c.b16 %v8573, %v8573
        %v9086 = vpack.c.b16 %v8574, %v8574
        %v9087 = vpack.c.b16 %v8575, %v8575
        %v9088 = vpack.c.b16 %v8576, %v8576
        %v9089 = vpack.c.b16 %v8577, %v8577
        %v9090 = vpack.c.b16 %v8578, %v8578
        %v9091 = vpack.c.b16 %v8579, %v8579
        %v9092 = vpack.c.b16 %v8580, %v8580
        %v9093 = vpack.c.b16 %v8581, %v8581
        %v9094 = vpack.c.b16 %v8582, %v8582
        %v9095 = vpack.c.b16 %v8583, %v8583
        %v9096 = vpack.c.b16 %v8584, %v8584
        %v9097 = vpack.c.b16 %v8585, %v8585
        %v9098 = vpack.c.b16 %v8586, %v8586
        %v9099 = vpack.c.b16 %v8587, %v8587
        %v9100 = vpack.c.b16 %v8588, %v8588
        %v9101 = vpack.c.b16 %v8589, %v8589
        %v9102 = vpack.c.b16 %v8590, %v8590
        %v9103 = vpack.c.b16 %v8591, %v8591
        %v9104 = vpack.c.b16 %v8592, %v8592
        %v9105 = vpack.c.b16 %v8593, %v8593
        %v9106 = vpack.c.b16 %v8594, %v8594
        %v9107 = vpack.c.b16 %v8595, %v8595
        %v9108 = vpack.c.b16 %v8596, %v8596
        %v9109 = vpack.c.b16 %v8597, %v8597
        %v9110 = vpack.c.b16 %v8598, %v8598
        %v9111 = vpack.c.b16 %v8599, %v8599
        %v9112 = vpack.c.b16 %v8600, %v8600
        %v9113 = vpack.c.b16 %v8601, %v8601
        %v9114 = vpack.c.b16 %v8602, %v8602
        %v9115 = vpack.c.b16 %v8603, %v8603
        %v9116 = vpack.c.b16 %v8604, %v8604
        %v9117 = vpack.c.b16 %v8605, %v8605
        %v9118 = vpack.c.b16 %v8606, %v8606
        %v9119 = vpack.c.b16 %v8607, %v8607
        %v9120 = vpack.c.b16 %v8608, %v8608
        %v9121 = vpack.c.b16 %v8609, %v8609
        %v9122 = vpack.c.b16 %v8610, %v8610
        %v9123 = vpack.c.b16 %v8611, %v8611
        %v9124 = vpack.c.b16 %v8612, %v8612
        %v9125 = vpack.c.b16 %v8613, %v8613
        %v9126 = vpack.c.b16 %v8614, %v8614
        %v9127 = vpack.c.b16 %v8615, %v8615
        %v9128 = vpack.c.b16 %v8616, %v8616
        %v9129 = vpack.c.b16 %v8617, %v8617
        %v9130 = vpack.c.b16 %v8618, %v8618
        %v9131 = vpack.c.b16 %v8619, %v8619
        %v9132 = vpack.c.b16 %v8620, %v8620
        %v9133 = vpack.c.b16 %v8621, %v8621
        %v9134 = vpack.c.b16 %v8622, %v8622
        %v9135 = vpack.c.b16 %v8623, %v8623
        %v9136 = vpack.c.b16 %v8624, %v8624
        %v9137 = vpack.c.b16 %v8625, %v8625
        %v9138 = vpack.c.b16 %v8626, %v8626
        %v9139 = vpack.c.b16 %v8627, %v8627
        %v9140 = vpack.c.b16 %v8628, %v8628
        %v9141 = vpack.c.b16 %v8629, %v8629
        %v9142 = vpack.c.b16 %v8630, %v8630
        %v9143 = vpack.c.b16 %v8631, %v8631
        %v9144 = vpack.c.b16 %v8632, %v8632
        %v9145 = vpack.c.b16 %v8633, %v8633
        %v9146 = vpack.c.b16 %v8634, %v8634
        %v9147 = vpack.c.b16 %v8635, %v8635
        %v9148 = vpack.c.b16 %v8636, %v8636
        %v9149 = vpack.c.b16 %v8637, %v8637
        %v9150 = vpack.c.b16 %v8638, %v8638
        %v9151 = vpack.c.b16 %v8639, %v8639
        %v9152 = vpack.c.b16 %v8640, %v8640
        %v9153 = vpack.c.b16 %v8641, %v8641
        %v9154 = vpack.c.b16 %v8642, %v8642
        %v9155 = vpack.c.b16 %v8643, %v8643
        %v9156 = vpack.c.b16 %v8644, %v8644
        %v9157 = vpack.c.b16 %v8645, %v8645
        %v9158 = vpack.c.b16 %v8646, %v8646
        %v9159 = vpack.c.b16 %v8647, %v8647
        %v9160 = vpack.c.b16 %v8648, %v8648
        %v9161 = vpack.c.b16 %v8649, %v8649
        %v9162 = vpack.c.b16 %v8650, %v8650
        %v9163 = vpack.c.b16 %v8651, %v8651
        %v9164 = vpack.c.b16 %v8652, %v8652
        %v9165 = vpack.c.b16 %v8653, %v8653
        %v9166 = vpack.c.b16 %v8654, %v8654
        %v9167 = vpack.c.b16 %v8655, %v8655
        %v9168 = vpack.c.b16 %v8656, %v8656
        %v9169 = vpack.c.b16 %v8657, %v8657
        %v9170 = vpack.c.b16 %v8658, %v8658
        %v9171 = vpack.c.b16 %v8659, %v8659
        %v9172 = vpack.c.b16 %v8660, %v8660
        %v9173 = vpack.c.b16 %v8661, %v8661
        %v9174 = vpack.c.b16 %v8662, %v8662
        %v9175 = vpack.c.b16 %v8663, %v8663
        %v9176 = vpack.c.b16 %v8664, %v8664
        %v9177 = vpack.c.b16 %v8665, %v8665
        %v9178 = vpack.c.b16 %v8666, %v8666
        %v9179 = vpack.c.b16 %v8667, %v8667
        %v9180 = vpack.c.b16 %v8668, %v8668
        %v9181 = vpack.c.b16 %v8669, %v8669
        %v9182 = vpack.c.b16 %v8670, %v8670
        %v9183 = vpack.c.b16 %v8671, %v8671
        %v9184 = vpack.c.b16 %v8672, %v8672
        %v9185 = vpack.c.b16 %v8673, %v8673
        %v9186 = vpack.c.b16 %v8674, %v8674
        %v9187 = vpack.c.b16 %v8675, %v8675
        %v9188 = vpack.c.b16 %v8676, %v8676
        %v9189 = vpack.c.b16 %v8677, %v8677
        %v9190 = vpack.c.b16 %v8678, %v8678
        %v9191 = vpack.c.b16 %v8679, %v8679
        %v9192 = vpack.c.b16 %v8680, %v8680
        %v9193 = vpack.c.b16 %v8681, %v8681
        %v9194 = vpack.c.b16 %v8682, %v8682
        %v9195 = vpack.c.b16 %v8683, %v8683
        %v9196 = vpack.c.b16 %v8684, %v8684
        %v9197 = vpack.c.b16 %v8685, %v8685
        %v9198 = vpack.c.b16 %v8686, %v8686
        %v9199 = vpack.c.b16 %v8687, %v8687
        %v9200 = vpack.c.b16 %v8688, %v8688
        %v9201 = vpack.c.b16 %v8689, %v8689
        %v9202 = vpack.c.b16 %v8690, %v8690
        %v9203 = vpack.c.b16 %v8691, %v8691
        %v9204 = vpack.c.b16 %v8692, %v8692
        %v9205 = vpack.c.b16 %v8693, %v8693
        %v9206 = vpack.c.b16 %v8694, %v8694
        %v9207 = vpack.c.b16 %v8695, %v8695
        %v9208 = vpack.c.b16 %v8696, %v8696
        %v9209 = vpack.c.b16 %v8697, %v8697
        %v9210 = vpack.c.b16 %v8698, %v8698
        %v9211 = vpack.c.b16 %v8699, %v8699
        %v9212 = vpack.c.b16 %v8700, %v8700
        %v9213 = vpack.c.b16 %v8701, %v8701
        %v9214 = vpack.c.b16 %v8702, %v8702
        %v9215 = vpack.c.b16 %v8703, %v8703
        %v9216 = vpack.c.b16 %v8704, %v8704
        %v9217 = vpack.c.b16 %v8705, %v8705
        %v9218 = vpack.c.b16 %v8706, %v8706
        %v9219 = vpack.c.b16 %v8707, %v8707
        %v9220 = vpack.c.b16 %v8708, %v8708
        %v9221 = vpack.c.b16 %v8709, %v8709
        %v9222 = vpack.c.b16 %v8710, %v8710
        %v9223 = vpack.c.b16 %v8711, %v8711
        %v9224 = vpack.c.b16 %v8712, %v8712
        %v9225 = vpack.c.b16 %v8713, %v8713
        %v9226 = vpack.c.b16 %v8714, %v8714
        %v9227 = vpack.c.b16 %v8715, %v8715
        %v9228 = vpack.c.b16 %v8716, %v8716
        %v9229 = vpack.c.b16 %v8717, %v8717
        %v9230 = vpack.c.b16 %v8718, %v8718
        %v9231 = vpack.c.b16 %v8719, %v8719
        %v9232 = vpack.c.b16 %v8720, %v8720
        %v9233 = vpack.c.b16 %v8721, %v8721
        %v9234 = vpack.c.b16 %v8722, %v8722
        %v9235 = vpack.c.b16 %v8723, %v8723
        %v9236 = vpack.c.b16 %v8724, %v8724
        %v9237 = vpack.c.b16 %v8725, %v8725
        %v9238 = vpack.c.b16 %v8726, %v8726
        %v9239 = vpack.c.b16 %v8727, %v8727
        %v9240 = vpack.c.b16 %v8728, %v8728
        %v9241 = vpack.c.b16 %v8729, %v8729
        %v9242 = vpack.c.b16 %v8730, %v8730
        %v9243 = vpack.c.b16 %v8731, %v8731
        %v9244 = vpack.c.b16 %v8732, %v8732
        %v9245 = vpack.c.b16 %v8733, %v8733
        %v9246 = vpack.c.b16 %v8734, %v8734
        %v9247 = vpack.c.b16 %v8735, %v8735
        %v9248 = vpack.c.b16 %v8736, %v8736
        %v9249 = vpack.c.b16 %v8737, %v8737
        %v9250 = vpack.c.b16 %v8738, %v8738
        %v9251 = vpack.c.b16 %v8739, %v8739
        %v9252 = vpack.c.b16 %v8740, %v8740
        %v9253 = vpack.c.b16 %v8741, %v8741
        %v9254 = vpack.c.b16 %v8742, %v8742
        %v9255 = vpack.c.b16 %v8743, %v8743
        %v9256 = vpack.c.b16 %v8744, %v8744
        %v9257 = vpack.c.b16 %v8745, %v8745
        %v9258 = vpack.c.b16 %v8746, %v8746
        %v9259 = vpack.c.b16 %v8747, %v8747
        %v9260 = vpack.c.b16 %v8748, %v8748
        %v9261 = vpack.c.b16 %v8749, %v8749
        %v9262 = vpack.c.b16 %v8750, %v8750
        %v9263 = vpack.c.b16 %v8751, %v8751
        %v9264 = vpack.c.b16 %v8752, %v8752
        %v9265 = vpack.c.b16 %v8753, %v8753
        %v9266 = vpack.c.b16 %v8754, %v8754
        %v9267 = vpack.c.b16 %v8755, %v8755
        %v9268 = vpack.c.b16 %v8756, %v8756
        %v9269 = vpack.c.b16 %v8757, %v8757
        %v9270 = vpack.c.b16 %v8758, %v8758
        %v9271 = vpack.c.b16 %v8759, %v8759
        %v9272 = vpack.c.b16 %v8760, %v8760
        %v9273 = vpack.c.b16 %v8761, %v8761
        %v9274 = vpack.c.b16 %v8762, %v8762
        %v9275 = vpack.c.b16 %v8763, %v8763
        %v9276 = vpack.c.b16 %v8764, %v8764
        %v9277 = vpack.c.b16 %v8765, %v8765
        %v9278 = vpack.c.b16 %v8766, %v8766
        %v9279 = vpack.c.b16 %v8767, %v8767
        %v9280 = vpack.c.b16 %v8768, %v8768
        %v9281 = vpack.c.b16 %v8769, %v8769
        %v9282 = vpack.c.b16 %v8770, %v8770
        %v9283 = vpack.c.b16 %v8771, %v8771
        %v9284 = vpack.c.b16 %v8772, %v8772
        %v9285 = vpack.c.b16 %v8773, %v8773
        %v9286 = vpack.c.b16 %v8774, %v8774
        %v9287 = vpack.c.b16 %v8775, %v8775
        %v9288 = vpack.c.b16 %v8776, %v8776
        %v9289 = vpack.c.b16 %v8777, %v8777
        %v9290 = vpack.c.b16 %v8778, %v8778
        %v9291 = vpack.c.b16 %v8779, %v8779
        %v9292 = vpack.c.b16 %v8780, %v8780
        %v9293 = vpack.c.b16 %v8781, %v8781
        %v9294 = vpack.c.b16 %v8782, %v8782
        %v9295 = vpack.c.b16 %v8783, %v8783
        %v9296 = vpack.c.b16 %v8784, %v8784
        %v9297 = vpack.c.b16 %v8785, %v8785
        %v9298 = vpack.c.b16 %v8786, %v8786
        %v9299 = vpack.c.b16 %v8787, %v8787
        %v9300 = vpack.c.b16 %v8788, %v8788
        %v9301 = vpack.c.b16 %v8789, %v8789
        %v9302 = vpack.c.b16 %v8790, %v8790
        %v9303 = vpack.c.b16 %v8791, %v8791
        %v9304 = vpack.c.b16 %v8792, %v8792
        %v9305 = vpack.c.b16 %v8793, %v8793
        %v9306 = vpack.c.b16 %v8794, %v8794
        %v9307 = vpack.c.b16 %v8795, %v8795
        %v9308 = vpack.c.b16 %v8796, %v8796
        %v9309 = vpack.c.b16 %v8797, %v8797
        %v9310 = vpack.c.b16 %v8798, %v8798
        %v9311 = vpack.c.b16 %v8799, %v8799
        %v9312 = vpack.c.b16 %v8800, %v8800
        %v9313 = vpack.c.b16 %v8801, %v8801
        %v9314 = vpack.c.b16 %v8802, %v8802
        %v9315 = vpack.c.b16 %v8803, %v8803
        %v9316 = vpack.c.b16 %v8804, %v8804
        %v9317 = vpack.c.b16 %v8805, %v8805
        %v9318 = vpack.c.b16 %v8806, %v8806
        %v9319 = vpack.c.b16 %v8807, %v8807
        %v9320 = vpack.c.b16 %v8808, %v8808
        %v9321 = vpack.c.b16 %v8809, %v8809
        %v9322 = vpack.c.b16 %v8810, %v8810
        %v9323 = vpack.c.b16 %v8811, %v8811
        %v9324 = vpack.c.b16 %v8812, %v8812
        %v9325 = vpack.c.b16 %v8813, %v8813
        %v9326 = vpack.c.b16 %v8814, %v8814
        %v9327 = vpack.c.b16 %v8815, %v8815
        %v9328 = vpack.c.b16 %v8816, %v8816
        %v9329 = vpack.c.b16 %v8817, %v8817
        %v9330 = vpack.c.b16 %v8818, %v8818
        %v9331 = vpack.c.b16 %v8819, %v8819
        %v9332 = vpack.c.b16 %v8820, %v8820
        %v9333 = vpack.c.b16 %v8821, %v8821
        %v9334 = vpack.c.b16 %v8822, %v8822
        %v9335 = vpack.c.b16 %v8823, %v8823
        %v9336 = vpack.c.b16 %v8824, %v8824
        %v9337 = vpack.c.b16 %v8825, %v8825
        %v9338 = vpack.c.b16 %v8826, %v8826
        %v9339 = vpack.c.b16 %v8827, %v8827
        %v9340 = vpack.c.b16 %v8828, %v8828
        %v9341 = vpack.c.b16 %v8829, %v8829
        %v9342 = vpack.c.b16 %v8830, %v8830
        %v9343 = vpack.c.b16 %v8831, %v8831
        %v9344 = vpack.c.b16 %v8832, %v8832
        %v9345 = vpack.c.b16 %v8833, %v8833
        %v9346 = vpack.c.b16 %v8834, %v8834
        %v9347 = vpack.c.b16 %v8835, %v8835
        %v9348 = vpack.c.b16 %v8836, %v8836
        %v9349 = vpack.c.b16 %v8837, %v8837
        %v9350 = vpack.c.b16 %v8838, %v8838
        %v9351 = vpack.c.b16 %v8839, %v8839
        %v9352 = vpack.c.b16 %v8840, %v8840
        %v9353 = vpack.c.b16 %v8841, %v8841
        %v9354 = vpack.c.b16 %v8842, %v8842
        %v9355 = vpack.c.b16 %v8843, %v8843
        %v9356 = vpack.c.b16 %v8844, %v8844
        %v9357 = vpack.c.b16 %v8845, %v8845
        %v9358 = vpack.c.b16 %v8846, %v8846
        %v9359 = vpack.c.b16 %v8847, %v8847
        %v9360 = vpack.c.b16 %v8848, %v8848
        %v9361 = vpack.c.b16 %v8849, %v8849
        %v9362 = vpack.c.b16 %v8850, %v8850
        %v9363 = vpack.c.b16 %v8851, %v8851
        %v9364 = vpack.c.b16 %v8852, %v8852
        %v9365 = vpack.c.b16 %v8853, %v8853
        %v9366 = vpack.c.b16 %v8854, %v8854
        %v9367 = vpack.c.b16 %v8855, %v8855
        %v9368 = vpack.c.b16 %v8856, %v8856
        %v9369 = vpack.c.b16 %v8857, %v8857
        %v9370 = vpack.c.b16 %v8858, %v8858
        %v9371 = vpack.c.b16 %v8859, %v8859
        %v9372 = vpack.c.b16 %v8860, %v8860
        %v9373 = vpack.c.b16 %v8861, %v8861
        %v9374 = vpack.c.b16 %v8862, %v8862
        %v9375 = vpack.c.b16 %v8863, %v8863
        %v9376 = vpack.c.b16 %v8864, %v8864
        %v9377 = vpack.c.b16 %v8865, %v8865
        %v9378 = vpack.c.b16 %v8866, %v8866
        %v9379 = vpack.c.b16 %v8867, %v8867
        %v9380 = vpack.c.b16 %v8868, %v8868
        %v9381 = vpack.c.b16 %v8869, %v8869
        %v9382 = vpack.c.b16 %v8870, %v8870
        %v9383 = vpack.c.b16 %v8871, %v8871
        %v9384 = vpack.c.b16 %v8872, %v8872
        %v9385 = vpack.c.b16 %v8873, %v8873
        %v9386 = vpack.c.b16 %v8874, %v8874
        %v9387 = vpack.c.b16 %v8875, %v8875
        %v9388 = vpack.c.b16 %v8876, %v8876
        %v9389 = vpack.c.b16 %v8877, %v8877
        %v9390 = vpack.c.b16 %v8878, %v8878
        %v9391 = vpack.c.b16 %v8879, %v8879
        %v9392 = vpack.c.b16 %v8880, %v8880
        %v9393 = vpack.c.b16 %v8881, %v8881
        %v9394 = vpack.c.b16 %v8882, %v8882
        %v9395 = vpack.c.b16 %v8883, %v8883
        %v9396 = vpack.c.b16 %v8884, %v8884
        %v9397 = vpack.c.b16 %v8885, %v8885
        %v9398 = vpack.c.b16 %v8886, %v8886
        %v9399 = vpack.c.b16 %v8887, %v8887
        %v9400 = vpack.c.b16 %v8888, %v8888
        %v9401 = vpack.c.b16 %v8889, %v8889
        %v9402 = vpack.c.b16 %v8890, %v8890
        %v9403 = vpack.c.b16 %v8891, %v8891
        %v9404 = vpack.c.b16 %v8892, %v8892
        %v9405 = vpack.c.b16 %v8893, %v8893
        %v9406 = vpack.c.b16 %v8894, %v8894
        %v9407 = vpack.c.b16 %v8895, %v8895
        %v9408 = vpack.c.b16 %v8896, %v8896
        %v9409 = vpack.c.b16 %v8897, %v8897
        %v9410 = vpack.c.b16 %v8898, %v8898
        %v9411 = vpack.c.b16 %v8899, %v8899
        %v9412 = vpack.c.b16 %v8900, %v8900
        %v9413 = vpack.c.b16 %v8901, %v8901
        %v9414 = vpack.c.b16 %v8902, %v8902
        %v9415 = vpack.c.b16 %v8903, %v8903
        %v9416 = vpack.c.b16 %v8904, %v8904
        %v9417 = vpack.c.b16 %v8905, %v8905
        %v9418 = vpack.c.b16 %v8906, %v8906
        %v9419 = vpack.c.b16 %v8907, %v8907
        %v9420 = vpack.c.b16 %v8908, %v8908
        %v9421 = vpack.c.b16 %v8909, %v8909
        %v9422 = vpack.c.b16 %v8910, %v8910
        %v9423 = vpack.c.b16 %v8911, %v8911
        %v9424 = vpack.c.b16 %v8912, %v8912
        %v9425 = vpack.c.b16 %v8913, %v8913
        %v9426 = vpack.c.b16 %v8914, %v8914
        %v9427 = vpack.c.b16 %v8915, %v8915
        %v9428 = vpack.c.b16 %v8916, %v8916
        %v9429 = vpack.c.b16 %v8917, %v8917
        %v9430 = vpack.c.b16 %v8918, %v8918
        %v9431 = vpack.c.b16 %v8919, %v8919
        %v9432 = vpack.c.b16 %v8920, %v8920
        %v9433 = vpack.c.b16 %v8921, %v8921
        %v9434 = vpack.c.b16 %v8922, %v8922
        %v9435 = vpack.c.b16 %v8923, %v8923
        %v9436 = vpack.c.b16 %v8924, %v8924
        %v9437 = vpack.c.b16 %v8925, %v8925
        %v9438 = vpack.c.b16 %v8926, %v8926
        %v9439 = vpack.c.b16 %v8927, %v8927
        %v9440 = vpack.c.b16 %v8928, %v8928
        %v9441 = vpack.c.b16 %v8929, %v8929
        %v9442 = vpack.c.b16 %v8930, %v8930
        %v9443 = vpack.c.b16 %v8931, %v8931
        %v9444 = vpack.c.b16 %v8932, %v8932
        %v9445 = vpack.c.b16 %v8933, %v8933
        %v9446 = vpack.c.b16 %v8934, %v8934
        %v9447 = vpack.c.b16 %v8935, %v8935
        %v9448 = vpack.c.b16 %v8936, %v8936
        %v9449 = vpack.c.b16 %v8937, %v8937
        %v9450 = vpack.c.b16 %v8938, %v8938
        %v9451 = vpack.c.b16 %v8939, %v8939
        %v9452 = vpack.c.b16 %v8940, %v8940
        %v9453 = vpack.c.b16 %v8941, %v8941
        %v9454 = vpack.c.b16 %v8942, %v8942
        %v9455 = vpack.c.b16 %v8943, %v8943
        %v9456 = vpack.c.b16 %v8944, %v8944
        %v9457 = vpack.c.b16 %v8945, %v8945
        %v9458 = vpack.c.b16 %v8946, %v8946
        %v9459 = vpack.c.b16 %v8947, %v8947
        %v9460 = vpack.c.b16 %v8948, %v8948
        %v9461 = vpack.c.b16 %v8949, %v8949
        %v9462 = vpack.c.b16 %v8950, %v8950
        %v9463 = vpack.c.b16 %v8951, %v8951
        %v9464 = vpack.c.b16 %v8952, %v8952
        %v9465 = vpack.c.b16 %v8953, %v8953
        %v9466 = vpack.c.b16 %v8954, %v8954
        %v9467 = vpack.c.b16 %v8955, %v8955
        %v9468 = vpack.c.b16 %v8956, %v8956
        %v9469 = vpack.c.b16 %v8957, %v8957
        %v9470 = vpack.c.b16 %v8958, %v8958
        %v9471 = vpack.c.b16 %v8959, %v8959
        %vm9984 = vcmask 257024
        %9985 = vst.msk [vmem:[%s172] sm:$0xf] %vm9984, %v8960
        %9986 = vst.msk [vmem:[%s172 + $0x4] sm:$0xf] %vm9984, %v8961
        %9987 = vst.msk [vmem:[%s172 + $0x8] sm:$0xf] %vm9984, %v8962
        %9988 = vst.msk [vmem:[%s172 + $0xc] sm:$0xf] %vm9984, %v8963
        %9989 = vst.msk [vmem:[%s172 + $0x10] sm:$0xf] %vm9984, %v8964
        %9990 = vst.msk [vmem:[%s172 + $0x14] sm:$0xf] %vm9984, %v8965
        %9991 = vst.msk [vmem:[%s172 + $0x18] sm:$0xf] %vm9984, %v8966
        %9992 = vst.msk [vmem:[%s172 + $0x1c] sm:$0xf] %vm9984, %v8967
        %9993 = vst.msk [vmem:[%s172 + $0x20] sm:$0xf] %vm9984, %v8968
        %9994 = vst.msk [vmem:[%s172 + $0x24] sm:$0xf] %vm9984, %v8969
        %9995 = vst.msk [vmem:[%s172 + $0x28] sm:$0xf] %vm9984, %v8970
        %9996 = vst.msk [vmem:[%s172 + $0x2c] sm:$0xf] %vm9984, %v8971
        %9997 = vst.msk [vmem:[%s172 + $0x30] sm:$0xf] %vm9984, %v8972
        %9998 = vst.msk [vmem:[%s172 + $0x34] sm:$0xf] %vm9984, %v8973
        %9999 = vst.msk [vmem:[%s172 + $0x38] sm:$0xf] %vm9984, %v8974
        %10000 = vst.msk [vmem:[%s172 + $0x3c] sm:$0xf] %vm9984, %v8975
        %10001 = vst.msk [vmem:[%s172 + $0x40] sm:$0xf] %vm9984, %v8976
        %10002 = vst.msk [vmem:[%s172 + $0x44] sm:$0xf] %vm9984, %v8977
        %10003 = vst.msk [vmem:[%s172 + $0x48] sm:$0xf] %vm9984, %v8978
        %10004 = vst.msk [vmem:[%s172 + $0x4c] sm:$0xf] %vm9984, %v8979
        %10005 = vst.msk [vmem:[%s172 + $0x50] sm:$0xf] %vm9984, %v8980
        %10006 = vst.msk [vmem:[%s172 + $0x54] sm:$0xf] %vm9984, %v8981
        %10007 = vst.msk [vmem:[%s172 + $0x58] sm:$0xf] %vm9984, %v8982
        %10008 = vst.msk [vmem:[%s172 + $0x5c] sm:$0xf] %vm9984, %v8983
        %10009 = vst.msk [vmem:[%s172 + $0x60] sm:$0xf] %vm9984, %v8984
        %10010 = vst.msk [vmem:[%s172 + $0x64] sm:$0xf] %vm9984, %v8985
        %10011 = vst.msk [vmem:[%s172 + $0x68] sm:$0xf] %vm9984, %v8986
        %10012 = vst.msk [vmem:[%s172 + $0x6c] sm:$0xf] %vm9984, %v8987
        %10013 = vst.msk [vmem:[%s172 + $0x70] sm:$0xf] %vm9984, %v8988
        %10014 = vst.msk [vmem:[%s172 + $0x74] sm:$0xf] %vm9984, %v8989
        %10015 = vst.msk [vmem:[%s172 + $0x78] sm:$0xf] %vm9984, %v8990
        %10016 = vst.msk [vmem:[%s172 + $0x7c] sm:$0xf] %vm9984, %v8991
        %10017 = vst.msk [vmem:[%s172 + $0x80] sm:$0xf] %vm9984, %v8992
        %10018 = vst.msk [vmem:[%s172 + $0x84] sm:$0xf] %vm9984, %v8993
        %10019 = vst.msk [vmem:[%s172 + $0x88] sm:$0xf] %vm9984, %v8994
        %10020 = vst.msk [vmem:[%s172 + $0x8c] sm:$0xf] %vm9984, %v8995
        %10021 = vst.msk [vmem:[%s172 + $0x90] sm:$0xf] %vm9984, %v8996
        %10022 = vst.msk [vmem:[%s172 + $0x94] sm:$0xf] %vm9984, %v8997
        %10023 = vst.msk [vmem:[%s172 + $0x98] sm:$0xf] %vm9984, %v8998
        %10024 = vst.msk [vmem:[%s172 + $0x9c] sm:$0xf] %vm9984, %v8999
        %10025 = vst.msk [vmem:[%s172 + $0xa0] sm:$0xf] %vm9984, %v9000
        %10026 = vst.msk [vmem:[%s172 + $0xa4] sm:$0xf] %vm9984, %v9001
        %10027 = vst.msk [vmem:[%s172 + $0xa8] sm:$0xf] %vm9984, %v9002
        %10028 = vst.msk [vmem:[%s172 + $0xac] sm:$0xf] %vm9984, %v9003
        %10029 = vst.msk [vmem:[%s172 + $0xb0] sm:$0xf] %vm9984, %v9004
        %10030 = vst.msk [vmem:[%s172 + $0xb4] sm:$0xf] %vm9984, %v9005
        %10031 = vst.msk [vmem:[%s172 + $0xb8] sm:$0xf] %vm9984, %v9006
        %10032 = vst.msk [vmem:[%s172 + $0xbc] sm:$0xf] %vm9984, %v9007
        %10033 = vst.msk [vmem:[%s172 + $0xc0] sm:$0xf] %vm9984, %v9008
        %10034 = vst.msk [vmem:[%s172 + $0xc4] sm:$0xf] %vm9984, %v9009
        %10035 = vst.msk [vmem:[%s172 + $0xc8] sm:$0xf] %vm9984, %v9010
        %10036 = vst.msk [vmem:[%s172 + $0xcc] sm:$0xf] %vm9984, %v9011
        %10037 = vst.msk [vmem:[%s172 + $0xd0] sm:$0xf] %vm9984, %v9012
        %10038 = vst.msk [vmem:[%s172 + $0xd4] sm:$0xf] %vm9984, %v9013
        %10039 = vst.msk [vmem:[%s172 + $0xd8] sm:$0xf] %vm9984, %v9014
        %10040 = vst.msk [vmem:[%s172 + $0xdc] sm:$0xf] %vm9984, %v9015
        %10041 = vst.msk [vmem:[%s172 + $0xe0] sm:$0xf] %vm9984, %v9016
        %10042 = vst.msk [vmem:[%s172 + $0xe4] sm:$0xf] %vm9984, %v9017
        %10043 = vst.msk [vmem:[%s172 + $0xe8] sm:$0xf] %vm9984, %v9018
        %10044 = vst.msk [vmem:[%s172 + $0xec] sm:$0xf] %vm9984, %v9019
        %10045 = vst.msk [vmem:[%s172 + $0xf0] sm:$0xf] %vm9984, %v9020
        %10046 = vst.msk [vmem:[%s172 + $0xf4] sm:$0xf] %vm9984, %v9021
        %10047 = vst.msk [vmem:[%s172 + $0xf8] sm:$0xf] %vm9984, %v9022
        %10048 = vst.msk [vmem:[%s172 + $0xfc] sm:$0xf] %vm9984, %v9023
        %10049 = vst.msk [vmem:[%s172 + $0x100] sm:$0xf] %vm9984, %v9024
        %10050 = vst.msk [vmem:[%s172 + $0x104] sm:$0xf] %vm9984, %v9025
        %10051 = vst.msk [vmem:[%s172 + $0x108] sm:$0xf] %vm9984, %v9026
        %10052 = vst.msk [vmem:[%s172 + $0x10c] sm:$0xf] %vm9984, %v9027
        %10053 = vst.msk [vmem:[%s172 + $0x110] sm:$0xf] %vm9984, %v9028
        %10054 = vst.msk [vmem:[%s172 + $0x114] sm:$0xf] %vm9984, %v9029
        %10055 = vst.msk [vmem:[%s172 + $0x118] sm:$0xf] %vm9984, %v9030
        %10056 = vst.msk [vmem:[%s172 + $0x11c] sm:$0xf] %vm9984, %v9031
        %10057 = vst.msk [vmem:[%s172 + $0x120] sm:$0xf] %vm9984, %v9032
        %10058 = vst.msk [vmem:[%s172 + $0x124] sm:$0xf] %vm9984, %v9033
        %10059 = vst.msk [vmem:[%s172 + $0x128] sm:$0xf] %vm9984, %v9034
        %10060 = vst.msk [vmem:[%s172 + $0x12c] sm:$0xf] %vm9984, %v9035
        %10061 = vst.msk [vmem:[%s172 + $0x130] sm:$0xf] %vm9984, %v9036
        %10062 = vst.msk [vmem:[%s172 + $0x134] sm:$0xf] %vm9984, %v9037
        %10063 = vst.msk [vmem:[%s172 + $0x138] sm:$0xf] %vm9984, %v9038
        %10064 = vst.msk [vmem:[%s172 + $0x13c] sm:$0xf] %vm9984, %v9039
        %10065 = vst.msk [vmem:[%s172 + $0x140] sm:$0xf] %vm9984, %v9040
        %10066 = vst.msk [vmem:[%s172 + $0x144] sm:$0xf] %vm9984, %v9041
        %10067 = vst.msk [vmem:[%s172 + $0x148] sm:$0xf] %vm9984, %v9042
        %10068 = vst.msk [vmem:[%s172 + $0x14c] sm:$0xf] %vm9984, %v9043
        %10069 = vst.msk [vmem:[%s172 + $0x150] sm:$0xf] %vm9984, %v9044
        %10070 = vst.msk [vmem:[%s172 + $0x154] sm:$0xf] %vm9984, %v9045
        %10071 = vst.msk [vmem:[%s172 + $0x158] sm:$0xf] %vm9984, %v9046
        %10072 = vst.msk [vmem:[%s172 + $0x15c] sm:$0xf] %vm9984, %v9047
        %10073 = vst.msk [vmem:[%s172 + $0x160] sm:$0xf] %vm9984, %v9048
        %10074 = vst.msk [vmem:[%s172 + $0x164] sm:$0xf] %vm9984, %v9049
        %10075 = vst.msk [vmem:[%s172 + $0x168] sm:$0xf] %vm9984, %v9050
        %10076 = vst.msk [vmem:[%s172 + $0x16c] sm:$0xf] %vm9984, %v9051
        %10077 = vst.msk [vmem:[%s172 + $0x170] sm:$0xf] %vm9984, %v9052
        %10078 = vst.msk [vmem:[%s172 + $0x174] sm:$0xf] %vm9984, %v9053
        %10079 = vst.msk [vmem:[%s172 + $0x178] sm:$0xf] %vm9984, %v9054
        %10080 = vst.msk [vmem:[%s172 + $0x17c] sm:$0xf] %vm9984, %v9055
        %10081 = vst.msk [vmem:[%s172 + $0x180] sm:$0xf] %vm9984, %v9056
        %10082 = vst.msk [vmem:[%s172 + $0x184] sm:$0xf] %vm9984, %v9057
        %10083 = vst.msk [vmem:[%s172 + $0x188] sm:$0xf] %vm9984, %v9058
        %10084 = vst.msk [vmem:[%s172 + $0x18c] sm:$0xf] %vm9984, %v9059
        %10085 = vst.msk [vmem:[%s172 + $0x190] sm:$0xf] %vm9984, %v9060
        %10086 = vst.msk [vmem:[%s172 + $0x194] sm:$0xf] %vm9984, %v9061
        %10087 = vst.msk [vmem:[%s172 + $0x198] sm:$0xf] %vm9984, %v9062
        %10088 = vst.msk [vmem:[%s172 + $0x19c] sm:$0xf] %vm9984, %v9063
        %10089 = vst.msk [vmem:[%s172 + $0x1a0] sm:$0xf] %vm9984, %v9064
        %10090 = vst.msk [vmem:[%s172 + $0x1a4] sm:$0xf] %vm9984, %v9065
        %10091 = vst.msk [vmem:[%s172 + $0x1a8] sm:$0xf] %vm9984, %v9066
        %10092 = vst.msk [vmem:[%s172 + $0x1ac] sm:$0xf] %vm9984, %v9067
        %10093 = vst.msk [vmem:[%s172 + $0x1b0] sm:$0xf] %vm9984, %v9068
        %10094 = vst.msk [vmem:[%s172 + $0x1b4] sm:$0xf] %vm9984, %v9069
        %10095 = vst.msk [vmem:[%s172 + $0x1b8] sm:$0xf] %vm9984, %v9070
        %10096 = vst.msk [vmem:[%s172 + $0x1bc] sm:$0xf] %vm9984, %v9071
        %10097 = vst.msk [vmem:[%s172 + $0x1c0] sm:$0xf] %vm9984, %v9072
        %10098 = vst.msk [vmem:[%s172 + $0x1c4] sm:$0xf] %vm9984, %v9073
        %10099 = vst.msk [vmem:[%s172 + $0x1c8] sm:$0xf] %vm9984, %v9074
        %10100 = vst.msk [vmem:[%s172 + $0x1cc] sm:$0xf] %vm9984, %v9075
        %10101 = vst.msk [vmem:[%s172 + $0x1d0] sm:$0xf] %vm9984, %v9076
        %10102 = vst.msk [vmem:[%s172 + $0x1d4] sm:$0xf] %vm9984, %v9077
        %10103 = vst.msk [vmem:[%s172 + $0x1d8] sm:$0xf] %vm9984, %v9078
        %10104 = vst.msk [vmem:[%s172 + $0x1dc] sm:$0xf] %vm9984, %v9079
        %10105 = vst.msk [vmem:[%s172 + $0x1e0] sm:$0xf] %vm9984, %v9080
        %10106 = vst.msk [vmem:[%s172 + $0x1e4] sm:$0xf] %vm9984, %v9081
        %10107 = vst.msk [vmem:[%s172 + $0x1e8] sm:$0xf] %vm9984, %v9082
        %10108 = vst.msk [vmem:[%s172 + $0x1ec] sm:$0xf] %vm9984, %v9083
        %10109 = vst.msk [vmem:[%s172 + $0x1f0] sm:$0xf] %vm9984, %v9084
        %10110 = vst.msk [vmem:[%s172 + $0x1f4] sm:$0xf] %vm9984, %v9085
        %10111 = vst.msk [vmem:[%s172 + $0x1f8] sm:$0xf] %vm9984, %v9086
        %10112 = vst.msk [vmem:[%s172 + $0x1fc] sm:$0xf] %vm9984, %v9087
        %10113 = vst.msk [vmem:[%s172 + $0x200] sm:$0xf] %vm9984, %v9088
        %10114 = vst.msk [vmem:[%s172 + $0x204] sm:$0xf] %vm9984, %v9089
        %10115 = vst.msk [vmem:[%s172 + $0x208] sm:$0xf] %vm9984, %v9090
        %10116 = vst.msk [vmem:[%s172 + $0x20c] sm:$0xf] %vm9984, %v9091
        %10117 = vst.msk [vmem:[%s172 + $0x210] sm:$0xf] %vm9984, %v9092
        %10118 = vst.msk [vmem:[%s172 + $0x214] sm:$0xf] %vm9984, %v9093
        %10119 = vst.msk [vmem:[%s172 + $0x218] sm:$0xf] %vm9984, %v9094
        %10120 = vst.msk [vmem:[%s172 + $0x21c] sm:$0xf] %vm9984, %v9095
        %10121 = vst.msk [vmem:[%s172 + $0x220] sm:$0xf] %vm9984, %v9096
        %10122 = vst.msk [vmem:[%s172 + $0x224] sm:$0xf] %vm9984, %v9097
        %10123 = vst.msk [vmem:[%s172 + $0x228] sm:$0xf] %vm9984, %v9098
        %10124 = vst.msk [vmem:[%s172 + $0x22c] sm:$0xf] %vm9984, %v9099
        %10125 = vst.msk [vmem:[%s172 + $0x230] sm:$0xf] %vm9984, %v9100
        %10126 = vst.msk [vmem:[%s172 + $0x234] sm:$0xf] %vm9984, %v9101
        %10127 = vst.msk [vmem:[%s172 + $0x238] sm:$0xf] %vm9984, %v9102
        %10128 = vst.msk [vmem:[%s172 + $0x23c] sm:$0xf] %vm9984, %v9103
        %10129 = vst.msk [vmem:[%s172 + $0x240] sm:$0xf] %vm9984, %v9104
        %10130 = vst.msk [vmem:[%s172 + $0x244] sm:$0xf] %vm9984, %v9105
        %10131 = vst.msk [vmem:[%s172 + $0x248] sm:$0xf] %vm9984, %v9106
        %10132 = vst.msk [vmem:[%s172 + $0x24c] sm:$0xf] %vm9984, %v9107
        %10133 = vst.msk [vmem:[%s172 + $0x250] sm:$0xf] %vm9984, %v9108
        %10134 = vst.msk [vmem:[%s172 + $0x254] sm:$0xf] %vm9984, %v9109
        %10135 = vst.msk [vmem:[%s172 + $0x258] sm:$0xf] %vm9984, %v9110
        %10136 = vst.msk [vmem:[%s172 + $0x25c] sm:$0xf] %vm9984, %v9111
        %10137 = vst.msk [vmem:[%s172 + $0x260] sm:$0xf] %vm9984, %v9112
        %10138 = vst.msk [vmem:[%s172 + $0x264] sm:$0xf] %vm9984, %v9113
        %10139 = vst.msk [vmem:[%s172 + $0x268] sm:$0xf] %vm9984, %v9114
        %10140 = vst.msk [vmem:[%s172 + $0x26c] sm:$0xf] %vm9984, %v9115
        %10141 = vst.msk [vmem:[%s172 + $0x270] sm:$0xf] %vm9984, %v9116
        %10142 = vst.msk [vmem:[%s172 + $0x274] sm:$0xf] %vm9984, %v9117
        %10143 = vst.msk [vmem:[%s172 + $0x278] sm:$0xf] %vm9984, %v9118
        %10144 = vst.msk [vmem:[%s172 + $0x27c] sm:$0xf] %vm9984, %v9119
        %10145 = vst.msk [vmem:[%s172 + $0x280] sm:$0xf] %vm9984, %v9120
        %10146 = vst.msk [vmem:[%s172 + $0x284] sm:$0xf] %vm9984, %v9121
        %10147 = vst.msk [vmem:[%s172 + $0x288] sm:$0xf] %vm9984, %v9122
        %10148 = vst.msk [vmem:[%s172 + $0x28c] sm:$0xf] %vm9984, %v9123
        %10149 = vst.msk [vmem:[%s172 + $0x290] sm:$0xf] %vm9984, %v9124
        %10150 = vst.msk [vmem:[%s172 + $0x294] sm:$0xf] %vm9984, %v9125
        %10151 = vst.msk [vmem:[%s172 + $0x298] sm:$0xf] %vm9984, %v9126
        %10152 = vst.msk [vmem:[%s172 + $0x29c] sm:$0xf] %vm9984, %v9127
        %10153 = vst.msk [vmem:[%s172 + $0x2a0] sm:$0xf] %vm9984, %v9128
        %10154 = vst.msk [vmem:[%s172 + $0x2a4] sm:$0xf] %vm9984, %v9129
        %10155 = vst.msk [vmem:[%s172 + $0x2a8] sm:$0xf] %vm9984, %v9130
        %10156 = vst.msk [vmem:[%s172 + $0x2ac] sm:$0xf] %vm9984, %v9131
        %10157 = vst.msk [vmem:[%s172 + $0x2b0] sm:$0xf] %vm9984, %v9132
        %10158 = vst.msk [vmem:[%s172 + $0x2b4] sm:$0xf] %vm9984, %v9133
        %10159 = vst.msk [vmem:[%s172 + $0x2b8] sm:$0xf] %vm9984, %v9134
        %10160 = vst.msk [vmem:[%s172 + $0x2bc] sm:$0xf] %vm9984, %v9135
        %10161 = vst.msk [vmem:[%s172 + $0x2c0] sm:$0xf] %vm9984, %v9136
        %10162 = vst.msk [vmem:[%s172 + $0x2c4] sm:$0xf] %vm9984, %v9137
        %10163 = vst.msk [vmem:[%s172 + $0x2c8] sm:$0xf] %vm9984, %v9138
        %10164 = vst.msk [vmem:[%s172 + $0x2cc] sm:$0xf] %vm9984, %v9139
        %10165 = vst.msk [vmem:[%s172 + $0x2d0] sm:$0xf] %vm9984, %v9140
        %10166 = vst.msk [vmem:[%s172 + $0x2d4] sm:$0xf] %vm9984, %v9141
        %10167 = vst.msk [vmem:[%s172 + $0x2d8] sm:$0xf] %vm9984, %v9142
        %10168 = vst.msk [vmem:[%s172 + $0x2dc] sm:$0xf] %vm9984, %v9143
        %10169 = vst.msk [vmem:[%s172 + $0x2e0] sm:$0xf] %vm9984, %v9144
        %10170 = vst.msk [vmem:[%s172 + $0x2e4] sm:$0xf] %vm9984, %v9145
        %10171 = vst.msk [vmem:[%s172 + $0x2e8] sm:$0xf] %vm9984, %v9146
        %10172 = vst.msk [vmem:[%s172 + $0x2ec] sm:$0xf] %vm9984, %v9147
        %10173 = vst.msk [vmem:[%s172 + $0x2f0] sm:$0xf] %vm9984, %v9148
        %10174 = vst.msk [vmem:[%s172 + $0x2f4] sm:$0xf] %vm9984, %v9149
        %10175 = vst.msk [vmem:[%s172 + $0x2f8] sm:$0xf] %vm9984, %v9150
        %10176 = vst.msk [vmem:[%s172 + $0x2fc] sm:$0xf] %vm9984, %v9151
        %10177 = vst.msk [vmem:[%s172 + $0x300] sm:$0xf] %vm9984, %v9152
        %10178 = vst.msk [vmem:[%s172 + $0x304] sm:$0xf] %vm9984, %v9153
        %10179 = vst.msk [vmem:[%s172 + $0x308] sm:$0xf] %vm9984, %v9154
        %10180 = vst.msk [vmem:[%s172 + $0x30c] sm:$0xf] %vm9984, %v9155
        %10181 = vst.msk [vmem:[%s172 + $0x310] sm:$0xf] %vm9984, %v9156
        %10182 = vst.msk [vmem:[%s172 + $0x314] sm:$0xf] %vm9984, %v9157
        %10183 = vst.msk [vmem:[%s172 + $0x318] sm:$0xf] %vm9984, %v9158
        %10184 = vst.msk [vmem:[%s172 + $0x31c] sm:$0xf] %vm9984, %v9159
        %10185 = vst.msk [vmem:[%s172 + $0x320] sm:$0xf] %vm9984, %v9160
        %10186 = vst.msk [vmem:[%s172 + $0x324] sm:$0xf] %vm9984, %v9161
        %10187 = vst.msk [vmem:[%s172 + $0x328] sm:$0xf] %vm9984, %v9162
        %10188 = vst.msk [vmem:[%s172 + $0x32c] sm:$0xf] %vm9984, %v9163
        %10189 = vst.msk [vmem:[%s172 + $0x330] sm:$0xf] %vm9984, %v9164
        %10190 = vst.msk [vmem:[%s172 + $0x334] sm:$0xf] %vm9984, %v9165
        %10191 = vst.msk [vmem:[%s172 + $0x338] sm:$0xf] %vm9984, %v9166
        %10192 = vst.msk [vmem:[%s172 + $0x33c] sm:$0xf] %vm9984, %v9167
        %10193 = vst.msk [vmem:[%s172 + $0x340] sm:$0xf] %vm9984, %v9168
        %10194 = vst.msk [vmem:[%s172 + $0x344] sm:$0xf] %vm9984, %v9169
        %10195 = vst.msk [vmem:[%s172 + $0x348] sm:$0xf] %vm9984, %v9170
        %10196 = vst.msk [vmem:[%s172 + $0x34c] sm:$0xf] %vm9984, %v9171
        %10197 = vst.msk [vmem:[%s172 + $0x350] sm:$0xf] %vm9984, %v9172
        %10198 = vst.msk [vmem:[%s172 + $0x354] sm:$0xf] %vm9984, %v9173
        %10199 = vst.msk [vmem:[%s172 + $0x358] sm:$0xf] %vm9984, %v9174
        %10200 = vst.msk [vmem:[%s172 + $0x35c] sm:$0xf] %vm9984, %v9175
        %10201 = vst.msk [vmem:[%s172 + $0x360] sm:$0xf] %vm9984, %v9176
        %10202 = vst.msk [vmem:[%s172 + $0x364] sm:$0xf] %vm9984, %v9177
        %10203 = vst.msk [vmem:[%s172 + $0x368] sm:$0xf] %vm9984, %v9178
        %10204 = vst.msk [vmem:[%s172 + $0x36c] sm:$0xf] %vm9984, %v9179
        %10205 = vst.msk [vmem:[%s172 + $0x370] sm:$0xf] %vm9984, %v9180
        %10206 = vst.msk [vmem:[%s172 + $0x374] sm:$0xf] %vm9984, %v9181
        %10207 = vst.msk [vmem:[%s172 + $0x378] sm:$0xf] %vm9984, %v9182
        %10208 = vst.msk [vmem:[%s172 + $0x37c] sm:$0xf] %vm9984, %v9183
        %10209 = vst.msk [vmem:[%s172 + $0x380] sm:$0xf] %vm9984, %v9184
        %10210 = vst.msk [vmem:[%s172 + $0x384] sm:$0xf] %vm9984, %v9185
        %10211 = vst.msk [vmem:[%s172 + $0x388] sm:$0xf] %vm9984, %v9186
        %10212 = vst.msk [vmem:[%s172 + $0x38c] sm:$0xf] %vm9984, %v9187
        %10213 = vst.msk [vmem:[%s172 + $0x390] sm:$0xf] %vm9984, %v9188
        %10214 = vst.msk [vmem:[%s172 + $0x394] sm:$0xf] %vm9984, %v9189
        %10215 = vst.msk [vmem:[%s172 + $0x398] sm:$0xf] %vm9984, %v9190
        %10216 = vst.msk [vmem:[%s172 + $0x39c] sm:$0xf] %vm9984, %v9191
        %10217 = vst.msk [vmem:[%s172 + $0x3a0] sm:$0xf] %vm9984, %v9192
        %10218 = vst.msk [vmem:[%s172 + $0x3a4] sm:$0xf] %vm9984, %v9193
        %10219 = vst.msk [vmem:[%s172 + $0x3a8] sm:$0xf] %vm9984, %v9194
        %10220 = vst.msk [vmem:[%s172 + $0x3ac] sm:$0xf] %vm9984, %v9195
        %10221 = vst.msk [vmem:[%s172 + $0x3b0] sm:$0xf] %vm9984, %v9196
        %10222 = vst.msk [vmem:[%s172 + $0x3b4] sm:$0xf] %vm9984, %v9197
        %10223 = vst.msk [vmem:[%s172 + $0x3b8] sm:$0xf] %vm9984, %v9198
        %10224 = vst.msk [vmem:[%s172 + $0x3bc] sm:$0xf] %vm9984, %v9199
        %10225 = vst.msk [vmem:[%s172 + $0x3c0] sm:$0xf] %vm9984, %v9200
        %10226 = vst.msk [vmem:[%s172 + $0x3c4] sm:$0xf] %vm9984, %v9201
        %10227 = vst.msk [vmem:[%s172 + $0x3c8] sm:$0xf] %vm9984, %v9202
        %10228 = vst.msk [vmem:[%s172 + $0x3cc] sm:$0xf] %vm9984, %v9203
        %10229 = vst.msk [vmem:[%s172 + $0x3d0] sm:$0xf] %vm9984, %v9204
        %10230 = vst.msk [vmem:[%s172 + $0x3d4] sm:$0xf] %vm9984, %v9205
        %10231 = vst.msk [vmem:[%s172 + $0x3d8] sm:$0xf] %vm9984, %v9206
        %10232 = vst.msk [vmem:[%s172 + $0x3dc] sm:$0xf] %vm9984, %v9207
        %10233 = vst.msk [vmem:[%s172 + $0x3e0] sm:$0xf] %vm9984, %v9208
        %10234 = vst.msk [vmem:[%s172 + $0x3e4] sm:$0xf] %vm9984, %v9209
        %10235 = vst.msk [vmem:[%s172 + $0x3e8] sm:$0xf] %vm9984, %v9210
        %10236 = vst.msk [vmem:[%s172 + $0x3ec] sm:$0xf] %vm9984, %v9211
        %10237 = vst.msk [vmem:[%s172 + $0x3f0] sm:$0xf] %vm9984, %v9212
        %10238 = vst.msk [vmem:[%s172 + $0x3f4] sm:$0xf] %vm9984, %v9213
        %10239 = vst.msk [vmem:[%s172 + $0x3f8] sm:$0xf] %vm9984, %v9214
        %10240 = vst.msk [vmem:[%s172 + $0x3fc] sm:$0xf] %vm9984, %v9215
        %10241 = vst.msk [vmem:[%s172 + $0x400] sm:$0xf] %vm9984, %v9216
        %10242 = vst.msk [vmem:[%s172 + $0x404] sm:$0xf] %vm9984, %v9217
        %10243 = vst.msk [vmem:[%s172 + $0x408] sm:$0xf] %vm9984, %v9218
        %10244 = vst.msk [vmem:[%s172 + $0x40c] sm:$0xf] %vm9984, %v9219
        %10245 = vst.msk [vmem:[%s172 + $0x410] sm:$0xf] %vm9984, %v9220
        %10246 = vst.msk [vmem:[%s172 + $0x414] sm:$0xf] %vm9984, %v9221
        %10247 = vst.msk [vmem:[%s172 + $0x418] sm:$0xf] %vm9984, %v9222
        %10248 = vst.msk [vmem:[%s172 + $0x41c] sm:$0xf] %vm9984, %v9223
        %10249 = vst.msk [vmem:[%s172 + $0x420] sm:$0xf] %vm9984, %v9224
        %10250 = vst.msk [vmem:[%s172 + $0x424] sm:$0xf] %vm9984, %v9225
        %10251 = vst.msk [vmem:[%s172 + $0x428] sm:$0xf] %vm9984, %v9226
        %10252 = vst.msk [vmem:[%s172 + $0x42c] sm:$0xf] %vm9984, %v9227
        %10253 = vst.msk [vmem:[%s172 + $0x430] sm:$0xf] %vm9984, %v9228
        %10254 = vst.msk [vmem:[%s172 + $0x434] sm:$0xf] %vm9984, %v9229
        %10255 = vst.msk [vmem:[%s172 + $0x438] sm:$0xf] %vm9984, %v9230
        %10256 = vst.msk [vmem:[%s172 + $0x43c] sm:$0xf] %vm9984, %v9231
        %10257 = vst.msk [vmem:[%s172 + $0x440] sm:$0xf] %vm9984, %v9232
        %10258 = vst.msk [vmem:[%s172 + $0x444] sm:$0xf] %vm9984, %v9233
        %10259 = vst.msk [vmem:[%s172 + $0x448] sm:$0xf] %vm9984, %v9234
        %10260 = vst.msk [vmem:[%s172 + $0x44c] sm:$0xf] %vm9984, %v9235
        %10261 = vst.msk [vmem:[%s172 + $0x450] sm:$0xf] %vm9984, %v9236
        %10262 = vst.msk [vmem:[%s172 + $0x454] sm:$0xf] %vm9984, %v9237
        %10263 = vst.msk [vmem:[%s172 + $0x458] sm:$0xf] %vm9984, %v9238
        %10264 = vst.msk [vmem:[%s172 + $0x45c] sm:$0xf] %vm9984, %v9239
        %10265 = vst.msk [vmem:[%s172 + $0x460] sm:$0xf] %vm9984, %v9240
        %10266 = vst.msk [vmem:[%s172 + $0x464] sm:$0xf] %vm9984, %v9241
        %10267 = vst.msk [vmem:[%s172 + $0x468] sm:$0xf] %vm9984, %v9242
        %10268 = vst.msk [vmem:[%s172 + $0x46c] sm:$0xf] %vm9984, %v9243
        %10269 = vst.msk [vmem:[%s172 + $0x470] sm:$0xf] %vm9984, %v9244
        %10270 = vst.msk [vmem:[%s172 + $0x474] sm:$0xf] %vm9984, %v9245
        %10271 = vst.msk [vmem:[%s172 + $0x478] sm:$0xf] %vm9984, %v9246
        %10272 = vst.msk [vmem:[%s172 + $0x47c] sm:$0xf] %vm9984, %v9247
        %10273 = vst.msk [vmem:[%s172 + $0x480] sm:$0xf] %vm9984, %v9248
        %10274 = vst.msk [vmem:[%s172 + $0x484] sm:$0xf] %vm9984, %v9249
        %10275 = vst.msk [vmem:[%s172 + $0x488] sm:$0xf] %vm9984, %v9250
        %10276 = vst.msk [vmem:[%s172 + $0x48c] sm:$0xf] %vm9984, %v9251
        %10277 = vst.msk [vmem:[%s172 + $0x490] sm:$0xf] %vm9984, %v9252
        %10278 = vst.msk [vmem:[%s172 + $0x494] sm:$0xf] %vm9984, %v9253
        %10279 = vst.msk [vmem:[%s172 + $0x498] sm:$0xf] %vm9984, %v9254
        %10280 = vst.msk [vmem:[%s172 + $0x49c] sm:$0xf] %vm9984, %v9255
        %10281 = vst.msk [vmem:[%s172 + $0x4a0] sm:$0xf] %vm9984, %v9256
        %10282 = vst.msk [vmem:[%s172 + $0x4a4] sm:$0xf] %vm9984, %v9257
        %10283 = vst.msk [vmem:[%s172 + $0x4a8] sm:$0xf] %vm9984, %v9258
        %10284 = vst.msk [vmem:[%s172 + $0x4ac] sm:$0xf] %vm9984, %v9259
        %10285 = vst.msk [vmem:[%s172 + $0x4b0] sm:$0xf] %vm9984, %v9260
        %10286 = vst.msk [vmem:[%s172 + $0x4b4] sm:$0xf] %vm9984, %v9261
        %10287 = vst.msk [vmem:[%s172 + $0x4b8] sm:$0xf] %vm9984, %v9262
        %10288 = vst.msk [vmem:[%s172 + $0x4bc] sm:$0xf] %vm9984, %v9263
        %10289 = vst.msk [vmem:[%s172 + $0x4c0] sm:$0xf] %vm9984, %v9264
        %10290 = vst.msk [vmem:[%s172 + $0x4c4] sm:$0xf] %vm9984, %v9265
        %10291 = vst.msk [vmem:[%s172 + $0x4c8] sm:$0xf] %vm9984, %v9266
        %10292 = vst.msk [vmem:[%s172 + $0x4cc] sm:$0xf] %vm9984, %v9267
        %10293 = vst.msk [vmem:[%s172 + $0x4d0] sm:$0xf] %vm9984, %v9268
        %10294 = vst.msk [vmem:[%s172 + $0x4d4] sm:$0xf] %vm9984, %v9269
        %10295 = vst.msk [vmem:[%s172 + $0x4d8] sm:$0xf] %vm9984, %v9270
        %10296 = vst.msk [vmem:[%s172 + $0x4dc] sm:$0xf] %vm9984, %v9271
        %10297 = vst.msk [vmem:[%s172 + $0x4e0] sm:$0xf] %vm9984, %v9272
        %10298 = vst.msk [vmem:[%s172 + $0x4e4] sm:$0xf] %vm9984, %v9273
        %10299 = vst.msk [vmem:[%s172 + $0x4e8] sm:$0xf] %vm9984, %v9274
        %10300 = vst.msk [vmem:[%s172 + $0x4ec] sm:$0xf] %vm9984, %v9275
        %10301 = vst.msk [vmem:[%s172 + $0x4f0] sm:$0xf] %vm9984, %v9276
        %10302 = vst.msk [vmem:[%s172 + $0x4f4] sm:$0xf] %vm9984, %v9277
        %10303 = vst.msk [vmem:[%s172 + $0x4f8] sm:$0xf] %vm9984, %v9278
        %10304 = vst.msk [vmem:[%s172 + $0x4fc] sm:$0xf] %vm9984, %v9279
        %10305 = vst.msk [vmem:[%s172 + $0x500] sm:$0xf] %vm9984, %v9280
        %10306 = vst.msk [vmem:[%s172 + $0x504] sm:$0xf] %vm9984, %v9281
        %10307 = vst.msk [vmem:[%s172 + $0x508] sm:$0xf] %vm9984, %v9282
        %10308 = vst.msk [vmem:[%s172 + $0x50c] sm:$0xf] %vm9984, %v9283
        %10309 = vst.msk [vmem:[%s172 + $0x510] sm:$0xf] %vm9984, %v9284
        %10310 = vst.msk [vmem:[%s172 + $0x514] sm:$0xf] %vm9984, %v9285
        %10311 = vst.msk [vmem:[%s172 + $0x518] sm:$0xf] %vm9984, %v9286
        %10312 = vst.msk [vmem:[%s172 + $0x51c] sm:$0xf] %vm9984, %v9287
        %10313 = vst.msk [vmem:[%s172 + $0x520] sm:$0xf] %vm9984, %v9288
        %10314 = vst.msk [vmem:[%s172 + $0x524] sm:$0xf] %vm9984, %v9289
        %10315 = vst.msk [vmem:[%s172 + $0x528] sm:$0xf] %vm9984, %v9290
        %10316 = vst.msk [vmem:[%s172 + $0x52c] sm:$0xf] %vm9984, %v9291
        %10317 = vst.msk [vmem:[%s172 + $0x530] sm:$0xf] %vm9984, %v9292
        %10318 = vst.msk [vmem:[%s172 + $0x534] sm:$0xf] %vm9984, %v9293
        %10319 = vst.msk [vmem:[%s172 + $0x538] sm:$0xf] %vm9984, %v9294
        %10320 = vst.msk [vmem:[%s172 + $0x53c] sm:$0xf] %vm9984, %v9295
        %10321 = vst.msk [vmem:[%s172 + $0x540] sm:$0xf] %vm9984, %v9296
        %10322 = vst.msk [vmem:[%s172 + $0x544] sm:$0xf] %vm9984, %v9297
        %10323 = vst.msk [vmem:[%s172 + $0x548] sm:$0xf] %vm9984, %v9298
        %10324 = vst.msk [vmem:[%s172 + $0x54c] sm:$0xf] %vm9984, %v9299
        %10325 = vst.msk [vmem:[%s172 + $0x550] sm:$0xf] %vm9984, %v9300
        %10326 = vst.msk [vmem:[%s172 + $0x554] sm:$0xf] %vm9984, %v9301
        %10327 = vst.msk [vmem:[%s172 + $0x558] sm:$0xf] %vm9984, %v9302
        %10328 = vst.msk [vmem:[%s172 + $0x55c] sm:$0xf] %vm9984, %v9303
        %10329 = vst.msk [vmem:[%s172 + $0x560] sm:$0xf] %vm9984, %v9304
        %10330 = vst.msk [vmem:[%s172 + $0x564] sm:$0xf] %vm9984, %v9305
        %10331 = vst.msk [vmem:[%s172 + $0x568] sm:$0xf] %vm9984, %v9306
        %10332 = vst.msk [vmem:[%s172 + $0x56c] sm:$0xf] %vm9984, %v9307
        %10333 = vst.msk [vmem:[%s172 + $0x570] sm:$0xf] %vm9984, %v9308
        %10334 = vst.msk [vmem:[%s172 + $0x574] sm:$0xf] %vm9984, %v9309
        %10335 = vst.msk [vmem:[%s172 + $0x578] sm:$0xf] %vm9984, %v9310
        %10336 = vst.msk [vmem:[%s172 + $0x57c] sm:$0xf] %vm9984, %v9311
        %10337 = vst.msk [vmem:[%s172 + $0x580] sm:$0xf] %vm9984, %v9312
        %10338 = vst.msk [vmem:[%s172 + $0x584] sm:$0xf] %vm9984, %v9313
        %10339 = vst.msk [vmem:[%s172 + $0x588] sm:$0xf] %vm9984, %v9314
        %10340 = vst.msk [vmem:[%s172 + $0x58c] sm:$0xf] %vm9984, %v9315
        %10341 = vst.msk [vmem:[%s172 + $0x590] sm:$0xf] %vm9984, %v9316
        %10342 = vst.msk [vmem:[%s172 + $0x594] sm:$0xf] %vm9984, %v9317
        %10343 = vst.msk [vmem:[%s172 + $0x598] sm:$0xf] %vm9984, %v9318
        %10344 = vst.msk [vmem:[%s172 + $0x59c] sm:$0xf] %vm9984, %v9319
        %10345 = vst.msk [vmem:[%s172 + $0x5a0] sm:$0xf] %vm9984, %v9320
        %10346 = vst.msk [vmem:[%s172 + $0x5a4] sm:$0xf] %vm9984, %v9321
        %10347 = vst.msk [vmem:[%s172 + $0x5a8] sm:$0xf] %vm9984, %v9322
        %10348 = vst.msk [vmem:[%s172 + $0x5ac] sm:$0xf] %vm9984, %v9323
        %10349 = vst.msk [vmem:[%s172 + $0x5b0] sm:$0xf] %vm9984, %v9324
        %10350 = vst.msk [vmem:[%s172 + $0x5b4] sm:$0xf] %vm9984, %v9325
        %10351 = vst.msk [vmem:[%s172 + $0x5b8] sm:$0xf] %vm9984, %v9326
        %10352 = vst.msk [vmem:[%s172 + $0x5bc] sm:$0xf] %vm9984, %v9327
        %10353 = vst.msk [vmem:[%s172 + $0x5c0] sm:$0xf] %vm9984, %v9328
        %10354 = vst.msk [vmem:[%s172 + $0x5c4] sm:$0xf] %vm9984, %v9329
        %10355 = vst.msk [vmem:[%s172 + $0x5c8] sm:$0xf] %vm9984, %v9330
        %10356 = vst.msk [vmem:[%s172 + $0x5cc] sm:$0xf] %vm9984, %v9331
        %10357 = vst.msk [vmem:[%s172 + $0x5d0] sm:$0xf] %vm9984, %v9332
        %10358 = vst.msk [vmem:[%s172 + $0x5d4] sm:$0xf] %vm9984, %v9333
        %10359 = vst.msk [vmem:[%s172 + $0x5d8] sm:$0xf] %vm9984, %v9334
        %10360 = vst.msk [vmem:[%s172 + $0x5dc] sm:$0xf] %vm9984, %v9335
        %10361 = vst.msk [vmem:[%s172 + $0x5e0] sm:$0xf] %vm9984, %v9336
        %10362 = vst.msk [vmem:[%s172 + $0x5e4] sm:$0xf] %vm9984, %v9337
        %10363 = vst.msk [vmem:[%s172 + $0x5e8] sm:$0xf] %vm9984, %v9338
        %10364 = vst.msk [vmem:[%s172 + $0x5ec] sm:$0xf] %vm9984, %v9339
        %10365 = vst.msk [vmem:[%s172 + $0x5f0] sm:$0xf] %vm9984, %v9340
        %10366 = vst.msk [vmem:[%s172 + $0x5f4] sm:$0xf] %vm9984, %v9341
        %10367 = vst.msk [vmem:[%s172 + $0x5f8] sm:$0xf] %vm9984, %v9342
        %10368 = vst.msk [vmem:[%s172 + $0x5fc] sm:$0xf] %vm9984, %v9343
        %10369 = vst.msk [vmem:[%s172 + $0x600] sm:$0xf] %vm9984, %v9344
        %10370 = vst.msk [vmem:[%s172 + $0x604] sm:$0xf] %vm9984, %v9345
        %10371 = vst.msk [vmem:[%s172 + $0x608] sm:$0xf] %vm9984, %v9346
        %10372 = vst.msk [vmem:[%s172 + $0x60c] sm:$0xf] %vm9984, %v9347
        %10373 = vst.msk [vmem:[%s172 + $0x610] sm:$0xf] %vm9984, %v9348
        %10374 = vst.msk [vmem:[%s172 + $0x614] sm:$0xf] %vm9984, %v9349
        %10375 = vst.msk [vmem:[%s172 + $0x618] sm:$0xf] %vm9984, %v9350
        %10376 = vst.msk [vmem:[%s172 + $0x61c] sm:$0xf] %vm9984, %v9351
        %10377 = vst.msk [vmem:[%s172 + $0x620] sm:$0xf] %vm9984, %v9352
        %10378 = vst.msk [vmem:[%s172 + $0x624] sm:$0xf] %vm9984, %v9353
        %10379 = vst.msk [vmem:[%s172 + $0x628] sm:$0xf] %vm9984, %v9354
        %10380 = vst.msk [vmem:[%s172 + $0x62c] sm:$0xf] %vm9984, %v9355
        %10381 = vst.msk [vmem:[%s172 + $0x630] sm:$0xf] %vm9984, %v9356
        %10382 = vst.msk [vmem:[%s172 + $0x634] sm:$0xf] %vm9984, %v9357
        %10383 = vst.msk [vmem:[%s172 + $0x638] sm:$0xf] %vm9984, %v9358
        %10384 = vst.msk [vmem:[%s172 + $0x63c] sm:$0xf] %vm9984, %v9359
        %10385 = vst.msk [vmem:[%s172 + $0x640] sm:$0xf] %vm9984, %v9360
        %10386 = vst.msk [vmem:[%s172 + $0x644] sm:$0xf] %vm9984, %v9361
        %10387 = vst.msk [vmem:[%s172 + $0x648] sm:$0xf] %vm9984, %v9362
        %10388 = vst.msk [vmem:[%s172 + $0x64c] sm:$0xf] %vm9984, %v9363
        %10389 = vst.msk [vmem:[%s172 + $0x650] sm:$0xf] %vm9984, %v9364
        %10390 = vst.msk [vmem:[%s172 + $0x654] sm:$0xf] %vm9984, %v9365
        %10391 = vst.msk [vmem:[%s172 + $0x658] sm:$0xf] %vm9984, %v9366
        %10392 = vst.msk [vmem:[%s172 + $0x65c] sm:$0xf] %vm9984, %v9367
        %10393 = vst.msk [vmem:[%s172 + $0x660] sm:$0xf] %vm9984, %v9368
        %10394 = vst.msk [vmem:[%s172 + $0x664] sm:$0xf] %vm9984, %v9369
        %10395 = vst.msk [vmem:[%s172 + $0x668] sm:$0xf] %vm9984, %v9370
        %10396 = vst.msk [vmem:[%s172 + $0x66c] sm:$0xf] %vm9984, %v9371
        %10397 = vst.msk [vmem:[%s172 + $0x670] sm:$0xf] %vm9984, %v9372
        %10398 = vst.msk [vmem:[%s172 + $0x674] sm:$0xf] %vm9984, %v9373
        %10399 = vst.msk [vmem:[%s172 + $0x678] sm:$0xf] %vm9984, %v9374
        %10400 = vst.msk [vmem:[%s172 + $0x67c] sm:$0xf] %vm9984, %v9375
        %10401 = vst.msk [vmem:[%s172 + $0x680] sm:$0xf] %vm9984, %v9376
        %10402 = vst.msk [vmem:[%s172 + $0x684] sm:$0xf] %vm9984, %v9377
        %10403 = vst.msk [vmem:[%s172 + $0x688] sm:$0xf] %vm9984, %v9378
        %10404 = vst.msk [vmem:[%s172 + $0x68c] sm:$0xf] %vm9984, %v9379
        %10405 = vst.msk [vmem:[%s172 + $0x690] sm:$0xf] %vm9984, %v9380
        %10406 = vst.msk [vmem:[%s172 + $0x694] sm:$0xf] %vm9984, %v9381
        %10407 = vst.msk [vmem:[%s172 + $0x698] sm:$0xf] %vm9984, %v9382
        %10408 = vst.msk [vmem:[%s172 + $0x69c] sm:$0xf] %vm9984, %v9383
        %10409 = vst.msk [vmem:[%s172 + $0x6a0] sm:$0xf] %vm9984, %v9384
        %10410 = vst.msk [vmem:[%s172 + $0x6a4] sm:$0xf] %vm9984, %v9385
        %10411 = vst.msk [vmem:[%s172 + $0x6a8] sm:$0xf] %vm9984, %v9386
        %10412 = vst.msk [vmem:[%s172 + $0x6ac] sm:$0xf] %vm9984, %v9387
        %10413 = vst.msk [vmem:[%s172 + $0x6b0] sm:$0xf] %vm9984, %v9388
        %10414 = vst.msk [vmem:[%s172 + $0x6b4] sm:$0xf] %vm9984, %v9389
        %10415 = vst.msk [vmem:[%s172 + $0x6b8] sm:$0xf] %vm9984, %v9390
        %10416 = vst.msk [vmem:[%s172 + $0x6bc] sm:$0xf] %vm9984, %v9391
        %10417 = vst.msk [vmem:[%s172 + $0x6c0] sm:$0xf] %vm9984, %v9392
        %10418 = vst.msk [vmem:[%s172 + $0x6c4] sm:$0xf] %vm9984, %v9393
        %10419 = vst.msk [vmem:[%s172 + $0x6c8] sm:$0xf] %vm9984, %v9394
        %10420 = vst.msk [vmem:[%s172 + $0x6cc] sm:$0xf] %vm9984, %v9395
        %10421 = vst.msk [vmem:[%s172 + $0x6d0] sm:$0xf] %vm9984, %v9396
        %10422 = vst.msk [vmem:[%s172 + $0x6d4] sm:$0xf] %vm9984, %v9397
        %10423 = vst.msk [vmem:[%s172 + $0x6d8] sm:$0xf] %vm9984, %v9398
        %10424 = vst.msk [vmem:[%s172 + $0x6dc] sm:$0xf] %vm9984, %v9399
        %10425 = vst.msk [vmem:[%s172 + $0x6e0] sm:$0xf] %vm9984, %v9400
        %10426 = vst.msk [vmem:[%s172 + $0x6e4] sm:$0xf] %vm9984, %v9401
        %10427 = vst.msk [vmem:[%s172 + $0x6e8] sm:$0xf] %vm9984, %v9402
        %10428 = vst.msk [vmem:[%s172 + $0x6ec] sm:$0xf] %vm9984, %v9403
        %10429 = vst.msk [vmem:[%s172 + $0x6f0] sm:$0xf] %vm9984, %v9404
        %10430 = vst.msk [vmem:[%s172 + $0x6f4] sm:$0xf] %vm9984, %v9405
        %10431 = vst.msk [vmem:[%s172 + $0x6f8] sm:$0xf] %vm9984, %v9406
        %10432 = vst.msk [vmem:[%s172 + $0x6fc] sm:$0xf] %vm9984, %v9407
        %10433 = vst.msk [vmem:[%s172 + $0x700] sm:$0xf] %vm9984, %v9408
        %10434 = vst.msk [vmem:[%s172 + $0x704] sm:$0xf] %vm9984, %v9409
        %10435 = vst.msk [vmem:[%s172 + $0x708] sm:$0xf] %vm9984, %v9410
        %10436 = vst.msk [vmem:[%s172 + $0x70c] sm:$0xf] %vm9984, %v9411
        %10437 = vst.msk [vmem:[%s172 + $0x710] sm:$0xf] %vm9984, %v9412
        %10438 = vst.msk [vmem:[%s172 + $0x714] sm:$0xf] %vm9984, %v9413
        %10439 = vst.msk [vmem:[%s172 + $0x718] sm:$0xf] %vm9984, %v9414
        %10440 = vst.msk [vmem:[%s172 + $0x71c] sm:$0xf] %vm9984, %v9415
        %10441 = vst.msk [vmem:[%s172 + $0x720] sm:$0xf] %vm9984, %v9416
        %10442 = vst.msk [vmem:[%s172 + $0x724] sm:$0xf] %vm9984, %v9417
        %10443 = vst.msk [vmem:[%s172 + $0x728] sm:$0xf] %vm9984, %v9418
        %10444 = vst.msk [vmem:[%s172 + $0x72c] sm:$0xf] %vm9984, %v9419
        %10445 = vst.msk [vmem:[%s172 + $0x730] sm:$0xf] %vm9984, %v9420
        %10446 = vst.msk [vmem:[%s172 + $0x734] sm:$0xf] %vm9984, %v9421
        %10447 = vst.msk [vmem:[%s172 + $0x738] sm:$0xf] %vm9984, %v9422
        %10448 = vst.msk [vmem:[%s172 + $0x73c] sm:$0xf] %vm9984, %v9423
        %10449 = vst.msk [vmem:[%s172 + $0x740] sm:$0xf] %vm9984, %v9424
        %10450 = vst.msk [vmem:[%s172 + $0x744] sm:$0xf] %vm9984, %v9425
        %10451 = vst.msk [vmem:[%s172 + $0x748] sm:$0xf] %vm9984, %v9426
        %10452 = vst.msk [vmem:[%s172 + $0x74c] sm:$0xf] %vm9984, %v9427
        %10453 = vst.msk [vmem:[%s172 + $0x750] sm:$0xf] %vm9984, %v9428
        %10454 = vst.msk [vmem:[%s172 + $0x754] sm:$0xf] %vm9984, %v9429
        %10455 = vst.msk [vmem:[%s172 + $0x758] sm:$0xf] %vm9984, %v9430
        %10456 = vst.msk [vmem:[%s172 + $0x75c] sm:$0xf] %vm9984, %v9431
        %10457 = vst.msk [vmem:[%s172 + $0x760] sm:$0xf] %vm9984, %v9432
        %10458 = vst.msk [vmem:[%s172 + $0x764] sm:$0xf] %vm9984, %v9433
        %10459 = vst.msk [vmem:[%s172 + $0x768] sm:$0xf] %vm9984, %v9434
        %10460 = vst.msk [vmem:[%s172 + $0x76c] sm:$0xf] %vm9984, %v9435
        %10461 = vst.msk [vmem:[%s172 + $0x770] sm:$0xf] %vm9984, %v9436
        %10462 = vst.msk [vmem:[%s172 + $0x774] sm:$0xf] %vm9984, %v9437
        %10463 = vst.msk [vmem:[%s172 + $0x778] sm:$0xf] %vm9984, %v9438
        %10464 = vst.msk [vmem:[%s172 + $0x77c] sm:$0xf] %vm9984, %v9439
        %10465 = vst.msk [vmem:[%s172 + $0x780] sm:$0xf] %vm9984, %v9440
        %10466 = vst.msk [vmem:[%s172 + $0x784] sm:$0xf] %vm9984, %v9441
        %10467 = vst.msk [vmem:[%s172 + $0x788] sm:$0xf] %vm9984, %v9442
        %10468 = vst.msk [vmem:[%s172 + $0x78c] sm:$0xf] %vm9984, %v9443
        %10469 = vst.msk [vmem:[%s172 + $0x790] sm:$0xf] %vm9984, %v9444
        %10470 = vst.msk [vmem:[%s172 + $0x794] sm:$0xf] %vm9984, %v9445
        %10471 = vst.msk [vmem:[%s172 + $0x798] sm:$0xf] %vm9984, %v9446
        %10472 = vst.msk [vmem:[%s172 + $0x79c] sm:$0xf] %vm9984, %v9447
        %10473 = vst.msk [vmem:[%s172 + $0x7a0] sm:$0xf] %vm9984, %v9448
        %10474 = vst.msk [vmem:[%s172 + $0x7a4] sm:$0xf] %vm9984, %v9449
        %10475 = vst.msk [vmem:[%s172 + $0x7a8] sm:$0xf] %vm9984, %v9450
        %10476 = vst.msk [vmem:[%s172 + $0x7ac] sm:$0xf] %vm9984, %v9451
        %10477 = vst.msk [vmem:[%s172 + $0x7b0] sm:$0xf] %vm9984, %v9452
        %10478 = vst.msk [vmem:[%s172 + $0x7b4] sm:$0xf] %vm9984, %v9453
        %10479 = vst.msk [vmem:[%s172 + $0x7b8] sm:$0xf] %vm9984, %v9454
        %10480 = vst.msk [vmem:[%s172 + $0x7bc] sm:$0xf] %vm9984, %v9455
        %10481 = vst.msk [vmem:[%s172 + $0x7c0] sm:$0xf] %vm9984, %v9456
        %10482 = vst.msk [vmem:[%s172 + $0x7c4] sm:$0xf] %vm9984, %v9457
        %10483 = vst.msk [vmem:[%s172 + $0x7c8] sm:$0xf] %vm9984, %v9458
        %10484 = vst.msk [vmem:[%s172 + $0x7cc] sm:$0xf] %vm9984, %v9459
        %10485 = vst.msk [vmem:[%s172 + $0x7d0] sm:$0xf] %vm9984, %v9460
        %10486 = vst.msk [vmem:[%s172 + $0x7d4] sm:$0xf] %vm9984, %v9461
        %10487 = vst.msk [vmem:[%s172 + $0x7d8] sm:$0xf] %vm9984, %v9462
        %10488 = vst.msk [vmem:[%s172 + $0x7dc] sm:$0xf] %vm9984, %v9463
        %10489 = vst.msk [vmem:[%s172 + $0x7e0] sm:$0xf] %vm9984, %v9464
        %10490 = vst.msk [vmem:[%s172 + $0x7e4] sm:$0xf] %vm9984, %v9465
        %10491 = vst.msk [vmem:[%s172 + $0x7e8] sm:$0xf] %vm9984, %v9466
        %10492 = vst.msk [vmem:[%s172 + $0x7ec] sm:$0xf] %vm9984, %v9467
        %10493 = vst.msk [vmem:[%s172 + $0x7f0] sm:$0xf] %vm9984, %v9468
        %10494 = vst.msk [vmem:[%s172 + $0x7f4] sm:$0xf] %vm9984, %v9469
        %10495 = vst.msk [vmem:[%s172 + $0x7f8] sm:$0xf] %vm9984, %v9470
        %10496 = vst.msk [vmem:[%s172 + $0x7fc] sm:$0xf] %vm9984, %v9471
        %s10497 = sand.u32 %s90, 1
        %s10498 = sand.u32 %s90, 1
        %s10499 = smul.addr %s10498, 2048
        %s10500 = scalar_lea.vmem [#allocation2], %s10499
        // Predicated region
        $region33: #{tpu_custom_call.1} parent=31 // pred_check
          %p10501 = pneg %p100
        $region34: #{tpu_custom_call.1} parent=31 // pred_check_branch
          %10503 = sbr.rel (%p10501) target = $region36
        $region35: #{tpu_custom_call.1} parent=31 // pred_region
          %s10504 = smul.u32 512, %s14
          %s10505 = ssub.s32 12544, %s10504
          %p10506 = scmp.lt.s32.totalorder %s10505, 512
          %s10507 = scalar_select %p10506, %s10505, 512
          %s10508 = smul.u32 64, %s10507
          %p10509 = scmp.ne.s32.totalorder 0, %s10508
          %s10510 = smul.addr %s10504, 4
          %s10511 = scalar_lea.vmem %s3, %s10510
          // Predicated region
          $region37: #{tpu_custom_call.1} parent=35 // pred_check
            %p10512 = pneg %p10509
          $region38: #{tpu_custom_call.1} parent=35 // pred_check_branch
            %10514 = sbr.rel (%p10512) target = $region40
          $region39: #{tpu_custom_call.1} parent=35 // pred_region
            // Predicated region
            $region41: #{tpu_custom_call.1} parent=39 // pred_check
              _
            $region42: #{tpu_custom_call.1} parent=39 // pred_check_branch
              %10516 = sbr.rel target = $region44
            $region43: #{tpu_custom_call.1} parent=39 // pred_region
              // Predicated region
              $region63: #{tpu_custom_call.1} parent=43 // pred_check
                _
              $region64: #{tpu_custom_call.1} parent=43 // pred_check_branch
                %10692 = sbr.rel (0) target = $region66
              $region65: #{tpu_custom_call.1} parent=43 // pred_region
                %s10694 = ssub.s32 16, 1
                %s10695 = sshrl.u32 %s10507, 6
                // While loop
                $region67: #{tpu_custom_call.1} parent=65 // loop_pre_header
                  _
                $region68: #{tpu_custom_call.1} parent=65 // loop_header
                  %s10697 = sphi 0, %s10699
                  %p10698 = scmp.ge.s32.totalorder %s10697, %s10695
                  %s10702 = sphi 0, %s10835
                  %s10703 = sphi %s10500, %s10838
                  %s10704 = sphi %s10511, %s10839
                $region69: #{tpu_custom_call.1} parent=65 // loop_header_branch
                  %10701 = sbr.rel (%p10698) target = $region73
                $region70: #{tpu_custom_call.1} parent=65 // loop_body
                  %v10705 = vld [vmem:[%s10703] sm:%s10694]
                  %10706 = vst [vmem:[%s10704] sm:%s10694] %v10705
                  %v10707 = vld [vmem:[%s10703 + $0x4] sm:%s10694]
                  %10708 = vst [vmem:[%s10704 + $0x4] sm:%s10694] %v10707
                  %v10709 = vld [vmem:[%s10703 + $0x8] sm:%s10694]
                  %10710 = vst [vmem:[%s10704 + $0x8] sm:%s10694] %v10709
                  %v10711 = vld [vmem:[%s10703 + $0xc] sm:%s10694]
                  %10712 = vst [vmem:[%s10704 + $0xc] sm:%s10694] %v10711
                  %v10713 = vld [vmem:[%s10703 + $0x10] sm:%s10694]
                  %10714 = vst [vmem:[%s10704 + $0x10] sm:%s10694] %v10713
                  %v10715 = vld [vmem:[%s10703 + $0x14] sm:%s10694]
                  %10716 = vst [vmem:[%s10704 + $0x14] sm:%s10694] %v10715
                  %v10717 = vld [vmem:[%s10703 + $0x18] sm:%s10694]
                  %10718 = vst [vmem:[%s10704 + $0x18] sm:%s10694] %v10717
                  %v10719 = vld [vmem:[%s10703 + $0x1c] sm:%s10694]
                  %10720 = vst [vmem:[%s10704 + $0x1c] sm:%s10694] %v10719
                  %v10721 = vld [vmem:[%s10703 + $0x20] sm:%s10694]
                  %10722 = vst [vmem:[%s10704 + $0x20] sm:%s10694] %v10721
                  %v10723 = vld [vmem:[%s10703 + $0x24] sm:%s10694]
                  %10724 = vst [vmem:[%s10704 + $0x24] sm:%s10694] %v10723
                  %v10725 = vld [vmem:[%s10703 + $0x28] sm:%s10694]
                  %10726 = vst [vmem:[%s10704 + $0x28] sm:%s10694] %v10725
                  %v10727 = vld [vmem:[%s10703 + $0x2c] sm:%s10694]
                  %10728 = vst [vmem:[%s10704 + $0x2c] sm:%s10694] %v10727
                  %v10729 = vld [vmem:[%s10703 + $0x30] sm:%s10694]
                  %10730 = vst [vmem:[%s10704 + $0x30] sm:%s10694] %v10729
                  %v10731 = vld [vmem:[%s10703 + $0x34] sm:%s10694]
                  %10732 = vst [vmem:[%s10704 + $0x34] sm:%s10694] %v10731
                  %v10733 = vld [vmem:[%s10703 + $0x38] sm:%s10694]
                  %10734 = vst [vmem:[%s10704 + $0x38] sm:%s10694] %v10733
                  %v10735 = vld [vmem:[%s10703 + $0x3c] sm:%s10694]
                  %10736 = vst [vmem:[%s10704 + $0x3c] sm:%s10694] %v10735
                  %v10737 = vld [vmem:[%s10703 + $0x40] sm:%s10694]
                  %10738 = vst [vmem:[%s10704 + $0x40] sm:%s10694] %v10737
                  %v10739 = vld [vmem:[%s10703 + $0x44] sm:%s10694]
                  %10740 = vst [vmem:[%s10704 + $0x44] sm:%s10694] %v10739
                  %v10741 = vld [vmem:[%s10703 + $0x48] sm:%s10694]
                  %10742 = vst [vmem:[%s10704 + $0x48] sm:%s10694] %v10741
                  %v10743 = vld [vmem:[%s10703 + $0x4c] sm:%s10694]
                  %10744 = vst [vmem:[%s10704 + $0x4c] sm:%s10694] %v10743
                  %v10745 = vld [vmem:[%s10703 + $0x50] sm:%s10694]
                  %10746 = vst [vmem:[%s10704 + $0x50] sm:%s10694] %v10745
                  %v10747 = vld [vmem:[%s10703 + $0x54] sm:%s10694]
                  %10748 = vst [vmem:[%s10704 + $0x54] sm:%s10694] %v10747
                  %v10749 = vld [vmem:[%s10703 + $0x58] sm:%s10694]
                  %10750 = vst [vmem:[%s10704 + $0x58] sm:%s10694] %v10749
                  %v10751 = vld [vmem:[%s10703 + $0x5c] sm:%s10694]
                  %10752 = vst [vmem:[%s10704 + $0x5c] sm:%s10694] %v10751
                  %v10753 = vld [vmem:[%s10703 + $0x60] sm:%s10694]
                  %10754 = vst [vmem:[%s10704 + $0x60] sm:%s10694] %v10753
                  %v10755 = vld [vmem:[%s10703 + $0x64] sm:%s10694]
                  %10756 = vst [vmem:[%s10704 + $0x64] sm:%s10694] %v10755
                  %v10757 = vld [vmem:[%s10703 + $0x68] sm:%s10694]
                  %10758 = vst [vmem:[%s10704 + $0x68] sm:%s10694] %v10757
                  %v10759 = vld [vmem:[%s10703 + $0x6c] sm:%s10694]
                  %10760 = vst [vmem:[%s10704 + $0x6c] sm:%s10694] %v10759
                  %v10761 = vld [vmem:[%s10703 + $0x70] sm:%s10694]
                  %10762 = vst [vmem:[%s10704 + $0x70] sm:%s10694] %v10761
                  %v10763 = vld [vmem:[%s10703 + $0x74] sm:%s10694]
                  %10764 = vst [vmem:[%s10704 + $0x74] sm:%s10694] %v10763
                  %v10765 = vld [vmem:[%s10703 + $0x78] sm:%s10694]
                  %10766 = vst [vmem:[%s10704 + $0x78] sm:%s10694] %v10765
                  %v10767 = vld [vmem:[%s10703 + $0x7c] sm:%s10694]
                  %10768 = vst [vmem:[%s10704 + $0x7c] sm:%s10694] %v10767
                  %v10769 = vld [vmem:[%s10703 + $0x80] sm:%s10694]
                  %10770 = vst [vmem:[%s10704 + $0x80] sm:%s10694] %v10769
                  %v10771 = vld [vmem:[%s10703 + $0x84] sm:%s10694]
                  %10772 = vst [vmem:[%s10704 + $0x84] sm:%s10694] %v10771
                  %v10773 = vld [vmem:[%s10703 + $0x88] sm:%s10694]
                  %10774 = vst [vmem:[%s10704 + $0x88] sm:%s10694] %v10773
                  %v10775 = vld [vmem:[%s10703 + $0x8c] sm:%s10694]
                  %10776 = vst [vmem:[%s10704 + $0x8c] sm:%s10694] %v10775
                  %v10777 = vld [vmem:[%s10703 + $0x90] sm:%s10694]
                  %10778 = vst [vmem:[%s10704 + $0x90] sm:%s10694] %v10777
                  %v10779 = vld [vmem:[%s10703 + $0x94] sm:%s10694]
                  %10780 = vst [vmem:[%s10704 + $0x94] sm:%s10694] %v10779
                  %v10781 = vld [vmem:[%s10703 + $0x98] sm:%s10694]
                  %10782 = vst [vmem:[%s10704 + $0x98] sm:%s10694] %v10781
                  %v10783 = vld [vmem:[%s10703 + $0x9c] sm:%s10694]
                  %10784 = vst [vmem:[%s10704 + $0x9c] sm:%s10694] %v10783
                  %v10785 = vld [vmem:[%s10703 + $0xa0] sm:%s10694]
                  %10786 = vst [vmem:[%s10704 + $0xa0] sm:%s10694] %v10785
                  %v10787 = vld [vmem:[%s10703 + $0xa4] sm:%s10694]
                  %10788 = vst [vmem:[%s10704 + $0xa4] sm:%s10694] %v10787
                  %v10789 = vld [vmem:[%s10703 + $0xa8] sm:%s10694]
                  %10790 = vst [vmem:[%s10704 + $0xa8] sm:%s10694] %v10789
                  %v10791 = vld [vmem:[%s10703 + $0xac] sm:%s10694]
                  %10792 = vst [vmem:[%s10704 + $0xac] sm:%s10694] %v10791
                  %v10793 = vld [vmem:[%s10703 + $0xb0] sm:%s10694]
                  %10794 = vst [vmem:[%s10704 + $0xb0] sm:%s10694] %v10793
                  %v10795 = vld [vmem:[%s10703 + $0xb4] sm:%s10694]
                  %10796 = vst [vmem:[%s10704 + $0xb4] sm:%s10694] %v10795
                  %v10797 = vld [vmem:[%s10703 + $0xb8] sm:%s10694]
                  %10798 = vst [vmem:[%s10704 + $0xb8] sm:%s10694] %v10797
                  %v10799 = vld [vmem:[%s10703 + $0xbc] sm:%s10694]
                  %10800 = vst [vmem:[%s10704 + $0xbc] sm:%s10694] %v10799
                  %v10801 = vld [vmem:[%s10703 + $0xc0] sm:%s10694]
                  %10802 = vst [vmem:[%s10704 + $0xc0] sm:%s10694] %v10801
                  %v10803 = vld [vmem:[%s10703 + $0xc4] sm:%s10694]
                  %10804 = vst [vmem:[%s10704 + $0xc4] sm:%s10694] %v10803
                  %v10805 = vld [vmem:[%s10703 + $0xc8] sm:%s10694]
                  %10806 = vst [vmem:[%s10704 + $0xc8] sm:%s10694] %v10805
                  %v10807 = vld [vmem:[%s10703 + $0xcc] sm:%s10694]
                  %10808 = vst [vmem:[%s10704 + $0xcc] sm:%s10694] %v10807
                  %v10809 = vld [vmem:[%s10703 + $0xd0] sm:%s10694]
                  %10810 = vst [vmem:[%s10704 + $0xd0] sm:%s10694] %v10809
                  %v10811 = vld [vmem:[%s10703 + $0xd4] sm:%s10694]
                  %10812 = vst [vmem:[%s10704 + $0xd4] sm:%s10694] %v10811
                  %v10813 = vld [vmem:[%s10703 + $0xd8] sm:%s10694]
                  %10814 = vst [vmem:[%s10704 + $0xd8] sm:%s10694] %v10813
                  %v10815 = vld [vmem:[%s10703 + $0xdc] sm:%s10694]
                  %10816 = vst [vmem:[%s10704 + $0xdc] sm:%s10694] %v10815
                  %v10817 = vld [vmem:[%s10703 + $0xe0] sm:%s10694]
                  %10818 = vst [vmem:[%s10704 + $0xe0] sm:%s10694] %v10817
                  %v10819 = vld [vmem:[%s10703 + $0xe4] sm:%s10694]
                  %10820 = vst [vmem:[%s10704 + $0xe4] sm:%s10694] %v10819
                  %v10821 = vld [vmem:[%s10703 + $0xe8] sm:%s10694]
                  %10822 = vst [vmem:[%s10704 + $0xe8] sm:%s10694] %v10821
                  %v10823 = vld [vmem:[%s10703 + $0xec] sm:%s10694]
                  %10824 = vst [vmem:[%s10704 + $0xec] sm:%s10694] %v10823
                  %v10825 = vld [vmem:[%s10703 + $0xf0] sm:%s10694]
                  %10826 = vst [vmem:[%s10704 + $0xf0] sm:%s10694] %v10825
                  %v10827 = vld [vmem:[%s10703 + $0xf4] sm:%s10694]
                  %10828 = vst [vmem:[%s10704 + $0xf4] sm:%s10694] %v10827
                  %v10829 = vld [vmem:[%s10703 + $0xf8] sm:%s10694]
                  %10830 = vst [vmem:[%s10704 + $0xf8] sm:%s10694] %v10829
                  %v10831 = vld [vmem:[%s10703 + $0xfc] sm:%s10694]
                  %10832 = vst [vmem:[%s10704 + $0xfc] sm:%s10694] %v10831
                  %s10833 = sadd.s32 1, %s10702
                  %p10834 = scmp.ge.s32.totalorder %s10833, %s10695
                  %s10835 = scalar_select %p10834, 0, %s10833
                  %s10836 = smul.u32 %s10835, 256
                  %s10837 = smul.u32 %s10835, 256
                  %s10838 = scalar_lea.vmem %s10500, %s10836 [#allocation2]
                  %s10839 = scalar_lea.vmem %s10511, %s10837
                $region71: #{tpu_custom_call.1} parent=65 // loop_footer
                  %s10699 = sadd.s32 %s10697, 1
                $region72: #{tpu_custom_call.1} parent=65 // loop_footer_branch
                  %10696 = sbr.rel target = $region68
                $region73: #{tpu_custom_call.1} parent=65 // loop_exit
                  _
                %s10840 = sshrl.u32 %s10507, 6
                %s10841 = sand.u32 %s10507, 63
                %s10842 = smul.u32 %s10840, 64
                %s10843 = smul.u32 4, %s10842
                %s10844 = scalar_lea.vmem %s10500, %s10843 [#allocation2]
                %s10845 = smul.u32 4, %s10842
                %s10846 = scalar_lea.vmem %s10511, %s10845
                // While loop
                $region74: #{tpu_custom_call.1} parent=65 // loop_pre_header
                  _
                $region75: #{tpu_custom_call.1} parent=65 // loop_header
                  %s10848 = sphi 0, %s10850
                  %p10849 = scmp.ge.s32.totalorder %s10848, %s10841
                  %s10853 = sphi 0, %s10860
                  %s10854 = sphi %s10844, %s10863
                  %s10855 = sphi %s10846, %s10864
                $region76: #{tpu_custom_call.1} parent=65 // loop_header_branch
                  %10852 = sbr.rel (%p10849) target = $region80
                $region77: #{tpu_custom_call.1} parent=65 // loop_body
                  %v10856 = vld [vmem:[%s10854] sm:%s10694]
                  %10857 = vst [vmem:[%s10855] sm:%s10694] %v10856
                  %s10858 = sadd.s32 1, %s10853
                  %p10859 = scmp.ge.s32.totalorder %s10858, %s10841
                  %s10860 = scalar_select %p10859, 0, %s10858
                  %s10861 = smul.u32 %s10860, 4
                  %s10862 = smul.u32 %s10860, 4
                  %s10863 = scalar_lea.vmem %s10844, %s10861 [#allocation2]
                  %s10864 = scalar_lea.vmem %s10846, %s10862
                $region78: #{tpu_custom_call.1} parent=65 // loop_footer
                  %s10850 = sadd.s32 %s10848, 1
                $region79: #{tpu_custom_call.1} parent=65 // loop_footer_branch
                  %10847 = sbr.rel target = $region75
                $region80: #{tpu_custom_call.1} parent=65 // loop_exit
                  _
              $region66: #{tpu_custom_call.1} parent=43 // pred_fallthru
                _
            $region44: #{tpu_custom_call.1} parent=39 // pred_fallthru
              _
            // Predicated region
            $region45: #{tpu_custom_call.1} parent=39 // pred_check
              _
            $region46: #{tpu_custom_call.1} parent=39 // pred_check_branch
              %10518 = sbr.rel (0) target = $region48
            $region47: #{tpu_custom_call.1} parent=39 // pred_region
              %s10520 = ssub.s32 16, 1
              %s10521 = sshrl.u32 %s10507, 6
              // While loop
              $region49: #{tpu_custom_call.1} parent=47 // loop_pre_header
                _
              $region50: #{tpu_custom_call.1} parent=47 // loop_header
                %s10523 = sphi 0, %s10525
                %p10524 = scmp.ge.s32.totalorder %s10523, %s10521
                %s10528 = sphi 0, %s10661
                %s10529 = sphi %s10500, %s10664
                %s10530 = sphi %s10511, %s10665
              $region51: #{tpu_custom_call.1} parent=47 // loop_header_branch
                %10527 = sbr.rel (%p10524) target = $region55
              $region52: #{tpu_custom_call.1} parent=47 // loop_body
                %v10531 = vld [vmem:[%s10529] sm:%s10520]
                %10532 = vst [vmem:[%s10530] sm:%s10520] %v10531
                %v10533 = vld [vmem:[%s10529 + $0x4] sm:%s10520]
                %10534 = vst [vmem:[%s10530 + $0x4] sm:%s10520] %v10533
                %v10535 = vld [vmem:[%s10529 + $0x8] sm:%s10520]
                %10536 = vst [vmem:[%s10530 + $0x8] sm:%s10520] %v10535
                %v10537 = vld [vmem:[%s10529 + $0xc] sm:%s10520]
                %10538 = vst [vmem:[%s10530 + $0xc] sm:%s10520] %v10537
                %v10539 = vld [vmem:[%s10529 + $0x10] sm:%s10520]
                %10540 = vst [vmem:[%s10530 + $0x10] sm:%s10520] %v10539
                %v10541 = vld [vmem:[%s10529 + $0x14] sm:%s10520]
                %10542 = vst [vmem:[%s10530 + $0x14] sm:%s10520] %v10541
                %v10543 = vld [vmem:[%s10529 + $0x18] sm:%s10520]
                %10544 = vst [vmem:[%s10530 + $0x18] sm:%s10520] %v10543
                %v10545 = vld [vmem:[%s10529 + $0x1c] sm:%s10520]
                %10546 = vst [vmem:[%s10530 + $0x1c] sm:%s10520] %v10545
                %v10547 = vld [vmem:[%s10529 + $0x20] sm:%s10520]
                %10548 = vst [vmem:[%s10530 + $0x20] sm:%s10520] %v10547
                %v10549 = vld [vmem:[%s10529 + $0x24] sm:%s10520]
                %10550 = vst [vmem:[%s10530 + $0x24] sm:%s10520] %v10549
                %v10551 = vld [vmem:[%s10529 + $0x28] sm:%s10520]
                %10552 = vst [vmem:[%s10530 + $0x28] sm:%s10520] %v10551
                %v10553 = vld [vmem:[%s10529 + $0x2c] sm:%s10520]
                %10554 = vst [vmem:[%s10530 + $0x2c] sm:%s10520] %v10553
                %v10555 = vld [vmem:[%s10529 + $0x30] sm:%s10520]
                %10556 = vst [vmem:[%s10530 + $0x30] sm:%s10520] %v10555
                %v10557 = vld [vmem:[%s10529 + $0x34] sm:%s10520]
                %10558 = vst [vmem:[%s10530 + $0x34] sm:%s10520] %v10557
                %v10559 = vld [vmem:[%s10529 + $0x38] sm:%s10520]
                %10560 = vst [vmem:[%s10530 + $0x38] sm:%s10520] %v10559
                %v10561 = vld [vmem:[%s10529 + $0x3c] sm:%s10520]
                %10562 = vst [vmem:[%s10530 + $0x3c] sm:%s10520] %v10561
                %v10563 = vld [vmem:[%s10529 + $0x40] sm:%s10520]
                %10564 = vst [vmem:[%s10530 + $0x40] sm:%s10520] %v10563
                %v10565 = vld [vmem:[%s10529 + $0x44] sm:%s10520]
                %10566 = vst [vmem:[%s10530 + $0x44] sm:%s10520] %v10565
                %v10567 = vld [vmem:[%s10529 + $0x48] sm:%s10520]
                %10568 = vst [vmem:[%s10530 + $0x48] sm:%s10520] %v10567
                %v10569 = vld [vmem:[%s10529 + $0x4c] sm:%s10520]
                %10570 = vst [vmem:[%s10530 + $0x4c] sm:%s10520] %v10569
                %v10571 = vld [vmem:[%s10529 + $0x50] sm:%s10520]
                %10572 = vst [vmem:[%s10530 + $0x50] sm:%s10520] %v10571
                %v10573 = vld [vmem:[%s10529 + $0x54] sm:%s10520]
                %10574 = vst [vmem:[%s10530 + $0x54] sm:%s10520] %v10573
                %v10575 = vld [vmem:[%s10529 + $0x58] sm:%s10520]
                %10576 = vst [vmem:[%s10530 + $0x58] sm:%s10520] %v10575
                %v10577 = vld [vmem:[%s10529 + $0x5c] sm:%s10520]
                %10578 = vst [vmem:[%s10530 + $0x5c] sm:%s10520] %v10577
                %v10579 = vld [vmem:[%s10529 + $0x60] sm:%s10520]
                %10580 = vst [vmem:[%s10530 + $0x60] sm:%s10520] %v10579
                %v10581 = vld [vmem:[%s10529 + $0x64] sm:%s10520]
                %10582 = vst [vmem:[%s10530 + $0x64] sm:%s10520] %v10581
                %v10583 = vld [vmem:[%s10529 + $0x68] sm:%s10520]
                %10584 = vst [vmem:[%s10530 + $0x68] sm:%s10520] %v10583
                %v10585 = vld [vmem:[%s10529 + $0x6c] sm:%s10520]
                %10586 = vst [vmem:[%s10530 + $0x6c] sm:%s10520] %v10585
                %v10587 = vld [vmem:[%s10529 + $0x70] sm:%s10520]
                %10588 = vst [vmem:[%s10530 + $0x70] sm:%s10520] %v10587
                %v10589 = vld [vmem:[%s10529 + $0x74] sm:%s10520]
                %10590 = vst [vmem:[%s10530 + $0x74] sm:%s10520] %v10589
                %v10591 = vld [vmem:[%s10529 + $0x78] sm:%s10520]
                %10592 = vst [vmem:[%s10530 + $0x78] sm:%s10520] %v10591
                %v10593 = vld [vmem:[%s10529 + $0x7c] sm:%s10520]
                %10594 = vst [vmem:[%s10530 + $0x7c] sm:%s10520] %v10593
                %v10595 = vld [vmem:[%s10529 + $0x80] sm:%s10520]
                %10596 = vst [vmem:[%s10530 + $0x80] sm:%s10520] %v10595
                %v10597 = vld [vmem:[%s10529 + $0x84] sm:%s10520]
                %10598 = vst [vmem:[%s10530 + $0x84] sm:%s10520] %v10597
                %v10599 = vld [vmem:[%s10529 + $0x88] sm:%s10520]
                %10600 = vst [vmem:[%s10530 + $0x88] sm:%s10520] %v10599
                %v10601 = vld [vmem:[%s10529 + $0x8c] sm:%s10520]
                %10602 = vst [vmem:[%s10530 + $0x8c] sm:%s10520] %v10601
                %v10603 = vld [vmem:[%s10529 + $0x90] sm:%s10520]
                %10604 = vst [vmem:[%s10530 + $0x90] sm:%s10520] %v10603
                %v10605 = vld [vmem:[%s10529 + $0x94] sm:%s10520]
                %10606 = vst [vmem:[%s10530 + $0x94] sm:%s10520] %v10605
                %v10607 = vld [vmem:[%s10529 + $0x98] sm:%s10520]
                %10608 = vst [vmem:[%s10530 + $0x98] sm:%s10520] %v10607
                %v10609 = vld [vmem:[%s10529 + $0x9c] sm:%s10520]
                %10610 = vst [vmem:[%s10530 + $0x9c] sm:%s10520] %v10609
                %v10611 = vld [vmem:[%s10529 + $0xa0] sm:%s10520]
                %10612 = vst [vmem:[%s10530 + $0xa0] sm:%s10520] %v10611
                %v10613 = vld [vmem:[%s10529 + $0xa4] sm:%s10520]
                %10614 = vst [vmem:[%s10530 + $0xa4] sm:%s10520] %v10613
                %v10615 = vld [vmem:[%s10529 + $0xa8] sm:%s10520]
                %10616 = vst [vmem:[%s10530 + $0xa8] sm:%s10520] %v10615
                %v10617 = vld [vmem:[%s10529 + $0xac] sm:%s10520]
                %10618 = vst [vmem:[%s10530 + $0xac] sm:%s10520] %v10617
                %v10619 = vld [vmem:[%s10529 + $0xb0] sm:%s10520]
                %10620 = vst [vmem:[%s10530 + $0xb0] sm:%s10520] %v10619
                %v10621 = vld [vmem:[%s10529 + $0xb4] sm:%s10520]
                %10622 = vst [vmem:[%s10530 + $0xb4] sm:%s10520] %v10621
                %v10623 = vld [vmem:[%s10529 + $0xb8] sm:%s10520]
                %10624 = vst [vmem:[%s10530 + $0xb8] sm:%s10520] %v10623
                %v10625 = vld [vmem:[%s10529 + $0xbc] sm:%s10520]
                %10626 = vst [vmem:[%s10530 + $0xbc] sm:%s10520] %v10625
                %v10627 = vld [vmem:[%s10529 + $0xc0] sm:%s10520]
                %10628 = vst [vmem:[%s10530 + $0xc0] sm:%s10520] %v10627
                %v10629 = vld [vmem:[%s10529 + $0xc4] sm:%s10520]
                %10630 = vst [vmem:[%s10530 + $0xc4] sm:%s10520] %v10629
                %v10631 = vld [vmem:[%s10529 + $0xc8] sm:%s10520]
                %10632 = vst [vmem:[%s10530 + $0xc8] sm:%s10520] %v10631
                %v10633 = vld [vmem:[%s10529 + $0xcc] sm:%s10520]
                %10634 = vst [vmem:[%s10530 + $0xcc] sm:%s10520] %v10633
                %v10635 = vld [vmem:[%s10529 + $0xd0] sm:%s10520]
                %10636 = vst [vmem:[%s10530 + $0xd0] sm:%s10520] %v10635
                %v10637 = vld [vmem:[%s10529 + $0xd4] sm:%s10520]
                %10638 = vst [vmem:[%s10530 + $0xd4] sm:%s10520] %v10637
                %v10639 = vld [vmem:[%s10529 + $0xd8] sm:%s10520]
                %10640 = vst [vmem:[%s10530 + $0xd8] sm:%s10520] %v10639
                %v10641 = vld [vmem:[%s10529 + $0xdc] sm:%s10520]
                %10642 = vst [vmem:[%s10530 + $0xdc] sm:%s10520] %v10641
                %v10643 = vld [vmem:[%s10529 + $0xe0] sm:%s10520]
                %10644 = vst [vmem:[%s10530 + $0xe0] sm:%s10520] %v10643
                %v10645 = vld [vmem:[%s10529 + $0xe4] sm:%s10520]
                %10646 = vst [vmem:[%s10530 + $0xe4] sm:%s10520] %v10645
                %v10647 = vld [vmem:[%s10529 + $0xe8] sm:%s10520]
                %10648 = vst [vmem:[%s10530 + $0xe8] sm:%s10520] %v10647
                %v10649 = vld [vmem:[%s10529 + $0xec] sm:%s10520]
                %10650 = vst [vmem:[%s10530 + $0xec] sm:%s10520] %v10649
                %v10651 = vld [vmem:[%s10529 + $0xf0] sm:%s10520]
                %10652 = vst [vmem:[%s10530 + $0xf0] sm:%s10520] %v10651
                %v10653 = vld [vmem:[%s10529 + $0xf4] sm:%s10520]
                %10654 = vst [vmem:[%s10530 + $0xf4] sm:%s10520] %v10653
                %v10655 = vld [vmem:[%s10529 + $0xf8] sm:%s10520]
                %10656 = vst [vmem:[%s10530 + $0xf8] sm:%s10520] %v10655
                %v10657 = vld [vmem:[%s10529 + $0xfc] sm:%s10520]
                %10658 = vst [vmem:[%s10530 + $0xfc] sm:%s10520] %v10657
                %s10659 = sadd.s32 1, %s10528
                %p10660 = scmp.ge.s32.totalorder %s10659, %s10521
                %s10661 = scalar_select %p10660, 0, %s10659
                %s10662 = smul.u32 %s10661, 256
                %s10663 = smul.u32 %s10661, 256
                %s10664 = scalar_lea.vmem %s10500, %s10662 [#allocation2]
                %s10665 = scalar_lea.vmem %s10511, %s10663
              $region53: #{tpu_custom_call.1} parent=47 // loop_footer
                %s10525 = sadd.s32 %s10523, 1
              $region54: #{tpu_custom_call.1} parent=47 // loop_footer_branch
                %10522 = sbr.rel target = $region50
              $region55: #{tpu_custom_call.1} parent=47 // loop_exit
                _
              %s10666 = sshrl.u32 %s10507, 6
              %s10667 = sand.u32 %s10507, 63
              %s10668 = smul.u32 %s10666, 64
              %s10669 = smul.u32 4, %s10668
              %s10670 = scalar_lea.vmem %s10500, %s10669 [#allocation2]
              %s10671 = smul.u32 4, %s10668
              %s10672 = scalar_lea.vmem %s10511, %s10671
              // While loop
              $region56: #{tpu_custom_call.1} parent=47 // loop_pre_header
                _
              $region57: #{tpu_custom_call.1} parent=47 // loop_header
                %s10674 = sphi 0, %s10676
                %p10675 = scmp.ge.s32.totalorder %s10674, %s10667
                %s10679 = sphi 0, %s10686
                %s10680 = sphi %s10670, %s10689
                %s10681 = sphi %s10672, %s10690
              $region58: #{tpu_custom_call.1} parent=47 // loop_header_branch
                %10678 = sbr.rel (%p10675) target = $region62
              $region59: #{tpu_custom_call.1} parent=47 // loop_body
                %v10682 = vld [vmem:[%s10680] sm:%s10520]
                %10683 = vst [vmem:[%s10681] sm:%s10520] %v10682
                %s10684 = sadd.s32 1, %s10679
                %p10685 = scmp.ge.s32.totalorder %s10684, %s10667
                %s10686 = scalar_select %p10685, 0, %s10684
                %s10687 = smul.u32 %s10686, 4
                %s10688 = smul.u32 %s10686, 4
                %s10689 = scalar_lea.vmem %s10670, %s10687 [#allocation2]
                %s10690 = scalar_lea.vmem %s10672, %s10688
              $region60: #{tpu_custom_call.1} parent=47 // loop_footer
                %s10676 = sadd.s32 %s10674, 1
              $region61: #{tpu_custom_call.1} parent=47 // loop_footer_branch
                %10673 = sbr.rel target = $region57
              $region62: #{tpu_custom_call.1} parent=47 // loop_exit
                _
            $region48: #{tpu_custom_call.1} parent=39 // pred_fallthru
              _
          $region40: #{tpu_custom_call.1} parent=35 // pred_fallthru
            _
          %10865 = vnop
        $region36: #{tpu_custom_call.1} parent=31 // pred_fallthru
          _
      $region32: #{tpu_custom_call.1} parent=5 // pred_fallthru
        _
      %p10866 = scmp.le.s32.totalorder 2, %s9
      // Predicated region
      $region81: #{tpu_custom_call.1} parent=5 // pred_check
        %p10867 = pneg %p10866
      $region82: #{tpu_custom_call.1} parent=5 // pred_check_branch
        %10869 = sbr.rel (%p10867) target = $region84
      $region83: #{tpu_custom_call.1} parent=5 // pred_region
        %s10870 = ssub.s32 %s9, 2
        // Predicated region
        $region85: #{tpu_custom_call.1} parent=83 // pred_check
          %p10871 = pneg %p106
        $region86: #{tpu_custom_call.1} parent=83 // pred_check_branch
          %10873 = sbr.rel (%p10871) target = $region88
        $region87: #{tpu_custom_call.1} parent=83 // pred_region
          %s10874 = sand.u32 %s91, 1
          %s10875 = sand.u32 %s91, 1
          %s10876 = smul.addr %s10875, 2048
          %s10877 = scalar_lea.vmem [#allocation2], %s10876
        $region88: #{tpu_custom_call.1} parent=83 // pred_fallthru
          _
      $region84: #{tpu_custom_call.1} parent=5 // pred_fallthru
        _
    $region6: #{tpu_custom_call.1} parent=1 // loop_footer
      %s13 = sadd.s32 1, %s9
    $region7: #{tpu_custom_call.1} parent=1 // loop_footer_branch
      %8 = sbr.rel target = $region3
    $region8: #{tpu_custom_call.1} parent=1 // loop_exit
      _

</llo_original>
